<compile_context>
chip_gen: v7x
topology: tpu7x:2x2x1
jax: 0.10.0
libtpu: 0.0.40
codegen_flags: <defaults>
</compile_context>

<pallas_src>
import jax
import jax.numpy as jnp
import numpy as np
from jax import lax
from jax.experimental import pallas as pl
from jax.experimental.pallas import tpu as pltpu

# ----------------------------- config ---------------------------------------
BATCH = 4
DIM = 8             # dims = (8,)
HIDDEN = 32         # base_filters of InvertibleResLinear
N_LAYERS = 2        # cfg.layers
SPNORM_COEFF = 0.97
N_POWER_SERIES = 8  # cfg.logdet == 'fixed' -> truncated power series
OUT_LANES = 128     # lane-dense packed output width (multiple of 128)


# ----------------------------- kernel ---------------------------------------
def _make_kernel(n_layers, n_power_series, out_lanes):
    inv_lipswish = 1.0 / 1.1

    def lipswish(x):
        # x * sigmoid(x) / 1.1 with sigmoid = 1/(1+exp(-x)); exp on the EUP and the
        # divide replaced by the EUP approximate reciprocal (VALU stays free).
        e = jnp.exp(-x)
        s = pl.reciprocal(1.0 + e, approx=True)
        xs = x * s
        y = xs * inv_lipswish
        dy = (s + xs * (1.0 - s)) * inv_lipswish
        return y, dy

    def bsum(x):                       # [TB, A, C] -> [TB, 1]
        return jnp.sum(jnp.sum(x, axis=2), axis=1, keepdims=True)

    def kernel(z_ref, sc_ref, ab_ref, w1_ref, b1_ref, w2_ref, b2_ref,
               w3_ref, w3t_ref, b3_ref, out_ref):
        z = z_ref[...].astype(jnp.float32)          # [TB, D]
        TB, D = z.shape
        ld = jnp.zeros((TB, 1), jnp.float32)        # residual log-dets only;
                                                    # ActNorm sum(log_scale) added outside

        # n_layers is small (2): static unroll is fine (see TODO at top for large L).
        for l in range(n_layers):
            # ----------------------- ActNorm (scale = exp(log_scale), precomputed) ----
            z = z * sc_ref[l] + ab_ref[l]

            # ------------------ InvertibleResLinear -----------------
            w1 = w1_ref[l]                          # [D, H]   (stored as [in, out])
            w2 = w2_ref[l]                          # [H, H]
            w3 = w3_ref[l]                          # [H, D]
            w3t = w3t_ref[l]                        # [D, H]  (= w3.T, precomputed)
            b1 = b1_ref[l]                          # [1, H]
            b2 = b2_ref[l]                          # [1, H]
            b3 = b3_ref[l]                          # [1, D]
            H = w1.shape[1]

            a1 = jnp.dot(z, w1, preferred_element_type=jnp.float32) + b1
            h1, d1 = lipswish(a1)                   # [TB, H]
            a2 = jnp.dot(h1, w2, preferred_element_type=jnp.float32) + b2
            h2, d2 = lipswish(a2)                   # [TB, H]
            g = jnp.dot(h2, w3, preferred_element_type=jnp.float32) + b3  # [TB, D]

            # Per-sample Jacobian in the row-vector convention
            # (J[b, d, k] = d g_k / d z_d):  J = W1 diag(d1) W2 diag(d2) W3.
            # Kept strictly 2-D on the [TB*D, H] folded view (layout-free because
            # D == 8 == f32 sublane tile; revisit if D changes).
            d1f = jnp.repeat(d1, D, axis=0)         # [TB*D, H]  sublane broadcast
            d2f = jnp.repeat(d2, D, axis=0)         # [TB*D, H]
            w1f = jnp.tile(w1, (TB, 1))             # [TB*D, H]
            w3tf = jnp.tile(w3t, (TB, 1))           # [TB*D, H]

            t1 = w1f * d1f                                                   # [TB*D, H]
            t2 = jnp.dot(t1, w2, preferred_element_type=jnp.float32) * d2f   # [TB*D, H]
            jt = jnp.dot(t2, w3, preferred_element_type=jnp.float32)         # [TB*D, D]

            # tr(J) = sum_{d,h} t2[b*D+d, h] * w3[h, d]   (no [D,D] identity mask)
            ld_res = bsum((t2 * w3tf).reshape(TB, D, H))                     # [TB, 1]

            # truncated power series: log det(I+J) = sum_k (-1)^{k+1}/k tr(J^k)
            # trace pairing: tr(J^{m+n}) = sum(J^n ⊙ (J^m)^T); only J^1..J^ceil(K/2)
            # are formed explicitly (3 batched matmuls for K=8 instead of 7).
            J = jt.reshape(TB, D, D)
            half = n_power_series // 2
            n_max = n_power_series - half
            powers = [J]                                                     # J^1..J^n_max
            for _ in range(n_max - 1):
                powers.append(jnp.einsum('bij,bjk->bik', powers[-1], J,
                                         preferred_element_type=jnp.float32))
            pow_t = [jnp.swapaxes(p, 1, 2) for p in powers[:half]]
            for k in range(2, n_power_series + 1):
                m = k // 2
                n = k - m
                tr_k = bsum(powers[n - 1] * pow_t[m - 1])
                ld_res = ld_res + ((-1.0) ** (k + 1) / k) * tr_k

            z = z + g
            ld = ld + ld_res

        # ---- lane-dense packed output: z -> lanes [0, D), ld -> lanes [D, 128).
        # Scatter via a tiny selector matmul on the (idle) MXU so the store is a
        # full 128-lane unmasked vst instead of 8-/1-wide masked stores.
        col = lax.broadcasted_iota(jnp.int32, (D, out_lanes), 1)
        row = lax.broadcasted_iota(jnp.int32, (D, out_lanes), 0)
        z_sel = (col == row).astype(jnp.float32)                  # [D, 128]
        ld_sel = (lax.broadcasted_iota(jnp.int32, (1, out_lanes), 1) >= D
                  ).astype(jnp.float32)                           # [1, 128]
        out_ref[...] = (jnp.dot(z, z_sel, preferred_element_type=jnp.float32)
                        + ld * ld_sel)

    return kernel


def resflow_forward(z, params, n_power_series=N_POWER_SERIES, tile_b=None):
    ls, ab, w1, b1, w2, b2, w3, b3 = params
    L = ls.shape[0]
    B, D = z.shape

    # hoisted out of the kernel (review): ActNorm scale + its log-det constant,
    # and the shared W3^T.
    scale = jnp.exp(ls)                              # [L, 1, D]
    ls_total = jnp.sum(ls)                           # scalar, added to ld post-call
    w3t = jnp.swapaxes(w3, 1, 2)                     # [L, D, H]

    # --- batch tile selection: large, sublane-aligned tiles amortize the
    #     ~0.35us/grid-step overhead; 1024 rows keeps live intermediates
    #     (~10 KiB f32 per row) well under the scoped VMEM limit on all gens.
    B8 = -(-B // 8) * 8
    if tile_b is None:
        tile_b = min(1024, B8)
        # prefer >= 2 grid steps so ("parallel",) splits across v7x's two TCs
        if B8 // tile_b < 2 and B8 >= 16:
            tile_b = max(8, ((B8 // 2) // 8) * 8)
    tile_b = max(8, (int(tile_b) // 8) * 8)

    B_pad = -(-B // tile_b) * tile_b
    if B_pad != B:
        # padded rows run per-row math on zeros and are sliced off below (safe:
        # no cross-row reductions in the kernel).
        z = jnp.pad(z, ((0, B_pad - B), (0, 0)))

    kernel = _make_kernel(L, n_power_series, OUT_LANES)

    def rep_spec(arr):
        nd = arr.ndim
        return pl.BlockSpec(arr.shape, lambda b, _n=nd: (0,) * _n)

    packed = pl.pallas_call(
        kernel,
        grid=(B_pad // tile_b,),
        out_shape=jax.ShapeDtypeStruct((B_pad, OUT_LANES), jnp.float32),
        in_specs=[pl.BlockSpec((tile_b, D), lambda b: (b, 0)),
                  rep_spec(scale), rep_spec(ab),
                  rep_spec(w1), rep_spec(b1),
                  rep_spec(w2), rep_spec(b2),
                  rep_spec(w3), rep_spec(w3t), rep_spec(b3)],
        out_specs=pl.BlockSpec((tile_b, OUT_LANES), lambda b: (b, 0)),
        compiler_params=pltpu.CompilerParams(
            dimension_semantics=("parallel",),       # megacore batch split on v7x
            vmem_limit_bytes=32 * 1024 * 1024),      # explicit (v5e default is 16 MiB)
    )(z, scale, ab, w1, b1, w2, b2, w3, w3t, b3)

    z_out = packed[:B, :D]
    log_df_dz = packed[:B, D] + ls_total             # fold ActNorm log-det constant back in
    return z_out, log_df_dz


# ---------------------- parameter construction (glue) ------------------------
def _spectral_normalize(w, key, coeff, n_iter=100):
    # w: [out, in]; scale so spectral norm <= coeff (residual-flow style).
    u = jax.random.normal(key, (w.shape[0],), jnp.float32)
    u = u / (jnp.linalg.norm(u) + 1e-12)
    for _ in range(n_iter):
        v = w.T @ u
        v = v / (jnp.linalg.norm(v) + 1e-12)
        u = w @ v
        u = u / (jnp.linalg.norm(u) + 1e-12)
    sigma = u @ (w @ v)
    return w * jnp.minimum(1.0, coeff / sigma)


def init_params(key, dim, hidden, n_layers, coeff):
    ls_l, ab_l, w1_l, b1_l, w2_l, b2_l, w3_l, b3_l = ([] for _ in range(8))
    for l in range(n_layers):
        ks = jax.random.split(jax.random.fold_in(key, l), 11)
        # ActNorm params (deterministic stand-in for data-dependent init)
        ls_l.append(0.1 * jax.random.normal(ks[0], (1, dim), jnp.float32))
        ab_l.append(0.1 * jax.random.normal(ks[1], (1, dim), jnp.float32))
        # spectral-normalized linears, stored transposed [in, out]
        w1 = _spectral_normalize(
            jax.random.normal(ks[2], (hidden, dim), jnp.float32) / np.sqrt(dim), ks[8], coeff)
        w2 = _spectral_normalize(
            jax.random.normal(ks[3], (hidden, hidden), jnp.float32) / np.sqrt(hidden), ks[9], coeff)
        w3 = _spectral_normalize(
            jax.random.normal(ks[4], (dim, hidden), jnp.float32) / np.sqrt(hidden), ks[10], coeff)
        w1_l.append(w1.T); w2_l.append(w2.T); w3_l.append(w3.T)
        b1_l.append(0.01 * jax.random.normal(ks[5], (1, hidden), jnp.float32))
        b2_l.append(0.01 * jax.random.normal(ks[6], (1, hidden), jnp.float32))
        b3_l.append(0.01 * jax.random.normal(ks[7], (1, dim), jnp.float32))
    stack = lambda xs: jnp.stack(xs, axis=0)
    return (stack(ls_l), stack(ab_l), stack(w1_l), stack(b1_l),
            stack(w2_l), stack(b2_l), stack(w3_l), stack(b3_l))


# --------------------------- pure-JAX reference -------------------------------
def resflow_reference(z, params, n_power_series=N_POWER_SERIES):
    ls, ab, w1, b1, w2, b2, w3, b3 = params
    ld = jnp.zeros((z.shape[0],), jnp.float32)

    def lipswish(x):
        s = 1.0 / (1.0 + jnp.exp(-x))
        return x * s / 1.1, (s + x * s * (1.0 - s)) / 1.1

    for l in range(ls.shape[0]):
        z = z * jnp.exp(ls[l]) + ab[l]
        ld = ld + jnp.sum(ls[l])
        a1 = z @ w1[l] + b1[l]
        h1, d1 = lipswish(a1)
        a2 = h1 @ w2[l] + b2[l]
        h2, d2 = lipswish(a2)
        g = h2 @ w3[l] + b3[l]
        jt = w1[l][None, :, :] * d1[:, None, :]
        jt = jnp.einsum('bdh,hg->bdg', jt, w2[l]) * d2[:, None, :]
        jt = jnp.einsum('bdh,hk->bdk', jt, w3[l])
        jk = jt
        ld_res = jnp.trace(jk, axis1=1, axis2=2)
        for k in range(2, n_power_series + 1):
            jk = jnp.einsum('bij,bjk->bik', jk, jt)
            ld_res = ld_res + ((-1.0) ** (k + 1) / k) * jnp.trace(jk, axis1=1, axis2=2)
        z = z + g
        ld = ld + ld_res
    return z, ld


# --------------------------------- main ---------------------------------------
if __name__ == "__main__":
    key = jax.random.PRNGKey(0)
    k_z, k_p, k_z2 = jax.random.split(key, 3)
    z = jax.random.normal(k_z, (BATCH, DIM), jnp.float32)
    params = init_params(k_p, DIM, HIDDEN, N_LAYERS, SPNORM_COEFF)

    # small-batch demo (padded to 8 rows internally)
    z_out, log_df_dz = resflow_forward(z, params)
    jax.block_until_ready(z_out)
    jax.block_until_ready(log_df_dz)

    z_ref, ld_ref = resflow_reference(z, params)
    # tolerance accounts for the EUP approx-reciprocal sigmoid in the kernel
    assert np.allclose(np.asarray(z_out), np.asarray(z_ref), atol=2e-3, rtol=2e-3)
    assert np.allclose(np.asarray(log_df_dz), np.asarray(ld_ref), atol=2e-3, rtol=2e-3)

    # non-multiple-of-8 batch: exercises padding + multi-step ("parallel") grid
    z2 = jax.random.normal(k_z2, (44, DIM), jnp.float32)
    z2_out, ld2 = resflow_forward(z2, params)
    jax.block_until_ready(z2_out)
    z2_ref, ld2_ref = resflow_reference(z2, params)
    assert np.allclose(np.asarray(z2_out), np.asarray(z2_ref), atol=2e-3, rtol=2e-3)
    assert np.allclose(np.asarray(ld2), np.asarray(ld2_ref), atol=2e-3, rtol=2e-3)

    print("KERNEL_OK")
</pallas_src>

<mosaic_0001>
module attributes {stable_mosaic.version = 11 : i64} {
  func.func @kernel(%arg0: i32, %arg1: memref<8x8xf32, #tpu.memory_space<vmem>>, %arg2: memref<2x1x8xf32, #tpu.memory_space<vmem>>, %arg3: memref<2x1x8xf32, #tpu.memory_space<vmem>>, %arg4: memref<2x8x32xf32, #tpu.memory_space<vmem>>, %arg5: memref<2x1x32xf32, #tpu.memory_space<vmem>>, %arg6: memref<2x32x32xf32, #tpu.memory_space<vmem>>, %arg7: memref<2x1x32xf32, #tpu.memory_space<vmem>>, %arg8: memref<2x32x8xf32, #tpu.memory_space<vmem>>, %arg9: memref<2x8x32xf32, #tpu.memory_space<vmem>>, %arg10: memref<2x1x8xf32, #tpu.memory_space<vmem>>, %arg11: memref<8x128xf32, #tpu.memory_space<vmem>>) attributes {dimension_semantics = [#tpu.dimension_semantics<parallel>], iteration_bounds = array<i64: 1>, scalar_prefetch = 0 : i64, scratch_operands = 0 : i64, tpu.core_type = #tpu.core_type<tc>, window_params = [{transform_indices = @transform_0, window_bounds = array<i64: 8, 8>}, {pipeline_mode = #tpu.pipeline_mode<synchronous>, transform_indices = @transform_1, window_bounds = array<i64: 2, 1, 8>}, {pipeline_mode = #tpu.pipeline_mode<synchronous>, transform_indices = @transform_2, window_bounds = array<i64: 2, 1, 8>}, {pipeline_mode = #tpu.pipeline_mode<synchronous>, transform_indices = @transform_3, window_bounds = array<i64: 2, 8, 32>}, {pipeline_mode = #tpu.pipeline_mode<synchronous>, transform_indices = @transform_4, window_bounds = array<i64: 2, 1, 32>}, {pipeline_mode = #tpu.pipeline_mode<synchronous>, transform_indices = @transform_5, window_bounds = array<i64: 2, 32, 32>}, {pipeline_mode = #tpu.pipeline_mode<synchronous>, transform_indices = @transform_6, window_bounds = array<i64: 2, 1, 32>}, {pipeline_mode = #tpu.pipeline_mode<synchronous>, transform_indices = @transform_7, window_bounds = array<i64: 2, 32, 8>}, {pipeline_mode = #tpu.pipeline_mode<synchronous>, transform_indices = @transform_8, window_bounds = array<i64: 2, 8, 32>}, {pipeline_mode = #tpu.pipeline_mode<synchronous>, transform_indices = @transform_9, window_bounds = array<i64: 2, 1, 8>}, {transform_indices = @transform_10, window_bounds = array<i64: 8, 128>}]} {
    %c0 = arith.constant 0 : index
    %c0_0 = arith.constant 0 : index
    %0 = vector.load %arg1[%c0, %c0_0] : memref<8x8xf32, #tpu.memory_space<vmem>>, vector<8x8xf32>
    %cst = arith.constant 0.000000e+00 : f32
    %1 = vector.broadcast %cst : f32 to vector<8x1xf32>
    %c0_1 = arith.constant 0 : index
    %c0_2 = arith.constant 0 : index
    %c0_3 = arith.constant 0 : index
    %2 = vector.load %arg2[%c0_1, %c0_2, %c0_3] : memref<2x1x8xf32, #tpu.memory_space<vmem>>, vector<1x1x8xf32>
    %3 = vector.shape_cast %2 : vector<1x1x8xf32> to vector<1x8xf32>
    %4 = vector.broadcast %3 : vector<1x8xf32> to vector<8x8xf32>
    %5 = arith.mulf %0, %4 : vector<8x8xf32>
    %c0_4 = arith.constant 0 : index
    %c0_5 = arith.constant 0 : index
    %c0_6 = arith.constant 0 : index
    %6 = vector.load %arg3[%c0_4, %c0_5, %c0_6] : memref<2x1x8xf32, #tpu.memory_space<vmem>>, vector<1x1x8xf32>
    %7 = vector.shape_cast %6 : vector<1x1x8xf32> to vector<1x8xf32>
    %8 = vector.broadcast %7 : vector<1x8xf32> to vector<8x8xf32>
    %9 = arith.addf %5, %8 : vector<8x8xf32>
    %c0_7 = arith.constant 0 : index
    %c0_8 = arith.constant 0 : index
    %c0_9 = arith.constant 0 : index
    %10 = vector.load %arg4[%c0_7, %c0_8, %c0_9] : memref<2x8x32xf32, #tpu.memory_space<vmem>>, vector<1x8x32xf32>
    %11 = vector.shape_cast %10 : vector<1x8x32xf32> to vector<8x32xf32>
    %c0_10 = arith.constant 0 : index
    %c0_11 = arith.constant 0 : index
    %c0_12 = arith.constant 0 : index
    %12 = vector.load %arg6[%c0_10, %c0_11, %c0_12] : memref<2x32x32xf32, #tpu.memory_space<vmem>>, vector<1x32x32xf32>
    %13 = vector.shape_cast %12 : vector<1x32x32xf32> to vector<32x32xf32>
    %c0_13 = arith.constant 0 : index
    %c0_14 = arith.constant 0 : index
    %c0_15 = arith.constant 0 : index
    %14 = vector.load %arg8[%c0_13, %c0_14, %c0_15] : memref<2x32x8xf32, #tpu.memory_space<vmem>>, vector<1x32x8xf32>
    %15 = vector.shape_cast %14 : vector<1x32x8xf32> to vector<32x8xf32>
    %c0_16 = arith.constant 0 : index
    %c0_17 = arith.constant 0 : index
    %c0_18 = arith.constant 0 : index
    %16 = vector.load %arg9[%c0_16, %c0_17, %c0_18] : memref<2x8x32xf32, #tpu.memory_space<vmem>>, vector<1x8x32xf32>
    %17 = vector.shape_cast %16 : vector<1x8x32xf32> to vector<8x32xf32>
    %c0_19 = arith.constant 0 : index
    %c0_20 = arith.constant 0 : index
    %c0_21 = arith.constant 0 : index
    %18 = vector.load %arg5[%c0_19, %c0_20, %c0_21] : memref<2x1x32xf32, #tpu.memory_space<vmem>>, vector<1x1x32xf32>
    %19 = vector.shape_cast %18 : vector<1x1x32xf32> to vector<1x32xf32>
    %c0_22 = arith.constant 0 : index
    %c0_23 = arith.constant 0 : index
    %c0_24 = arith.constant 0 : index
    %20 = vector.load %arg7[%c0_22, %c0_23, %c0_24] : memref<2x1x32xf32, #tpu.memory_space<vmem>>, vector<1x1x32xf32>
    %21 = vector.shape_cast %20 : vector<1x1x32xf32> to vector<1x32xf32>
    %c0_25 = arith.constant 0 : index
    %c0_26 = arith.constant 0 : index
    %c0_27 = arith.constant 0 : index
    %22 = vector.load %arg10[%c0_25, %c0_26, %c0_27] : memref<2x1x8xf32, #tpu.memory_space<vmem>>, vector<1x1x8xf32>
    %23 = vector.shape_cast %22 : vector<1x1x8xf32> to vector<1x8xf32>
    %cst_28 = arith.constant dense<0.000000e+00> : vector<8x32xf32>
    %24 = tpu.matmul %9, %11, %cst_28 {dimension_numbers = #tpu.dot_dimension_numbers<[1], [0], [0], [1], [0, 0, 1, 1], [], []>} : vector<8x8xf32>, vector<8x32xf32>, vector<8x32xf32> -> vector<8x32xf32>
    %25 = vector.broadcast %19 : vector<1x32xf32> to vector<8x32xf32>
    %26 = arith.addf %24, %25 : vector<8x32xf32>
    %cst_29 = arith.constant 0.000000e+00 : f32
    %27 = vector.broadcast %cst_29 : f32 to vector<8x32xf32>
    %28 = arith.subf %27, %26 : vector<8x32xf32>
    %29 = math.exp %28 : vector<8x32xf32>
    %cst_30 = arith.constant 1.000000e+00 : f32
    %30 = vector.broadcast %cst_30 : f32 to vector<8x32xf32>
    %31 = arith.addf %30, %29 : vector<8x32xf32>
    %32 = tpu.reciprocal %31 {approx = true} : vector<8x32xf32> -> vector<8x32xf32>
    %33 = arith.mulf %26, %32 : vector<8x32xf32>
    %cst_31 = arith.constant 0.909090936 : f32
    %34 = vector.broadcast %cst_31 : f32 to vector<8x32xf32>
    %35 = arith.mulf %33, %34 : vector<8x32xf32>
    %cst_32 = arith.constant 1.000000e+00 : f32
    %36 = vector.broadcast %cst_32 : f32 to vector<8x32xf32>
    %37 = arith.subf %36, %32 : vector<8x32xf32>
    %38 = arith.mulf %33, %37 : vector<8x32xf32>
    %39 = arith.addf %32, %38 : vector<8x32xf32>
    %cst_33 = arith.constant 0.909090936 : f32
    %40 = vector.broadcast %cst_33 : f32 to vector<8x32xf32>
    %41 = arith.mulf %39, %40 : vector<8x32xf32>
    %cst_34 = arith.constant dense<0.000000e+00> : vector<8x32xf32>
    %42 = tpu.matmul %35, %13, %cst_34 {dimension_numbers = #tpu.dot_dimension_numbers<[1], [0], [0], [1], [0, 0, 1, 1], [], []>} : vector<8x32xf32>, vector<32x32xf32>, vector<8x32xf32> -> vector<8x32xf32>
    %43 = vector.broadcast %21 : vector<1x32xf32> to vector<8x32xf32>
    %44 = arith.addf %42, %43 : vector<8x32xf32>
    %cst_35 = arith.constant 0.000000e+00 : f32
    %45 = vector.broadcast %cst_35 : f32 to vector<8x32xf32>
    %46 = arith.subf %45, %44 : vector<8x32xf32>
    %47 = math.exp %46 : vector<8x32xf32>
    %cst_36 = arith.constant 1.000000e+00 : f32
    %48 = vector.broadcast %cst_36 : f32 to vector<8x32xf32>
    %49 = arith.addf %48, %47 : vector<8x32xf32>
    %50 = tpu.reciprocal %49 {approx = true} : vector<8x32xf32> -> vector<8x32xf32>
    %51 = arith.mulf %44, %50 : vector<8x32xf32>
    %cst_37 = arith.constant 0.909090936 : f32
    %52 = vector.broadcast %cst_37 : f32 to vector<8x32xf32>
    %53 = arith.mulf %51, %52 : vector<8x32xf32>
    %cst_38 = arith.constant 1.000000e+00 : f32
    %54 = vector.broadcast %cst_38 : f32 to vector<8x32xf32>
    %55 = arith.subf %54, %50 : vector<8x32xf32>
    %56 = arith.mulf %51, %55 : vector<8x32xf32>
    %57 = arith.addf %50, %56 : vector<8x32xf32>
    %cst_39 = arith.constant 0.909090936 : f32
    %58 = vector.broadcast %cst_39 : f32 to vector<8x32xf32>
    %59 = arith.mulf %57, %58 : vector<8x32xf32>
    %cst_40 = arith.constant dense<0.000000e+00> : vector<8x8xf32>
    %60 = tpu.matmul %53, %15, %cst_40 {dimension_numbers = #tpu.dot_dimension_numbers<[1], [0], [0], [1], [0, 0, 1, 1], [], []>} : vector<8x32xf32>, vector<32x8xf32>, vector<8x8xf32> -> vector<8x8xf32>
    %61 = vector.broadcast %23 : vector<1x8xf32> to vector<8x8xf32>
    %62 = arith.addf %60, %61 : vector<8x8xf32>
    %63 = vector.shape_cast %41 : vector<8x32xf32> to vector<8x1x32xf32>
    %64 = vector.broadcast %63 : vector<8x1x32xf32> to vector<8x8x32xf32>
    %65 = vector.shape_cast %64 : vector<8x8x32xf32> to vector<64x32xf32>
    %66 = vector.shape_cast %59 : vector<8x32xf32> to vector<8x1x32xf32>
    %67 = vector.broadcast %66 : vector<8x1x32xf32> to vector<8x8x32xf32>
    %68 = vector.shape_cast %67 : vector<8x8x32xf32> to vector<64x32xf32>
    %69 = tpu.concatenate %11, %11, %11, %11, %11, %11, %11, %11 in 0 : vector<8x32xf32>, vector<8x32xf32>, vector<8x32xf32>, vector<8x32xf32>, vector<8x32xf32>, vector<8x32xf32>, vector<8x32xf32>, vector<8x32xf32> -> vector<64x32xf32>
    %70 = tpu.concatenate %17, %17, %17, %17, %17, %17, %17, %17 in 0 : vector<8x32xf32>, vector<8x32xf32>, vector<8x32xf32>, vector<8x32xf32>, vector<8x32xf32>, vector<8x32xf32>, vector<8x32xf32>, vector<8x32xf32> -> vector<64x32xf32>
    %71 = arith.mulf %69, %65 : vector<64x32xf32>
    %cst_41 = arith.constant dense<0.000000e+00> : vector<64x32xf32>
    %72 = tpu.matmul %71, %13, %cst_41 {dimension_numbers = #tpu.dot_dimension_numbers<[1], [0], [0], [1], [0, 0, 1, 1], [], []>} : vector<64x32xf32>, vector<32x32xf32>, vector<64x32xf32> -> vector<64x32xf32>
    %73 = arith.mulf %72, %68 : vector<64x32xf32>
    %cst_42 = arith.constant dense<0.000000e+00> : vector<64x8xf32>
    %74 = tpu.matmul %73, %15, %cst_42 {dimension_numbers = #tpu.dot_dimension_numbers<[1], [0], [0], [1], [0, 0, 1, 1], [], []>} : vector<64x32xf32>, vector<32x8xf32>, vector<64x8xf32> -> vector<64x8xf32>
    %75 = arith.mulf %73, %70 : vector<64x32xf32>
    %76 = vector.shape_cast %75 : vector<64x32xf32> to vector<8x8x32xf32>
    %cst_43 = arith.constant dense<0.000000e+00> : vector<8x8xf32>
    %77 = vector.multi_reduction <add>, %76, %cst_43 [2] : vector<8x8x32xf32> to vector<8x8xf32>
    %cst_44 = arith.constant dense<0.000000e+00> : vector<8xf32>
    %78 = vector.multi_reduction <add>, %77, %cst_44 [1] : vector<8x8xf32> to vector<8xf32>
    %79 = vector.shape_cast %78 : vector<8xf32> to vector<8x1xf32>
    %80 = vector.shape_cast %74 : vector<64x8xf32> to vector<8x8x8xf32>
    "tpu.trace_start"() <{level = 10 : i32, message = "bij,bjk->bik"}> : () -> ()
    %cst_45 = arith.constant dense<0.000000e+00> : vector<8x8x8xf32>
    %81 = tpu.matmul %80, %80, %cst_45 {dimension_numbers = #tpu.dot_dimension_numbers<[2], [1], [1], [2], [0, 0, 0, 1, 1, 2], [0], [0]>} : vector<8x8x8xf32>, vector<8x8x8xf32>, vector<8x8x8xf32> -> vector<8x8x8xf32>
    %cst_46 = arith.constant dense<0.000000e+00> : vector<8x8x8xf32>
    %82 = tpu.matmul %81, %80, %cst_46 {dimension_numbers = #tpu.dot_dimension_numbers<[2], [1], [1], [2], [0, 0, 0, 1, 1, 2], [0], [0]>} : vector<8x8x8xf32>, vector<8x8x8xf32>, vector<8x8x8xf32> -> vector<8x8x8xf32>
    %cst_47 = arith.constant dense<0.000000e+00> : vector<8x8x8xf32>
    %83 = tpu.matmul %82, %80, %cst_47 {dimension_numbers = #tpu.dot_dimension_numbers<[2], [1], [1], [2], [0, 0, 0, 1, 1, 2], [0], [0]>} : vector<8x8x8xf32>, vector<8x8x8xf32>, vector<8x8x8xf32> -> vector<8x8x8xf32>
    "tpu.trace_stop"() : () -> ()
    %84 = tpu.transpose %80, [0, 2, 1] : vector<8x8x8xf32> -> vector<8x8x8xf32>
    %85 = tpu.transpose %81, [0, 2, 1] : vector<8x8x8xf32> -> vector<8x8x8xf32>
    %86 = tpu.transpose %82, [0, 2, 1] : vector<8x8x8xf32> -> vector<8x8x8xf32>
    %87 = tpu.transpose %83, [0, 2, 1] : vector<8x8x8xf32> -> vector<8x8x8xf32>
    %88 = arith.mulf %80, %84 : vector<8x8x8xf32>
    %cst_48 = arith.constant dense<0.000000e+00> : vector<8x8xf32>
    %89 = vector.multi_reduction <add>, %88, %cst_48 [2] : vector<8x8x8xf32> to vector<8x8xf32>
    %cst_49 = arith.constant dense<0.000000e+00> : vector<8xf32>
    %90 = vector.multi_reduction <add>, %89, %cst_49 [1] : vector<8x8xf32> to vector<8xf32>
    %91 = vector.shape_cast %90 : vector<8xf32> to vector<8x1xf32>
    %cst_50 = arith.constant -5.000000e-01 : f32
    %92 = vector.broadcast %cst_50 : f32 to vector<8x1xf32>
    %93 = arith.mulf %92, %91 : vector<8x1xf32>
    %94 = arith.addf %79, %93 : vector<8x1xf32>
    %95 = arith.mulf %81, %84 : vector<8x8x8xf32>
    %cst_51 = arith.constant dense<0.000000e+00> : vector<8x8xf32>
    %96 = vector.multi_reduction <add>, %95, %cst_51 [2] : vector<8x8x8xf32> to vector<8x8xf32>
    %cst_52 = arith.constant dense<0.000000e+00> : vector<8xf32>
    %97 = vector.multi_reduction <add>, %96, %cst_52 [1] : vector<8x8xf32> to vector<8xf32>
    %98 = vector.shape_cast %97 : vector<8xf32> to vector<8x1xf32>
    %cst_53 = arith.constant 0.333333343 : f32
    %99 = vector.broadcast %cst_53 : f32 to vector<8x1xf32>
    %100 = arith.mulf %99, %98 : vector<8x1xf32>
    %101 = arith.addf %94, %100 : vector<8x1xf32>
    %102 = arith.mulf %81, %85 : vector<8x8x8xf32>
    %cst_54 = arith.constant dense<0.000000e+00> : vector<8x8xf32>
    %103 = vector.multi_reduction <add>, %102, %cst_54 [2] : vector<8x8x8xf32> to vector<8x8xf32>
    %cst_55 = arith.constant dense<0.000000e+00> : vector<8xf32>
    %104 = vector.multi_reduction <add>, %103, %cst_55 [1] : vector<8x8xf32> to vector<8xf32>
    %105 = vector.shape_cast %104 : vector<8xf32> to vector<8x1xf32>
    %cst_56 = arith.constant -2.500000e-01 : f32
    %106 = vector.broadcast %cst_56 : f32 to vector<8x1xf32>
    %107 = arith.mulf %106, %105 : vector<8x1xf32>
    %108 = arith.addf %101, %107 : vector<8x1xf32>
    %109 = arith.mulf %82, %85 : vector<8x8x8xf32>
    %cst_57 = arith.constant dense<0.000000e+00> : vector<8x8xf32>
    %110 = vector.multi_reduction <add>, %109, %cst_57 [2] : vector<8x8x8xf32> to vector<8x8xf32>
    %cst_58 = arith.constant dense<0.000000e+00> : vector<8xf32>
    %111 = vector.multi_reduction <add>, %110, %cst_58 [1] : vector<8x8xf32> to vector<8xf32>
    %112 = vector.shape_cast %111 : vector<8xf32> to vector<8x1xf32>
    %cst_59 = arith.constant 2.000000e-01 : f32
    %113 = vector.broadcast %cst_59 : f32 to vector<8x1xf32>
    %114 = arith.mulf %113, %112 : vector<8x1xf32>
    %115 = arith.addf %108, %114 : vector<8x1xf32>
    %116 = arith.mulf %82, %86 : vector<8x8x8xf32>
    %cst_60 = arith.constant dense<0.000000e+00> : vector<8x8xf32>
    %117 = vector.multi_reduction <add>, %116, %cst_60 [2] : vector<8x8x8xf32> to vector<8x8xf32>
    %cst_61 = arith.constant dense<0.000000e+00> : vector<8xf32>
    %118 = vector.multi_reduction <add>, %117, %cst_61 [1] : vector<8x8xf32> to vector<8xf32>
    %119 = vector.shape_cast %118 : vector<8xf32> to vector<8x1xf32>
    %cst_62 = arith.constant -0.166666672 : f32
    %120 = vector.broadcast %cst_62 : f32 to vector<8x1xf32>
    %121 = arith.mulf %120, %119 : vector<8x1xf32>
    %122 = arith.addf %115, %121 : vector<8x1xf32>
    %123 = arith.mulf %83, %86 : vector<8x8x8xf32>
    %cst_63 = arith.constant dense<0.000000e+00> : vector<8x8xf32>
    %124 = vector.multi_reduction <add>, %123, %cst_63 [2] : vector<8x8x8xf32> to vector<8x8xf32>
    %cst_64 = arith.constant dense<0.000000e+00> : vector<8xf32>
    %125 = vector.multi_reduction <add>, %124, %cst_64 [1] : vector<8x8xf32> to vector<8xf32>
    %126 = vector.shape_cast %125 : vector<8xf32> to vector<8x1xf32>
    %cst_65 = arith.constant 0.142857149 : f32
    %127 = vector.broadcast %cst_65 : f32 to vector<8x1xf32>
    %128 = arith.mulf %127, %126 : vector<8x1xf32>
    %129 = arith.addf %122, %128 : vector<8x1xf32>
    %130 = arith.mulf %83, %87 : vector<8x8x8xf32>
    %cst_66 = arith.constant dense<0.000000e+00> : vector<8x8xf32>
    %131 = vector.multi_reduction <add>, %130, %cst_66 [2] : vector<8x8x8xf32> to vector<8x8xf32>
    %cst_67 = arith.constant dense<0.000000e+00> : vector<8xf32>
    %132 = vector.multi_reduction <add>, %131, %cst_67 [1] : vector<8x8xf32> to vector<8xf32>
    %133 = vector.shape_cast %132 : vector<8xf32> to vector<8x1xf32>
    %cst_68 = arith.constant -1.250000e-01 : f32
    %134 = vector.broadcast %cst_68 : f32 to vector<8x1xf32>
    %135 = arith.mulf %134, %133 : vector<8x1xf32>
    %136 = arith.addf %129, %135 : vector<8x1xf32>
    %137 = arith.addf %9, %62 : vector<8x8xf32>
    %138 = arith.addf %1, %136 : vector<8x1xf32>
    %c1 = arith.constant 1 : index
    %c0_69 = arith.constant 0 : index
    %c0_70 = arith.constant 0 : index
    %139 = vector.load %arg2[%c1, %c0_69, %c0_70] : memref<2x1x8xf32, #tpu.memory_space<vmem>>, vector<1x1x8xf32>
    %140 = vector.shape_cast %139 : vector<1x1x8xf32> to vector<1x8xf32>
    %141 = vector.broadcast %140 : vector<1x8xf32> to vector<8x8xf32>
    %142 = arith.mulf %137, %141 : vector<8x8xf32>
    %c1_71 = arith.constant 1 : index
    %c0_72 = arith.constant 0 : index
    %c0_73 = arith.constant 0 : index
    %143 = vector.load %arg3[%c1_71, %c0_72, %c0_73] : memref<2x1x8xf32, #tpu.memory_space<vmem>>, vector<1x1x8xf32>
    %144 = vector.shape_cast %143 : vector<1x1x8xf32> to vector<1x8xf32>
    %145 = vector.broadcast %144 : vector<1x8xf32> to vector<8x8xf32>
    %146 = arith.addf %142, %145 : vector<8x8xf32>
    %c1_74 = arith.constant 1 : index
    %c0_75 = arith.constant 0 : index
    %c0_76 = arith.constant 0 : index
    %147 = vector.load %arg4[%c1_74, %c0_75, %c0_76] : memref<2x8x32xf32, #tpu.memory_space<vmem>>, vector<1x8x32xf32>
    %148 = vector.shape_cast %147 : vector<1x8x32xf32> to vector<8x32xf32>
    %c1_77 = arith.constant 1 : index
    %c0_78 = arith.constant 0 : index
    %c0_79 = arith.constant 0 : index
    %149 = vector.load %arg6[%c1_77, %c0_78, %c0_79] : memref<2x32x32xf32, #tpu.memory_space<vmem>>, vector<1x32x32xf32>
    %150 = vector.shape_cast %149 : vector<1x32x32xf32> to vector<32x32xf32>
    %c1_80 = arith.constant 1 : index
    %c0_81 = arith.constant 0 : index
    %c0_82 = arith.constant 0 : index
    %151 = vector.load %arg8[%c1_80, %c0_81, %c0_82] : memref<2x32x8xf32, #tpu.memory_space<vmem>>, vector<1x32x8xf32>
    %152 = vector.shape_cast %151 : vector<1x32x8xf32> to vector<32x8xf32>
    %c1_83 = arith.constant 1 : index
    %c0_84 = arith.constant 0 : index
    %c0_85 = arith.constant 0 : index
    %153 = vector.load %arg9[%c1_83, %c0_84, %c0_85] : memref<2x8x32xf32, #tpu.memory_space<vmem>>, vector<1x8x32xf32>
    %154 = vector.shape_cast %153 : vector<1x8x32xf32> to vector<8x32xf32>
    %c1_86 = arith.constant 1 : index
    %c0_87 = arith.constant 0 : index
    %c0_88 = arith.constant 0 : index
    %155 = vector.load %arg5[%c1_86, %c0_87, %c0_88] : memref<2x1x32xf32, #tpu.memory_space<vmem>>, vector<1x1x32xf32>
    %156 = vector.shape_cast %155 : vector<1x1x32xf32> to vector<1x32xf32>
    %c1_89 = arith.constant 1 : index
    %c0_90 = arith.constant 0 : index
    %c0_91 = arith.constant 0 : index
    %157 = vector.load %arg7[%c1_89, %c0_90, %c0_91] : memref<2x1x32xf32, #tpu.memory_space<vmem>>, vector<1x1x32xf32>
    %158 = vector.shape_cast %157 : vector<1x1x32xf32> to vector<1x32xf32>
    %c1_92 = arith.constant 1 : index
    %c0_93 = arith.constant 0 : index
    %c0_94 = arith.constant 0 : index
    %159 = vector.load %arg10[%c1_92, %c0_93, %c0_94] : memref<2x1x8xf32, #tpu.memory_space<vmem>>, vector<1x1x8xf32>
    %160 = vector.shape_cast %159 : vector<1x1x8xf32> to vector<1x8xf32>
    %cst_95 = arith.constant dense<0.000000e+00> : vector<8x32xf32>
    %161 = tpu.matmul %146, %148, %cst_95 {dimension_numbers = #tpu.dot_dimension_numbers<[1], [0], [0], [1], [0, 0, 1, 1], [], []>} : vector<8x8xf32>, vector<8x32xf32>, vector<8x32xf32> -> vector<8x32xf32>
    %162 = vector.broadcast %156 : vector<1x32xf32> to vector<8x32xf32>
    %163 = arith.addf %161, %162 : vector<8x32xf32>
    %cst_96 = arith.constant 0.000000e+00 : f32
    %164 = vector.broadcast %cst_96 : f32 to vector<8x32xf32>
    %165 = arith.subf %164, %163 : vector<8x32xf32>
    %166 = math.exp %165 : vector<8x32xf32>
    %cst_97 = arith.constant 1.000000e+00 : f32
    %167 = vector.broadcast %cst_97 : f32 to vector<8x32xf32>
    %168 = arith.addf %167, %166 : vector<8x32xf32>
    %169 = tpu.reciprocal %168 {approx = true} : vector<8x32xf32> -> vector<8x32xf32>
    %170 = arith.mulf %163, %169 : vector<8x32xf32>
    %cst_98 = arith.constant 0.909090936 : f32
    %171 = vector.broadcast %cst_98 : f32 to vector<8x32xf32>
    %172 = arith.mulf %170, %171 : vector<8x32xf32>
    %cst_99 = arith.constant 1.000000e+00 : f32
    %173 = vector.broadcast %cst_99 : f32 to vector<8x32xf32>
    %174 = arith.subf %173, %169 : vector<8x32xf32>
    %175 = arith.mulf %170, %174 : vector<8x32xf32>
    %176 = arith.addf %169, %175 : vector<8x32xf32>
    %cst_100 = arith.constant 0.909090936 : f32
    %177 = vector.broadcast %cst_100 : f32 to vector<8x32xf32>
    %178 = arith.mulf %176, %177 : vector<8x32xf32>
    %cst_101 = arith.constant dense<0.000000e+00> : vector<8x32xf32>
    %179 = tpu.matmul %172, %150, %cst_101 {dimension_numbers = #tpu.dot_dimension_numbers<[1], [0], [0], [1], [0, 0, 1, 1], [], []>} : vector<8x32xf32>, vector<32x32xf32>, vector<8x32xf32> -> vector<8x32xf32>
    %180 = vector.broadcast %158 : vector<1x32xf32> to vector<8x32xf32>
    %181 = arith.addf %179, %180 : vector<8x32xf32>
    %cst_102 = arith.constant 0.000000e+00 : f32
    %182 = vector.broadcast %cst_102 : f32 to vector<8x32xf32>
    %183 = arith.subf %182, %181 : vector<8x32xf32>
    %184 = math.exp %183 : vector<8x32xf32>
    %cst_103 = arith.constant 1.000000e+00 : f32
    %185 = vector.broadcast %cst_103 : f32 to vector<8x32xf32>
    %186 = arith.addf %185, %184 : vector<8x32xf32>
    %187 = tpu.reciprocal %186 {approx = true} : vector<8x32xf32> -> vector<8x32xf32>
    %188 = arith.mulf %181, %187 : vector<8x32xf32>
    %cst_104 = arith.constant 0.909090936 : f32
    %189 = vector.broadcast %cst_104 : f32 to vector<8x32xf32>
    %190 = arith.mulf %188, %189 : vector<8x32xf32>
    %cst_105 = arith.constant 1.000000e+00 : f32
    %191 = vector.broadcast %cst_105 : f32 to vector<8x32xf32>
    %192 = arith.subf %191, %187 : vector<8x32xf32>
    %193 = arith.mulf %188, %192 : vector<8x32xf32>
    %194 = arith.addf %187, %193 : vector<8x32xf32>
    %cst_106 = arith.constant 0.909090936 : f32
    %195 = vector.broadcast %cst_106 : f32 to vector<8x32xf32>
    %196 = arith.mulf %194, %195 : vector<8x32xf32>
    %cst_107 = arith.constant dense<0.000000e+00> : vector<8x8xf32>
    %197 = tpu.matmul %190, %152, %cst_107 {dimension_numbers = #tpu.dot_dimension_numbers<[1], [0], [0], [1], [0, 0, 1, 1], [], []>} : vector<8x32xf32>, vector<32x8xf32>, vector<8x8xf32> -> vector<8x8xf32>
    %198 = vector.broadcast %160 : vector<1x8xf32> to vector<8x8xf32>
    %199 = arith.addf %197, %198 : vector<8x8xf32>
    %200 = vector.shape_cast %178 : vector<8x32xf32> to vector<8x1x32xf32>
    %201 = vector.broadcast %200 : vector<8x1x32xf32> to vector<8x8x32xf32>
    %202 = vector.shape_cast %201 : vector<8x8x32xf32> to vector<64x32xf32>
    %203 = vector.shape_cast %196 : vector<8x32xf32> to vector<8x1x32xf32>
    %204 = vector.broadcast %203 : vector<8x1x32xf32> to vector<8x8x32xf32>
    %205 = vector.shape_cast %204 : vector<8x8x32xf32> to vector<64x32xf32>
    %206 = tpu.concatenate %148, %148, %148, %148, %148, %148, %148, %148 in 0 : vector<8x32xf32>, vector<8x32xf32>, vector<8x32xf32>, vector<8x32xf32>, vector<8x32xf32>, vector<8x32xf32>, vector<8x32xf32>, vector<8x32xf32> -> vector<64x32xf32>
    %207 = tpu.concatenate %154, %154, %154, %154, %154, %154, %154, %154 in 0 : vector<8x32xf32>, vector<8x32xf32>, vector<8x32xf32>, vector<8x32xf32>, vector<8x32xf32>, vector<8x32xf32>, vector<8x32xf32>, vector<8x32xf32> -> vector<64x32xf32>
    %208 = arith.mulf %206, %202 : vector<64x32xf32>
    %cst_108 = arith.constant dense<0.000000e+00> : vector<64x32xf32>
    %209 = tpu.matmul %208, %150, %cst_108 {dimension_numbers = #tpu.dot_dimension_numbers<[1], [0], [0], [1], [0, 0, 1, 1], [], []>} : vector<64x32xf32>, vector<32x32xf32>, vector<64x32xf32> -> vector<64x32xf32>
    %210 = arith.mulf %209, %205 : vector<64x32xf32>
    %cst_109 = arith.constant dense<0.000000e+00> : vector<64x8xf32>
    %211 = tpu.matmul %210, %152, %cst_109 {dimension_numbers = #tpu.dot_dimension_numbers<[1], [0], [0], [1], [0, 0, 1, 1], [], []>} : vector<64x32xf32>, vector<32x8xf32>, vector<64x8xf32> -> vector<64x8xf32>
    %212 = arith.mulf %210, %207 : vector<64x32xf32>
    %213 = vector.shape_cast %212 : vector<64x32xf32> to vector<8x8x32xf32>
    %cst_110 = arith.constant dense<0.000000e+00> : vector<8x8xf32>
    %214 = vector.multi_reduction <add>, %213, %cst_110 [2] : vector<8x8x32xf32> to vector<8x8xf32>
    %cst_111 = arith.constant dense<0.000000e+00> : vector<8xf32>
    %215 = vector.multi_reduction <add>, %214, %cst_111 [1] : vector<8x8xf32> to vector<8xf32>
    %216 = vector.shape_cast %215 : vector<8xf32> to vector<8x1xf32>
    %217 = vector.shape_cast %211 : vector<64x8xf32> to vector<8x8x8xf32>
    "tpu.trace_start"() <{level = 10 : i32, message = "bij,bjk->bik"}> : () -> ()
    %cst_112 = arith.constant dense<0.000000e+00> : vector<8x8x8xf32>
    %218 = tpu.matmul %217, %217, %cst_112 {dimension_numbers = #tpu.dot_dimension_numbers<[2], [1], [1], [2], [0, 0, 0, 1, 1, 2], [0], [0]>} : vector<8x8x8xf32>, vector<8x8x8xf32>, vector<8x8x8xf32> -> vector<8x8x8xf32>
    %cst_113 = arith.constant dense<0.000000e+00> : vector<8x8x8xf32>
    %219 = tpu.matmul %218, %217, %cst_113 {dimension_numbers = #tpu.dot_dimension_numbers<[2], [1], [1], [2], [0, 0, 0, 1, 1, 2], [0], [0]>} : vector<8x8x8xf32>, vector<8x8x8xf32>, vector<8x8x8xf32> -> vector<8x8x8xf32>
    %cst_114 = arith.constant dense<0.000000e+00> : vector<8x8x8xf32>
    %220 = tpu.matmul %219, %217, %cst_114 {dimension_numbers = #tpu.dot_dimension_numbers<[2], [1], [1], [2], [0, 0, 0, 1, 1, 2], [0], [0]>} : vector<8x8x8xf32>, vector<8x8x8xf32>, vector<8x8x8xf32> -> vector<8x8x8xf32>
    "tpu.trace_stop"() : () -> ()
    %221 = tpu.transpose %217, [0, 2, 1] : vector<8x8x8xf32> -> vector<8x8x8xf32>
    %222 = tpu.transpose %218, [0, 2, 1] : vector<8x8x8xf32> -> vector<8x8x8xf32>
    %223 = tpu.transpose %219, [0, 2, 1] : vector<8x8x8xf32> -> vector<8x8x8xf32>
    %224 = tpu.transpose %220, [0, 2, 1] : vector<8x8x8xf32> -> vector<8x8x8xf32>
    %225 = arith.mulf %217, %221 : vector<8x8x8xf32>
    %cst_115 = arith.constant dense<0.000000e+00> : vector<8x8xf32>
    %226 = vector.multi_reduction <add>, %225, %cst_115 [2] : vector<8x8x8xf32> to vector<8x8xf32>
    %cst_116 = arith.constant dense<0.000000e+00> : vector<8xf32>
    %227 = vector.multi_reduction <add>, %226, %cst_116 [1] : vector<8x8xf32> to vector<8xf32>
    %228 = vector.shape_cast %227 : vector<8xf32> to vector<8x1xf32>
    %cst_117 = arith.constant -5.000000e-01 : f32
    %229 = vector.broadcast %cst_117 : f32 to vector<8x1xf32>
    %230 = arith.mulf %229, %228 : vector<8x1xf32>
    %231 = arith.addf %216, %230 : vector<8x1xf32>
    %232 = arith.mulf %218, %221 : vector<8x8x8xf32>
    %cst_118 = arith.constant dense<0.000000e+00> : vector<8x8xf32>
    %233 = vector.multi_reduction <add>, %232, %cst_118 [2] : vector<8x8x8xf32> to vector<8x8xf32>
    %cst_119 = arith.constant dense<0.000000e+00> : vector<8xf32>
    %234 = vector.multi_reduction <add>, %233, %cst_119 [1] : vector<8x8xf32> to vector<8xf32>
    %235 = vector.shape_cast %234 : vector<8xf32> to vector<8x1xf32>
    %cst_120 = arith.constant 0.333333343 : f32
    %236 = vector.broadcast %cst_120 : f32 to vector<8x1xf32>
    %237 = arith.mulf %236, %235 : vector<8x1xf32>
    %238 = arith.addf %231, %237 : vector<8x1xf32>
    %239 = arith.mulf %218, %222 : vector<8x8x8xf32>
    %cst_121 = arith.constant dense<0.000000e+00> : vector<8x8xf32>
    %240 = vector.multi_reduction <add>, %239, %cst_121 [2] : vector<8x8x8xf32> to vector<8x8xf32>
    %cst_122 = arith.constant dense<0.000000e+00> : vector<8xf32>
    %241 = vector.multi_reduction <add>, %240, %cst_122 [1] : vector<8x8xf32> to vector<8xf32>
    %242 = vector.shape_cast %241 : vector<8xf32> to vector<8x1xf32>
    %cst_123 = arith.constant -2.500000e-01 : f32
    %243 = vector.broadcast %cst_123 : f32 to vector<8x1xf32>
    %244 = arith.mulf %243, %242 : vector<8x1xf32>
    %245 = arith.addf %238, %244 : vector<8x1xf32>
    %246 = arith.mulf %219, %222 : vector<8x8x8xf32>
    %cst_124 = arith.constant dense<0.000000e+00> : vector<8x8xf32>
    %247 = vector.multi_reduction <add>, %246, %cst_124 [2] : vector<8x8x8xf32> to vector<8x8xf32>
    %cst_125 = arith.constant dense<0.000000e+00> : vector<8xf32>
    %248 = vector.multi_reduction <add>, %247, %cst_125 [1] : vector<8x8xf32> to vector<8xf32>
    %249 = vector.shape_cast %248 : vector<8xf32> to vector<8x1xf32>
    %cst_126 = arith.constant 2.000000e-01 : f32
    %250 = vector.broadcast %cst_126 : f32 to vector<8x1xf32>
    %251 = arith.mulf %250, %249 : vector<8x1xf32>
    %252 = arith.addf %245, %251 : vector<8x1xf32>
    %253 = arith.mulf %219, %223 : vector<8x8x8xf32>
    %cst_127 = arith.constant dense<0.000000e+00> : vector<8x8xf32>
    %254 = vector.multi_reduction <add>, %253, %cst_127 [2] : vector<8x8x8xf32> to vector<8x8xf32>
    %cst_128 = arith.constant dense<0.000000e+00> : vector<8xf32>
    %255 = vector.multi_reduction <add>, %254, %cst_128 [1] : vector<8x8xf32> to vector<8xf32>
    %256 = vector.shape_cast %255 : vector<8xf32> to vector<8x1xf32>
    %cst_129 = arith.constant -0.166666672 : f32
    %257 = vector.broadcast %cst_129 : f32 to vector<8x1xf32>
    %258 = arith.mulf %257, %256 : vector<8x1xf32>
    %259 = arith.addf %252, %258 : vector<8x1xf32>
    %260 = arith.mulf %220, %223 : vector<8x8x8xf32>
    %cst_130 = arith.constant dense<0.000000e+00> : vector<8x8xf32>
    %261 = vector.multi_reduction <add>, %260, %cst_130 [2] : vector<8x8x8xf32> to vector<8x8xf32>
    %cst_131 = arith.constant dense<0.000000e+00> : vector<8xf32>
    %262 = vector.multi_reduction <add>, %261, %cst_131 [1] : vector<8x8xf32> to vector<8xf32>
    %263 = vector.shape_cast %262 : vector<8xf32> to vector<8x1xf32>
    %cst_132 = arith.constant 0.142857149 : f32
    %264 = vector.broadcast %cst_132 : f32 to vector<8x1xf32>
    %265 = arith.mulf %264, %263 : vector<8x1xf32>
    %266 = arith.addf %259, %265 : vector<8x1xf32>
    %267 = arith.mulf %220, %224 : vector<8x8x8xf32>
    %cst_133 = arith.constant dense<0.000000e+00> : vector<8x8xf32>
    %268 = vector.multi_reduction <add>, %267, %cst_133 [2] : vector<8x8x8xf32> to vector<8x8xf32>
    %cst_134 = arith.constant dense<0.000000e+00> : vector<8xf32>
    %269 = vector.multi_reduction <add>, %268, %cst_134 [1] : vector<8x8xf32> to vector<8xf32>
    %270 = vector.shape_cast %269 : vector<8xf32> to vector<8x1xf32>
    %cst_135 = arith.constant -1.250000e-01 : f32
    %271 = vector.broadcast %cst_135 : f32 to vector<8x1xf32>
    %272 = arith.mulf %271, %270 : vector<8x1xf32>
    %273 = arith.addf %266, %272 : vector<8x1xf32>
    %274 = arith.addf %146, %199 : vector<8x8xf32>
    %275 = arith.addf %138, %273 : vector<8x1xf32>
    %276 = tpu.iota {dimensions = array<i32: 1>} : vector<8x128xi32>
    %277 = tpu.iota {dimensions = array<i32: 0>} : vector<8x128xi32>
    %278 = arith.cmpi eq, %276, %277 : vector<8x128xi32>
    %279 = arith.extui %278 : vector<8x128xi1> to vector<8x128xi32>
    %280 = arith.sitofp %279 : vector<8x128xi32> to vector<8x128xf32>
    %281 = tpu.iota {dimensions = array<i32: 1>} : vector<1x128xi32>
    %c8_i32 = arith.constant 8 : i32
    %282 = vector.broadcast %c8_i32 : i32 to vector<1x128xi32>
    %283 = arith.cmpi sge, %281, %282 : vector<1x128xi32>
    %284 = arith.extui %283 : vector<1x128xi1> to vector<1x128xi32>
    %285 = arith.sitofp %284 : vector<1x128xi32> to vector<1x128xf32>
    %cst_136 = arith.constant dense<0.000000e+00> : vector<8x128xf32>
    %286 = tpu.matmul %274, %280, %cst_136 {dimension_numbers = #tpu.dot_dimension_numbers<[1], [0], [0], [1], [0, 0, 1, 1], [], []>} : vector<8x8xf32>, vector<8x128xf32>, vector<8x128xf32> -> vector<8x128xf32>
    %287 = vector.broadcast %275 : vector<8x1xf32> to vector<8x128xf32>
    %288 = vector.broadcast %285 : vector<1x128xf32> to vector<8x128xf32>
    %289 = arith.mulf %287, %288 : vector<8x128xf32>
    %290 = arith.addf %286, %289 : vector<8x128xf32>
    %c0_137 = arith.constant 0 : index
    %c0_138 = arith.constant 0 : index
    %291 = vector.load %arg11[%c0_137, %c0_138] : memref<8x128xf32, #tpu.memory_space<vmem>>, vector<8x128xf32>
    tpu.vector_store %arg11[%c0_137, %c0_138], %290 {strides = array<i32>} : memref<8x128xf32, #tpu.memory_space<vmem>>, vector<8x128xf32>,
    return
  }
  func.func @transform_0(%arg0: i32) -> (i32, i32) {
    %c0_i32 = arith.constant 0 : i32
    %c0_i32_0 = arith.constant 0 : i32
    return %arg0, %c0_i32 : i32, i32
  }
  func.func @transform_1(%arg0: i32) -> (i32, i32, i32) {
    %c0_i32 = arith.constant 0 : i32
    %c0_i32_0 = arith.constant 0 : i32
    %c0_i32_1 = arith.constant 0 : i32
    %c0_i32_2 = arith.constant 0 : i32
    return %c0_i32, %c0_i32_0, %c0_i32_1 : i32, i32, i32
  }
  func.func @transform_2(%arg0: i32) -> (i32, i32, i32) {
    %c0_i32 = arith.constant 0 : i32
    %c0_i32_0 = arith.constant 0 : i32
    %c0_i32_1 = arith.constant 0 : i32
    %c0_i32_2 = arith.constant 0 : i32
    return %c0_i32, %c0_i32_0, %c0_i32_1 : i32, i32, i32
  }
  func.func @transform_3(%arg0: i32) -> (i32, i32, i32) {
    %c0_i32 = arith.constant 0 : i32
    %c0_i32_0 = arith.constant 0 : i32
    %c0_i32_1 = arith.constant 0 : i32
    %c0_i32_2 = arith.constant 0 : i32
    return %c0_i32, %c0_i32_0, %c0_i32_1 : i32, i32, i32
  }
  func.func @transform_4(%arg0: i32) -> (i32, i32, i32) {
    %c0_i32 = arith.constant 0 : i32
    %c0_i32_0 = arith.constant 0 : i32
    %c0_i32_1 = arith.constant 0 : i32
    %c0_i32_2 = arith.constant 0 : i32
    return %c0_i32, %c0_i32_0, %c0_i32_1 : i32, i32, i32
  }
  func.func @transform_5(%arg0: i32) -> (i32, i32, i32) {
    %c0_i32 = arith.constant 0 : i32
    %c0_i32_0 = arith.constant 0 : i32
    %c0_i32_1 = arith.constant 0 : i32
    %c0_i32_2 = arith.constant 0 : i32
    return %c0_i32, %c0_i32_0, %c0_i32_1 : i32, i32, i32
  }
  func.func @transform_6(%arg0: i32) -> (i32, i32, i32) {
    %c0_i32 = arith.constant 0 : i32
    %c0_i32_0 = arith.constant 0 : i32
    %c0_i32_1 = arith.constant 0 : i32
    %c0_i32_2 = arith.constant 0 : i32
    return %c0_i32, %c0_i32_0, %c0_i32_1 : i32, i32, i32
  }
  func.func @transform_7(%arg0: i32) -> (i32, i32, i32) {
    %c0_i32 = arith.constant 0 : i32
    %c0_i32_0 = arith.constant 0 : i32
    %c0_i32_1 = arith.constant 0 : i32
    %c0_i32_2 = arith.constant 0 : i32
    return %c0_i32, %c0_i32_0, %c0_i32_1 : i32, i32, i32
  }
  func.func @transform_8(%arg0: i32) -> (i32, i32, i32) {
    %c0_i32 = arith.constant 0 : i32
    %c0_i32_0 = arith.constant 0 : i32
    %c0_i32_1 = arith.constant 0 : i32
    %c0_i32_2 = arith.constant 0 : i32
    return %c0_i32, %c0_i32_0, %c0_i32_1 : i32, i32, i32
  }
  func.func @transform_9(%arg0: i32) -> (i32, i32, i32) {
    %c0_i32 = arith.constant 0 : i32
    %c0_i32_0 = arith.constant 0 : i32
    %c0_i32_1 = arith.constant 0 : i32
    %c0_i32_2 = arith.constant 0 : i32
    return %c0_i32, %c0_i32_0, %c0_i32_1 : i32, i32, i32
  }
  func.func @transform_10(%arg0: i32) -> (i32, i32) {
    %c0_i32 = arith.constant 0 : i32
    %c0_i32_0 = arith.constant 0 : i32
    return %arg0, %c0_i32 : i32, i32
  }
}

</mosaic_0001>

<llo_original>
// kernel: tpu_custom_call.1
$region0: #{tpu_custom_call.1}
  #allocation0 [shape = 'u32[]', space=smem, size = 0x4, offset = 0x4, fixed_abs, tag = 'smem constant byte address 0x4 - core index']
  #allocation1 [shape = 'u32[144,128]{1,0:T(1,128)}', space=vmem, size = 0x12000, scoped, tag = 'internal scratch']
  %s0 = inlined_call_operand.vmem [shape: f32[8,8], index: 0, kind: input, shape index: {}]
  %s1 = inlined_call_operand.vmem [shape: f32[2,1,8], index: 1, kind: input, shape index: {}]
  %s2 = inlined_call_operand.hbm [shape: f32[2,1,8], index: 2, kind: input, shape index: {}]
  %s3 = inlined_call_operand.vmem [shape: f32[2,8,32], index: 3, kind: input, shape index: {}]
  %s4 = inlined_call_operand.hbm [shape: f32[2,1,32], index: 4, kind: input, shape index: {}]
  %s5 = inlined_call_operand.vmem [shape: f32[2,32,32], index: 5, kind: input, shape index: {}]
  %s6 = inlined_call_operand.hbm [shape: f32[2,1,32], index: 6, kind: input, shape index: {}]
  %s7 = inlined_call_operand.vmem [shape: f32[2,32,8], index: 7, kind: input, shape index: {}]
  %s8 = inlined_call_operand.hbm [shape: f32[2,8,32], index: 8, kind: input, shape index: {}]
  %s9 = inlined_call_operand.vmem [shape: f32[2,1,8], index: 9, kind: input, shape index: {}]
  %s10 = inlined_call_operand.hbm [shape: f32[8,128], index: 10, kind: output, shape index: {}]
  %s11 = sld [smem:[#allocation0]]
  $region66: #{tpu_custom_call.1} parent=0
    _
  %s13 = ssub.s32 1, %s11
  %s14 = scalar_select 0, %s13, %s11
  $region1: #{tpu_custom_call.1} parent=0
    #allocation2 [shape = 'u8[1024]{0}', space=vmem, size = 0x400, scoped, tag = 'input window, operand 2, single buffered']
    #allocation3 [shape = 's32[1]{0}', space=sflag, size = 0x4, scoped, tag = 'scoped memory for tpu_custom_call.1']
    #allocation4 [shape = 's32[1]{0}', space=sflag, size = 0x4, scoped, tag = 'scoped memory for tpu_custom_call.1']
    #allocation5 [shape = 'u8[1024]{0}', space=vmem, size = 0x400, scoped, tag = 'input window, operand 4, single buffered']
    #allocation6 [shape = 's32[1]{0}', space=sflag, size = 0x4, scoped, tag = 'scoped memory for tpu_custom_call.1']
    #allocation7 [shape = 'u8[1024]{0}', space=vmem, size = 0x400, scoped, tag = 'input window, operand 6, single buffered']
    #allocation8 [shape = 'u8[8192]{0}', space=vmem, size = 0x2000, scoped, tag = 'input window, operand 8, single buffered']
    #allocation9 [shape = 's32[1]{0}', space=sflag, size = 0x4, scoped, tag = 'scoped memory for tpu_custom_call.1']
    #allocation10 [shape = 'u8[4096]{0}', space=vmem, size = 0x1000, scoped, tag = 'output window, operand 0, single buffered']
    %15 = vsyncpa [#allocation3], 0
    %16 = vsyncpa [#allocation6], 0
    %17 = vsyncpa [#allocation9], 0
    %18 = vsyncpa [#allocation4], 0
    // Predicated region
    $region2: #{tpu_custom_call.1} parent=1 // pred_check
      _
    $region3: #{tpu_custom_call.1} parent=1 // pred_check_branch
      %20 = sbr.rel (0) target = $region5
    $region4: #{tpu_custom_call.1} parent=1 // pred_region
      _
    $region5: #{tpu_custom_call.1} parent=1 // pred_fallthru
      _
    // Predicated region
    $region6: #{tpu_custom_call.1} parent=1 // pred_check
      _
    $region7: #{tpu_custom_call.1} parent=1 // pred_check_branch
      %22 = sbr.rel (0) target = $region9
    $region8: #{tpu_custom_call.1} parent=1 // pred_region
      _
    $region9: #{tpu_custom_call.1} parent=1 // pred_fallthru
      _
    // Predicated region
    $region10: #{tpu_custom_call.1} parent=1 // pred_check
      _
    $region11: #{tpu_custom_call.1} parent=1 // pred_check_branch
      %24 = sbr.rel (0) target = $region13
    $region12: #{tpu_custom_call.1} parent=1 // pred_region
      %s26 = ssub.s32 32, 32
      %27 = vsyncadd [#allocation3], %s26
      %s28 = sshll.u32 [#allocation2], 4
      %s29 = int_to_ptr.vmem [resolvable:$true] %s28
      %34 = dma.hbm_to_vmem [thread:$0]  %s2, 32, %s29, [#allocation3], 16, 16, 1
    $region13: #{tpu_custom_call.1} parent=1 // pred_fallthru
      _
    // Predicated region
    $region14: #{tpu_custom_call.1} parent=1 // pred_check
      _
    $region15: #{tpu_custom_call.1} parent=1 // pred_check_branch
      %36 = sbr.rel (0) target = $region17
    $region16: #{tpu_custom_call.1} parent=1 // pred_region
      _
    $region17: #{tpu_custom_call.1} parent=1 // pred_fallthru
      _
    // Predicated region
    $region18: #{tpu_custom_call.1} parent=1 // pred_check
      _
    $region19: #{tpu_custom_call.1} parent=1 // pred_check_branch
      %38 = sbr.rel (0) target = $region21
    $region20: #{tpu_custom_call.1} parent=1 // pred_region
      %s40 = ssub.s32 32, 32
      %41 = vsyncadd [#allocation6], %s40
      %s42 = sshll.u32 [#allocation5], 4
      %s43 = int_to_ptr.vmem [resolvable:$true] %s42
      %48 = dma.hbm_to_vmem [thread:$0]  %s4, 32, %s43, [#allocation6], 16, 16, 1
    $region21: #{tpu_custom_call.1} parent=1 // pred_fallthru
      _
    // Predicated region
    $region22: #{tpu_custom_call.1} parent=1 // pred_check
      _
    $region23: #{tpu_custom_call.1} parent=1 // pred_check_branch
      %50 = sbr.rel (0) target = $region25
    $region24: #{tpu_custom_call.1} parent=1 // pred_region
      _
    $region25: #{tpu_custom_call.1} parent=1 // pred_fallthru
      _
    // Predicated region
    $region26: #{tpu_custom_call.1} parent=1 // pred_check
      _
    $region27: #{tpu_custom_call.1} parent=1 // pred_check_branch
      %52 = sbr.rel (0) target = $region29
    $region28: #{tpu_custom_call.1} parent=1 // pred_region
      %s54 = ssub.s32 32, 32
      %55 = vsyncadd [#allocation6], %s54
      %s56 = sshll.u32 [#allocation7], 4
      %s57 = int_to_ptr.vmem [resolvable:$true] %s56
      %62 = dma.hbm_to_vmem [thread:$0]  %s6, 32, %s57, [#allocation6], 16, 16, 1
    $region29: #{tpu_custom_call.1} parent=1 // pred_fallthru
      _
    // Predicated region
    $region30: #{tpu_custom_call.1} parent=1 // pred_check
      _
    $region31: #{tpu_custom_call.1} parent=1 // pred_check_branch
      %64 = sbr.rel (0) target = $region33
    $region32: #{tpu_custom_call.1} parent=1 // pred_region
      _
    $region33: #{tpu_custom_call.1} parent=1 // pred_fallthru
      _
    // Predicated region
    $region34: #{tpu_custom_call.1} parent=1 // pred_check
      _
    $region35: #{tpu_custom_call.1} parent=1 // pred_check_branch
      %66 = sbr.rel (0) target = $region37
    $region36: #{tpu_custom_call.1} parent=1 // pred_region
      %s68 = ssub.s32 256, 256
      %69 = vsyncadd [#allocation9], %s68
      %s70 = sshll.u32 [#allocation8], 4
      %s71 = int_to_ptr.vmem [resolvable:$true] %s70
      %76 = dma.hbm_to_vmem [thread:$0]  %s8, 256, %s71, [#allocation9], 128, 128, 8
    $region37: #{tpu_custom_call.1} parent=1 // pred_fallthru
      _
    // Predicated region
    $region38: #{tpu_custom_call.1} parent=1 // pred_check
      _
    $region39: #{tpu_custom_call.1} parent=1 // pred_check_branch
      %78 = sbr.rel (0) target = $region41
    $region40: #{tpu_custom_call.1} parent=1 // pred_region
      _
    $region41: #{tpu_custom_call.1} parent=1 // pred_fallthru
      _
    // Predicated region
    $region42: #{tpu_custom_call.1} parent=1 // pred_check
      _
    $region43: #{tpu_custom_call.1} parent=1 // pred_check_branch
      %80 = sbr.rel (0) target = $region45
    $region44: #{tpu_custom_call.1} parent=1 // pred_region
      %81 = dma.done [#allocation3], 32
    $region45: #{tpu_custom_call.1} parent=1 // pred_fallthru
      _
    // Predicated region
    $region46: #{tpu_custom_call.1} parent=1 // pred_check
      _
    $region47: #{tpu_custom_call.1} parent=1 // pred_check_branch
      %83 = sbr.rel (0) target = $region49
    $region48: #{tpu_custom_call.1} parent=1 // pred_region
      %84 = dma.done [#allocation6], 32
    $region49: #{tpu_custom_call.1} parent=1 // pred_fallthru
      _
    // Predicated region
    $region50: #{tpu_custom_call.1} parent=1 // pred_check
      _
    $region51: #{tpu_custom_call.1} parent=1 // pred_check_branch
      %86 = sbr.rel (0) target = $region53
    $region52: #{tpu_custom_call.1} parent=1 // pred_region
      %87 = dma.done [#allocation6], 32
    $region53: #{tpu_custom_call.1} parent=1 // pred_fallthru
      _
    // Predicated region
    $region54: #{tpu_custom_call.1} parent=1 // pred_check
      _
    $region55: #{tpu_custom_call.1} parent=1 // pred_check_branch
      %89 = sbr.rel (0) target = $region57
    $region56: #{tpu_custom_call.1} parent=1 // pred_region
      %90 = dma.done [#allocation9], 256
    $region57: #{tpu_custom_call.1} parent=1 // pred_fallthru
      _
    %v91 = vld [vmem:[%s0] sm:$0xff]
    %v92 = vld [vmem:[%s1] sm:$0x1]
    %v94 = vlaneseq
    %v95 = vshrl.u32 %v94, 7
    %v96 = vsub.s32 0, %v95
    %v97 = vrot.slane %v92, %v96
    %v99 = vmul.f32 %v91, %v97
    %v100 = vld [vmem:[#allocation2] sm:$0x1]
    %v102 = vlaneseq
    %v103 = vshrl.u32 %v102, 7
    %v104 = vsub.s32 0, %v103
    %v105 = vrot.slane %v100, %v104
    %v107 = vadd.f32 %v99, %v105
    %v108 = vld [vmem:[%s3] sm:$0xff]
    %v109 = vld [vmem:[%s5] sm:$0xff]
    %v110 = vld [vmem:[%s5 + $0x8] sm:$0xff]
    %v111 = vld [vmem:[%s5 + $0x10] sm:$0xff]
    %v112 = vld [vmem:[%s5 + $0x18] sm:$0xff]
    %v113 = vld [vmem:[%s7] sm:$0xff]
    %v114 = vld [vmem:[%s7 + $0x8] sm:$0xff]
    %v115 = vld [vmem:[%s7 + $0x10] sm:$0xff]
    %v116 = vld [vmem:[%s7 + $0x18] sm:$0xff]
    %v117 = vld [vmem:[#allocation8] sm:$0xff]
    %v118 = vld [vmem:[#allocation5] sm:$0x1]
    %v119 = vld [vmem:[#allocation7] sm:$0x1]
    %v120 = vld [vmem:[%s9] sm:$0x1]
    %v122 = vlaneseq
    %v123 = vshrl.u32 %v122, 7
    %v124 = vsub.s32 0, %v123
    %v125 = vrot.slane %v118, %v124
    %vm127 = vcmask 64512
    %v129 = vsel %vm127, %v107, 0
    %131 = vmatprep.subr.mxu0 0.0
    %132 = vmatpush1.msra.mxu0 %v108
    %133 = vmatprep.subr.mxu0 0.0
    %134 = vmatpush1.msra.mxu0 0.0
    %135 = vmatprep.subr.mxu0 0.0
    %136 = vmatpush1.msra.mxu0 0.0
    %137 = vmatprep.subr.mxu0 0.0
    %138 = vmatpush1.msra.mxu0 0.0
    %139 = vmatprep.subr.mxu0 0.0
    %140 = vmatpush1.msra.mxu0 0.0
    %141 = vmatprep.subr.mxu0 0.0
    %142 = vmatpush1.msra.mxu0 0.0
    %143 = vmatprep.subr.mxu0 0.0
    %144 = vmatpush1.msra.mxu0 0.0
    %145 = vmatprep.subr.mxu0 0.0
    %146 = vmatpush1.msra.mxu0 0.0
    %147 = vmatprep.subr.mxu0 0.0
    %148 = vmatpush1.msra.mxu0 0.0
    %149 = vmatprep.subr.mxu0 0.0
    %150 = vmatpush1.msra.mxu0 0.0
    %151 = vmatprep.subr.mxu0 0.0
    %152 = vmatpush1.msra.mxu0 0.0
    %153 = vmatprep.subr.mxu0 0.0
    %154 = vmatpush1.msra.mxu0 0.0
    %155 = vmatprep.subr.mxu0 0.0
    %156 = vmatpush1.msra.mxu0 0.0
    %157 = vmatprep.subr.mxu0 0.0
    %158 = vmatpush1.msra.mxu0 0.0
    %159 = vmatprep.subr.mxu0 0.0
    %160 = vmatpush1.msra.mxu0 0.0
    %161 = vmatprep.subr.mxu0 0.0
    %162 = vmatpush1.msra.mxu0 0.0
    %163 = vmatprep.subr.mxu0 0.0
    %164 = vmatpush1.msra.mxu0 0.0
    %165 = vmatprep.subr.mxu0 0.0
    %166 = vmatpush1.msra.mxu0 0.0
    %167 = vmatprep.subr.mxu0 0.0
    %168 = vmatpush1.msra.mxu0 0.0
    %169 = vmatprep.subr.mxu0 0.0
    %170 = vmatpush1.msra.mxu0 0.0
    %171 = vmatprep.subr.mxu0 0.0
    %172 = vmatpush1.msra.mxu0 0.0
    %173 = vmatprep.subr.mxu0 0.0
    %174 = vmatpush1.msra.mxu0 0.0
    %175 = vmatprep.subr.mxu0 0.0
    %176 = vmatpush1.msra.mxu0 0.0
    %177 = vmatprep.subr.mxu0 0.0
    %178 = vmatpush1.msra.mxu0 0.0
    %179 = vmatprep.subr.mxu0 0.0
    %180 = vmatpush1.msra.mxu0 0.0
    %181 = vmatprep.subr.mxu0 0.0
    %182 = vmatpush1.msra.mxu0 0.0
    %183 = vmatprep.subr.mxu0 0.0
    %184 = vmatpush1.msra.mxu0 0.0
    %185 = vmatprep.subr.mxu0 0.0
    %186 = vmatpush1.msra.mxu0 0.0
    %187 = vmatprep.subr.mxu0 0.0
    %188 = vmatpush1.msra.mxu0 0.0
    %189 = vmatprep.subr.mxu0 0.0
    %190 = vmatpush1.msra.mxu0 0.0
    %191 = vmatprep.subr.mxu0 0.0
    %192 = vmatpush1.msra.mxu0 0.0
    %193 = vmatprep.subr.mxu0 0.0
    %194 = vmatpush1.msra.mxu0 0.0
    %195 = vmatprep.mubr.f32.mxu0 0.0
    %196 = vmatmul.mubr.f32.gmra.mrb[0].mxu0 %v129
    %v197 = vpop.f32.mrb[0].mxu0
    %v198 = vadd.f32 %v125, %v197
    %v199 = vpop.f32.mrb[0].mxu0
    %200 = vdwg.mxu0
    %v201 = vsub.f32 0.0, %v198
    %v202 = vmul.f32 %v201, 1.442695
    %v203 = vpow.pop %v202
    %v204 = vadd.f32 %v203, 1.0
    %v205 = vrcp.pop %v204
    %v206 = vmul.f32 %v198, %v205
    %v207 = vmul.f32 %v206, 0.90909094
    %v208 = vsub.f32 1.0, %v205
    %v209 = vmul.f32 %v206, %v208
    %v210 = vadd.f32 %v205, %v209
    %v211 = vmul.f32 %v210, 0.90909094
    %v213 = vlaneseq
    %v214 = vshrl.u32 %v213, 7
    %v215 = vsub.s32 0, %v214
    %v216 = vrot.slane %v119, %v215
    %vm218 = vcmask 261120
    %v220 = vsel %vm218, %v207, 0
    %222 = vmatprep.subr.mxu0 0.0
    %223 = vmatpush1.msra.mxu0 %v109
    %224 = vmatprep.subr.mxu0 0.0
    %225 = vmatpush1.msra.mxu0 %v110
    %226 = vmatprep.subr.mxu0 0.0
    %227 = vmatpush1.msra.mxu0 %v111
    %228 = vmatprep.subr.mxu0 0.0
    %229 = vmatpush1.msra.mxu0 %v112
    %230 = vmatprep.subr.mxu0 0.0
    %231 = vmatpush1.msra.mxu0 0.0
    %232 = vmatprep.subr.mxu0 0.0
    %233 = vmatpush1.msra.mxu0 0.0
    %234 = vmatprep.subr.mxu0 0.0
    %235 = vmatpush1.msra.mxu0 0.0
    %236 = vmatprep.subr.mxu0 0.0
    %237 = vmatpush1.msra.mxu0 0.0
    %238 = vmatprep.subr.mxu0 0.0
    %239 = vmatpush1.msra.mxu0 0.0
    %240 = vmatprep.subr.mxu0 0.0
    %241 = vmatpush1.msra.mxu0 0.0
    %242 = vmatprep.subr.mxu0 0.0
    %243 = vmatpush1.msra.mxu0 0.0
    %244 = vmatprep.subr.mxu0 0.0
    %245 = vmatpush1.msra.mxu0 0.0
    %246 = vmatprep.subr.mxu0 0.0
    %247 = vmatpush1.msra.mxu0 0.0
    %248 = vmatprep.subr.mxu0 0.0
    %249 = vmatpush1.msra.mxu0 0.0
    %250 = vmatprep.subr.mxu0 0.0
    %251 = vmatpush1.msra.mxu0 0.0
    %252 = vmatprep.subr.mxu0 0.0
    %253 = vmatpush1.msra.mxu0 0.0
    %254 = vmatprep.subr.mxu0 0.0
    %255 = vmatpush1.msra.mxu0 0.0
    %256 = vmatprep.subr.mxu0 0.0
    %257 = vmatpush1.msra.mxu0 0.0
    %258 = vmatprep.subr.mxu0 0.0
    %259 = vmatpush1.msra.mxu0 0.0
    %260 = vmatprep.subr.mxu0 0.0
    %261 = vmatpush1.msra.mxu0 0.0
    %262 = vmatprep.subr.mxu0 0.0
    %263 = vmatpush1.msra.mxu0 0.0
    %264 = vmatprep.subr.mxu0 0.0
    %265 = vmatpush1.msra.mxu0 0.0
    %266 = vmatprep.subr.mxu0 0.0
    %267 = vmatpush1.msra.mxu0 0.0
    %268 = vmatprep.subr.mxu0 0.0
    %269 = vmatpush1.msra.mxu0 0.0
    %270 = vmatprep.subr.mxu0 0.0
    %271 = vmatpush1.msra.mxu0 0.0
    %272 = vmatprep.subr.mxu0 0.0
    %273 = vmatpush1.msra.mxu0 0.0
    %274 = vmatprep.subr.mxu0 0.0
    %275 = vmatpush1.msra.mxu0 0.0
    %276 = vmatprep.subr.mxu0 0.0
    %277 = vmatpush1.msra.mxu0 0.0
    %278 = vmatprep.subr.mxu0 0.0
    %279 = vmatpush1.msra.mxu0 0.0
    %280 = vmatprep.subr.mxu0 0.0
    %281 = vmatpush1.msra.mxu0 0.0
    %282 = vmatprep.subr.mxu0 0.0
    %283 = vmatpush1.msra.mxu0 0.0
    %284 = vmatprep.subr.mxu0 0.0
    %285 = vmatpush1.msra.mxu0 0.0
    %286 = vmatprep.mubr.f32.mxu0 0.0
    %287 = vmatmul.mubr.f32.gmra.mrb[0].mxu0 %v220
    %v288 = vpop.f32.mrb[0].mxu0
    %v289 = vadd.f32 %v216, %v288
    %v290 = vpop.f32.mrb[0].mxu0
    %291 = vdwg.mxu0
    %v292 = vsub.f32 0.0, %v289
    %v293 = vmul.f32 %v292, 1.442695
    %v294 = vpow.pop %v293
    %v295 = vadd.f32 %v294, 1.0
    %v296 = vrcp.pop %v295
    %v297 = vmul.f32 %v289, %v296
    %v298 = vmul.f32 %v297, 0.90909094
    %v299 = vsub.f32 1.0, %v296
    %v300 = vmul.f32 %v297, %v299
    %v301 = vadd.f32 %v296, %v300
    %v302 = vmul.f32 %v301, 0.90909094
    %v304 = vlaneseq
    %v305 = vshrl.u32 %v304, 7
    %v306 = vsub.s32 0, %v305
    %v307 = vrot.slane %v120, %v306
    %v310 = vsel %vm218, %v298, 0
    %312 = vmatprep.subr.mxu0 0.0
    %313 = vmatpush1.msra.mxu0 %v113
    %314 = vmatprep.subr.mxu0 0.0
    %315 = vmatpush1.msra.mxu0 %v114
    %316 = vmatprep.subr.mxu0 0.0
    %317 = vmatpush1.msra.mxu0 %v115
    %318 = vmatprep.subr.mxu0 0.0
    %319 = vmatpush1.msra.mxu0 %v116
    %320 = vmatprep.subr.mxu0 0.0
    %321 = vmatpush1.msra.mxu0 0.0
    %322 = vmatprep.subr.mxu0 0.0
    %323 = vmatpush1.msra.mxu0 0.0
    %324 = vmatprep.subr.mxu0 0.0
    %325 = vmatpush1.msra.mxu0 0.0
    %326 = vmatprep.subr.mxu0 0.0
    %327 = vmatpush1.msra.mxu0 0.0
    %328 = vmatprep.subr.mxu0 0.0
    %329 = vmatpush1.msra.mxu0 0.0
    %330 = vmatprep.subr.mxu0 0.0
    %331 = vmatpush1.msra.mxu0 0.0
    %332 = vmatprep.subr.mxu0 0.0
    %333 = vmatpush1.msra.mxu0 0.0
    %334 = vmatprep.subr.mxu0 0.0
    %335 = vmatpush1.msra.mxu0 0.0
    %336 = vmatprep.subr.mxu0 0.0
    %337 = vmatpush1.msra.mxu0 0.0
    %338 = vmatprep.subr.mxu0 0.0
    %339 = vmatpush1.msra.mxu0 0.0
    %340 = vmatprep.subr.mxu0 0.0
    %341 = vmatpush1.msra.mxu0 0.0
    %342 = vmatprep.subr.mxu0 0.0
    %343 = vmatpush1.msra.mxu0 0.0
    %344 = vmatprep.subr.mxu0 0.0
    %345 = vmatpush1.msra.mxu0 0.0
    %346 = vmatprep.subr.mxu0 0.0
    %347 = vmatpush1.msra.mxu0 0.0
    %348 = vmatprep.subr.mxu0 0.0
    %349 = vmatpush1.msra.mxu0 0.0
    %350 = vmatprep.subr.mxu0 0.0
    %351 = vmatpush1.msra.mxu0 0.0
    %352 = vmatprep.subr.mxu0 0.0
    %353 = vmatpush1.msra.mxu0 0.0
    %354 = vmatprep.subr.mxu0 0.0
    %355 = vmatpush1.msra.mxu0 0.0
    %356 = vmatprep.subr.mxu0 0.0
    %357 = vmatpush1.msra.mxu0 0.0
    %358 = vmatprep.subr.mxu0 0.0
    %359 = vmatpush1.msra.mxu0 0.0
    %360 = vmatprep.subr.mxu0 0.0
    %361 = vmatpush1.msra.mxu0 0.0
    %362 = vmatprep.subr.mxu0 0.0
    %363 = vmatpush1.msra.mxu0 0.0
    %364 = vmatprep.subr.mxu0 0.0
    %365 = vmatpush1.msra.mxu0 0.0
    %366 = vmatprep.subr.mxu0 0.0
    %367 = vmatpush1.msra.mxu0 0.0
    %368 = vmatprep.subr.mxu0 0.0
    %369 = vmatpush1.msra.mxu0 0.0
    %370 = vmatprep.subr.mxu0 0.0
    %371 = vmatpush1.msra.mxu0 0.0
    %372 = vmatprep.subr.mxu0 0.0
    %373 = vmatpush1.msra.mxu0 0.0
    %374 = vmatprep.subr.mxu0 0.0
    %375 = vmatpush1.msra.mxu0 0.0
    %376 = vmatprep.mubr.f32.mxu0 0.0
    %377 = vmatmul.mubr.f32.gmra.mrb[0].mxu0 %v310
    %v378 = vpop.f32.mrb[0].mxu0
    %v379 = vadd.f32 %v307, %v378
    %v380 = vpop.f32.mrb[0].mxu0
    %381 = vdwg.mxu0
    %v383 = vcombine.high %v211, %v211
    %v385 = vunpack.c.l.s4 1966171168
    %v386 = vunpack.c.0.s8 %v385
    %v387 = vlaneseq
    %v388 = vshrl.u32 %v387, 7
    %v389 = vsub.s32 %v386, %v388
    %v390 = vrot.slane %v211, %v389
    %v392 = vunpack.c.l.s4 1966171168
    %v393 = vunpack.c.0.s8 %v392
    %v394 = vlaneseq
    %v395 = vshrl.u32 %v394, 7
    %v396 = vsub.s32 %v393, %v395
    %v397 = vrot.slane %v383, %v396
    %v398 = vcombine.high %v390, %v390
    %v399 = vcombine.high %v397, %v397
    %v401 = vunpack.c.l.s4 1966171168
    %v402 = vunpack.c.0.s8 %v401
    %v403 = vlaneseq
    %v404 = vshrl.u32 %v403, 7
    %v405 = vsub.s32 %v402, %v404
    %v406 = vrot.slane %v390, %v405
    %v408 = vunpack.c.l.s4 1966171168
    %v409 = vunpack.c.0.s8 %v408
    %v410 = vlaneseq
    %v411 = vshrl.u32 %v410, 7
    %v412 = vsub.s32 %v409, %v411
    %v413 = vrot.slane %v397, %v412
    %v415 = vunpack.c.l.s4 1966171168
    %v416 = vunpack.c.0.s8 %v415
    %v417 = vlaneseq
    %v418 = vshrl.u32 %v417, 7
    %v419 = vsub.s32 %v416, %v418
    %v420 = vrot.slane %v398, %v419
    %v422 = vunpack.c.l.s4 1966171168
    %v423 = vunpack.c.0.s8 %v422
    %v424 = vlaneseq
    %v425 = vshrl.u32 %v424, 7
    %v426 = vsub.s32 %v423, %v425
    %v427 = vrot.slane %v399, %v426
    %v428 = vcombine.high %v406, %v406
    %v429 = vcombine.high %v413, %v413
    %v430 = vcombine.high %v420, %v420
    %v431 = vcombine.high %v427, %v427
    %v432 = vlaneseq
    %v433 = vshrl.u32 %v432, 7
    %v434 = vsub.s32 0, %v433
    %v435 = vrot.slane %v406, %v434
    %v436 = vlaneseq
    %v437 = vshrl.u32 %v436, 7
    %v438 = vsub.s32 0, %v437
    %v439 = vrot.slane %v420, %v438
    %v440 = vlaneseq
    %v441 = vshrl.u32 %v440, 7
    %v442 = vsub.s32 0, %v441
    %v443 = vrot.slane %v428, %v442
    %v444 = vlaneseq
    %v445 = vshrl.u32 %v444, 7
    %v446 = vsub.s32 0, %v445
    %v447 = vrot.slane %v430, %v446
    %v448 = vlaneseq
    %v449 = vshrl.u32 %v448, 7
    %v450 = vsub.s32 0, %v449
    %v451 = vrot.slane %v413, %v450
    %v452 = vlaneseq
    %v453 = vshrl.u32 %v452, 7
    %v454 = vsub.s32 0, %v453
    %v455 = vrot.slane %v427, %v454
    %v456 = vlaneseq
    %v457 = vshrl.u32 %v456, 7
    %v458 = vsub.s32 0, %v457
    %v459 = vrot.slane %v429, %v458
    %v460 = vlaneseq
    %v461 = vshrl.u32 %v460, 7
    %v462 = vsub.s32 0, %v461
    %v463 = vrot.slane %v431, %v462
    %v473 = vcombine.high %v302, %v302
    %v475 = vunpack.c.l.s4 1966171168
    %v476 = vunpack.c.0.s8 %v475
    %v477 = vlaneseq
    %v478 = vshrl.u32 %v477, 7
    %v479 = vsub.s32 %v476, %v478
    %v480 = vrot.slane %v302, %v479
    %v482 = vunpack.c.l.s4 1966171168
    %v483 = vunpack.c.0.s8 %v482
    %v484 = vlaneseq
    %v485 = vshrl.u32 %v484, 7
    %v486 = vsub.s32 %v483, %v485
    %v487 = vrot.slane %v473, %v486
    %v488 = vcombine.high %v480, %v480
    %v489 = vcombine.high %v487, %v487
    %v491 = vunpack.c.l.s4 1966171168
    %v492 = vunpack.c.0.s8 %v491
    %v493 = vlaneseq
    %v494 = vshrl.u32 %v493, 7
    %v495 = vsub.s32 %v492, %v494
    %v496 = vrot.slane %v480, %v495
    %v498 = vunpack.c.l.s4 1966171168
    %v499 = vunpack.c.0.s8 %v498
    %v500 = vlaneseq
    %v501 = vshrl.u32 %v500, 7
    %v502 = vsub.s32 %v499, %v501
    %v503 = vrot.slane %v487, %v502
    %v505 = vunpack.c.l.s4 1966171168
    %v506 = vunpack.c.0.s8 %v505
    %v507 = vlaneseq
    %v508 = vshrl.u32 %v507, 7
    %v509 = vsub.s32 %v506, %v508
    %v510 = vrot.slane %v488, %v509
    %v512 = vunpack.c.l.s4 1966171168
    %v513 = vunpack.c.0.s8 %v512
    %v514 = vlaneseq
    %v515 = vshrl.u32 %v514, 7
    %v516 = vsub.s32 %v513, %v515
    %v517 = vrot.slane %v489, %v516
    %v518 = vcombine.high %v496, %v496
    %v519 = vcombine.high %v503, %v503
    %v520 = vcombine.high %v510, %v510
    %v521 = vcombine.high %v517, %v517
    %v522 = vlaneseq
    %v523 = vshrl.u32 %v522, 7
    %v524 = vsub.s32 0, %v523
    %v525 = vrot.slane %v496, %v524
    %v526 = vlaneseq
    %v527 = vshrl.u32 %v526, 7
    %v528 = vsub.s32 0, %v527
    %v529 = vrot.slane %v510, %v528
    %v530 = vlaneseq
    %v531 = vshrl.u32 %v530, 7
    %v532 = vsub.s32 0, %v531
    %v533 = vrot.slane %v518, %v532
    %v534 = vlaneseq
    %v535 = vshrl.u32 %v534, 7
    %v536 = vsub.s32 0, %v535
    %v537 = vrot.slane %v520, %v536
    %v538 = vlaneseq
    %v539 = vshrl.u32 %v538, 7
    %v540 = vsub.s32 0, %v539
    %v541 = vrot.slane %v503, %v540
    %v542 = vlaneseq
    %v543 = vshrl.u32 %v542, 7
    %v544 = vsub.s32 0, %v543
    %v545 = vrot.slane %v517, %v544
    %v546 = vlaneseq
    %v547 = vshrl.u32 %v546, 7
    %v548 = vsub.s32 0, %v547
    %v549 = vrot.slane %v519, %v548
    %v550 = vlaneseq
    %v551 = vshrl.u32 %v550, 7
    %v552 = vsub.s32 0, %v551
    %v553 = vrot.slane %v521, %v552
    %v562 = vmul.f32 %v108, %v435
    %v563 = vmul.f32 %v108, %v439
    %v564 = vmul.f32 %v108, %v443
    %v565 = vmul.f32 %v108, %v447
    %v566 = vmul.f32 %v108, %v451
    %v567 = vmul.f32 %v108, %v455
    %v568 = vmul.f32 %v108, %v459
    %v569 = vmul.f32 %v108, %v463
    %v571 = vsel %vm218, %v562, 0
    %v574 = vsel %vm218, %v563, 0
    %v577 = vsel %vm218, %v564, 0
    %v580 = vsel %vm218, %v565, 0
    %v583 = vsel %vm218, %v566, 0
    %v586 = vsel %vm218, %v567, 0
    %v589 = vsel %vm218, %v568, 0
    %v592 = vsel %vm218, %v569, 0
    %594 = vmatprep.subr.mxu0 0.0
    %595 = vmatpush1.msra.mxu0 %v109
    %596 = vmatprep.subr.mxu0 0.0
    %597 = vmatpush1.msra.mxu0 %v110
    %598 = vmatprep.subr.mxu0 0.0
    %599 = vmatpush1.msra.mxu0 %v111
    %600 = vmatprep.subr.mxu0 0.0
    %601 = vmatpush1.msra.mxu0 %v112
    %602 = vmatprep.subr.mxu0 0.0
    %603 = vmatpush1.msra.mxu0 0.0
    %604 = vmatprep.subr.mxu0 0.0
    %605 = vmatpush1.msra.mxu0 0.0
    %606 = vmatprep.subr.mxu0 0.0
    %607 = vmatpush1.msra.mxu0 0.0
    %608 = vmatprep.subr.mxu0 0.0
    %609 = vmatpush1.msra.mxu0 0.0
    %610 = vmatprep.subr.mxu0 0.0
    %611 = vmatpush1.msra.mxu0 0.0
    %612 = vmatprep.subr.mxu0 0.0
    %613 = vmatpush1.msra.mxu0 0.0
    %614 = vmatprep.subr.mxu0 0.0
    %615 = vmatpush1.msra.mxu0 0.0
    %616 = vmatprep.subr.mxu0 0.0
    %617 = vmatpush1.msra.mxu0 0.0
    %618 = vmatprep.subr.mxu0 0.0
    %619 = vmatpush1.msra.mxu0 0.0
    %620 = vmatprep.subr.mxu0 0.0
    %621 = vmatpush1.msra.mxu0 0.0
    %622 = vmatprep.subr.mxu0 0.0
    %623 = vmatpush1.msra.mxu0 0.0
    %624 = vmatprep.subr.mxu0 0.0
    %625 = vmatpush1.msra.mxu0 0.0
    %626 = vmatprep.subr.mxu0 0.0
    %627 = vmatpush1.msra.mxu0 0.0
    %628 = vmatprep.subr.mxu0 0.0
    %629 = vmatpush1.msra.mxu0 0.0
    %630 = vmatprep.subr.mxu0 0.0
    %631 = vmatpush1.msra.mxu0 0.0
    %632 = vmatprep.subr.mxu0 0.0
    %633 = vmatpush1.msra.mxu0 0.0
    %634 = vmatprep.subr.mxu0 0.0
    %635 = vmatpush1.msra.mxu0 0.0
    %636 = vmatprep.subr.mxu0 0.0
    %637 = vmatpush1.msra.mxu0 0.0
    %638 = vmatprep.subr.mxu0 0.0
    %639 = vmatpush1.msra.mxu0 0.0
    %640 = vmatprep.subr.mxu0 0.0
    %641 = vmatpush1.msra.mxu0 0.0
    %642 = vmatprep.subr.mxu0 0.0
    %643 = vmatpush1.msra.mxu0 0.0
    %644 = vmatprep.subr.mxu0 0.0
    %645 = vmatpush1.msra.mxu0 0.0
    %646 = vmatprep.subr.mxu0 0.0
    %647 = vmatpush1.msra.mxu0 0.0
    %648 = vmatprep.subr.mxu0 0.0
    %649 = vmatpush1.msra.mxu0 0.0
    %650 = vmatprep.subr.mxu0 0.0
    %651 = vmatpush1.msra.mxu0 0.0
    %652 = vmatprep.subr.mxu0 0.0
    %653 = vmatpush1.msra.mxu0 0.0
    %654 = vmatprep.subr.mxu0 0.0
    %655 = vmatpush1.msra.mxu0 0.0
    %656 = vmatprep.subr.mxu0 0.0
    %657 = vmatpush1.msra.mxu0 0.0
    %658 = vmatprep.mubr.f32.mxu0 0.0
    %659 = vmatmul.mubr.f32.gmra.mrb[0].mxu0 %v571
    %v660 = vpop.f32.mrb[0].mxu0
    %v661 = vadd.f32 0.0, %v660
    %v662 = vpop.f32.mrb[0].mxu0
    %663 = vmatprep.mubr.f32.mxu0 0.0
    %664 = vmatmul.mubr.f32.gmra.mrb[0].mxu0 %v574
    %v665 = vpop.f32.mrb[0].mxu0
    %v666 = vadd.f32 0.0, %v665
    %v667 = vpop.f32.mrb[0].mxu0
    %668 = vmatprep.mubr.f32.mxu0 0.0
    %669 = vmatmul.mubr.f32.gmra.mrb[0].mxu0 %v577
    %v670 = vpop.f32.mrb[0].mxu0
    %v671 = vadd.f32 0.0, %v670
    %v672 = vpop.f32.mrb[0].mxu0
    %673 = vmatprep.mubr.f32.mxu0 0.0
    %674 = vmatmul.mubr.f32.gmra.mrb[0].mxu0 %v580
    %v675 = vpop.f32.mrb[0].mxu0
    %v676 = vadd.f32 0.0, %v675
    %v677 = vpop.f32.mrb[0].mxu0
    %678 = vmatprep.mubr.f32.mxu0 0.0
    %679 = vmatmul.mubr.f32.gmra.mrb[0].mxu0 %v583
    %v680 = vpop.f32.mrb[0].mxu0
    %v681 = vadd.f32 0.0, %v680
    %v682 = vpop.f32.mrb[0].mxu0
    %683 = vmatprep.mubr.f32.mxu0 0.0
    %684 = vmatmul.mubr.f32.gmra.mrb[0].mxu0 %v586
    %v685 = vpop.f32.mrb[0].mxu0
    %v686 = vadd.f32 0.0, %v685
    %v687 = vpop.f32.mrb[0].mxu0
    %688 = vmatprep.mubr.f32.mxu0 0.0
    %689 = vmatmul.mubr.f32.gmra.mrb[0].mxu0 %v589
    %v690 = vpop.f32.mrb[0].mxu0
    %v691 = vadd.f32 0.0, %v690
    %v692 = vpop.f32.mrb[0].mxu0
    %693 = vmatprep.mubr.f32.mxu0 0.0
    %694 = vmatmul.mubr.f32.gmra.mrb[0].mxu0 %v592
    %v695 = vpop.f32.mrb[0].mxu0
    %v696 = vadd.f32 0.0, %v695
    %v697 = vpop.f32.mrb[0].mxu0
    %698 = vdwg.mxu0
    %v699 = vmul.f32 %v661, %v525
    %v700 = vmul.f32 %v666, %v529
    %v701 = vmul.f32 %v671, %v533
    %v702 = vmul.f32 %v676, %v537
    %v703 = vmul.f32 %v681, %v541
    %v704 = vmul.f32 %v686, %v545
    %v705 = vmul.f32 %v691, %v549
    %v706 = vmul.f32 %v696, %v553
    %v708 = vsel %vm218, %v699, 0
    %v711 = vsel %vm218, %v700, 0
    %v714 = vsel %vm218, %v701, 0
    %v717 = vsel %vm218, %v702, 0
    %v720 = vsel %vm218, %v703, 0
    %v723 = vsel %vm218, %v704, 0
    %v726 = vsel %vm218, %v705, 0
    %v729 = vsel %vm218, %v706, 0
    %731 = vmatprep.subr.mxu0 0.0
    %732 = vmatpush1.msra.mxu0 %v113
    %733 = vmatprep.subr.mxu0 0.0
    %734 = vmatpush1.msra.mxu0 %v114
    %735 = vmatprep.subr.mxu0 0.0
    %736 = vmatpush1.msra.mxu0 %v115
    %737 = vmatprep.subr.mxu0 0.0
    %738 = vmatpush1.msra.mxu0 %v116
    %739 = vmatprep.subr.mxu0 0.0
    %740 = vmatpush1.msra.mxu0 0.0
    %741 = vmatprep.subr.mxu0 0.0
    %742 = vmatpush1.msra.mxu0 0.0
    %743 = vmatprep.subr.mxu0 0.0
    %744 = vmatpush1.msra.mxu0 0.0
    %745 = vmatprep.subr.mxu0 0.0
    %746 = vmatpush1.msra.mxu0 0.0
    %747 = vmatprep.subr.mxu0 0.0
    %748 = vmatpush1.msra.mxu0 0.0
    %749 = vmatprep.subr.mxu0 0.0
    %750 = vmatpush1.msra.mxu0 0.0
    %751 = vmatprep.subr.mxu0 0.0
    %752 = vmatpush1.msra.mxu0 0.0
    %753 = vmatprep.subr.mxu0 0.0
    %754 = vmatpush1.msra.mxu0 0.0
    %755 = vmatprep.subr.mxu0 0.0
    %756 = vmatpush1.msra.mxu0 0.0
    %757 = vmatprep.subr.mxu0 0.0
    %758 = vmatpush1.msra.mxu0 0.0
    %759 = vmatprep.subr.mxu0 0.0
    %760 = vmatpush1.msra.mxu0 0.0
    %761 = vmatprep.subr.mxu0 0.0
    %762 = vmatpush1.msra.mxu0 0.0
    %763 = vmatprep.subr.mxu0 0.0
    %764 = vmatpush1.msra.mxu0 0.0
    %765 = vmatprep.subr.mxu0 0.0
    %766 = vmatpush1.msra.mxu0 0.0
    %767 = vmatprep.subr.mxu0 0.0
    %768 = vmatpush1.msra.mxu0 0.0
    %769 = vmatprep.subr.mxu0 0.0
    %770 = vmatpush1.msra.mxu0 0.0
    %771 = vmatprep.subr.mxu0 0.0
    %772 = vmatpush1.msra.mxu0 0.0
    %773 = vmatprep.subr.mxu0 0.0
    %774 = vmatpush1.msra.mxu0 0.0
    %775 = vmatprep.subr.mxu0 0.0
    %776 = vmatpush1.msra.mxu0 0.0
    %777 = vmatprep.subr.mxu0 0.0
    %778 = vmatpush1.msra.mxu0 0.0
    %779 = vmatprep.subr.mxu0 0.0
    %780 = vmatpush1.msra.mxu0 0.0
    %781 = vmatprep.subr.mxu0 0.0
    %782 = vmatpush1.msra.mxu0 0.0
    %783 = vmatprep.subr.mxu0 0.0
    %784 = vmatpush1.msra.mxu0 0.0
    %785 = vmatprep.subr.mxu0 0.0
    %786 = vmatpush1.msra.mxu0 0.0
    %787 = vmatprep.subr.mxu0 0.0
    %788 = vmatpush1.msra.mxu0 0.0
    %789 = vmatprep.subr.mxu0 0.0
    %790 = vmatpush1.msra.mxu0 0.0
    %791 = vmatprep.subr.mxu0 0.0
    %792 = vmatpush1.msra.mxu0 0.0
    %793 = vmatprep.subr.mxu0 0.0
    %794 = vmatpush1.msra.mxu0 0.0
    %795 = vmatprep.mubr.f32.mxu0 0.0
    %796 = vmatmul.mubr.f32.gmra.mrb[0].mxu0 %v708
    %v797 = vpop.f32.mrb[0].mxu0
    %v798 = vadd.f32 0.0, %v797
    %v799 = vpop.f32.mrb[0].mxu0
    %800 = vmatprep.mubr.f32.mxu0 0.0
    %801 = vmatmul.mubr.f32.gmra.mrb[0].mxu0 %v711
    %v802 = vpop.f32.mrb[0].mxu0
    %v803 = vadd.f32 0.0, %v802
    %v804 = vpop.f32.mrb[0].mxu0
    %805 = vmatprep.mubr.f32.mxu0 0.0
    %806 = vmatmul.mubr.f32.gmra.mrb[0].mxu0 %v714
    %v807 = vpop.f32.mrb[0].mxu0
    %v808 = vadd.f32 0.0, %v807
    %v809 = vpop.f32.mrb[0].mxu0
    %810 = vmatprep.mubr.f32.mxu0 0.0
    %811 = vmatmul.mubr.f32.gmra.mrb[0].mxu0 %v717
    %v812 = vpop.f32.mrb[0].mxu0
    %v813 = vadd.f32 0.0, %v812
    %v814 = vpop.f32.mrb[0].mxu0
    %815 = vmatprep.mubr.f32.mxu0 0.0
    %816 = vmatmul.mubr.f32.gmra.mrb[0].mxu0 %v720
    %v817 = vpop.f32.mrb[0].mxu0
    %v818 = vadd.f32 0.0, %v817
    %v819 = vpop.f32.mrb[0].mxu0
    %820 = vmatprep.mubr.f32.mxu0 0.0
    %821 = vmatmul.mubr.f32.gmra.mrb[0].mxu0 %v723
    %v822 = vpop.f32.mrb[0].mxu0
    %v823 = vadd.f32 0.0, %v822
    %v824 = vpop.f32.mrb[0].mxu0
    %825 = vmatprep.mubr.f32.mxu0 0.0
    %826 = vmatmul.mubr.f32.gmra.mrb[0].mxu0 %v726
    %v827 = vpop.f32.mrb[0].mxu0
    %v828 = vadd.f32 0.0, %v827
    %v829 = vpop.f32.mrb[0].mxu0
    %830 = vmatprep.mubr.f32.mxu0 0.0
    %831 = vmatmul.mubr.f32.gmra.mrb[0].mxu0 %v729
    %v832 = vpop.f32.mrb[0].mxu0
    %v833 = vadd.f32 0.0, %v832
    %v834 = vpop.f32.mrb[0].mxu0
    %835 = vdwg.mxu0
    %v836 = vmul.f32 %v699, %v117
    %v837 = vmul.f32 %v700, %v117
    %v838 = vmul.f32 %v701, %v117
    %v839 = vmul.f32 %v702, %v117
    %v840 = vmul.f32 %v703, %v117
    %v841 = vmul.f32 %v704, %v117
    %v842 = vmul.f32 %v705, %v117
    %v843 = vmul.f32 %v706, %v117
    %v844 = vsel %vm218, %v836, 0.0
    %845 = vadd.xlane.f32.xlu0 %v844
    %v846 = vpop.xlane.xlu0 %845
    %v847 = vsel %vm218, %v837, 0.0
    %848 = vadd.xlane.f32.xlu0 %v847
    %v849 = vpop.xlane.xlu0 %848
    %v850 = vsel %vm218, %v838, 0.0
    %851 = vadd.xlane.f32.xlu0 %v850
    %v852 = vpop.xlane.xlu0 %851
    %v853 = vsel %vm218, %v839, 0.0
    %854 = vadd.xlane.f32.xlu0 %v853
    %v855 = vpop.xlane.xlu0 %854
    %v856 = vsel %vm218, %v840, 0.0
    %857 = vadd.xlane.f32.xlu0 %v856
    %v858 = vpop.xlane.xlu0 %857
    %v859 = vsel %vm218, %v841, 0.0
    %860 = vadd.xlane.f32.xlu0 %v859
    %v861 = vpop.xlane.xlu0 %860
    %v862 = vsel %vm218, %v842, 0.0
    %863 = vadd.xlane.f32.xlu0 %v862
    %v864 = vpop.xlane.xlu0 %863
    %v865 = vsel %vm218, %v843, 0.0
    %866 = vadd.xlane.f32.xlu0 %v865
    %v867 = vpop.xlane.xlu0 %866
    %v876 = vlaneseq
    %v877 = vand.u32 %v876, 127
    %v878 = vlaneseq
    %v879 = vshrl.u32 %v878, 7
    %v880 = vsub.s32 %v877, %v879
    %v881 = vrot.slane %v846, %v880
    %v882 = vlaneseq
    %v883 = vshrl.u32 %v882, 7
    %v884 = vsub.s32 %v877, %v883
    %v885 = vrot.slane %v849, %v884
    %v886 = vlaneseq
    %v887 = vshrl.u32 %v886, 7
    %v888 = vsub.s32 %v877, %v887
    %v889 = vrot.slane %v852, %v888
    %v890 = vlaneseq
    %v891 = vshrl.u32 %v890, 7
    %v892 = vsub.s32 %v877, %v891
    %v893 = vrot.slane %v855, %v892
    %v894 = vlaneseq
    %v895 = vshrl.u32 %v894, 7
    %v896 = vsub.s32 %v877, %v895
    %v897 = vrot.slane %v858, %v896
    %v898 = vlaneseq
    %v899 = vshrl.u32 %v898, 7
    %v900 = vsub.s32 %v877, %v899
    %v901 = vrot.slane %v861, %v900
    %v902 = vlaneseq
    %v903 = vshrl.u32 %v902, 7
    %v904 = vsub.s32 %v877, %v903
    %v905 = vrot.slane %v864, %v904
    %v906 = vlaneseq
    %v907 = vshrl.u32 %v906, 7
    %v908 = vsub.s32 %v877, %v907
    %v909 = vrot.slane %v867, %v908
    %vm910 = vcmask 1041409
    %v911 = vsel %vm910, %v885, %v881
    %vm912 = vcmask 1042434
    %v913 = vsel %vm912, %v889, %v911
    %vm914 = vcmask 1043459
    %v915 = vsel %vm914, %v893, %v913
    %vm916 = vcmask 1044484
    %v917 = vsel %vm916, %v897, %v915
    %vm918 = vcmask 1045509
    %v919 = vsel %vm918, %v901, %v917
    %vm920 = vcmask 1046534
    %v921 = vsel %vm920, %v905, %v919
    %vm922 = vcmask 1047559
    %v923 = vsel %vm922, %v909, %v921
    %v925 = vsel %vm127, %v923, 0.0
    %926 = vadd.xlane.f32.xlu0 %v925
    %v927 = vpop.xlane.xlu0 %926
    %v929 = vsel %vm127, %v798, 0
    %931 = vmatprep.subr.mxu0 0.0
    %932 = vmatpush1.msra.mxu0 %v798
    %933 = vmatprep.subr.mxu0 0.0
    %934 = vmatpush1.msra.mxu0 0.0
    %935 = vmatprep.subr.mxu0 0.0
    %936 = vmatpush1.msra.mxu0 0.0
    %937 = vmatprep.subr.mxu0 0.0
    %938 = vmatpush1.msra.mxu0 0.0
    %939 = vmatprep.subr.mxu0 0.0
    %940 = vmatpush1.msra.mxu0 0.0
    %941 = vmatprep.subr.mxu0 0.0
    %942 = vmatpush1.msra.mxu0 0.0
    %943 = vmatprep.subr.mxu0 0.0
    %944 = vmatpush1.msra.mxu0 0.0
    %945 = vmatprep.subr.mxu0 0.0
    %946 = vmatpush1.msra.mxu0 0.0
    %947 = vmatprep.subr.mxu0 0.0
    %948 = vmatpush1.msra.mxu0 0.0
    %949 = vmatprep.subr.mxu0 0.0
    %950 = vmatpush1.msra.mxu0 0.0
    %951 = vmatprep.subr.mxu0 0.0
    %952 = vmatpush1.msra.mxu0 0.0
    %953 = vmatprep.subr.mxu0 0.0
    %954 = vmatpush1.msra.mxu0 0.0
    %955 = vmatprep.subr.mxu0 0.0
    %956 = vmatpush1.msra.mxu0 0.0
    %957 = vmatprep.subr.mxu0 0.0
    %958 = vmatpush1.msra.mxu0 0.0
    %959 = vmatprep.subr.mxu0 0.0
    %960 = vmatpush1.msra.mxu0 0.0
    %961 = vmatprep.subr.mxu0 0.0
    %962 = vmatpush1.msra.mxu0 0.0
    %963 = vmatprep.subr.mxu0 0.0
    %964 = vmatpush1.msra.mxu0 0.0
    %965 = vmatprep.subr.mxu0 0.0
    %966 = vmatpush1.msra.mxu0 0.0
    %967 = vmatprep.subr.mxu0 0.0
    %968 = vmatpush1.msra.mxu0 0.0
    %969 = vmatprep.subr.mxu0 0.0
    %970 = vmatpush1.msra.mxu0 0.0
    %971 = vmatprep.subr.mxu0 0.0
    %972 = vmatpush1.msra.mxu0 0.0
    %973 = vmatprep.subr.mxu0 0.0
    %974 = vmatpush1.msra.mxu0 0.0
    %975 = vmatprep.subr.mxu0 0.0
    %976 = vmatpush1.msra.mxu0 0.0
    %977 = vmatprep.subr.mxu0 0.0
    %978 = vmatpush1.msra.mxu0 0.0
    %979 = vmatprep.subr.mxu0 0.0
    %980 = vmatpush1.msra.mxu0 0.0
    %981 = vmatprep.subr.mxu0 0.0
    %982 = vmatpush1.msra.mxu0 0.0
    %983 = vmatprep.subr.mxu0 0.0
    %984 = vmatpush1.msra.mxu0 0.0
    %985 = vmatprep.subr.mxu0 0.0
    %986 = vmatpush1.msra.mxu0 0.0
    %987 = vmatprep.subr.mxu0 0.0
    %988 = vmatpush1.msra.mxu0 0.0
    %989 = vmatprep.subr.mxu0 0.0
    %990 = vmatpush1.msra.mxu0 0.0
    %991 = vmatprep.subr.mxu0 0.0
    %992 = vmatpush1.msra.mxu0 0.0
    %993 = vmatprep.subr.mxu0 0.0
    %994 = vmatpush1.msra.mxu0 0.0
    %995 = vmatprep.mubr.f32.mxu0 0.0
    %996 = vmatmul.mubr.f32.gmra.mrb[0].mxu0 %v929
    %v997 = vpop.f32.mrb[0].mxu0
    %v998 = vadd.f32 0.0, %v997
    %v999 = vpop.f32.mrb[0].mxu0
    %1000 = vdwg.mxu0
    %v1002 = vsel %vm127, %v803, 0
    %1004 = vmatprep.subr.mxu0 0.0
    %1005 = vmatpush1.msra.mxu0 %v803
    %1006 = vmatprep.subr.mxu0 0.0
    %1007 = vmatpush1.msra.mxu0 0.0
    %1008 = vmatprep.subr.mxu0 0.0
    %1009 = vmatpush1.msra.mxu0 0.0
    %1010 = vmatprep.subr.mxu0 0.0
    %1011 = vmatpush1.msra.mxu0 0.0
    %1012 = vmatprep.subr.mxu0 0.0
    %1013 = vmatpush1.msra.mxu0 0.0
    %1014 = vmatprep.subr.mxu0 0.0
    %1015 = vmatpush1.msra.mxu0 0.0
    %1016 = vmatprep.subr.mxu0 0.0
    %1017 = vmatpush1.msra.mxu0 0.0
    %1018 = vmatprep.subr.mxu0 0.0
    %1019 = vmatpush1.msra.mxu0 0.0
    %1020 = vmatprep.subr.mxu0 0.0
    %1021 = vmatpush1.msra.mxu0 0.0
    %1022 = vmatprep.subr.mxu0 0.0
    %1023 = vmatpush1.msra.mxu0 0.0
    %1024 = vmatprep.subr.mxu0 0.0
    %1025 = vmatpush1.msra.mxu0 0.0
    %1026 = vmatprep.subr.mxu0 0.0
    %1027 = vmatpush1.msra.mxu0 0.0
    %1028 = vmatprep.subr.mxu0 0.0
    %1029 = vmatpush1.msra.mxu0 0.0
    %1030 = vmatprep.subr.mxu0 0.0
    %1031 = vmatpush1.msra.mxu0 0.0
    %1032 = vmatprep.subr.mxu0 0.0
    %1033 = vmatpush1.msra.mxu0 0.0
    %1034 = vmatprep.subr.mxu0 0.0
    %1035 = vmatpush1.msra.mxu0 0.0
    %1036 = vmatprep.subr.mxu0 0.0
    %1037 = vmatpush1.msra.mxu0 0.0
    %1038 = vmatprep.subr.mxu0 0.0
    %1039 = vmatpush1.msra.mxu0 0.0
    %1040 = vmatprep.subr.mxu0 0.0
    %1041 = vmatpush1.msra.mxu0 0.0
    %1042 = vmatprep.subr.mxu0 0.0
    %1043 = vmatpush1.msra.mxu0 0.0
    %1044 = vmatprep.subr.mxu0 0.0
    %1045 = vmatpush1.msra.mxu0 0.0
    %1046 = vmatprep.subr.mxu0 0.0
    %1047 = vmatpush1.msra.mxu0 0.0
    %1048 = vmatprep.subr.mxu0 0.0
    %1049 = vmatpush1.msra.mxu0 0.0
    %1050 = vmatprep.subr.mxu0 0.0
    %1051 = vmatpush1.msra.mxu0 0.0
    %1052 = vmatprep.subr.mxu0 0.0
    %1053 = vmatpush1.msra.mxu0 0.0
    %1054 = vmatprep.subr.mxu0 0.0
    %1055 = vmatpush1.msra.mxu0 0.0
    %1056 = vmatprep.subr.mxu0 0.0
    %1057 = vmatpush1.msra.mxu0 0.0
    %1058 = vmatprep.subr.mxu0 0.0
    %1059 = vmatpush1.msra.mxu0 0.0
    %1060 = vmatprep.subr.mxu0 0.0
    %1061 = vmatpush1.msra.mxu0 0.0
    %1062 = vmatprep.subr.mxu0 0.0
    %1063 = vmatpush1.msra.mxu0 0.0
    %1064 = vmatprep.subr.mxu0 0.0
    %1065 = vmatpush1.msra.mxu0 0.0
    %1066 = vmatprep.subr.mxu0 0.0
    %1067 = vmatpush1.msra.mxu0 0.0
    %1068 = vmatprep.mubr.f32.mxu0 0.0
    %1069 = vmatmul.mubr.f32.gmra.mrb[0].mxu0 %v1002
    %v1070 = vpop.f32.mrb[0].mxu0
    %v1071 = vadd.f32 0.0, %v1070
    %v1072 = vpop.f32.mrb[0].mxu0
    %1073 = vdwg.mxu0
    %v1075 = vsel %vm127, %v808, 0
    %1077 = vmatprep.subr.mxu0 0.0
    %1078 = vmatpush1.msra.mxu0 %v808
    %1079 = vmatprep.subr.mxu0 0.0
    %1080 = vmatpush1.msra.mxu0 0.0
    %1081 = vmatprep.subr.mxu0 0.0
    %1082 = vmatpush1.msra.mxu0 0.0
    %1083 = vmatprep.subr.mxu0 0.0
    %1084 = vmatpush1.msra.mxu0 0.0
    %1085 = vmatprep.subr.mxu0 0.0
    %1086 = vmatpush1.msra.mxu0 0.0
    %1087 = vmatprep.subr.mxu0 0.0
    %1088 = vmatpush1.msra.mxu0 0.0
    %1089 = vmatprep.subr.mxu0 0.0
    %1090 = vmatpush1.msra.mxu0 0.0
    %1091 = vmatprep.subr.mxu0 0.0
    %1092 = vmatpush1.msra.mxu0 0.0
    %1093 = vmatprep.subr.mxu0 0.0
    %1094 = vmatpush1.msra.mxu0 0.0
    %1095 = vmatprep.subr.mxu0 0.0
    %1096 = vmatpush1.msra.mxu0 0.0
    %1097 = vmatprep.subr.mxu0 0.0
    %1098 = vmatpush1.msra.mxu0 0.0
    %1099 = vmatprep.subr.mxu0 0.0
    %1100 = vmatpush1.msra.mxu0 0.0
    %1101 = vmatprep.subr.mxu0 0.0
    %1102 = vmatpush1.msra.mxu0 0.0
    %1103 = vmatprep.subr.mxu0 0.0
    %1104 = vmatpush1.msra.mxu0 0.0
    %1105 = vmatprep.subr.mxu0 0.0
    %1106 = vmatpush1.msra.mxu0 0.0
    %1107 = vmatprep.subr.mxu0 0.0
    %1108 = vmatpush1.msra.mxu0 0.0
    %1109 = vmatprep.subr.mxu0 0.0
    %1110 = vmatpush1.msra.mxu0 0.0
    %1111 = vmatprep.subr.mxu0 0.0
    %1112 = vmatpush1.msra.mxu0 0.0
    %1113 = vmatprep.subr.mxu0 0.0
    %1114 = vmatpush1.msra.mxu0 0.0
    %1115 = vmatprep.subr.mxu0 0.0
    %1116 = vmatpush1.msra.mxu0 0.0
    %1117 = vmatprep.subr.mxu0 0.0
    %1118 = vmatpush1.msra.mxu0 0.0
    %1119 = vmatprep.subr.mxu0 0.0
    %1120 = vmatpush1.msra.mxu0 0.0
    %1121 = vmatprep.subr.mxu0 0.0
    %1122 = vmatpush1.msra.mxu0 0.0
    %1123 = vmatprep.subr.mxu0 0.0
    %1124 = vmatpush1.msra.mxu0 0.0
    %1125 = vmatprep.subr.mxu0 0.0
    %1126 = vmatpush1.msra.mxu0 0.0
    %1127 = vmatprep.subr.mxu0 0.0
    %1128 = vmatpush1.msra.mxu0 0.0
    %1129 = vmatprep.subr.mxu0 0.0
    %1130 = vmatpush1.msra.mxu0 0.0
    %1131 = vmatprep.subr.mxu0 0.0
    %1132 = vmatpush1.msra.mxu0 0.0
    %1133 = vmatprep.subr.mxu0 0.0
    %1134 = vmatpush1.msra.mxu0 0.0
    %1135 = vmatprep.subr.mxu0 0.0
    %1136 = vmatpush1.msra.mxu0 0.0
    %1137 = vmatprep.subr.mxu0 0.0
    %1138 = vmatpush1.msra.mxu0 0.0
    %1139 = vmatprep.subr.mxu0 0.0
    %1140 = vmatpush1.msra.mxu0 0.0
    %1141 = vmatprep.mubr.f32.mxu0 0.0
    %1142 = vmatmul.mubr.f32.gmra.mrb[0].mxu0 %v1075
    %v1143 = vpop.f32.mrb[0].mxu0
    %v1144 = vadd.f32 0.0, %v1143
    %v1145 = vpop.f32.mrb[0].mxu0
    %1146 = vdwg.mxu0
    %v1148 = vsel %vm127, %v813, 0
    %1150 = vmatprep.subr.mxu0 0.0
    %1151 = vmatpush1.msra.mxu0 %v813
    %1152 = vmatprep.subr.mxu0 0.0
    %1153 = vmatpush1.msra.mxu0 0.0
    %1154 = vmatprep.subr.mxu0 0.0
    %1155 = vmatpush1.msra.mxu0 0.0
    %1156 = vmatprep.subr.mxu0 0.0
    %1157 = vmatpush1.msra.mxu0 0.0
    %1158 = vmatprep.subr.mxu0 0.0
    %1159 = vmatpush1.msra.mxu0 0.0
    %1160 = vmatprep.subr.mxu0 0.0
    %1161 = vmatpush1.msra.mxu0 0.0
    %1162 = vmatprep.subr.mxu0 0.0
    %1163 = vmatpush1.msra.mxu0 0.0
    %1164 = vmatprep.subr.mxu0 0.0
    %1165 = vmatpush1.msra.mxu0 0.0
    %1166 = vmatprep.subr.mxu0 0.0
    %1167 = vmatpush1.msra.mxu0 0.0
    %1168 = vmatprep.subr.mxu0 0.0
    %1169 = vmatpush1.msra.mxu0 0.0
    %1170 = vmatprep.subr.mxu0 0.0
    %1171 = vmatpush1.msra.mxu0 0.0
    %1172 = vmatprep.subr.mxu0 0.0
    %1173 = vmatpush1.msra.mxu0 0.0
    %1174 = vmatprep.subr.mxu0 0.0
    %1175 = vmatpush1.msra.mxu0 0.0
    %1176 = vmatprep.subr.mxu0 0.0
    %1177 = vmatpush1.msra.mxu0 0.0
    %1178 = vmatprep.subr.mxu0 0.0
    %1179 = vmatpush1.msra.mxu0 0.0
    %1180 = vmatprep.subr.mxu0 0.0
    %1181 = vmatpush1.msra.mxu0 0.0
    %1182 = vmatprep.subr.mxu0 0.0
    %1183 = vmatpush1.msra.mxu0 0.0
    %1184 = vmatprep.subr.mxu0 0.0
    %1185 = vmatpush1.msra.mxu0 0.0
    %1186 = vmatprep.subr.mxu0 0.0
    %1187 = vmatpush1.msra.mxu0 0.0
    %1188 = vmatprep.subr.mxu0 0.0
    %1189 = vmatpush1.msra.mxu0 0.0
    %1190 = vmatprep.subr.mxu0 0.0
    %1191 = vmatpush1.msra.mxu0 0.0
    %1192 = vmatprep.subr.mxu0 0.0
    %1193 = vmatpush1.msra.mxu0 0.0
    %1194 = vmatprep.subr.mxu0 0.0
    %1195 = vmatpush1.msra.mxu0 0.0
    %1196 = vmatprep.subr.mxu0 0.0
    %1197 = vmatpush1.msra.mxu0 0.0
    %1198 = vmatprep.subr.mxu0 0.0
    %1199 = vmatpush1.msra.mxu0 0.0
    %1200 = vmatprep.subr.mxu0 0.0
    %1201 = vmatpush1.msra.mxu0 0.0
    %1202 = vmatprep.subr.mxu0 0.0
    %1203 = vmatpush1.msra.mxu0 0.0
    %1204 = vmatprep.subr.mxu0 0.0
    %1205 = vmatpush1.msra.mxu0 0.0
    %1206 = vmatprep.subr.mxu0 0.0
    %1207 = vmatpush1.msra.mxu0 0.0
    %1208 = vmatprep.subr.mxu0 0.0
    %1209 = vmatpush1.msra.mxu0 0.0
    %1210 = vmatprep.subr.mxu0 0.0
    %1211 = vmatpush1.msra.mxu0 0.0
    %1212 = vmatprep.subr.mxu0 0.0
    %1213 = vmatpush1.msra.mxu0 0.0
    %1214 = vmatprep.mubr.f32.mxu0 0.0
    %1215 = vmatmul.mubr.f32.gmra.mrb[0].mxu0 %v1148
    %v1216 = vpop.f32.mrb[0].mxu0
    %v1217 = vadd.f32 0.0, %v1216
    %v1218 = vpop.f32.mrb[0].mxu0
    %1219 = vdwg.mxu0
    %v1221 = vsel %vm127, %v818, 0
    %1223 = vmatprep.subr.mxu0 0.0
    %1224 = vmatpush1.msra.mxu0 %v818
    %1225 = vmatprep.subr.mxu0 0.0
    %1226 = vmatpush1.msra.mxu0 0.0
    %1227 = vmatprep.subr.mxu0 0.0
    %1228 = vmatpush1.msra.mxu0 0.0
    %1229 = vmatprep.subr.mxu0 0.0
    %1230 = vmatpush1.msra.mxu0 0.0
    %1231 = vmatprep.subr.mxu0 0.0
    %1232 = vmatpush1.msra.mxu0 0.0
    %1233 = vmatprep.subr.mxu0 0.0
    %1234 = vmatpush1.msra.mxu0 0.0
    %1235 = vmatprep.subr.mxu0 0.0
    %1236 = vmatpush1.msra.mxu0 0.0
    %1237 = vmatprep.subr.mxu0 0.0
    %1238 = vmatpush1.msra.mxu0 0.0
    %1239 = vmatprep.subr.mxu0 0.0
    %1240 = vmatpush1.msra.mxu0 0.0
    %1241 = vmatprep.subr.mxu0 0.0
    %1242 = vmatpush1.msra.mxu0 0.0
    %1243 = vmatprep.subr.mxu0 0.0
    %1244 = vmatpush1.msra.mxu0 0.0
    %1245 = vmatprep.subr.mxu0 0.0
    %1246 = vmatpush1.msra.mxu0 0.0
    %1247 = vmatprep.subr.mxu0 0.0
    %1248 = vmatpush1.msra.mxu0 0.0
    %1249 = vmatprep.subr.mxu0 0.0
    %1250 = vmatpush1.msra.mxu0 0.0
    %1251 = vmatprep.subr.mxu0 0.0
    %1252 = vmatpush1.msra.mxu0 0.0
    %1253 = vmatprep.subr.mxu0 0.0
    %1254 = vmatpush1.msra.mxu0 0.0
    %1255 = vmatprep.subr.mxu0 0.0
    %1256 = vmatpush1.msra.mxu0 0.0
    %1257 = vmatprep.subr.mxu0 0.0
    %1258 = vmatpush1.msra.mxu0 0.0
    %1259 = vmatprep.subr.mxu0 0.0
    %1260 = vmatpush1.msra.mxu0 0.0
    %1261 = vmatprep.subr.mxu0 0.0
    %1262 = vmatpush1.msra.mxu0 0.0
    %1263 = vmatprep.subr.mxu0 0.0
    %1264 = vmatpush1.msra.mxu0 0.0
    %1265 = vmatprep.subr.mxu0 0.0
    %1266 = vmatpush1.msra.mxu0 0.0
    %1267 = vmatprep.subr.mxu0 0.0
    %1268 = vmatpush1.msra.mxu0 0.0
    %1269 = vmatprep.subr.mxu0 0.0
    %1270 = vmatpush1.msra.mxu0 0.0
    %1271 = vmatprep.subr.mxu0 0.0
    %1272 = vmatpush1.msra.mxu0 0.0
    %1273 = vmatprep.subr.mxu0 0.0
    %1274 = vmatpush1.msra.mxu0 0.0
    %1275 = vmatprep.subr.mxu0 0.0
    %1276 = vmatpush1.msra.mxu0 0.0
    %1277 = vmatprep.subr.mxu0 0.0
    %1278 = vmatpush1.msra.mxu0 0.0
    %1279 = vmatprep.subr.mxu0 0.0
    %1280 = vmatpush1.msra.mxu0 0.0
    %1281 = vmatprep.subr.mxu0 0.0
    %1282 = vmatpush1.msra.mxu0 0.0
    %1283 = vmatprep.subr.mxu0 0.0
    %1284 = vmatpush1.msra.mxu0 0.0
    %1285 = vmatprep.subr.mxu0 0.0
    %1286 = vmatpush1.msra.mxu0 0.0
    %1287 = vmatprep.mubr.f32.mxu0 0.0
    %1288 = vmatmul.mubr.f32.gmra.mrb[0].mxu0 %v1221
    %v1289 = vpop.f32.mrb[0].mxu0
    %v1290 = vadd.f32 0.0, %v1289
    %v1291 = vpop.f32.mrb[0].mxu0
    %1292 = vdwg.mxu0
    %v1294 = vsel %vm127, %v823, 0
    %1296 = vmatprep.subr.mxu0 0.0
    %1297 = vmatpush1.msra.mxu0 %v823
    %1298 = vmatprep.subr.mxu0 0.0
    %1299 = vmatpush1.msra.mxu0 0.0
    %1300 = vmatprep.subr.mxu0 0.0
    %1301 = vmatpush1.msra.mxu0 0.0
    %1302 = vmatprep.subr.mxu0 0.0
    %1303 = vmatpush1.msra.mxu0 0.0
    %1304 = vmatprep.subr.mxu0 0.0
    %1305 = vmatpush1.msra.mxu0 0.0
    %1306 = vmatprep.subr.mxu0 0.0
    %1307 = vmatpush1.msra.mxu0 0.0
    %1308 = vmatprep.subr.mxu0 0.0
    %1309 = vmatpush1.msra.mxu0 0.0
    %1310 = vmatprep.subr.mxu0 0.0
    %1311 = vmatpush1.msra.mxu0 0.0
    %1312 = vmatprep.subr.mxu0 0.0
    %1313 = vmatpush1.msra.mxu0 0.0
    %1314 = vmatprep.subr.mxu0 0.0
    %1315 = vmatpush1.msra.mxu0 0.0
    %1316 = vmatprep.subr.mxu0 0.0
    %1317 = vmatpush1.msra.mxu0 0.0
    %1318 = vmatprep.subr.mxu0 0.0
    %1319 = vmatpush1.msra.mxu0 0.0
    %1320 = vmatprep.subr.mxu0 0.0
    %1321 = vmatpush1.msra.mxu0 0.0
    %1322 = vmatprep.subr.mxu0 0.0
    %1323 = vmatpush1.msra.mxu0 0.0
    %1324 = vmatprep.subr.mxu0 0.0
    %1325 = vmatpush1.msra.mxu0 0.0
    %1326 = vmatprep.subr.mxu0 0.0
    %1327 = vmatpush1.msra.mxu0 0.0
    %1328 = vmatprep.subr.mxu0 0.0
    %1329 = vmatpush1.msra.mxu0 0.0
    %1330 = vmatprep.subr.mxu0 0.0
    %1331 = vmatpush1.msra.mxu0 0.0
    %1332 = vmatprep.subr.mxu0 0.0
    %1333 = vmatpush1.msra.mxu0 0.0
    %1334 = vmatprep.subr.mxu0 0.0
    %1335 = vmatpush1.msra.mxu0 0.0
    %1336 = vmatprep.subr.mxu0 0.0
    %1337 = vmatpush1.msra.mxu0 0.0
    %1338 = vmatprep.subr.mxu0 0.0
    %1339 = vmatpush1.msra.mxu0 0.0
    %1340 = vmatprep.subr.mxu0 0.0
    %1341 = vmatpush1.msra.mxu0 0.0
    %1342 = vmatprep.subr.mxu0 0.0
    %1343 = vmatpush1.msra.mxu0 0.0
    %1344 = vmatprep.subr.mxu0 0.0
    %1345 = vmatpush1.msra.mxu0 0.0
    %1346 = vmatprep.subr.mxu0 0.0
    %1347 = vmatpush1.msra.mxu0 0.0
    %1348 = vmatprep.subr.mxu0 0.0
    %1349 = vmatpush1.msra.mxu0 0.0
    %1350 = vmatprep.subr.mxu0 0.0
    %1351 = vmatpush1.msra.mxu0 0.0
    %1352 = vmatprep.subr.mxu0 0.0
    %1353 = vmatpush1.msra.mxu0 0.0
    %1354 = vmatprep.subr.mxu0 0.0
    %1355 = vmatpush1.msra.mxu0 0.0
    %1356 = vmatprep.subr.mxu0 0.0
    %1357 = vmatpush1.msra.mxu0 0.0
    %1358 = vmatprep.subr.mxu0 0.0
    %1359 = vmatpush1.msra.mxu0 0.0
    %1360 = vmatprep.mubr.f32.mxu0 0.0
    %1361 = vmatmul.mubr.f32.gmra.mrb[0].mxu0 %v1294
    %v1362 = vpop.f32.mrb[0].mxu0
    %v1363 = vadd.f32 0.0, %v1362
    %v1364 = vpop.f32.mrb[0].mxu0
    %1365 = vdwg.mxu0
    %v1367 = vsel %vm127, %v828, 0
    %1369 = vmatprep.subr.mxu0 0.0
    %1370 = vmatpush1.msra.mxu0 %v828
    %1371 = vmatprep.subr.mxu0 0.0
    %1372 = vmatpush1.msra.mxu0 0.0
    %1373 = vmatprep.subr.mxu0 0.0
    %1374 = vmatpush1.msra.mxu0 0.0
    %1375 = vmatprep.subr.mxu0 0.0
    %1376 = vmatpush1.msra.mxu0 0.0
    %1377 = vmatprep.subr.mxu0 0.0
    %1378 = vmatpush1.msra.mxu0 0.0
    %1379 = vmatprep.subr.mxu0 0.0
    %1380 = vmatpush1.msra.mxu0 0.0
    %1381 = vmatprep.subr.mxu0 0.0
    %1382 = vmatpush1.msra.mxu0 0.0
    %1383 = vmatprep.subr.mxu0 0.0
    %1384 = vmatpush1.msra.mxu0 0.0
    %1385 = vmatprep.subr.mxu0 0.0
    %1386 = vmatpush1.msra.mxu0 0.0
    %1387 = vmatprep.subr.mxu0 0.0
    %1388 = vmatpush1.msra.mxu0 0.0
    %1389 = vmatprep.subr.mxu0 0.0
    %1390 = vmatpush1.msra.mxu0 0.0
    %1391 = vmatprep.subr.mxu0 0.0
    %1392 = vmatpush1.msra.mxu0 0.0
    %1393 = vmatprep.subr.mxu0 0.0
    %1394 = vmatpush1.msra.mxu0 0.0
    %1395 = vmatprep.subr.mxu0 0.0
    %1396 = vmatpush1.msra.mxu0 0.0
    %1397 = vmatprep.subr.mxu0 0.0
    %1398 = vmatpush1.msra.mxu0 0.0
    %1399 = vmatprep.subr.mxu0 0.0
    %1400 = vmatpush1.msra.mxu0 0.0
    %1401 = vmatprep.subr.mxu0 0.0
    %1402 = vmatpush1.msra.mxu0 0.0
    %1403 = vmatprep.subr.mxu0 0.0
    %1404 = vmatpush1.msra.mxu0 0.0
    %1405 = vmatprep.subr.mxu0 0.0
    %1406 = vmatpush1.msra.mxu0 0.0
    %1407 = vmatprep.subr.mxu0 0.0
    %1408 = vmatpush1.msra.mxu0 0.0
    %1409 = vmatprep.subr.mxu0 0.0
    %1410 = vmatpush1.msra.mxu0 0.0
    %1411 = vmatprep.subr.mxu0 0.0
    %1412 = vmatpush1.msra.mxu0 0.0
    %1413 = vmatprep.subr.mxu0 0.0
    %1414 = vmatpush1.msra.mxu0 0.0
    %1415 = vmatprep.subr.mxu0 0.0
    %1416 = vmatpush1.msra.mxu0 0.0
    %1417 = vmatprep.subr.mxu0 0.0
    %1418 = vmatpush1.msra.mxu0 0.0
    %1419 = vmatprep.subr.mxu0 0.0
    %1420 = vmatpush1.msra.mxu0 0.0
    %1421 = vmatprep.subr.mxu0 0.0
    %1422 = vmatpush1.msra.mxu0 0.0
    %1423 = vmatprep.subr.mxu0 0.0
    %1424 = vmatpush1.msra.mxu0 0.0
    %1425 = vmatprep.subr.mxu0 0.0
    %1426 = vmatpush1.msra.mxu0 0.0
    %1427 = vmatprep.subr.mxu0 0.0
    %1428 = vmatpush1.msra.mxu0 0.0
    %1429 = vmatprep.subr.mxu0 0.0
    %1430 = vmatpush1.msra.mxu0 0.0
    %1431 = vmatprep.subr.mxu0 0.0
    %1432 = vmatpush1.msra.mxu0 0.0
    %1433 = vmatprep.mubr.f32.mxu0 0.0
    %1434 = vmatmul.mubr.f32.gmra.mrb[0].mxu0 %v1367
    %v1435 = vpop.f32.mrb[0].mxu0
    %v1436 = vadd.f32 0.0, %v1435
    %v1437 = vpop.f32.mrb[0].mxu0
    %1438 = vdwg.mxu0
    %v1440 = vsel %vm127, %v833, 0
    %1442 = vmatprep.subr.mxu0 0.0
    %1443 = vmatpush1.msra.mxu0 %v833
    %1444 = vmatprep.subr.mxu0 0.0
    %1445 = vmatpush1.msra.mxu0 0.0
    %1446 = vmatprep.subr.mxu0 0.0
    %1447 = vmatpush1.msra.mxu0 0.0
    %1448 = vmatprep.subr.mxu0 0.0
    %1449 = vmatpush1.msra.mxu0 0.0
    %1450 = vmatprep.subr.mxu0 0.0
    %1451 = vmatpush1.msra.mxu0 0.0
    %1452 = vmatprep.subr.mxu0 0.0
    %1453 = vmatpush1.msra.mxu0 0.0
    %1454 = vmatprep.subr.mxu0 0.0
    %1455 = vmatpush1.msra.mxu0 0.0
    %1456 = vmatprep.subr.mxu0 0.0
    %1457 = vmatpush1.msra.mxu0 0.0
    %1458 = vmatprep.subr.mxu0 0.0
    %1459 = vmatpush1.msra.mxu0 0.0
    %1460 = vmatprep.subr.mxu0 0.0
    %1461 = vmatpush1.msra.mxu0 0.0
    %1462 = vmatprep.subr.mxu0 0.0
    %1463 = vmatpush1.msra.mxu0 0.0
    %1464 = vmatprep.subr.mxu0 0.0
    %1465 = vmatpush1.msra.mxu0 0.0
    %1466 = vmatprep.subr.mxu0 0.0
    %1467 = vmatpush1.msra.mxu0 0.0
    %1468 = vmatprep.subr.mxu0 0.0
    %1469 = vmatpush1.msra.mxu0 0.0
    %1470 = vmatprep.subr.mxu0 0.0
    %1471 = vmatpush1.msra.mxu0 0.0
    %1472 = vmatprep.subr.mxu0 0.0
    %1473 = vmatpush1.msra.mxu0 0.0
    %1474 = vmatprep.subr.mxu0 0.0
    %1475 = vmatpush1.msra.mxu0 0.0
    %1476 = vmatprep.subr.mxu0 0.0
    %1477 = vmatpush1.msra.mxu0 0.0
    %1478 = vmatprep.subr.mxu0 0.0
    %1479 = vmatpush1.msra.mxu0 0.0
    %1480 = vmatprep.subr.mxu0 0.0
    %1481 = vmatpush1.msra.mxu0 0.0
    %1482 = vmatprep.subr.mxu0 0.0
    %1483 = vmatpush1.msra.mxu0 0.0
    %1484 = vmatprep.subr.mxu0 0.0
    %1485 = vmatpush1.msra.mxu0 0.0
    %1486 = vmatprep.subr.mxu0 0.0
    %1487 = vmatpush1.msra.mxu0 0.0
    %1488 = vmatprep.subr.mxu0 0.0
    %1489 = vmatpush1.msra.mxu0 0.0
    %1490 = vmatprep.subr.mxu0 0.0
    %1491 = vmatpush1.msra.mxu0 0.0
    %1492 = vmatprep.subr.mxu0 0.0
    %1493 = vmatpush1.msra.mxu0 0.0
    %1494 = vmatprep.subr.mxu0 0.0
    %1495 = vmatpush1.msra.mxu0 0.0
    %1496 = vmatprep.subr.mxu0 0.0
    %1497 = vmatpush1.msra.mxu0 0.0
    %1498 = vmatprep.subr.mxu0 0.0
    %1499 = vmatpush1.msra.mxu0 0.0
    %1500 = vmatprep.subr.mxu0 0.0
    %1501 = vmatpush1.msra.mxu0 0.0
    %1502 = vmatprep.subr.mxu0 0.0
    %1503 = vmatpush1.msra.mxu0 0.0
    %1504 = vmatprep.subr.mxu0 0.0
    %1505 = vmatpush1.msra.mxu0 0.0
    %1506 = vmatprep.mubr.f32.mxu0 0.0
    %1507 = vmatmul.mubr.f32.gmra.mrb[0].mxu0 %v1440
    %v1508 = vpop.f32.mrb[0].mxu0
    %v1509 = vadd.f32 0.0, %v1508
    %v1510 = vpop.f32.mrb[0].mxu0
    %1511 = vdwg.mxu0
    %v1513 = vsel %vm127, %v998, 0
    %1515 = vmatprep.subr.mxu0 0.0
    %1516 = vmatpush1.msra.mxu0 %v798
    %1517 = vmatprep.subr.mxu0 0.0
    %1518 = vmatpush1.msra.mxu0 0.0
    %1519 = vmatprep.subr.mxu0 0.0
    %1520 = vmatpush1.msra.mxu0 0.0
    %1521 = vmatprep.subr.mxu0 0.0
    %1522 = vmatpush1.msra.mxu0 0.0
    %1523 = vmatprep.subr.mxu0 0.0
    %1524 = vmatpush1.msra.mxu0 0.0
    %1525 = vmatprep.subr.mxu0 0.0
    %1526 = vmatpush1.msra.mxu0 0.0
    %1527 = vmatprep.subr.mxu0 0.0
    %1528 = vmatpush1.msra.mxu0 0.0
    %1529 = vmatprep.subr.mxu0 0.0
    %1530 = vmatpush1.msra.mxu0 0.0
    %1531 = vmatprep.subr.mxu0 0.0
    %1532 = vmatpush1.msra.mxu0 0.0
    %1533 = vmatprep.subr.mxu0 0.0
    %1534 = vmatpush1.msra.mxu0 0.0
    %1535 = vmatprep.subr.mxu0 0.0
    %1536 = vmatpush1.msra.mxu0 0.0
    %1537 = vmatprep.subr.mxu0 0.0
    %1538 = vmatpush1.msra.mxu0 0.0
    %1539 = vmatprep.subr.mxu0 0.0
    %1540 = vmatpush1.msra.mxu0 0.0
    %1541 = vmatprep.subr.mxu0 0.0
    %1542 = vmatpush1.msra.mxu0 0.0
    %1543 = vmatprep.subr.mxu0 0.0
    %1544 = vmatpush1.msra.mxu0 0.0
    %1545 = vmatprep.subr.mxu0 0.0
    %1546 = vmatpush1.msra.mxu0 0.0
    %1547 = vmatprep.subr.mxu0 0.0
    %1548 = vmatpush1.msra.mxu0 0.0
    %1549 = vmatprep.subr.mxu0 0.0
    %1550 = vmatpush1.msra.mxu0 0.0
    %1551 = vmatprep.subr.mxu0 0.0
    %1552 = vmatpush1.msra.mxu0 0.0
    %1553 = vmatprep.subr.mxu0 0.0
    %1554 = vmatpush1.msra.mxu0 0.0
    %1555 = vmatprep.subr.mxu0 0.0
    %1556 = vmatpush1.msra.mxu0 0.0
    %1557 = vmatprep.subr.mxu0 0.0
    %1558 = vmatpush1.msra.mxu0 0.0
    %1559 = vmatprep.subr.mxu0 0.0
    %1560 = vmatpush1.msra.mxu0 0.0
    %1561 = vmatprep.subr.mxu0 0.0
    %1562 = vmatpush1.msra.mxu0 0.0
    %1563 = vmatprep.subr.mxu0 0.0
    %1564 = vmatpush1.msra.mxu0 0.0
    %1565 = vmatprep.subr.mxu0 0.0
    %1566 = vmatpush1.msra.mxu0 0.0
    %1567 = vmatprep.subr.mxu0 0.0
    %1568 = vmatpush1.msra.mxu0 0.0
    %1569 = vmatprep.subr.mxu0 0.0
    %1570 = vmatpush1.msra.mxu0 0.0
    %1571 = vmatprep.subr.mxu0 0.0
    %1572 = vmatpush1.msra.mxu0 0.0
    %1573 = vmatprep.subr.mxu0 0.0
    %1574 = vmatpush1.msra.mxu0 0.0
    %1575 = vmatprep.subr.mxu0 0.0
    %1576 = vmatpush1.msra.mxu0 0.0
    %1577 = vmatprep.subr.mxu0 0.0
    %1578 = vmatpush1.msra.mxu0 0.0
    %1579 = vmatprep.mubr.f32.mxu0 0.0
    %1580 = vmatmul.mubr.f32.gmra.mrb[0].mxu0 %v1513
    %v1581 = vpop.f32.mrb[0].mxu0
    %v1582 = vadd.f32 0.0, %v1581
    %v1583 = vpop.f32.mrb[0].mxu0
    %1584 = vdwg.mxu0
    %v1586 = vsel %vm127, %v1071, 0
    %1588 = vmatprep.subr.mxu0 0.0
    %1589 = vmatpush1.msra.mxu0 %v803
    %1590 = vmatprep.subr.mxu0 0.0
    %1591 = vmatpush1.msra.mxu0 0.0
    %1592 = vmatprep.subr.mxu0 0.0
    %1593 = vmatpush1.msra.mxu0 0.0
    %1594 = vmatprep.subr.mxu0 0.0
    %1595 = vmatpush1.msra.mxu0 0.0
    %1596 = vmatprep.subr.mxu0 0.0
    %1597 = vmatpush1.msra.mxu0 0.0
    %1598 = vmatprep.subr.mxu0 0.0
    %1599 = vmatpush1.msra.mxu0 0.0
    %1600 = vmatprep.subr.mxu0 0.0
    %1601 = vmatpush1.msra.mxu0 0.0
    %1602 = vmatprep.subr.mxu0 0.0
    %1603 = vmatpush1.msra.mxu0 0.0
    %1604 = vmatprep.subr.mxu0 0.0
    %1605 = vmatpush1.msra.mxu0 0.0
    %1606 = vmatprep.subr.mxu0 0.0
    %1607 = vmatpush1.msra.mxu0 0.0
    %1608 = vmatprep.subr.mxu0 0.0
    %1609 = vmatpush1.msra.mxu0 0.0
    %1610 = vmatprep.subr.mxu0 0.0
    %1611 = vmatpush1.msra.mxu0 0.0
    %1612 = vmatprep.subr.mxu0 0.0
    %1613 = vmatpush1.msra.mxu0 0.0
    %1614 = vmatprep.subr.mxu0 0.0
    %1615 = vmatpush1.msra.mxu0 0.0
    %1616 = vmatprep.subr.mxu0 0.0
    %1617 = vmatpush1.msra.mxu0 0.0
    %1618 = vmatprep.subr.mxu0 0.0
    %1619 = vmatpush1.msra.mxu0 0.0
    %1620 = vmatprep.subr.mxu0 0.0
    %1621 = vmatpush1.msra.mxu0 0.0
    %1622 = vmatprep.subr.mxu0 0.0
    %1623 = vmatpush1.msra.mxu0 0.0
    %1624 = vmatprep.subr.mxu0 0.0
    %1625 = vmatpush1.msra.mxu0 0.0
    %1626 = vmatprep.subr.mxu0 0.0
    %1627 = vmatpush1.msra.mxu0 0.0
    %1628 = vmatprep.subr.mxu0 0.0
    %1629 = vmatpush1.msra.mxu0 0.0
    %1630 = vmatprep.subr.mxu0 0.0
    %1631 = vmatpush1.msra.mxu0 0.0
    %1632 = vmatprep.subr.mxu0 0.0
    %1633 = vmatpush1.msra.mxu0 0.0
    %1634 = vmatprep.subr.mxu0 0.0
    %1635 = vmatpush1.msra.mxu0 0.0
    %1636 = vmatprep.subr.mxu0 0.0
    %1637 = vmatpush1.msra.mxu0 0.0
    %1638 = vmatprep.subr.mxu0 0.0
    %1639 = vmatpush1.msra.mxu0 0.0
    %1640 = vmatprep.subr.mxu0 0.0
    %1641 = vmatpush1.msra.mxu0 0.0
    %1642 = vmatprep.subr.mxu0 0.0
    %1643 = vmatpush1.msra.mxu0 0.0
    %1644 = vmatprep.subr.mxu0 0.0
    %1645 = vmatpush1.msra.mxu0 0.0
    %1646 = vmatprep.subr.mxu0 0.0
    %1647 = vmatpush1.msra.mxu0 0.0
    %1648 = vmatprep.subr.mxu0 0.0
    %1649 = vmatpush1.msra.mxu0 0.0
    %1650 = vmatprep.subr.mxu0 0.0
    %1651 = vmatpush1.msra.mxu0 0.0
    %1652 = vmatprep.mubr.f32.mxu0 0.0
    %1653 = vmatmul.mubr.f32.gmra.mrb[0].mxu0 %v1586
    %v1654 = vpop.f32.mrb[0].mxu0
    %v1655 = vadd.f32 0.0, %v1654
    %v1656 = vpop.f32.mrb[0].mxu0
    %1657 = vdwg.mxu0
    %v1659 = vsel %vm127, %v1144, 0
    %1661 = vmatprep.subr.mxu0 0.0
    %1662 = vmatpush1.msra.mxu0 %v808
    %1663 = vmatprep.subr.mxu0 0.0
    %1664 = vmatpush1.msra.mxu0 0.0
    %1665 = vmatprep.subr.mxu0 0.0
    %1666 = vmatpush1.msra.mxu0 0.0
    %1667 = vmatprep.subr.mxu0 0.0
    %1668 = vmatpush1.msra.mxu0 0.0
    %1669 = vmatprep.subr.mxu0 0.0
    %1670 = vmatpush1.msra.mxu0 0.0
    %1671 = vmatprep.subr.mxu0 0.0
    %1672 = vmatpush1.msra.mxu0 0.0
    %1673 = vmatprep.subr.mxu0 0.0
    %1674 = vmatpush1.msra.mxu0 0.0
    %1675 = vmatprep.subr.mxu0 0.0
    %1676 = vmatpush1.msra.mxu0 0.0
    %1677 = vmatprep.subr.mxu0 0.0
    %1678 = vmatpush1.msra.mxu0 0.0
    %1679 = vmatprep.subr.mxu0 0.0
    %1680 = vmatpush1.msra.mxu0 0.0
    %1681 = vmatprep.subr.mxu0 0.0
    %1682 = vmatpush1.msra.mxu0 0.0
    %1683 = vmatprep.subr.mxu0 0.0
    %1684 = vmatpush1.msra.mxu0 0.0
    %1685 = vmatprep.subr.mxu0 0.0
    %1686 = vmatpush1.msra.mxu0 0.0
    %1687 = vmatprep.subr.mxu0 0.0
    %1688 = vmatpush1.msra.mxu0 0.0
    %1689 = vmatprep.subr.mxu0 0.0
    %1690 = vmatpush1.msra.mxu0 0.0
    %1691 = vmatprep.subr.mxu0 0.0
    %1692 = vmatpush1.msra.mxu0 0.0
    %1693 = vmatprep.subr.mxu0 0.0
    %1694 = vmatpush1.msra.mxu0 0.0
    %1695 = vmatprep.subr.mxu0 0.0
    %1696 = vmatpush1.msra.mxu0 0.0
    %1697 = vmatprep.subr.mxu0 0.0
    %1698 = vmatpush1.msra.mxu0 0.0
    %1699 = vmatprep.subr.mxu0 0.0
    %1700 = vmatpush1.msra.mxu0 0.0
    %1701 = vmatprep.subr.mxu0 0.0
    %1702 = vmatpush1.msra.mxu0 0.0
    %1703 = vmatprep.subr.mxu0 0.0
    %1704 = vmatpush1.msra.mxu0 0.0
    %1705 = vmatprep.subr.mxu0 0.0
    %1706 = vmatpush1.msra.mxu0 0.0
    %1707 = vmatprep.subr.mxu0 0.0
    %1708 = vmatpush1.msra.mxu0 0.0
    %1709 = vmatprep.subr.mxu0 0.0
    %1710 = vmatpush1.msra.mxu0 0.0
    %1711 = vmatprep.subr.mxu0 0.0
    %1712 = vmatpush1.msra.mxu0 0.0
    %1713 = vmatprep.subr.mxu0 0.0
    %1714 = vmatpush1.msra.mxu0 0.0
    %1715 = vmatprep.subr.mxu0 0.0
    %1716 = vmatpush1.msra.mxu0 0.0
    %1717 = vmatprep.subr.mxu0 0.0
    %1718 = vmatpush1.msra.mxu0 0.0
    %1719 = vmatprep.subr.mxu0 0.0
    %1720 = vmatpush1.msra.mxu0 0.0
    %1721 = vmatprep.subr.mxu0 0.0
    %1722 = vmatpush1.msra.mxu0 0.0
    %1723 = vmatprep.subr.mxu0 0.0
    %1724 = vmatpush1.msra.mxu0 0.0
    %1725 = vmatprep.mubr.f32.mxu0 0.0
    %1726 = vmatmul.mubr.f32.gmra.mrb[0].mxu0 %v1659
    %v1727 = vpop.f32.mrb[0].mxu0
    %v1728 = vadd.f32 0.0, %v1727
    %v1729 = vpop.f32.mrb[0].mxu0
    %1730 = vdwg.mxu0
    %v1732 = vsel %vm127, %v1217, 0
    %1734 = vmatprep.subr.mxu0 0.0
    %1735 = vmatpush1.msra.mxu0 %v813
    %1736 = vmatprep.subr.mxu0 0.0
    %1737 = vmatpush1.msra.mxu0 0.0
    %1738 = vmatprep.subr.mxu0 0.0
    %1739 = vmatpush1.msra.mxu0 0.0
    %1740 = vmatprep.subr.mxu0 0.0
    %1741 = vmatpush1.msra.mxu0 0.0
    %1742 = vmatprep.subr.mxu0 0.0
    %1743 = vmatpush1.msra.mxu0 0.0
    %1744 = vmatprep.subr.mxu0 0.0
    %1745 = vmatpush1.msra.mxu0 0.0
    %1746 = vmatprep.subr.mxu0 0.0
    %1747 = vmatpush1.msra.mxu0 0.0
    %1748 = vmatprep.subr.mxu0 0.0
    %1749 = vmatpush1.msra.mxu0 0.0
    %1750 = vmatprep.subr.mxu0 0.0
    %1751 = vmatpush1.msra.mxu0 0.0
    %1752 = vmatprep.subr.mxu0 0.0
    %1753 = vmatpush1.msra.mxu0 0.0
    %1754 = vmatprep.subr.mxu0 0.0
    %1755 = vmatpush1.msra.mxu0 0.0
    %1756 = vmatprep.subr.mxu0 0.0
    %1757 = vmatpush1.msra.mxu0 0.0
    %1758 = vmatprep.subr.mxu0 0.0
    %1759 = vmatpush1.msra.mxu0 0.0
    %1760 = vmatprep.subr.mxu0 0.0
    %1761 = vmatpush1.msra.mxu0 0.0
    %1762 = vmatprep.subr.mxu0 0.0
    %1763 = vmatpush1.msra.mxu0 0.0
    %1764 = vmatprep.subr.mxu0 0.0
    %1765 = vmatpush1.msra.mxu0 0.0
    %1766 = vmatprep.subr.mxu0 0.0
    %1767 = vmatpush1.msra.mxu0 0.0
    %1768 = vmatprep.subr.mxu0 0.0
    %1769 = vmatpush1.msra.mxu0 0.0
    %1770 = vmatprep.subr.mxu0 0.0
    %1771 = vmatpush1.msra.mxu0 0.0
    %1772 = vmatprep.subr.mxu0 0.0
    %1773 = vmatpush1.msra.mxu0 0.0
    %1774 = vmatprep.subr.mxu0 0.0
    %1775 = vmatpush1.msra.mxu0 0.0
    %1776 = vmatprep.subr.mxu0 0.0
    %1777 = vmatpush1.msra.mxu0 0.0
    %1778 = vmatprep.subr.mxu0 0.0
    %1779 = vmatpush1.msra.mxu0 0.0
    %1780 = vmatprep.subr.mxu0 0.0
    %1781 = vmatpush1.msra.mxu0 0.0
    %1782 = vmatprep.subr.mxu0 0.0
    %1783 = vmatpush1.msra.mxu0 0.0
    %1784 = vmatprep.subr.mxu0 0.0
    %1785 = vmatpush1.msra.mxu0 0.0
    %1786 = vmatprep.subr.mxu0 0.0
    %1787 = vmatpush1.msra.mxu0 0.0
    %1788 = vmatprep.subr.mxu0 0.0
    %1789 = vmatpush1.msra.mxu0 0.0
    %1790 = vmatprep.subr.mxu0 0.0
    %1791 = vmatpush1.msra.mxu0 0.0
    %1792 = vmatprep.subr.mxu0 0.0
    %1793 = vmatpush1.msra.mxu0 0.0
    %1794 = vmatprep.subr.mxu0 0.0
    %1795 = vmatpush1.msra.mxu0 0.0
    %1796 = vmatprep.subr.mxu0 0.0
    %1797 = vmatpush1.msra.mxu0 0.0
    %1798 = vmatprep.mubr.f32.mxu0 0.0
    %1799 = vmatmul.mubr.f32.gmra.mrb[0].mxu0 %v1732
    %v1800 = vpop.f32.mrb[0].mxu0
    %v1801 = vadd.f32 0.0, %v1800
    %v1802 = vpop.f32.mrb[0].mxu0
    %1803 = vdwg.mxu0
    %v1805 = vsel %vm127, %v1290, 0
    %1807 = vmatprep.subr.mxu0 0.0
    %1808 = vmatpush1.msra.mxu0 %v818
    %1809 = vmatprep.subr.mxu0 0.0
    %1810 = vmatpush1.msra.mxu0 0.0
    %1811 = vmatprep.subr.mxu0 0.0
    %1812 = vmatpush1.msra.mxu0 0.0
    %1813 = vmatprep.subr.mxu0 0.0
    %1814 = vmatpush1.msra.mxu0 0.0
    %1815 = vmatprep.subr.mxu0 0.0
    %1816 = vmatpush1.msra.mxu0 0.0
    %1817 = vmatprep.subr.mxu0 0.0
    %1818 = vmatpush1.msra.mxu0 0.0
    %1819 = vmatprep.subr.mxu0 0.0
    %1820 = vmatpush1.msra.mxu0 0.0
    %1821 = vmatprep.subr.mxu0 0.0
    %1822 = vmatpush1.msra.mxu0 0.0
    %1823 = vmatprep.subr.mxu0 0.0
    %1824 = vmatpush1.msra.mxu0 0.0
    %1825 = vmatprep.subr.mxu0 0.0
    %1826 = vmatpush1.msra.mxu0 0.0
    %1827 = vmatprep.subr.mxu0 0.0
    %1828 = vmatpush1.msra.mxu0 0.0
    %1829 = vmatprep.subr.mxu0 0.0
    %1830 = vmatpush1.msra.mxu0 0.0
    %1831 = vmatprep.subr.mxu0 0.0
    %1832 = vmatpush1.msra.mxu0 0.0
    %1833 = vmatprep.subr.mxu0 0.0
    %1834 = vmatpush1.msra.mxu0 0.0
    %1835 = vmatprep.subr.mxu0 0.0
    %1836 = vmatpush1.msra.mxu0 0.0
    %1837 = vmatprep.subr.mxu0 0.0
    %1838 = vmatpush1.msra.mxu0 0.0
    %1839 = vmatprep.subr.mxu0 0.0
    %1840 = vmatpush1.msra.mxu0 0.0
    %1841 = vmatprep.subr.mxu0 0.0
    %1842 = vmatpush1.msra.mxu0 0.0
    %1843 = vmatprep.subr.mxu0 0.0
    %1844 = vmatpush1.msra.mxu0 0.0
    %1845 = vmatprep.subr.mxu0 0.0
    %1846 = vmatpush1.msra.mxu0 0.0
    %1847 = vmatprep.subr.mxu0 0.0
    %1848 = vmatpush1.msra.mxu0 0.0
    %1849 = vmatprep.subr.mxu0 0.0
    %1850 = vmatpush1.msra.mxu0 0.0
    %1851 = vmatprep.subr.mxu0 0.0
    %1852 = vmatpush1.msra.mxu0 0.0
    %1853 = vmatprep.subr.mxu0 0.0
    %1854 = vmatpush1.msra.mxu0 0.0
    %1855 = vmatprep.subr.mxu0 0.0
    %1856 = vmatpush1.msra.mxu0 0.0
    %1857 = vmatprep.subr.mxu0 0.0
    %1858 = vmatpush1.msra.mxu0 0.0
    %1859 = vmatprep.subr.mxu0 0.0
    %1860 = vmatpush1.msra.mxu0 0.0
    %1861 = vmatprep.subr.mxu0 0.0
    %1862 = vmatpush1.msra.mxu0 0.0
    %1863 = vmatprep.subr.mxu0 0.0
    %1864 = vmatpush1.msra.mxu0 0.0
    %1865 = vmatprep.subr.mxu0 0.0
    %1866 = vmatpush1.msra.mxu0 0.0
    %1867 = vmatprep.subr.mxu0 0.0
    %1868 = vmatpush1.msra.mxu0 0.0
    %1869 = vmatprep.subr.mxu0 0.0
    %1870 = vmatpush1.msra.mxu0 0.0
    %1871 = vmatprep.mubr.f32.mxu0 0.0
    %1872 = vmatmul.mubr.f32.gmra.mrb[0].mxu0 %v1805
    %v1873 = vpop.f32.mrb[0].mxu0
    %v1874 = vadd.f32 0.0, %v1873
    %v1875 = vpop.f32.mrb[0].mxu0
    %1876 = vdwg.mxu0
    %v1878 = vsel %vm127, %v1363, 0
    %1880 = vmatprep.subr.mxu0 0.0
    %1881 = vmatpush1.msra.mxu0 %v823
    %1882 = vmatprep.subr.mxu0 0.0
    %1883 = vmatpush1.msra.mxu0 0.0
    %1884 = vmatprep.subr.mxu0 0.0
    %1885 = vmatpush1.msra.mxu0 0.0
    %1886 = vmatprep.subr.mxu0 0.0
    %1887 = vmatpush1.msra.mxu0 0.0
    %1888 = vmatprep.subr.mxu0 0.0
    %1889 = vmatpush1.msra.mxu0 0.0
    %1890 = vmatprep.subr.mxu0 0.0
    %1891 = vmatpush1.msra.mxu0 0.0
    %1892 = vmatprep.subr.mxu0 0.0
    %1893 = vmatpush1.msra.mxu0 0.0
    %1894 = vmatprep.subr.mxu0 0.0
    %1895 = vmatpush1.msra.mxu0 0.0
    %1896 = vmatprep.subr.mxu0 0.0
    %1897 = vmatpush1.msra.mxu0 0.0
    %1898 = vmatprep.subr.mxu0 0.0
    %1899 = vmatpush1.msra.mxu0 0.0
    %1900 = vmatprep.subr.mxu0 0.0
    %1901 = vmatpush1.msra.mxu0 0.0
    %1902 = vmatprep.subr.mxu0 0.0
    %1903 = vmatpush1.msra.mxu0 0.0
    %1904 = vmatprep.subr.mxu0 0.0
    %1905 = vmatpush1.msra.mxu0 0.0
    %1906 = vmatprep.subr.mxu0 0.0
    %1907 = vmatpush1.msra.mxu0 0.0
    %1908 = vmatprep.subr.mxu0 0.0
    %1909 = vmatpush1.msra.mxu0 0.0
    %1910 = vmatprep.subr.mxu0 0.0
    %1911 = vmatpush1.msra.mxu0 0.0
    %1912 = vmatprep.subr.mxu0 0.0
    %1913 = vmatpush1.msra.mxu0 0.0
    %1914 = vmatprep.subr.mxu0 0.0
    %1915 = vmatpush1.msra.mxu0 0.0
    %1916 = vmatprep.subr.mxu0 0.0
    %1917 = vmatpush1.msra.mxu0 0.0
    %1918 = vmatprep.subr.mxu0 0.0
    %1919 = vmatpush1.msra.mxu0 0.0
    %1920 = vmatprep.subr.mxu0 0.0
    %1921 = vmatpush1.msra.mxu0 0.0
    %1922 = vmatprep.subr.mxu0 0.0
    %1923 = vmatpush1.msra.mxu0 0.0
    %1924 = vmatprep.subr.mxu0 0.0
    %1925 = vmatpush1.msra.mxu0 0.0
    %1926 = vmatprep.subr.mxu0 0.0
    %1927 = vmatpush1.msra.mxu0 0.0
    %1928 = vmatprep.subr.mxu0 0.0
    %1929 = vmatpush1.msra.mxu0 0.0
    %1930 = vmatprep.subr.mxu0 0.0
    %1931 = vmatpush1.msra.mxu0 0.0
    %1932 = vmatprep.subr.mxu0 0.0
    %1933 = vmatpush1.msra.mxu0 0.0
    %1934 = vmatprep.subr.mxu0 0.0
    %1935 = vmatpush1.msra.mxu0 0.0
    %1936 = vmatprep.subr.mxu0 0.0
    %1937 = vmatpush1.msra.mxu0 0.0
    %1938 = vmatprep.subr.mxu0 0.0
    %1939 = vmatpush1.msra.mxu0 0.0
    %1940 = vmatprep.subr.mxu0 0.0
    %1941 = vmatpush1.msra.mxu0 0.0
    %1942 = vmatprep.subr.mxu0 0.0
    %1943 = vmatpush1.msra.mxu0 0.0
    %1944 = vmatprep.mubr.f32.mxu0 0.0
    %1945 = vmatmul.mubr.f32.gmra.mrb[0].mxu0 %v1878
    %v1946 = vpop.f32.mrb[0].mxu0
    %v1947 = vadd.f32 0.0, %v1946
    %v1948 = vpop.f32.mrb[0].mxu0
    %1949 = vdwg.mxu0
    %v1951 = vsel %vm127, %v1436, 0
    %1953 = vmatprep.subr.mxu0 0.0
    %1954 = vmatpush1.msra.mxu0 %v828
    %1955 = vmatprep.subr.mxu0 0.0
    %1956 = vmatpush1.msra.mxu0 0.0
    %1957 = vmatprep.subr.mxu0 0.0
    %1958 = vmatpush1.msra.mxu0 0.0
    %1959 = vmatprep.subr.mxu0 0.0
    %1960 = vmatpush1.msra.mxu0 0.0
    %1961 = vmatprep.subr.mxu0 0.0
    %1962 = vmatpush1.msra.mxu0 0.0
    %1963 = vmatprep.subr.mxu0 0.0
    %1964 = vmatpush1.msra.mxu0 0.0
    %1965 = vmatprep.subr.mxu0 0.0
    %1966 = vmatpush1.msra.mxu0 0.0
    %1967 = vmatprep.subr.mxu0 0.0
    %1968 = vmatpush1.msra.mxu0 0.0
    %1969 = vmatprep.subr.mxu0 0.0
    %1970 = vmatpush1.msra.mxu0 0.0
    %1971 = vmatprep.subr.mxu0 0.0
    %1972 = vmatpush1.msra.mxu0 0.0
    %1973 = vmatprep.subr.mxu0 0.0
    %1974 = vmatpush1.msra.mxu0 0.0
    %1975 = vmatprep.subr.mxu0 0.0
    %1976 = vmatpush1.msra.mxu0 0.0
    %1977 = vmatprep.subr.mxu0 0.0
    %1978 = vmatpush1.msra.mxu0 0.0
    %1979 = vmatprep.subr.mxu0 0.0
    %1980 = vmatpush1.msra.mxu0 0.0
    %1981 = vmatprep.subr.mxu0 0.0
    %1982 = vmatpush1.msra.mxu0 0.0
    %1983 = vmatprep.subr.mxu0 0.0
    %1984 = vmatpush1.msra.mxu0 0.0
    %1985 = vmatprep.subr.mxu0 0.0
    %1986 = vmatpush1.msra.mxu0 0.0
    %1987 = vmatprep.subr.mxu0 0.0
    %1988 = vmatpush1.msra.mxu0 0.0
    %1989 = vmatprep.subr.mxu0 0.0
    %1990 = vmatpush1.msra.mxu0 0.0
    %1991 = vmatprep.subr.mxu0 0.0
    %1992 = vmatpush1.msra.mxu0 0.0
    %1993 = vmatprep.subr.mxu0 0.0
    %1994 = vmatpush1.msra.mxu0 0.0
    %1995 = vmatprep.subr.mxu0 0.0
    %1996 = vmatpush1.msra.mxu0 0.0
    %1997 = vmatprep.subr.mxu0 0.0
    %1998 = vmatpush1.msra.mxu0 0.0
    %1999 = vmatprep.subr.mxu0 0.0
    %2000 = vmatpush1.msra.mxu0 0.0
    %2001 = vmatprep.subr.mxu0 0.0
    %2002 = vmatpush1.msra.mxu0 0.0
    %2003 = vmatprep.subr.mxu0 0.0
    %2004 = vmatpush1.msra.mxu0 0.0
    %2005 = vmatprep.subr.mxu0 0.0
    %2006 = vmatpush1.msra.mxu0 0.0
    %2007 = vmatprep.subr.mxu0 0.0
    %2008 = vmatpush1.msra.mxu0 0.0
    %2009 = vmatprep.subr.mxu0 0.0
    %2010 = vmatpush1.msra.mxu0 0.0
    %2011 = vmatprep.subr.mxu0 0.0
    %2012 = vmatpush1.msra.mxu0 0.0
    %2013 = vmatprep.subr.mxu0 0.0
    %2014 = vmatpush1.msra.mxu0 0.0
    %2015 = vmatprep.subr.mxu0 0.0
    %2016 = vmatpush1.msra.mxu0 0.0
    %2017 = vmatprep.mubr.f32.mxu0 0.0
    %2018 = vmatmul.mubr.f32.gmra.mrb[0].mxu0 %v1951
    %v2019 = vpop.f32.mrb[0].mxu0
    %v2020 = vadd.f32 0.0, %v2019
    %v2021 = vpop.f32.mrb[0].mxu0
    %2022 = vdwg.mxu0
    %v2024 = vsel %vm127, %v1509, 0
    %2026 = vmatprep.subr.mxu0 0.0
    %2027 = vmatpush1.msra.mxu0 %v833
    %2028 = vmatprep.subr.mxu0 0.0
    %2029 = vmatpush1.msra.mxu0 0.0
    %2030 = vmatprep.subr.mxu0 0.0
    %2031 = vmatpush1.msra.mxu0 0.0
    %2032 = vmatprep.subr.mxu0 0.0
    %2033 = vmatpush1.msra.mxu0 0.0
    %2034 = vmatprep.subr.mxu0 0.0
    %2035 = vmatpush1.msra.mxu0 0.0
    %2036 = vmatprep.subr.mxu0 0.0
    %2037 = vmatpush1.msra.mxu0 0.0
    %2038 = vmatprep.subr.mxu0 0.0
    %2039 = vmatpush1.msra.mxu0 0.0
    %2040 = vmatprep.subr.mxu0 0.0
    %2041 = vmatpush1.msra.mxu0 0.0
    %2042 = vmatprep.subr.mxu0 0.0
    %2043 = vmatpush1.msra.mxu0 0.0
    %2044 = vmatprep.subr.mxu0 0.0
    %2045 = vmatpush1.msra.mxu0 0.0
    %2046 = vmatprep.subr.mxu0 0.0
    %2047 = vmatpush1.msra.mxu0 0.0
    %2048 = vmatprep.subr.mxu0 0.0
    %2049 = vmatpush1.msra.mxu0 0.0
    %2050 = vmatprep.subr.mxu0 0.0
    %2051 = vmatpush1.msra.mxu0 0.0
    %2052 = vmatprep.subr.mxu0 0.0
    %2053 = vmatpush1.msra.mxu0 0.0
    %2054 = vmatprep.subr.mxu0 0.0
    %2055 = vmatpush1.msra.mxu0 0.0
    %2056 = vmatprep.subr.mxu0 0.0
    %2057 = vmatpush1.msra.mxu0 0.0
    %2058 = vmatprep.subr.mxu0 0.0
    %2059 = vmatpush1.msra.mxu0 0.0
    %2060 = vmatprep.subr.mxu0 0.0
    %2061 = vmatpush1.msra.mxu0 0.0
    %2062 = vmatprep.subr.mxu0 0.0
    %2063 = vmatpush1.msra.mxu0 0.0
    %2064 = vmatprep.subr.mxu0 0.0
    %2065 = vmatpush1.msra.mxu0 0.0
    %2066 = vmatprep.subr.mxu0 0.0
    %2067 = vmatpush1.msra.mxu0 0.0
    %2068 = vmatprep.subr.mxu0 0.0
    %2069 = vmatpush1.msra.mxu0 0.0
    %2070 = vmatprep.subr.mxu0 0.0
    %2071 = vmatpush1.msra.mxu0 0.0
    %2072 = vmatprep.subr.mxu0 0.0
    %2073 = vmatpush1.msra.mxu0 0.0
    %2074 = vmatprep.subr.mxu0 0.0
    %2075 = vmatpush1.msra.mxu0 0.0
    %2076 = vmatprep.subr.mxu0 0.0
    %2077 = vmatpush1.msra.mxu0 0.0
    %2078 = vmatprep.subr.mxu0 0.0
    %2079 = vmatpush1.msra.mxu0 0.0
    %2080 = vmatprep.subr.mxu0 0.0
    %2081 = vmatpush1.msra.mxu0 0.0
    %2082 = vmatprep.subr.mxu0 0.0
    %2083 = vmatpush1.msra.mxu0 0.0
    %2084 = vmatprep.subr.mxu0 0.0
    %2085 = vmatpush1.msra.mxu0 0.0
    %2086 = vmatprep.subr.mxu0 0.0
    %2087 = vmatpush1.msra.mxu0 0.0
    %2088 = vmatprep.subr.mxu0 0.0
    %2089 = vmatpush1.msra.mxu0 0.0
    %2090 = vmatprep.mubr.f32.mxu0 0.0
    %2091 = vmatmul.mubr.f32.gmra.mrb[0].mxu0 %v2024
    %v2092 = vpop.f32.mrb[0].mxu0
    %v2093 = vadd.f32 0.0, %v2092
    %v2094 = vpop.f32.mrb[0].mxu0
    %2095 = vdwg.mxu0
    %v2097 = vsel %vm127, %v1582, 0
    %2099 = vmatprep.subr.mxu0 0.0
    %2100 = vmatpush1.msra.mxu0 %v798
    %2101 = vmatprep.subr.mxu0 0.0
    %2102 = vmatpush1.msra.mxu0 0.0
    %2103 = vmatprep.subr.mxu0 0.0
    %2104 = vmatpush1.msra.mxu0 0.0
    %2105 = vmatprep.subr.mxu0 0.0
    %2106 = vmatpush1.msra.mxu0 0.0
    %2107 = vmatprep.subr.mxu0 0.0
    %2108 = vmatpush1.msra.mxu0 0.0
    %2109 = vmatprep.subr.mxu0 0.0
    %2110 = vmatpush1.msra.mxu0 0.0
    %2111 = vmatprep.subr.mxu0 0.0
    %2112 = vmatpush1.msra.mxu0 0.0
    %2113 = vmatprep.subr.mxu0 0.0
    %2114 = vmatpush1.msra.mxu0 0.0
    %2115 = vmatprep.subr.mxu0 0.0
    %2116 = vmatpush1.msra.mxu0 0.0
    %2117 = vmatprep.subr.mxu0 0.0
    %2118 = vmatpush1.msra.mxu0 0.0
    %2119 = vmatprep.subr.mxu0 0.0
    %2120 = vmatpush1.msra.mxu0 0.0
    %2121 = vmatprep.subr.mxu0 0.0
    %2122 = vmatpush1.msra.mxu0 0.0
    %2123 = vmatprep.subr.mxu0 0.0
    %2124 = vmatpush1.msra.mxu0 0.0
    %2125 = vmatprep.subr.mxu0 0.0
    %2126 = vmatpush1.msra.mxu0 0.0
    %2127 = vmatprep.subr.mxu0 0.0
    %2128 = vmatpush1.msra.mxu0 0.0
    %2129 = vmatprep.subr.mxu0 0.0
    %2130 = vmatpush1.msra.mxu0 0.0
    %2131 = vmatprep.subr.mxu0 0.0
    %2132 = vmatpush1.msra.mxu0 0.0
    %2133 = vmatprep.subr.mxu0 0.0
    %2134 = vmatpush1.msra.mxu0 0.0
    %2135 = vmatprep.subr.mxu0 0.0
    %2136 = vmatpush1.msra.mxu0 0.0
    %2137 = vmatprep.subr.mxu0 0.0
    %2138 = vmatpush1.msra.mxu0 0.0
    %2139 = vmatprep.subr.mxu0 0.0
    %2140 = vmatpush1.msra.mxu0 0.0
    %2141 = vmatprep.subr.mxu0 0.0
    %2142 = vmatpush1.msra.mxu0 0.0
    %2143 = vmatprep.subr.mxu0 0.0
    %2144 = vmatpush1.msra.mxu0 0.0
    %2145 = vmatprep.subr.mxu0 0.0
    %2146 = vmatpush1.msra.mxu0 0.0
    %2147 = vmatprep.subr.mxu0 0.0
    %2148 = vmatpush1.msra.mxu0 0.0
    %2149 = vmatprep.subr.mxu0 0.0
    %2150 = vmatpush1.msra.mxu0 0.0
    %2151 = vmatprep.subr.mxu0 0.0
    %2152 = vmatpush1.msra.mxu0 0.0
    %2153 = vmatprep.subr.mxu0 0.0
    %2154 = vmatpush1.msra.mxu0 0.0
    %2155 = vmatprep.subr.mxu0 0.0
    %2156 = vmatpush1.msra.mxu0 0.0
    %2157 = vmatprep.subr.mxu0 0.0
    %2158 = vmatpush1.msra.mxu0 0.0
    %2159 = vmatprep.subr.mxu0 0.0
    %2160 = vmatpush1.msra.mxu0 0.0
    %2161 = vmatprep.subr.mxu0 0.0
    %2162 = vmatpush1.msra.mxu0 0.0
    %2163 = vmatprep.mubr.f32.mxu0 0.0
    %2164 = vmatmul.mubr.f32.gmra.mrb[0].mxu0 %v2097
    %v2165 = vpop.f32.mrb[0].mxu0
    %v2166 = vadd.f32 0.0, %v2165
    %v2167 = vpop.f32.mrb[0].mxu0
    %2168 = vdwg.mxu0
    %v2170 = vsel %vm127, %v1655, 0
    %2172 = vmatprep.subr.mxu0 0.0
    %2173 = vmatpush1.msra.mxu0 %v803
    %2174 = vmatprep.subr.mxu0 0.0
    %2175 = vmatpush1.msra.mxu0 0.0
    %2176 = vmatprep.subr.mxu0 0.0
    %2177 = vmatpush1.msra.mxu0 0.0
    %2178 = vmatprep.subr.mxu0 0.0
    %2179 = vmatpush1.msra.mxu0 0.0
    %2180 = vmatprep.subr.mxu0 0.0
    %2181 = vmatpush1.msra.mxu0 0.0
    %2182 = vmatprep.subr.mxu0 0.0
    %2183 = vmatpush1.msra.mxu0 0.0
    %2184 = vmatprep.subr.mxu0 0.0
    %2185 = vmatpush1.msra.mxu0 0.0
    %2186 = vmatprep.subr.mxu0 0.0
    %2187 = vmatpush1.msra.mxu0 0.0
    %2188 = vmatprep.subr.mxu0 0.0
    %2189 = vmatpush1.msra.mxu0 0.0
    %2190 = vmatprep.subr.mxu0 0.0
    %2191 = vmatpush1.msra.mxu0 0.0
    %2192 = vmatprep.subr.mxu0 0.0
    %2193 = vmatpush1.msra.mxu0 0.0
    %2194 = vmatprep.subr.mxu0 0.0
    %2195 = vmatpush1.msra.mxu0 0.0
    %2196 = vmatprep.subr.mxu0 0.0
    %2197 = vmatpush1.msra.mxu0 0.0
    %2198 = vmatprep.subr.mxu0 0.0
    %2199 = vmatpush1.msra.mxu0 0.0
    %2200 = vmatprep.subr.mxu0 0.0
    %2201 = vmatpush1.msra.mxu0 0.0
    %2202 = vmatprep.subr.mxu0 0.0
    %2203 = vmatpush1.msra.mxu0 0.0
    %2204 = vmatprep.subr.mxu0 0.0
    %2205 = vmatpush1.msra.mxu0 0.0
    %2206 = vmatprep.subr.mxu0 0.0
    %2207 = vmatpush1.msra.mxu0 0.0
    %2208 = vmatprep.subr.mxu0 0.0
    %2209 = vmatpush1.msra.mxu0 0.0
    %2210 = vmatprep.subr.mxu0 0.0
    %2211 = vmatpush1.msra.mxu0 0.0
    %2212 = vmatprep.subr.mxu0 0.0
    %2213 = vmatpush1.msra.mxu0 0.0
    %2214 = vmatprep.subr.mxu0 0.0
    %2215 = vmatpush1.msra.mxu0 0.0
    %2216 = vmatprep.subr.mxu0 0.0
    %2217 = vmatpush1.msra.mxu0 0.0
    %2218 = vmatprep.subr.mxu0 0.0
    %2219 = vmatpush1.msra.mxu0 0.0
    %2220 = vmatprep.subr.mxu0 0.0
    %2221 = vmatpush1.msra.mxu0 0.0
    %2222 = vmatprep.subr.mxu0 0.0
    %2223 = vmatpush1.msra.mxu0 0.0
    %2224 = vmatprep.subr.mxu0 0.0
    %2225 = vmatpush1.msra.mxu0 0.0
    %2226 = vmatprep.subr.mxu0 0.0
    %2227 = vmatpush1.msra.mxu0 0.0
    %2228 = vmatprep.subr.mxu0 0.0
    %2229 = vmatpush1.msra.mxu0 0.0
    %2230 = vmatprep.subr.mxu0 0.0
    %2231 = vmatpush1.msra.mxu0 0.0
    %2232 = vmatprep.subr.mxu0 0.0
    %2233 = vmatpush1.msra.mxu0 0.0
    %2234 = vmatprep.subr.mxu0 0.0
    %2235 = vmatpush1.msra.mxu0 0.0
    %2236 = vmatprep.mubr.f32.mxu0 0.0
    %2237 = vmatmul.mubr.f32.gmra.mrb[0].mxu0 %v2170
    %v2238 = vpop.f32.mrb[0].mxu0
    %v2239 = vadd.f32 0.0, %v2238
    %v2240 = vpop.f32.mrb[0].mxu0
    %2241 = vdwg.mxu0
    %v2243 = vsel %vm127, %v1728, 0
    %2245 = vmatprep.subr.mxu0 0.0
    %2246 = vmatpush1.msra.mxu0 %v808
    %2247 = vmatprep.subr.mxu0 0.0
    %2248 = vmatpush1.msra.mxu0 0.0
    %2249 = vmatprep.subr.mxu0 0.0
    %2250 = vmatpush1.msra.mxu0 0.0
    %2251 = vmatprep.subr.mxu0 0.0
    %2252 = vmatpush1.msra.mxu0 0.0
    %2253 = vmatprep.subr.mxu0 0.0
    %2254 = vmatpush1.msra.mxu0 0.0
    %2255 = vmatprep.subr.mxu0 0.0
    %2256 = vmatpush1.msra.mxu0 0.0
    %2257 = vmatprep.subr.mxu0 0.0
    %2258 = vmatpush1.msra.mxu0 0.0
    %2259 = vmatprep.subr.mxu0 0.0
    %2260 = vmatpush1.msra.mxu0 0.0
    %2261 = vmatprep.subr.mxu0 0.0
    %2262 = vmatpush1.msra.mxu0 0.0
    %2263 = vmatprep.subr.mxu0 0.0
    %2264 = vmatpush1.msra.mxu0 0.0
    %2265 = vmatprep.subr.mxu0 0.0
    %2266 = vmatpush1.msra.mxu0 0.0
    %2267 = vmatprep.subr.mxu0 0.0
    %2268 = vmatpush1.msra.mxu0 0.0
    %2269 = vmatprep.subr.mxu0 0.0
    %2270 = vmatpush1.msra.mxu0 0.0
    %2271 = vmatprep.subr.mxu0 0.0
    %2272 = vmatpush1.msra.mxu0 0.0
    %2273 = vmatprep.subr.mxu0 0.0
    %2274 = vmatpush1.msra.mxu0 0.0
    %2275 = vmatprep.subr.mxu0 0.0
    %2276 = vmatpush1.msra.mxu0 0.0
    %2277 = vmatprep.subr.mxu0 0.0
    %2278 = vmatpush1.msra.mxu0 0.0
    %2279 = vmatprep.subr.mxu0 0.0
    %2280 = vmatpush1.msra.mxu0 0.0
    %2281 = vmatprep.subr.mxu0 0.0
    %2282 = vmatpush1.msra.mxu0 0.0
    %2283 = vmatprep.subr.mxu0 0.0
    %2284 = vmatpush1.msra.mxu0 0.0
    %2285 = vmatprep.subr.mxu0 0.0
    %2286 = vmatpush1.msra.mxu0 0.0
    %2287 = vmatprep.subr.mxu0 0.0
    %2288 = vmatpush1.msra.mxu0 0.0
    %2289 = vmatprep.subr.mxu0 0.0
    %2290 = vmatpush1.msra.mxu0 0.0
    %2291 = vmatprep.subr.mxu0 0.0
    %2292 = vmatpush1.msra.mxu0 0.0
    %2293 = vmatprep.subr.mxu0 0.0
    %2294 = vmatpush1.msra.mxu0 0.0
    %2295 = vmatprep.subr.mxu0 0.0
    %2296 = vmatpush1.msra.mxu0 0.0
    %2297 = vmatprep.subr.mxu0 0.0
    %2298 = vmatpush1.msra.mxu0 0.0
    %2299 = vmatprep.subr.mxu0 0.0
    %2300 = vmatpush1.msra.mxu0 0.0
    %2301 = vmatprep.subr.mxu0 0.0
    %2302 = vmatpush1.msra.mxu0 0.0
    %2303 = vmatprep.subr.mxu0 0.0
    %2304 = vmatpush1.msra.mxu0 0.0
    %2305 = vmatprep.subr.mxu0 0.0
    %2306 = vmatpush1.msra.mxu0 0.0
    %2307 = vmatprep.subr.mxu0 0.0
    %2308 = vmatpush1.msra.mxu0 0.0
    %2309 = vmatprep.mubr.f32.mxu0 0.0
    %2310 = vmatmul.mubr.f32.gmra.mrb[0].mxu0 %v2243
    %v2311 = vpop.f32.mrb[0].mxu0
    %v2312 = vadd.f32 0.0, %v2311
    %v2313 = vpop.f32.mrb[0].mxu0
    %2314 = vdwg.mxu0
    %v2316 = vsel %vm127, %v1801, 0
    %2318 = vmatprep.subr.mxu0 0.0
    %2319 = vmatpush1.msra.mxu0 %v813
    %2320 = vmatprep.subr.mxu0 0.0
    %2321 = vmatpush1.msra.mxu0 0.0
    %2322 = vmatprep.subr.mxu0 0.0
    %2323 = vmatpush1.msra.mxu0 0.0
    %2324 = vmatprep.subr.mxu0 0.0
    %2325 = vmatpush1.msra.mxu0 0.0
    %2326 = vmatprep.subr.mxu0 0.0
    %2327 = vmatpush1.msra.mxu0 0.0
    %2328 = vmatprep.subr.mxu0 0.0
    %2329 = vmatpush1.msra.mxu0 0.0
    %2330 = vmatprep.subr.mxu0 0.0
    %2331 = vmatpush1.msra.mxu0 0.0
    %2332 = vmatprep.subr.mxu0 0.0
    %2333 = vmatpush1.msra.mxu0 0.0
    %2334 = vmatprep.subr.mxu0 0.0
    %2335 = vmatpush1.msra.mxu0 0.0
    %2336 = vmatprep.subr.mxu0 0.0
    %2337 = vmatpush1.msra.mxu0 0.0
    %2338 = vmatprep.subr.mxu0 0.0
    %2339 = vmatpush1.msra.mxu0 0.0
    %2340 = vmatprep.subr.mxu0 0.0
    %2341 = vmatpush1.msra.mxu0 0.0
    %2342 = vmatprep.subr.mxu0 0.0
    %2343 = vmatpush1.msra.mxu0 0.0
    %2344 = vmatprep.subr.mxu0 0.0
    %2345 = vmatpush1.msra.mxu0 0.0
    %2346 = vmatprep.subr.mxu0 0.0
    %2347 = vmatpush1.msra.mxu0 0.0
    %2348 = vmatprep.subr.mxu0 0.0
    %2349 = vmatpush1.msra.mxu0 0.0
    %2350 = vmatprep.subr.mxu0 0.0
    %2351 = vmatpush1.msra.mxu0 0.0
    %2352 = vmatprep.subr.mxu0 0.0
    %2353 = vmatpush1.msra.mxu0 0.0
    %2354 = vmatprep.subr.mxu0 0.0
    %2355 = vmatpush1.msra.mxu0 0.0
    %2356 = vmatprep.subr.mxu0 0.0
    %2357 = vmatpush1.msra.mxu0 0.0
    %2358 = vmatprep.subr.mxu0 0.0
    %2359 = vmatpush1.msra.mxu0 0.0
    %2360 = vmatprep.subr.mxu0 0.0
    %2361 = vmatpush1.msra.mxu0 0.0
    %2362 = vmatprep.subr.mxu0 0.0
    %2363 = vmatpush1.msra.mxu0 0.0
    %2364 = vmatprep.subr.mxu0 0.0
    %2365 = vmatpush1.msra.mxu0 0.0
    %2366 = vmatprep.subr.mxu0 0.0
    %2367 = vmatpush1.msra.mxu0 0.0
    %2368 = vmatprep.subr.mxu0 0.0
    %2369 = vmatpush1.msra.mxu0 0.0
    %2370 = vmatprep.subr.mxu0 0.0
    %2371 = vmatpush1.msra.mxu0 0.0
    %2372 = vmatprep.subr.mxu0 0.0
    %2373 = vmatpush1.msra.mxu0 0.0
    %2374 = vmatprep.subr.mxu0 0.0
    %2375 = vmatpush1.msra.mxu0 0.0
    %2376 = vmatprep.subr.mxu0 0.0
    %2377 = vmatpush1.msra.mxu0 0.0
    %2378 = vmatprep.subr.mxu0 0.0
    %2379 = vmatpush1.msra.mxu0 0.0
    %2380 = vmatprep.subr.mxu0 0.0
    %2381 = vmatpush1.msra.mxu0 0.0
    %2382 = vmatprep.mubr.f32.mxu0 0.0
    %2383 = vmatmul.mubr.f32.gmra.mrb[0].mxu0 %v2316
    %v2384 = vpop.f32.mrb[0].mxu0
    %v2385 = vadd.f32 0.0, %v2384
    %v2386 = vpop.f32.mrb[0].mxu0
    %2387 = vdwg.mxu0
    %v2389 = vsel %vm127, %v1874, 0
    %2391 = vmatprep.subr.mxu0 0.0
    %2392 = vmatpush1.msra.mxu0 %v818
    %2393 = vmatprep.subr.mxu0 0.0
    %2394 = vmatpush1.msra.mxu0 0.0
    %2395 = vmatprep.subr.mxu0 0.0
    %2396 = vmatpush1.msra.mxu0 0.0
    %2397 = vmatprep.subr.mxu0 0.0
    %2398 = vmatpush1.msra.mxu0 0.0
    %2399 = vmatprep.subr.mxu0 0.0
    %2400 = vmatpush1.msra.mxu0 0.0
    %2401 = vmatprep.subr.mxu0 0.0
    %2402 = vmatpush1.msra.mxu0 0.0
    %2403 = vmatprep.subr.mxu0 0.0
    %2404 = vmatpush1.msra.mxu0 0.0
    %2405 = vmatprep.subr.mxu0 0.0
    %2406 = vmatpush1.msra.mxu0 0.0
    %2407 = vmatprep.subr.mxu0 0.0
    %2408 = vmatpush1.msra.mxu0 0.0
    %2409 = vmatprep.subr.mxu0 0.0
    %2410 = vmatpush1.msra.mxu0 0.0
    %2411 = vmatprep.subr.mxu0 0.0
    %2412 = vmatpush1.msra.mxu0 0.0
    %2413 = vmatprep.subr.mxu0 0.0
    %2414 = vmatpush1.msra.mxu0 0.0
    %2415 = vmatprep.subr.mxu0 0.0
    %2416 = vmatpush1.msra.mxu0 0.0
    %2417 = vmatprep.subr.mxu0 0.0
    %2418 = vmatpush1.msra.mxu0 0.0
    %2419 = vmatprep.subr.mxu0 0.0
    %2420 = vmatpush1.msra.mxu0 0.0
    %2421 = vmatprep.subr.mxu0 0.0
    %2422 = vmatpush1.msra.mxu0 0.0
    %2423 = vmatprep.subr.mxu0 0.0
    %2424 = vmatpush1.msra.mxu0 0.0
    %2425 = vmatprep.subr.mxu0 0.0
    %2426 = vmatpush1.msra.mxu0 0.0
    %2427 = vmatprep.subr.mxu0 0.0
    %2428 = vmatpush1.msra.mxu0 0.0
    %2429 = vmatprep.subr.mxu0 0.0
    %2430 = vmatpush1.msra.mxu0 0.0
    %2431 = vmatprep.subr.mxu0 0.0
    %2432 = vmatpush1.msra.mxu0 0.0
    %2433 = vmatprep.subr.mxu0 0.0
    %2434 = vmatpush1.msra.mxu0 0.0
    %2435 = vmatprep.subr.mxu0 0.0
    %2436 = vmatpush1.msra.mxu0 0.0
    %2437 = vmatprep.subr.mxu0 0.0
    %2438 = vmatpush1.msra.mxu0 0.0
    %2439 = vmatprep.subr.mxu0 0.0
    %2440 = vmatpush1.msra.mxu0 0.0
    %2441 = vmatprep.subr.mxu0 0.0
    %2442 = vmatpush1.msra.mxu0 0.0
    %2443 = vmatprep.subr.mxu0 0.0
    %2444 = vmatpush1.msra.mxu0 0.0
    %2445 = vmatprep.subr.mxu0 0.0
    %2446 = vmatpush1.msra.mxu0 0.0
    %2447 = vmatprep.subr.mxu0 0.0
    %2448 = vmatpush1.msra.mxu0 0.0
    %2449 = vmatprep.subr.mxu0 0.0
    %2450 = vmatpush1.msra.mxu0 0.0
    %2451 = vmatprep.subr.mxu0 0.0
    %2452 = vmatpush1.msra.mxu0 0.0
    %2453 = vmatprep.subr.mxu0 0.0
    %2454 = vmatpush1.msra.mxu0 0.0
    %2455 = vmatprep.mubr.f32.mxu0 0.0
    %2456 = vmatmul.mubr.f32.gmra.mrb[0].mxu0 %v2389
    %v2457 = vpop.f32.mrb[0].mxu0
    %v2458 = vadd.f32 0.0, %v2457
    %v2459 = vpop.f32.mrb[0].mxu0
    %2460 = vdwg.mxu0
    %v2462 = vsel %vm127, %v1947, 0
    %2464 = vmatprep.subr.mxu0 0.0
    %2465 = vmatpush1.msra.mxu0 %v823
    %2466 = vmatprep.subr.mxu0 0.0
    %2467 = vmatpush1.msra.mxu0 0.0
    %2468 = vmatprep.subr.mxu0 0.0
    %2469 = vmatpush1.msra.mxu0 0.0
    %2470 = vmatprep.subr.mxu0 0.0
    %2471 = vmatpush1.msra.mxu0 0.0
    %2472 = vmatprep.subr.mxu0 0.0
    %2473 = vmatpush1.msra.mxu0 0.0
    %2474 = vmatprep.subr.mxu0 0.0
    %2475 = vmatpush1.msra.mxu0 0.0
    %2476 = vmatprep.subr.mxu0 0.0
    %2477 = vmatpush1.msra.mxu0 0.0
    %2478 = vmatprep.subr.mxu0 0.0
    %2479 = vmatpush1.msra.mxu0 0.0
    %2480 = vmatprep.subr.mxu0 0.0
    %2481 = vmatpush1.msra.mxu0 0.0
    %2482 = vmatprep.subr.mxu0 0.0
    %2483 = vmatpush1.msra.mxu0 0.0
    %2484 = vmatprep.subr.mxu0 0.0
    %2485 = vmatpush1.msra.mxu0 0.0
    %2486 = vmatprep.subr.mxu0 0.0
    %2487 = vmatpush1.msra.mxu0 0.0
    %2488 = vmatprep.subr.mxu0 0.0
    %2489 = vmatpush1.msra.mxu0 0.0
    %2490 = vmatprep.subr.mxu0 0.0
    %2491 = vmatpush1.msra.mxu0 0.0
    %2492 = vmatprep.subr.mxu0 0.0
    %2493 = vmatpush1.msra.mxu0 0.0
    %2494 = vmatprep.subr.mxu0 0.0
    %2495 = vmatpush1.msra.mxu0 0.0
    %2496 = vmatprep.subr.mxu0 0.0
    %2497 = vmatpush1.msra.mxu0 0.0
    %2498 = vmatprep.subr.mxu0 0.0
    %2499 = vmatpush1.msra.mxu0 0.0
    %2500 = vmatprep.subr.mxu0 0.0
    %2501 = vmatpush1.msra.mxu0 0.0
    %2502 = vmatprep.subr.mxu0 0.0
    %2503 = vmatpush1.msra.mxu0 0.0
    %2504 = vmatprep.subr.mxu0 0.0
    %2505 = vmatpush1.msra.mxu0 0.0
    %2506 = vmatprep.subr.mxu0 0.0
    %2507 = vmatpush1.msra.mxu0 0.0
    %2508 = vmatprep.subr.mxu0 0.0
    %2509 = vmatpush1.msra.mxu0 0.0
    %2510 = vmatprep.subr.mxu0 0.0
    %2511 = vmatpush1.msra.mxu0 0.0
    %2512 = vmatprep.subr.mxu0 0.0
    %2513 = vmatpush1.msra.mxu0 0.0
    %2514 = vmatprep.subr.mxu0 0.0
    %2515 = vmatpush1.msra.mxu0 0.0
    %2516 = vmatprep.subr.mxu0 0.0
    %2517 = vmatpush1.msra.mxu0 0.0
    %2518 = vmatprep.subr.mxu0 0.0
    %2519 = vmatpush1.msra.mxu0 0.0
    %2520 = vmatprep.subr.mxu0 0.0
    %2521 = vmatpush1.msra.mxu0 0.0
    %2522 = vmatprep.subr.mxu0 0.0
    %2523 = vmatpush1.msra.mxu0 0.0
    %2524 = vmatprep.subr.mxu0 0.0
    %2525 = vmatpush1.msra.mxu0 0.0
    %2526 = vmatprep.subr.mxu0 0.0
    %2527 = vmatpush1.msra.mxu0 0.0
    %2528 = vmatprep.mubr.f32.mxu0 0.0
    %2529 = vmatmul.mubr.f32.gmra.mrb[0].mxu0 %v2462
    %v2530 = vpop.f32.mrb[0].mxu0
    %v2531 = vadd.f32 0.0, %v2530
    %v2532 = vpop.f32.mrb[0].mxu0
    %2533 = vdwg.mxu0
    %v2535 = vsel %vm127, %v2020, 0
    %2537 = vmatprep.subr.mxu0 0.0
    %2538 = vmatpush1.msra.mxu0 %v828
    %2539 = vmatprep.subr.mxu0 0.0
    %2540 = vmatpush1.msra.mxu0 0.0
    %2541 = vmatprep.subr.mxu0 0.0
    %2542 = vmatpush1.msra.mxu0 0.0
    %2543 = vmatprep.subr.mxu0 0.0
    %2544 = vmatpush1.msra.mxu0 0.0
    %2545 = vmatprep.subr.mxu0 0.0
    %2546 = vmatpush1.msra.mxu0 0.0
    %2547 = vmatprep.subr.mxu0 0.0
    %2548 = vmatpush1.msra.mxu0 0.0
    %2549 = vmatprep.subr.mxu0 0.0
    %2550 = vmatpush1.msra.mxu0 0.0
    %2551 = vmatprep.subr.mxu0 0.0
    %2552 = vmatpush1.msra.mxu0 0.0
    %2553 = vmatprep.subr.mxu0 0.0
    %2554 = vmatpush1.msra.mxu0 0.0
    %2555 = vmatprep.subr.mxu0 0.0
    %2556 = vmatpush1.msra.mxu0 0.0
    %2557 = vmatprep.subr.mxu0 0.0
    %2558 = vmatpush1.msra.mxu0 0.0
    %2559 = vmatprep.subr.mxu0 0.0
    %2560 = vmatpush1.msra.mxu0 0.0
    %2561 = vmatprep.subr.mxu0 0.0
    %2562 = vmatpush1.msra.mxu0 0.0
    %2563 = vmatprep.subr.mxu0 0.0
    %2564 = vmatpush1.msra.mxu0 0.0
    %2565 = vmatprep.subr.mxu0 0.0
    %2566 = vmatpush1.msra.mxu0 0.0
    %2567 = vmatprep.subr.mxu0 0.0
    %2568 = vmatpush1.msra.mxu0 0.0
    %2569 = vmatprep.subr.mxu0 0.0
    %2570 = vmatpush1.msra.mxu0 0.0
    %2571 = vmatprep.subr.mxu0 0.0
    %2572 = vmatpush1.msra.mxu0 0.0
    %2573 = vmatprep.subr.mxu0 0.0
    %2574 = vmatpush1.msra.mxu0 0.0
    %2575 = vmatprep.subr.mxu0 0.0
    %2576 = vmatpush1.msra.mxu0 0.0
    %2577 = vmatprep.subr.mxu0 0.0
    %2578 = vmatpush1.msra.mxu0 0.0
    %2579 = vmatprep.subr.mxu0 0.0
    %2580 = vmatpush1.msra.mxu0 0.0
    %2581 = vmatprep.subr.mxu0 0.0
    %2582 = vmatpush1.msra.mxu0 0.0
    %2583 = vmatprep.subr.mxu0 0.0
    %2584 = vmatpush1.msra.mxu0 0.0
    %2585 = vmatprep.subr.mxu0 0.0
    %2586 = vmatpush1.msra.mxu0 0.0
    %2587 = vmatprep.subr.mxu0 0.0
    %2588 = vmatpush1.msra.mxu0 0.0
    %2589 = vmatprep.subr.mxu0 0.0
    %2590 = vmatpush1.msra.mxu0 0.0
    %2591 = vmatprep.subr.mxu0 0.0
    %2592 = vmatpush1.msra.mxu0 0.0
    %2593 = vmatprep.subr.mxu0 0.0
    %2594 = vmatpush1.msra.mxu0 0.0
    %2595 = vmatprep.subr.mxu0 0.0
    %2596 = vmatpush1.msra.mxu0 0.0
    %2597 = vmatprep.subr.mxu0 0.0
    %2598 = vmatpush1.msra.mxu0 0.0
    %2599 = vmatprep.subr.mxu0 0.0
    %2600 = vmatpush1.msra.mxu0 0.0
    %2601 = vmatprep.mubr.f32.mxu0 0.0
    %2602 = vmatmul.mubr.f32.gmra.mrb[0].mxu0 %v2535
    %v2603 = vpop.f32.mrb[0].mxu0
    %v2604 = vadd.f32 0.0, %v2603
    %v2605 = vpop.f32.mrb[0].mxu0
    %2606 = vdwg.mxu0
    %v2608 = vsel %vm127, %v2093, 0
    %2610 = vmatprep.subr.mxu0 0.0
    %2611 = vmatpush1.msra.mxu0 %v833
    %2612 = vmatprep.subr.mxu0 0.0
    %2613 = vmatpush1.msra.mxu0 0.0
    %2614 = vmatprep.subr.mxu0 0.0
    %2615 = vmatpush1.msra.mxu0 0.0
    %2616 = vmatprep.subr.mxu0 0.0
    %2617 = vmatpush1.msra.mxu0 0.0
    %2618 = vmatprep.subr.mxu0 0.0
    %2619 = vmatpush1.msra.mxu0 0.0
    %2620 = vmatprep.subr.mxu0 0.0
    %2621 = vmatpush1.msra.mxu0 0.0
    %2622 = vmatprep.subr.mxu0 0.0
    %2623 = vmatpush1.msra.mxu0 0.0
    %2624 = vmatprep.subr.mxu0 0.0
    %2625 = vmatpush1.msra.mxu0 0.0
    %2626 = vmatprep.subr.mxu0 0.0
    %2627 = vmatpush1.msra.mxu0 0.0
    %2628 = vmatprep.subr.mxu0 0.0
    %2629 = vmatpush1.msra.mxu0 0.0
    %2630 = vmatprep.subr.mxu0 0.0
    %2631 = vmatpush1.msra.mxu0 0.0
    %2632 = vmatprep.subr.mxu0 0.0
    %2633 = vmatpush1.msra.mxu0 0.0
    %2634 = vmatprep.subr.mxu0 0.0
    %2635 = vmatpush1.msra.mxu0 0.0
    %2636 = vmatprep.subr.mxu0 0.0
    %2637 = vmatpush1.msra.mxu0 0.0
    %2638 = vmatprep.subr.mxu0 0.0
    %2639 = vmatpush1.msra.mxu0 0.0
    %2640 = vmatprep.subr.mxu0 0.0
    %2641 = vmatpush1.msra.mxu0 0.0
    %2642 = vmatprep.subr.mxu0 0.0
    %2643 = vmatpush1.msra.mxu0 0.0
    %2644 = vmatprep.subr.mxu0 0.0
    %2645 = vmatpush1.msra.mxu0 0.0
    %2646 = vmatprep.subr.mxu0 0.0
    %2647 = vmatpush1.msra.mxu0 0.0
    %2648 = vmatprep.subr.mxu0 0.0
    %2649 = vmatpush1.msra.mxu0 0.0
    %2650 = vmatprep.subr.mxu0 0.0
    %2651 = vmatpush1.msra.mxu0 0.0
    %2652 = vmatprep.subr.mxu0 0.0
    %2653 = vmatpush1.msra.mxu0 0.0
    %2654 = vmatprep.subr.mxu0 0.0
    %2655 = vmatpush1.msra.mxu0 0.0
    %2656 = vmatprep.subr.mxu0 0.0
    %2657 = vmatpush1.msra.mxu0 0.0
    %2658 = vmatprep.subr.mxu0 0.0
    %2659 = vmatpush1.msra.mxu0 0.0
    %2660 = vmatprep.subr.mxu0 0.0
    %2661 = vmatpush1.msra.mxu0 0.0
    %2662 = vmatprep.subr.mxu0 0.0
    %2663 = vmatpush1.msra.mxu0 0.0
    %2664 = vmatprep.subr.mxu0 0.0
    %2665 = vmatpush1.msra.mxu0 0.0
    %2666 = vmatprep.subr.mxu0 0.0
    %2667 = vmatpush1.msra.mxu0 0.0
    %2668 = vmatprep.subr.mxu0 0.0
    %2669 = vmatpush1.msra.mxu0 0.0
    %2670 = vmatprep.subr.mxu0 0.0
    %2671 = vmatpush1.msra.mxu0 0.0
    %2672 = vmatprep.subr.mxu0 0.0
    %2673 = vmatpush1.msra.mxu0 0.0
    %2674 = vmatprep.mubr.f32.mxu0 0.0
    %2675 = vmatmul.mubr.f32.gmra.mrb[0].mxu0 %v2608
    %v2676 = vpop.f32.mrb[0].mxu0
    %v2677 = vadd.f32 0.0, %v2676
    %v2678 = vpop.f32.mrb[0].mxu0
    %2679 = vdwg.mxu0
    %2680 = vxpose.xlu0.b32.start [1/16] %v798, 128
    %2681 = vxpose.xlu0.b32.cont [2/16] 0.0, 128
    %2682 = vxpose.xlu0.b32.cont [3/16] 0.0, 128
    %2683 = vxpose.xlu0.b32.cont [4/16] 0.0, 128
    %2684 = vxpose.xlu0.b32.cont [5/16] 0.0, 128
    %2685 = vxpose.xlu0.b32.cont [6/16] 0.0, 128
    %2686 = vxpose.xlu0.b32.cont [7/16] 0.0, 128
    %2687 = vxpose.xlu0.b32.cont [8/16] 0.0, 128
    %2688 = vxpose.xlu0.b32.cont [9/16] 0.0, 128
    %2689 = vxpose.xlu0.b32.cont [10/16] 0.0, 128
    %2690 = vxpose.xlu0.b32.cont [11/16] 0.0, 128
    %2691 = vxpose.xlu0.b32.cont [12/16] 0.0, 128
    %2692 = vxpose.xlu0.b32.cont [13/16] 0.0, 128
    %2693 = vxpose.xlu0.b32.cont [14/16] 0.0, 128
    %2694 = vxpose.xlu0.b32.cont [15/16] 0.0, 128
    %2695 = vxpose.xlu0.b32.end [16/16] 0.0, 128
    %v2696 = vpop.trf.xlu0
    %v2697 = vpop.trf.xlu0
    %v2698 = vpop.trf.xlu0
    %v2699 = vpop.trf.xlu0
    %v2700 = vpop.trf.xlu0
    %v2701 = vpop.trf.xlu0
    %v2702 = vpop.trf.xlu0
    %v2703 = vpop.trf.xlu0
    %v2704 = vpop.trf.xlu0
    %v2705 = vpop.trf.xlu0
    %v2706 = vpop.trf.xlu0
    %v2707 = vpop.trf.xlu0
    %v2708 = vpop.trf.xlu0
    %v2709 = vpop.trf.xlu0
    %v2710 = vpop.trf.xlu0
    %v2711 = vpop.trf.xlu0
    %2712 = vxpose.xlu0.b32.start [1/16] %v803, 128
    %2713 = vxpose.xlu0.b32.cont [2/16] 0.0, 128
    %2714 = vxpose.xlu0.b32.cont [3/16] 0.0, 128
    %2715 = vxpose.xlu0.b32.cont [4/16] 0.0, 128
    %2716 = vxpose.xlu0.b32.cont [5/16] 0.0, 128
    %2717 = vxpose.xlu0.b32.cont [6/16] 0.0, 128
    %2718 = vxpose.xlu0.b32.cont [7/16] 0.0, 128
    %2719 = vxpose.xlu0.b32.cont [8/16] 0.0, 128
    %2720 = vxpose.xlu0.b32.cont [9/16] 0.0, 128
    %2721 = vxpose.xlu0.b32.cont [10/16] 0.0, 128
    %2722 = vxpose.xlu0.b32.cont [11/16] 0.0, 128
    %2723 = vxpose.xlu0.b32.cont [12/16] 0.0, 128
    %2724 = vxpose.xlu0.b32.cont [13/16] 0.0, 128
    %2725 = vxpose.xlu0.b32.cont [14/16] 0.0, 128
    %2726 = vxpose.xlu0.b32.cont [15/16] 0.0, 128
    %2727 = vxpose.xlu0.b32.end [16/16] 0.0, 128
    %v2728 = vpop.trf.xlu0
    %v2729 = vpop.trf.xlu0
    %v2730 = vpop.trf.xlu0
    %v2731 = vpop.trf.xlu0
    %v2732 = vpop.trf.xlu0
    %v2733 = vpop.trf.xlu0
    %v2734 = vpop.trf.xlu0
    %v2735 = vpop.trf.xlu0
    %v2736 = vpop.trf.xlu0
    %v2737 = vpop.trf.xlu0
    %v2738 = vpop.trf.xlu0
    %v2739 = vpop.trf.xlu0
    %v2740 = vpop.trf.xlu0
    %v2741 = vpop.trf.xlu0
    %v2742 = vpop.trf.xlu0
    %v2743 = vpop.trf.xlu0
    %2744 = vxpose.xlu0.b32.start [1/16] %v808, 128
    %2745 = vxpose.xlu0.b32.cont [2/16] 0.0, 128
    %2746 = vxpose.xlu0.b32.cont [3/16] 0.0, 128
    %2747 = vxpose.xlu0.b32.cont [4/16] 0.0, 128
    %2748 = vxpose.xlu0.b32.cont [5/16] 0.0, 128
    %2749 = vxpose.xlu0.b32.cont [6/16] 0.0, 128
    %2750 = vxpose.xlu0.b32.cont [7/16] 0.0, 128
    %2751 = vxpose.xlu0.b32.cont [8/16] 0.0, 128
    %2752 = vxpose.xlu0.b32.cont [9/16] 0.0, 128
    %2753 = vxpose.xlu0.b32.cont [10/16] 0.0, 128
    %2754 = vxpose.xlu0.b32.cont [11/16] 0.0, 128
    %2755 = vxpose.xlu0.b32.cont [12/16] 0.0, 128
    %2756 = vxpose.xlu0.b32.cont [13/16] 0.0, 128
    %2757 = vxpose.xlu0.b32.cont [14/16] 0.0, 128
    %2758 = vxpose.xlu0.b32.cont [15/16] 0.0, 128
    %2759 = vxpose.xlu0.b32.end [16/16] 0.0, 128
    %v2760 = vpop.trf.xlu0
    %v2761 = vpop.trf.xlu0
    %v2762 = vpop.trf.xlu0
    %v2763 = vpop.trf.xlu0
    %v2764 = vpop.trf.xlu0
    %v2765 = vpop.trf.xlu0
    %v2766 = vpop.trf.xlu0
    %v2767 = vpop.trf.xlu0
    %v2768 = vpop.trf.xlu0
    %v2769 = vpop.trf.xlu0
    %v2770 = vpop.trf.xlu0
    %v2771 = vpop.trf.xlu0
    %v2772 = vpop.trf.xlu0
    %v2773 = vpop.trf.xlu0
    %v2774 = vpop.trf.xlu0
    %v2775 = vpop.trf.xlu0
    %2776 = vxpose.xlu0.b32.start [1/16] %v813, 128
    %2777 = vxpose.xlu0.b32.cont [2/16] 0.0, 128
    %2778 = vxpose.xlu0.b32.cont [3/16] 0.0, 128
    %2779 = vxpose.xlu0.b32.cont [4/16] 0.0, 128
    %2780 = vxpose.xlu0.b32.cont [5/16] 0.0, 128
    %2781 = vxpose.xlu0.b32.cont [6/16] 0.0, 128
    %2782 = vxpose.xlu0.b32.cont [7/16] 0.0, 128
    %2783 = vxpose.xlu0.b32.cont [8/16] 0.0, 128
    %2784 = vxpose.xlu0.b32.cont [9/16] 0.0, 128
    %2785 = vxpose.xlu0.b32.cont [10/16] 0.0, 128
    %2786 = vxpose.xlu0.b32.cont [11/16] 0.0, 128
    %2787 = vxpose.xlu0.b32.cont [12/16] 0.0, 128
    %2788 = vxpose.xlu0.b32.cont [13/16] 0.0, 128
    %2789 = vxpose.xlu0.b32.cont [14/16] 0.0, 128
    %2790 = vxpose.xlu0.b32.cont [15/16] 0.0, 128
    %2791 = vxpose.xlu0.b32.end [16/16] 0.0, 128
    %v2792 = vpop.trf.xlu0
    %v2793 = vpop.trf.xlu0
    %v2794 = vpop.trf.xlu0
    %v2795 = vpop.trf.xlu0
    %v2796 = vpop.trf.xlu0
    %v2797 = vpop.trf.xlu0
    %v2798 = vpop.trf.xlu0
    %v2799 = vpop.trf.xlu0
    %v2800 = vpop.trf.xlu0
    %v2801 = vpop.trf.xlu0
    %v2802 = vpop.trf.xlu0
    %v2803 = vpop.trf.xlu0
    %v2804 = vpop.trf.xlu0
    %v2805 = vpop.trf.xlu0
    %v2806 = vpop.trf.xlu0
    %v2807 = vpop.trf.xlu0
    %2808 = vxpose.xlu0.b32.start [1/16] %v818, 128
    %2809 = vxpose.xlu0.b32.cont [2/16] 0.0, 128
    %2810 = vxpose.xlu0.b32.cont [3/16] 0.0, 128
    %2811 = vxpose.xlu0.b32.cont [4/16] 0.0, 128
    %2812 = vxpose.xlu0.b32.cont [5/16] 0.0, 128
    %2813 = vxpose.xlu0.b32.cont [6/16] 0.0, 128
    %2814 = vxpose.xlu0.b32.cont [7/16] 0.0, 128
    %2815 = vxpose.xlu0.b32.cont [8/16] 0.0, 128
    %2816 = vxpose.xlu0.b32.cont [9/16] 0.0, 128
    %2817 = vxpose.xlu0.b32.cont [10/16] 0.0, 128
    %2818 = vxpose.xlu0.b32.cont [11/16] 0.0, 128
    %2819 = vxpose.xlu0.b32.cont [12/16] 0.0, 128
    %2820 = vxpose.xlu0.b32.cont [13/16] 0.0, 128
    %2821 = vxpose.xlu0.b32.cont [14/16] 0.0, 128
    %2822 = vxpose.xlu0.b32.cont [15/16] 0.0, 128
    %2823 = vxpose.xlu0.b32.end [16/16] 0.0, 128
    %v2824 = vpop.trf.xlu0
    %v2825 = vpop.trf.xlu0
    %v2826 = vpop.trf.xlu0
    %v2827 = vpop.trf.xlu0
    %v2828 = vpop.trf.xlu0
    %v2829 = vpop.trf.xlu0
    %v2830 = vpop.trf.xlu0
    %v2831 = vpop.trf.xlu0
    %v2832 = vpop.trf.xlu0
    %v2833 = vpop.trf.xlu0
    %v2834 = vpop.trf.xlu0
    %v2835 = vpop.trf.xlu0
    %v2836 = vpop.trf.xlu0
    %v2837 = vpop.trf.xlu0
    %v2838 = vpop.trf.xlu0
    %v2839 = vpop.trf.xlu0
    %2840 = vxpose.xlu0.b32.start [1/16] %v823, 128
    %2841 = vxpose.xlu0.b32.cont [2/16] 0.0, 128
    %2842 = vxpose.xlu0.b32.cont [3/16] 0.0, 128
    %2843 = vxpose.xlu0.b32.cont [4/16] 0.0, 128
    %2844 = vxpose.xlu0.b32.cont [5/16] 0.0, 128
    %2845 = vxpose.xlu0.b32.cont [6/16] 0.0, 128
    %2846 = vxpose.xlu0.b32.cont [7/16] 0.0, 128
    %2847 = vxpose.xlu0.b32.cont [8/16] 0.0, 128
    %2848 = vxpose.xlu0.b32.cont [9/16] 0.0, 128
    %2849 = vxpose.xlu0.b32.cont [10/16] 0.0, 128
    %2850 = vxpose.xlu0.b32.cont [11/16] 0.0, 128
    %2851 = vxpose.xlu0.b32.cont [12/16] 0.0, 128
    %2852 = vxpose.xlu0.b32.cont [13/16] 0.0, 128
    %2853 = vxpose.xlu0.b32.cont [14/16] 0.0, 128
    %2854 = vxpose.xlu0.b32.cont [15/16] 0.0, 128
    %2855 = vxpose.xlu0.b32.end [16/16] 0.0, 128
    %v2856 = vpop.trf.xlu0
    %v2857 = vpop.trf.xlu0
    %v2858 = vpop.trf.xlu0
    %v2859 = vpop.trf.xlu0
    %v2860 = vpop.trf.xlu0
    %v2861 = vpop.trf.xlu0
    %v2862 = vpop.trf.xlu0
    %v2863 = vpop.trf.xlu0
    %v2864 = vpop.trf.xlu0
    %v2865 = vpop.trf.xlu0
    %v2866 = vpop.trf.xlu0
    %v2867 = vpop.trf.xlu0
    %v2868 = vpop.trf.xlu0
    %v2869 = vpop.trf.xlu0
    %v2870 = vpop.trf.xlu0
    %v2871 = vpop.trf.xlu0
    %2872 = vxpose.xlu0.b32.start [1/16] %v828, 128
    %2873 = vxpose.xlu0.b32.cont [2/16] 0.0, 128
    %2874 = vxpose.xlu0.b32.cont [3/16] 0.0, 128
    %2875 = vxpose.xlu0.b32.cont [4/16] 0.0, 128
    %2876 = vxpose.xlu0.b32.cont [5/16] 0.0, 128
    %2877 = vxpose.xlu0.b32.cont [6/16] 0.0, 128
    %2878 = vxpose.xlu0.b32.cont [7/16] 0.0, 128
    %2879 = vxpose.xlu0.b32.cont [8/16] 0.0, 128
    %2880 = vxpose.xlu0.b32.cont [9/16] 0.0, 128
    %2881 = vxpose.xlu0.b32.cont [10/16] 0.0, 128
    %2882 = vxpose.xlu0.b32.cont [11/16] 0.0, 128
    %2883 = vxpose.xlu0.b32.cont [12/16] 0.0, 128
    %2884 = vxpose.xlu0.b32.cont [13/16] 0.0, 128
    %2885 = vxpose.xlu0.b32.cont [14/16] 0.0, 128
    %2886 = vxpose.xlu0.b32.cont [15/16] 0.0, 128
    %2887 = vxpose.xlu0.b32.end [16/16] 0.0, 128
    %v2888 = vpop.trf.xlu0
    %v2889 = vpop.trf.xlu0
    %v2890 = vpop.trf.xlu0
    %v2891 = vpop.trf.xlu0
    %v2892 = vpop.trf.xlu0
    %v2893 = vpop.trf.xlu0
    %v2894 = vpop.trf.xlu0
    %v2895 = vpop.trf.xlu0
    %v2896 = vpop.trf.xlu0
    %v2897 = vpop.trf.xlu0
    %v2898 = vpop.trf.xlu0
    %v2899 = vpop.trf.xlu0
    %v2900 = vpop.trf.xlu0
    %v2901 = vpop.trf.xlu0
    %v2902 = vpop.trf.xlu0
    %v2903 = vpop.trf.xlu0
    %2904 = vxpose.xlu0.b32.start [1/16] %v833, 128
    %2905 = vxpose.xlu0.b32.cont [2/16] 0.0, 128
    %2906 = vxpose.xlu0.b32.cont [3/16] 0.0, 128
    %2907 = vxpose.xlu0.b32.cont [4/16] 0.0, 128
    %2908 = vxpose.xlu0.b32.cont [5/16] 0.0, 128
    %2909 = vxpose.xlu0.b32.cont [6/16] 0.0, 128
    %2910 = vxpose.xlu0.b32.cont [7/16] 0.0, 128
    %2911 = vxpose.xlu0.b32.cont [8/16] 0.0, 128
    %2912 = vxpose.xlu0.b32.cont [9/16] 0.0, 128
    %2913 = vxpose.xlu0.b32.cont [10/16] 0.0, 128
    %2914 = vxpose.xlu0.b32.cont [11/16] 0.0, 128
    %2915 = vxpose.xlu0.b32.cont [12/16] 0.0, 128
    %2916 = vxpose.xlu0.b32.cont [13/16] 0.0, 128
    %2917 = vxpose.xlu0.b32.cont [14/16] 0.0, 128
    %2918 = vxpose.xlu0.b32.cont [15/16] 0.0, 128
    %2919 = vxpose.xlu0.b32.end [16/16] 0.0, 128
    %v2920 = vpop.trf.xlu0
    %v2921 = vpop.trf.xlu0
    %v2922 = vpop.trf.xlu0
    %v2923 = vpop.trf.xlu0
    %v2924 = vpop.trf.xlu0
    %v2925 = vpop.trf.xlu0
    %v2926 = vpop.trf.xlu0
    %v2927 = vpop.trf.xlu0
    %v2928 = vpop.trf.xlu0
    %v2929 = vpop.trf.xlu0
    %v2930 = vpop.trf.xlu0
    %v2931 = vpop.trf.xlu0
    %v2932 = vpop.trf.xlu0
    %v2933 = vpop.trf.xlu0
    %v2934 = vpop.trf.xlu0
    %v2935 = vpop.trf.xlu0
    %2936 = vxpose.xlu0.b32.start [1/16] %v998, 128
    %2937 = vxpose.xlu0.b32.cont [2/16] 0.0, 128
    %2938 = vxpose.xlu0.b32.cont [3/16] 0.0, 128
    %2939 = vxpose.xlu0.b32.cont [4/16] 0.0, 128
    %2940 = vxpose.xlu0.b32.cont [5/16] 0.0, 128
    %2941 = vxpose.xlu0.b32.cont [6/16] 0.0, 128
    %2942 = vxpose.xlu0.b32.cont [7/16] 0.0, 128
    %2943 = vxpose.xlu0.b32.cont [8/16] 0.0, 128
    %2944 = vxpose.xlu0.b32.cont [9/16] 0.0, 128
    %2945 = vxpose.xlu0.b32.cont [10/16] 0.0, 128
    %2946 = vxpose.xlu0.b32.cont [11/16] 0.0, 128
    %2947 = vxpose.xlu0.b32.cont [12/16] 0.0, 128
    %2948 = vxpose.xlu0.b32.cont [13/16] 0.0, 128
    %2949 = vxpose.xlu0.b32.cont [14/16] 0.0, 128
    %2950 = vxpose.xlu0.b32.cont [15/16] 0.0, 128
    %2951 = vxpose.xlu0.b32.end [16/16] 0.0, 128
    %v2952 = vpop.trf.xlu0
    %v2953 = vpop.trf.xlu0
    %v2954 = vpop.trf.xlu0
    %v2955 = vpop.trf.xlu0
    %v2956 = vpop.trf.xlu0
    %v2957 = vpop.trf.xlu0
    %v2958 = vpop.trf.xlu0
    %v2959 = vpop.trf.xlu0
    %v2960 = vpop.trf.xlu0
    %v2961 = vpop.trf.xlu0
    %v2962 = vpop.trf.xlu0
    %v2963 = vpop.trf.xlu0
    %v2964 = vpop.trf.xlu0
    %v2965 = vpop.trf.xlu0
    %v2966 = vpop.trf.xlu0
    %v2967 = vpop.trf.xlu0
    %2968 = vxpose.xlu0.b32.start [1/16] %v1071, 128
    %2969 = vxpose.xlu0.b32.cont [2/16] 0.0, 128
    %2970 = vxpose.xlu0.b32.cont [3/16] 0.0, 128
    %2971 = vxpose.xlu0.b32.cont [4/16] 0.0, 128
    %2972 = vxpose.xlu0.b32.cont [5/16] 0.0, 128
    %2973 = vxpose.xlu0.b32.cont [6/16] 0.0, 128
    %2974 = vxpose.xlu0.b32.cont [7/16] 0.0, 128
    %2975 = vxpose.xlu0.b32.cont [8/16] 0.0, 128
    %2976 = vxpose.xlu0.b32.cont [9/16] 0.0, 128
    %2977 = vxpose.xlu0.b32.cont [10/16] 0.0, 128
    %2978 = vxpose.xlu0.b32.cont [11/16] 0.0, 128
    %2979 = vxpose.xlu0.b32.cont [12/16] 0.0, 128
    %2980 = vxpose.xlu0.b32.cont [13/16] 0.0, 128
    %2981 = vxpose.xlu0.b32.cont [14/16] 0.0, 128
    %2982 = vxpose.xlu0.b32.cont [15/16] 0.0, 128
    %2983 = vxpose.xlu0.b32.end [16/16] 0.0, 128
    %v2984 = vpop.trf.xlu0
    %v2985 = vpop.trf.xlu0
    %v2986 = vpop.trf.xlu0
    %v2987 = vpop.trf.xlu0
    %v2988 = vpop.trf.xlu0
    %v2989 = vpop.trf.xlu0
    %v2990 = vpop.trf.xlu0
    %v2991 = vpop.trf.xlu0
    %v2992 = vpop.trf.xlu0
    %v2993 = vpop.trf.xlu0
    %v2994 = vpop.trf.xlu0
    %v2995 = vpop.trf.xlu0
    %v2996 = vpop.trf.xlu0
    %v2997 = vpop.trf.xlu0
    %v2998 = vpop.trf.xlu0
    %v2999 = vpop.trf.xlu0
    %3000 = vxpose.xlu0.b32.start [1/16] %v1144, 128
    %3001 = vxpose.xlu0.b32.cont [2/16] 0.0, 128
    %3002 = vxpose.xlu0.b32.cont [3/16] 0.0, 128
    %3003 = vxpose.xlu0.b32.cont [4/16] 0.0, 128
    %3004 = vxpose.xlu0.b32.cont [5/16] 0.0, 128
    %3005 = vxpose.xlu0.b32.cont [6/16] 0.0, 128
    %3006 = vxpose.xlu0.b32.cont [7/16] 0.0, 128
    %3007 = vxpose.xlu0.b32.cont [8/16] 0.0, 128
    %3008 = vxpose.xlu0.b32.cont [9/16] 0.0, 128
    %3009 = vxpose.xlu0.b32.cont [10/16] 0.0, 128
    %3010 = vxpose.xlu0.b32.cont [11/16] 0.0, 128
    %3011 = vxpose.xlu0.b32.cont [12/16] 0.0, 128
    %3012 = vxpose.xlu0.b32.cont [13/16] 0.0, 128
    %3013 = vxpose.xlu0.b32.cont [14/16] 0.0, 128
    %3014 = vxpose.xlu0.b32.cont [15/16] 0.0, 128
    %3015 = vxpose.xlu0.b32.end [16/16] 0.0, 128
    %v3016 = vpop.trf.xlu0
    %v3017 = vpop.trf.xlu0
    %v3018 = vpop.trf.xlu0
    %v3019 = vpop.trf.xlu0
    %v3020 = vpop.trf.xlu0
    %v3021 = vpop.trf.xlu0
    %v3022 = vpop.trf.xlu0
    %v3023 = vpop.trf.xlu0
    %v3024 = vpop.trf.xlu0
    %v3025 = vpop.trf.xlu0
    %v3026 = vpop.trf.xlu0
    %v3027 = vpop.trf.xlu0
    %v3028 = vpop.trf.xlu0
    %v3029 = vpop.trf.xlu0
    %v3030 = vpop.trf.xlu0
    %v3031 = vpop.trf.xlu0
    %3032 = vxpose.xlu0.b32.start [1/16] %v1217, 128
    %3033 = vxpose.xlu0.b32.cont [2/16] 0.0, 128
    %3034 = vxpose.xlu0.b32.cont [3/16] 0.0, 128
    %3035 = vxpose.xlu0.b32.cont [4/16] 0.0, 128
    %3036 = vxpose.xlu0.b32.cont [5/16] 0.0, 128
    %3037 = vxpose.xlu0.b32.cont [6/16] 0.0, 128
    %3038 = vxpose.xlu0.b32.cont [7/16] 0.0, 128
    %3039 = vxpose.xlu0.b32.cont [8/16] 0.0, 128
    %3040 = vxpose.xlu0.b32.cont [9/16] 0.0, 128
    %3041 = vxpose.xlu0.b32.cont [10/16] 0.0, 128
    %3042 = vxpose.xlu0.b32.cont [11/16] 0.0, 128
    %3043 = vxpose.xlu0.b32.cont [12/16] 0.0, 128
    %3044 = vxpose.xlu0.b32.cont [13/16] 0.0, 128
    %3045 = vxpose.xlu0.b32.cont [14/16] 0.0, 128
    %3046 = vxpose.xlu0.b32.cont [15/16] 0.0, 128
    %3047 = vxpose.xlu0.b32.end [16/16] 0.0, 128
    %v3048 = vpop.trf.xlu0
    %v3049 = vpop.trf.xlu0
    %v3050 = vpop.trf.xlu0
    %v3051 = vpop.trf.xlu0
    %v3052 = vpop.trf.xlu0
    %v3053 = vpop.trf.xlu0
    %v3054 = vpop.trf.xlu0
    %v3055 = vpop.trf.xlu0
    %v3056 = vpop.trf.xlu0
    %v3057 = vpop.trf.xlu0
    %v3058 = vpop.trf.xlu0
    %v3059 = vpop.trf.xlu0
    %v3060 = vpop.trf.xlu0
    %v3061 = vpop.trf.xlu0
    %v3062 = vpop.trf.xlu0
    %v3063 = vpop.trf.xlu0
    %3064 = vxpose.xlu0.b32.start [1/16] %v1290, 128
    %3065 = vxpose.xlu0.b32.cont [2/16] 0.0, 128
    %3066 = vxpose.xlu0.b32.cont [3/16] 0.0, 128
    %3067 = vxpose.xlu0.b32.cont [4/16] 0.0, 128
    %3068 = vxpose.xlu0.b32.cont [5/16] 0.0, 128
    %3069 = vxpose.xlu0.b32.cont [6/16] 0.0, 128
    %3070 = vxpose.xlu0.b32.cont [7/16] 0.0, 128
    %3071 = vxpose.xlu0.b32.cont [8/16] 0.0, 128
    %3072 = vxpose.xlu0.b32.cont [9/16] 0.0, 128
    %3073 = vxpose.xlu0.b32.cont [10/16] 0.0, 128
    %3074 = vxpose.xlu0.b32.cont [11/16] 0.0, 128
    %3075 = vxpose.xlu0.b32.cont [12/16] 0.0, 128
    %3076 = vxpose.xlu0.b32.cont [13/16] 0.0, 128
    %3077 = vxpose.xlu0.b32.cont [14/16] 0.0, 128
    %3078 = vxpose.xlu0.b32.cont [15/16] 0.0, 128
    %3079 = vxpose.xlu0.b32.end [16/16] 0.0, 128
    %v3080 = vpop.trf.xlu0
    %v3081 = vpop.trf.xlu0
    %v3082 = vpop.trf.xlu0
    %v3083 = vpop.trf.xlu0
    %v3084 = vpop.trf.xlu0
    %v3085 = vpop.trf.xlu0
    %v3086 = vpop.trf.xlu0
    %v3087 = vpop.trf.xlu0
    %v3088 = vpop.trf.xlu0
    %v3089 = vpop.trf.xlu0
    %v3090 = vpop.trf.xlu0
    %v3091 = vpop.trf.xlu0
    %v3092 = vpop.trf.xlu0
    %v3093 = vpop.trf.xlu0
    %v3094 = vpop.trf.xlu0
    %v3095 = vpop.trf.xlu0
    %3096 = vxpose.xlu0.b32.start [1/16] %v1363, 128
    %3097 = vxpose.xlu0.b32.cont [2/16] 0.0, 128
    %3098 = vxpose.xlu0.b32.cont [3/16] 0.0, 128
    %3099 = vxpose.xlu0.b32.cont [4/16] 0.0, 128
    %3100 = vxpose.xlu0.b32.cont [5/16] 0.0, 128
    %3101 = vxpose.xlu0.b32.cont [6/16] 0.0, 128
    %3102 = vxpose.xlu0.b32.cont [7/16] 0.0, 128
    %3103 = vxpose.xlu0.b32.cont [8/16] 0.0, 128
    %3104 = vxpose.xlu0.b32.cont [9/16] 0.0, 128
    %3105 = vxpose.xlu0.b32.cont [10/16] 0.0, 128
    %3106 = vxpose.xlu0.b32.cont [11/16] 0.0, 128
    %3107 = vxpose.xlu0.b32.cont [12/16] 0.0, 128
    %3108 = vxpose.xlu0.b32.cont [13/16] 0.0, 128
    %3109 = vxpose.xlu0.b32.cont [14/16] 0.0, 128
    %3110 = vxpose.xlu0.b32.cont [15/16] 0.0, 128
    %3111 = vxpose.xlu0.b32.end [16/16] 0.0, 128
    %v3112 = vpop.trf.xlu0
    %v3113 = vpop.trf.xlu0
    %v3114 = vpop.trf.xlu0
    %v3115 = vpop.trf.xlu0
    %v3116 = vpop.trf.xlu0
    %v3117 = vpop.trf.xlu0
    %v3118 = vpop.trf.xlu0
    %v3119 = vpop.trf.xlu0
    %v3120 = vpop.trf.xlu0
    %v3121 = vpop.trf.xlu0
    %v3122 = vpop.trf.xlu0
    %v3123 = vpop.trf.xlu0
    %v3124 = vpop.trf.xlu0
    %v3125 = vpop.trf.xlu0
    %v3126 = vpop.trf.xlu0
    %v3127 = vpop.trf.xlu0
    %3128 = vxpose.xlu0.b32.start [1/16] %v1436, 128
    %3129 = vxpose.xlu0.b32.cont [2/16] 0.0, 128
    %3130 = vxpose.xlu0.b32.cont [3/16] 0.0, 128
    %3131 = vxpose.xlu0.b32.cont [4/16] 0.0, 128
    %3132 = vxpose.xlu0.b32.cont [5/16] 0.0, 128
    %3133 = vxpose.xlu0.b32.cont [6/16] 0.0, 128
    %3134 = vxpose.xlu0.b32.cont [7/16] 0.0, 128
    %3135 = vxpose.xlu0.b32.cont [8/16] 0.0, 128
    %3136 = vxpose.xlu0.b32.cont [9/16] 0.0, 128
    %3137 = vxpose.xlu0.b32.cont [10/16] 0.0, 128
    %3138 = vxpose.xlu0.b32.cont [11/16] 0.0, 128
    %3139 = vxpose.xlu0.b32.cont [12/16] 0.0, 128
    %3140 = vxpose.xlu0.b32.cont [13/16] 0.0, 128
    %3141 = vxpose.xlu0.b32.cont [14/16] 0.0, 128
    %3142 = vxpose.xlu0.b32.cont [15/16] 0.0, 128
    %3143 = vxpose.xlu0.b32.end [16/16] 0.0, 128
    %v3144 = vpop.trf.xlu0
    %v3145 = vpop.trf.xlu0
    %v3146 = vpop.trf.xlu0
    %v3147 = vpop.trf.xlu0
    %v3148 = vpop.trf.xlu0
    %v3149 = vpop.trf.xlu0
    %v3150 = vpop.trf.xlu0
    %v3151 = vpop.trf.xlu0
    %v3152 = vpop.trf.xlu0
    %v3153 = vpop.trf.xlu0
    %v3154 = vpop.trf.xlu0
    %v3155 = vpop.trf.xlu0
    %v3156 = vpop.trf.xlu0
    %v3157 = vpop.trf.xlu0
    %v3158 = vpop.trf.xlu0
    %v3159 = vpop.trf.xlu0
    %3160 = vxpose.xlu0.b32.start [1/16] %v1509, 128
    %3161 = vxpose.xlu0.b32.cont [2/16] 0.0, 128
    %3162 = vxpose.xlu0.b32.cont [3/16] 0.0, 128
    %3163 = vxpose.xlu0.b32.cont [4/16] 0.0, 128
    %3164 = vxpose.xlu0.b32.cont [5/16] 0.0, 128
    %3165 = vxpose.xlu0.b32.cont [6/16] 0.0, 128
    %3166 = vxpose.xlu0.b32.cont [7/16] 0.0, 128
    %3167 = vxpose.xlu0.b32.cont [8/16] 0.0, 128
    %3168 = vxpose.xlu0.b32.cont [9/16] 0.0, 128
    %3169 = vxpose.xlu0.b32.cont [10/16] 0.0, 128
    %3170 = vxpose.xlu0.b32.cont [11/16] 0.0, 128
    %3171 = vxpose.xlu0.b32.cont [12/16] 0.0, 128
    %3172 = vxpose.xlu0.b32.cont [13/16] 0.0, 128
    %3173 = vxpose.xlu0.b32.cont [14/16] 0.0, 128
    %3174 = vxpose.xlu0.b32.cont [15/16] 0.0, 128
    %3175 = vxpose.xlu0.b32.end [16/16] 0.0, 128
    %v3176 = vpop.trf.xlu0
    %v3177 = vpop.trf.xlu0
    %v3178 = vpop.trf.xlu0
    %v3179 = vpop.trf.xlu0
    %v3180 = vpop.trf.xlu0
    %v3181 = vpop.trf.xlu0
    %v3182 = vpop.trf.xlu0
    %v3183 = vpop.trf.xlu0
    %v3184 = vpop.trf.xlu0
    %v3185 = vpop.trf.xlu0
    %v3186 = vpop.trf.xlu0
    %v3187 = vpop.trf.xlu0
    %v3188 = vpop.trf.xlu0
    %v3189 = vpop.trf.xlu0
    %v3190 = vpop.trf.xlu0
    %v3191 = vpop.trf.xlu0
    %3192 = vxpose.xlu0.b32.start [1/16] %v1582, 128
    %3193 = vxpose.xlu0.b32.cont [2/16] 0.0, 128
    %3194 = vxpose.xlu0.b32.cont [3/16] 0.0, 128
    %3195 = vxpose.xlu0.b32.cont [4/16] 0.0, 128
    %3196 = vxpose.xlu0.b32.cont [5/16] 0.0, 128
    %3197 = vxpose.xlu0.b32.cont [6/16] 0.0, 128
    %3198 = vxpose.xlu0.b32.cont [7/16] 0.0, 128
    %3199 = vxpose.xlu0.b32.cont [8/16] 0.0, 128
    %3200 = vxpose.xlu0.b32.cont [9/16] 0.0, 128
    %3201 = vxpose.xlu0.b32.cont [10/16] 0.0, 128
    %3202 = vxpose.xlu0.b32.cont [11/16] 0.0, 128
    %3203 = vxpose.xlu0.b32.cont [12/16] 0.0, 128
    %3204 = vxpose.xlu0.b32.cont [13/16] 0.0, 128
    %3205 = vxpose.xlu0.b32.cont [14/16] 0.0, 128
    %3206 = vxpose.xlu0.b32.cont [15/16] 0.0, 128
    %3207 = vxpose.xlu0.b32.end [16/16] 0.0, 128
    %v3208 = vpop.trf.xlu0
    %v3209 = vpop.trf.xlu0
    %v3210 = vpop.trf.xlu0
    %v3211 = vpop.trf.xlu0
    %v3212 = vpop.trf.xlu0
    %v3213 = vpop.trf.xlu0
    %v3214 = vpop.trf.xlu0
    %v3215 = vpop.trf.xlu0
    %v3216 = vpop.trf.xlu0
    %v3217 = vpop.trf.xlu0
    %v3218 = vpop.trf.xlu0
    %v3219 = vpop.trf.xlu0
    %v3220 = vpop.trf.xlu0
    %v3221 = vpop.trf.xlu0
    %v3222 = vpop.trf.xlu0
    %v3223 = vpop.trf.xlu0
    %3224 = vxpose.xlu0.b32.start [1/16] %v1655, 128
    %3225 = vxpose.xlu0.b32.cont [2/16] 0.0, 128
    %3226 = vxpose.xlu0.b32.cont [3/16] 0.0, 128
    %3227 = vxpose.xlu0.b32.cont [4/16] 0.0, 128
    %3228 = vxpose.xlu0.b32.cont [5/16] 0.0, 128
    %3229 = vxpose.xlu0.b32.cont [6/16] 0.0, 128
    %3230 = vxpose.xlu0.b32.cont [7/16] 0.0, 128
    %3231 = vxpose.xlu0.b32.cont [8/16] 0.0, 128
    %3232 = vxpose.xlu0.b32.cont [9/16] 0.0, 128
    %3233 = vxpose.xlu0.b32.cont [10/16] 0.0, 128
    %3234 = vxpose.xlu0.b32.cont [11/16] 0.0, 128
    %3235 = vxpose.xlu0.b32.cont [12/16] 0.0, 128
    %3236 = vxpose.xlu0.b32.cont [13/16] 0.0, 128
    %3237 = vxpose.xlu0.b32.cont [14/16] 0.0, 128
    %3238 = vxpose.xlu0.b32.cont [15/16] 0.0, 128
    %3239 = vxpose.xlu0.b32.end [16/16] 0.0, 128
    %v3240 = vpop.trf.xlu0
    %v3241 = vpop.trf.xlu0
    %v3242 = vpop.trf.xlu0
    %v3243 = vpop.trf.xlu0
    %v3244 = vpop.trf.xlu0
    %v3245 = vpop.trf.xlu0
    %v3246 = vpop.trf.xlu0
    %v3247 = vpop.trf.xlu0
    %v3248 = vpop.trf.xlu0
    %v3249 = vpop.trf.xlu0
    %v3250 = vpop.trf.xlu0
    %v3251 = vpop.trf.xlu0
    %v3252 = vpop.trf.xlu0
    %v3253 = vpop.trf.xlu0
    %v3254 = vpop.trf.xlu0
    %v3255 = vpop.trf.xlu0
    %3256 = vxpose.xlu0.b32.start [1/16] %v1728, 128
    %3257 = vxpose.xlu0.b32.cont [2/16] 0.0, 128
    %3258 = vxpose.xlu0.b32.cont [3/16] 0.0, 128
    %3259 = vxpose.xlu0.b32.cont [4/16] 0.0, 128
    %3260 = vxpose.xlu0.b32.cont [5/16] 0.0, 128
    %3261 = vxpose.xlu0.b32.cont [6/16] 0.0, 128
    %3262 = vxpose.xlu0.b32.cont [7/16] 0.0, 128
    %3263 = vxpose.xlu0.b32.cont [8/16] 0.0, 128
    %3264 = vxpose.xlu0.b32.cont [9/16] 0.0, 128
    %3265 = vxpose.xlu0.b32.cont [10/16] 0.0, 128
    %3266 = vxpose.xlu0.b32.cont [11/16] 0.0, 128
    %3267 = vxpose.xlu0.b32.cont [12/16] 0.0, 128
    %3268 = vxpose.xlu0.b32.cont [13/16] 0.0, 128
    %3269 = vxpose.xlu0.b32.cont [14/16] 0.0, 128
    %3270 = vxpose.xlu0.b32.cont [15/16] 0.0, 128
    %3271 = vxpose.xlu0.b32.end [16/16] 0.0, 128
    %v3272 = vpop.trf.xlu0
    %v3273 = vpop.trf.xlu0
    %v3274 = vpop.trf.xlu0
    %v3275 = vpop.trf.xlu0
    %v3276 = vpop.trf.xlu0
    %v3277 = vpop.trf.xlu0
    %v3278 = vpop.trf.xlu0
    %v3279 = vpop.trf.xlu0
    %v3280 = vpop.trf.xlu0
    %v3281 = vpop.trf.xlu0
    %v3282 = vpop.trf.xlu0
    %v3283 = vpop.trf.xlu0
    %v3284 = vpop.trf.xlu0
    %v3285 = vpop.trf.xlu0
    %v3286 = vpop.trf.xlu0
    %v3287 = vpop.trf.xlu0
    %3288 = vxpose.xlu0.b32.start [1/16] %v1801, 128
    %3289 = vxpose.xlu0.b32.cont [2/16] 0.0, 128
    %3290 = vxpose.xlu0.b32.cont [3/16] 0.0, 128
    %3291 = vxpose.xlu0.b32.cont [4/16] 0.0, 128
    %3292 = vxpose.xlu0.b32.cont [5/16] 0.0, 128
    %3293 = vxpose.xlu0.b32.cont [6/16] 0.0, 128
    %3294 = vxpose.xlu0.b32.cont [7/16] 0.0, 128
    %3295 = vxpose.xlu0.b32.cont [8/16] 0.0, 128
    %3296 = vxpose.xlu0.b32.cont [9/16] 0.0, 128
    %3297 = vxpose.xlu0.b32.cont [10/16] 0.0, 128
    %3298 = vxpose.xlu0.b32.cont [11/16] 0.0, 128
    %3299 = vxpose.xlu0.b32.cont [12/16] 0.0, 128
    %3300 = vxpose.xlu0.b32.cont [13/16] 0.0, 128
    %3301 = vxpose.xlu0.b32.cont [14/16] 0.0, 128
    %3302 = vxpose.xlu0.b32.cont [15/16] 0.0, 128
    %3303 = vxpose.xlu0.b32.end [16/16] 0.0, 128
    %v3304 = vpop.trf.xlu0
    %v3305 = vpop.trf.xlu0
    %v3306 = vpop.trf.xlu0
    %v3307 = vpop.trf.xlu0
    %v3308 = vpop.trf.xlu0
    %v3309 = vpop.trf.xlu0
    %v3310 = vpop.trf.xlu0
    %v3311 = vpop.trf.xlu0
    %v3312 = vpop.trf.xlu0
    %v3313 = vpop.trf.xlu0
    %v3314 = vpop.trf.xlu0
    %v3315 = vpop.trf.xlu0
    %v3316 = vpop.trf.xlu0
    %v3317 = vpop.trf.xlu0
    %v3318 = vpop.trf.xlu0
    %v3319 = vpop.trf.xlu0
    %3320 = vxpose.xlu0.b32.start [1/16] %v1874, 128
    %3321 = vxpose.xlu0.b32.cont [2/16] 0.0, 128
    %3322 = vxpose.xlu0.b32.cont [3/16] 0.0, 128
    %3323 = vxpose.xlu0.b32.cont [4/16] 0.0, 128
    %3324 = vxpose.xlu0.b32.cont [5/16] 0.0, 128
    %3325 = vxpose.xlu0.b32.cont [6/16] 0.0, 128
    %3326 = vxpose.xlu0.b32.cont [7/16] 0.0, 128
    %3327 = vxpose.xlu0.b32.cont [8/16] 0.0, 128
    %3328 = vxpose.xlu0.b32.cont [9/16] 0.0, 128
    %3329 = vxpose.xlu0.b32.cont [10/16] 0.0, 128
    %3330 = vxpose.xlu0.b32.cont [11/16] 0.0, 128
    %3331 = vxpose.xlu0.b32.cont [12/16] 0.0, 128
    %3332 = vxpose.xlu0.b32.cont [13/16] 0.0, 128
    %3333 = vxpose.xlu0.b32.cont [14/16] 0.0, 128
    %3334 = vxpose.xlu0.b32.cont [15/16] 0.0, 128
    %3335 = vxpose.xlu0.b32.end [16/16] 0.0, 128
    %v3336 = vpop.trf.xlu0
    %v3337 = vpop.trf.xlu0
    %v3338 = vpop.trf.xlu0
    %v3339 = vpop.trf.xlu0
    %v3340 = vpop.trf.xlu0
    %v3341 = vpop.trf.xlu0
    %v3342 = vpop.trf.xlu0
    %v3343 = vpop.trf.xlu0
    %v3344 = vpop.trf.xlu0
    %v3345 = vpop.trf.xlu0
    %v3346 = vpop.trf.xlu0
    %v3347 = vpop.trf.xlu0
    %v3348 = vpop.trf.xlu0
    %v3349 = vpop.trf.xlu0
    %v3350 = vpop.trf.xlu0
    %v3351 = vpop.trf.xlu0
    %3352 = vxpose.xlu0.b32.start [1/16] %v1947, 128
    %3353 = vxpose.xlu0.b32.cont [2/16] 0.0, 128
    %3354 = vxpose.xlu0.b32.cont [3/16] 0.0, 128
    %3355 = vxpose.xlu0.b32.cont [4/16] 0.0, 128
    %3356 = vxpose.xlu0.b32.cont [5/16] 0.0, 128
    %3357 = vxpose.xlu0.b32.cont [6/16] 0.0, 128
    %3358 = vxpose.xlu0.b32.cont [7/16] 0.0, 128
    %3359 = vxpose.xlu0.b32.cont [8/16] 0.0, 128
    %3360 = vxpose.xlu0.b32.cont [9/16] 0.0, 128
    %3361 = vxpose.xlu0.b32.cont [10/16] 0.0, 128
    %3362 = vxpose.xlu0.b32.cont [11/16] 0.0, 128
    %3363 = vxpose.xlu0.b32.cont [12/16] 0.0, 128
    %3364 = vxpose.xlu0.b32.cont [13/16] 0.0, 128
    %3365 = vxpose.xlu0.b32.cont [14/16] 0.0, 128
    %3366 = vxpose.xlu0.b32.cont [15/16] 0.0, 128
    %3367 = vxpose.xlu0.b32.end [16/16] 0.0, 128
    %v3368 = vpop.trf.xlu0
    %v3369 = vpop.trf.xlu0
    %v3370 = vpop.trf.xlu0
    %v3371 = vpop.trf.xlu0
    %v3372 = vpop.trf.xlu0
    %v3373 = vpop.trf.xlu0
    %v3374 = vpop.trf.xlu0
    %v3375 = vpop.trf.xlu0
    %v3376 = vpop.trf.xlu0
    %v3377 = vpop.trf.xlu0
    %v3378 = vpop.trf.xlu0
    %v3379 = vpop.trf.xlu0
    %v3380 = vpop.trf.xlu0
    %v3381 = vpop.trf.xlu0
    %v3382 = vpop.trf.xlu0
    %v3383 = vpop.trf.xlu0
    %3384 = vxpose.xlu0.b32.start [1/16] %v2020, 128
    %3385 = vxpose.xlu0.b32.cont [2/16] 0.0, 128
    %3386 = vxpose.xlu0.b32.cont [3/16] 0.0, 128
    %3387 = vxpose.xlu0.b32.cont [4/16] 0.0, 128
    %3388 = vxpose.xlu0.b32.cont [5/16] 0.0, 128
    %3389 = vxpose.xlu0.b32.cont [6/16] 0.0, 128
    %3390 = vxpose.xlu0.b32.cont [7/16] 0.0, 128
    %3391 = vxpose.xlu0.b32.cont [8/16] 0.0, 128
    %3392 = vxpose.xlu0.b32.cont [9/16] 0.0, 128
    %3393 = vxpose.xlu0.b32.cont [10/16] 0.0, 128
    %3394 = vxpose.xlu0.b32.cont [11/16] 0.0, 128
    %3395 = vxpose.xlu0.b32.cont [12/16] 0.0, 128
    %3396 = vxpose.xlu0.b32.cont [13/16] 0.0, 128
    %3397 = vxpose.xlu0.b32.cont [14/16] 0.0, 128
    %3398 = vxpose.xlu0.b32.cont [15/16] 0.0, 128
    %3399 = vxpose.xlu0.b32.end [16/16] 0.0, 128
    %v3400 = vpop.trf.xlu0
    %v3401 = vpop.trf.xlu0
    %v3402 = vpop.trf.xlu0
    %v3403 = vpop.trf.xlu0
    %v3404 = vpop.trf.xlu0
    %v3405 = vpop.trf.xlu0
    %v3406 = vpop.trf.xlu0
    %v3407 = vpop.trf.xlu0
    %v3408 = vpop.trf.xlu0
    %v3409 = vpop.trf.xlu0
    %v3410 = vpop.trf.xlu0
    %v3411 = vpop.trf.xlu0
    %v3412 = vpop.trf.xlu0
    %v3413 = vpop.trf.xlu0
    %v3414 = vpop.trf.xlu0
    %v3415 = vpop.trf.xlu0
    %3416 = vxpose.xlu0.b32.start [1/16] %v2093, 128
    %3417 = vxpose.xlu0.b32.cont [2/16] 0.0, 128
    %3418 = vxpose.xlu0.b32.cont [3/16] 0.0, 128
    %3419 = vxpose.xlu0.b32.cont [4/16] 0.0, 128
    %3420 = vxpose.xlu0.b32.cont [5/16] 0.0, 128
    %3421 = vxpose.xlu0.b32.cont [6/16] 0.0, 128
    %3422 = vxpose.xlu0.b32.cont [7/16] 0.0, 128
    %3423 = vxpose.xlu0.b32.cont [8/16] 0.0, 128
    %3424 = vxpose.xlu0.b32.cont [9/16] 0.0, 128
    %3425 = vxpose.xlu0.b32.cont [10/16] 0.0, 128
    %3426 = vxpose.xlu0.b32.cont [11/16] 0.0, 128
    %3427 = vxpose.xlu0.b32.cont [12/16] 0.0, 128
    %3428 = vxpose.xlu0.b32.cont [13/16] 0.0, 128
    %3429 = vxpose.xlu0.b32.cont [14/16] 0.0, 128
    %3430 = vxpose.xlu0.b32.cont [15/16] 0.0, 128
    %3431 = vxpose.xlu0.b32.end [16/16] 0.0, 128
    %v3432 = vpop.trf.xlu0
    %v3433 = vpop.trf.xlu0
    %v3434 = vpop.trf.xlu0
    %v3435 = vpop.trf.xlu0
    %v3436 = vpop.trf.xlu0
    %v3437 = vpop.trf.xlu0
    %v3438 = vpop.trf.xlu0
    %v3439 = vpop.trf.xlu0
    %v3440 = vpop.trf.xlu0
    %v3441 = vpop.trf.xlu0
    %v3442 = vpop.trf.xlu0
    %v3443 = vpop.trf.xlu0
    %v3444 = vpop.trf.xlu0
    %v3445 = vpop.trf.xlu0
    %v3446 = vpop.trf.xlu0
    %v3447 = vpop.trf.xlu0
    %3448 = vxpose.xlu0.b32.start [1/16] %v2166, 128
    %3449 = vxpose.xlu0.b32.cont [2/16] 0.0, 128
    %3450 = vxpose.xlu0.b32.cont [3/16] 0.0, 128
    %3451 = vxpose.xlu0.b32.cont [4/16] 0.0, 128
    %3452 = vxpose.xlu0.b32.cont [5/16] 0.0, 128
    %3453 = vxpose.xlu0.b32.cont [6/16] 0.0, 128
    %3454 = vxpose.xlu0.b32.cont [7/16] 0.0, 128
    %3455 = vxpose.xlu0.b32.cont [8/16] 0.0, 128
    %3456 = vxpose.xlu0.b32.cont [9/16] 0.0, 128
    %3457 = vxpose.xlu0.b32.cont [10/16] 0.0, 128
    %3458 = vxpose.xlu0.b32.cont [11/16] 0.0, 128
    %3459 = vxpose.xlu0.b32.cont [12/16] 0.0, 128
    %3460 = vxpose.xlu0.b32.cont [13/16] 0.0, 128
    %3461 = vxpose.xlu0.b32.cont [14/16] 0.0, 128
    %3462 = vxpose.xlu0.b32.cont [15/16] 0.0, 128
    %3463 = vxpose.xlu0.b32.end [16/16] 0.0, 128
    %v3464 = vpop.trf.xlu0
    %v3465 = vpop.trf.xlu0
    %v3466 = vpop.trf.xlu0
    %v3467 = vpop.trf.xlu0
    %v3468 = vpop.trf.xlu0
    %v3469 = vpop.trf.xlu0
    %v3470 = vpop.trf.xlu0
    %v3471 = vpop.trf.xlu0
    %v3472 = vpop.trf.xlu0
    %v3473 = vpop.trf.xlu0
    %v3474 = vpop.trf.xlu0
    %v3475 = vpop.trf.xlu0
    %v3476 = vpop.trf.xlu0
    %v3477 = vpop.trf.xlu0
    %v3478 = vpop.trf.xlu0
    %v3479 = vpop.trf.xlu0
    %3480 = vxpose.xlu0.b32.start [1/16] %v2239, 128
    %3481 = vxpose.xlu0.b32.cont [2/16] 0.0, 128
    %3482 = vxpose.xlu0.b32.cont [3/16] 0.0, 128
    %3483 = vxpose.xlu0.b32.cont [4/16] 0.0, 128
    %3484 = vxpose.xlu0.b32.cont [5/16] 0.0, 128
    %3485 = vxpose.xlu0.b32.cont [6/16] 0.0, 128
    %3486 = vxpose.xlu0.b32.cont [7/16] 0.0, 128
    %3487 = vxpose.xlu0.b32.cont [8/16] 0.0, 128
    %3488 = vxpose.xlu0.b32.cont [9/16] 0.0, 128
    %3489 = vxpose.xlu0.b32.cont [10/16] 0.0, 128
    %3490 = vxpose.xlu0.b32.cont [11/16] 0.0, 128
    %3491 = vxpose.xlu0.b32.cont [12/16] 0.0, 128
    %3492 = vxpose.xlu0.b32.cont [13/16] 0.0, 128
    %3493 = vxpose.xlu0.b32.cont [14/16] 0.0, 128
    %3494 = vxpose.xlu0.b32.cont [15/16] 0.0, 128
    %3495 = vxpose.xlu0.b32.end [16/16] 0.0, 128
    %v3496 = vpop.trf.xlu0
    %v3497 = vpop.trf.xlu0
    %v3498 = vpop.trf.xlu0
    %v3499 = vpop.trf.xlu0
    %v3500 = vpop.trf.xlu0
    %v3501 = vpop.trf.xlu0
    %v3502 = vpop.trf.xlu0
    %v3503 = vpop.trf.xlu0
    %v3504 = vpop.trf.xlu0
    %v3505 = vpop.trf.xlu0
    %v3506 = vpop.trf.xlu0
    %v3507 = vpop.trf.xlu0
    %v3508 = vpop.trf.xlu0
    %v3509 = vpop.trf.xlu0
    %v3510 = vpop.trf.xlu0
    %v3511 = vpop.trf.xlu0
    %3512 = vxpose.xlu0.b32.start [1/16] %v2312, 128
    %3513 = vxpose.xlu0.b32.cont [2/16] 0.0, 128
    %3514 = vxpose.xlu0.b32.cont [3/16] 0.0, 128
    %3515 = vxpose.xlu0.b32.cont [4/16] 0.0, 128
    %3516 = vxpose.xlu0.b32.cont [5/16] 0.0, 128
    %3517 = vxpose.xlu0.b32.cont [6/16] 0.0, 128
    %3518 = vxpose.xlu0.b32.cont [7/16] 0.0, 128
    %3519 = vxpose.xlu0.b32.cont [8/16] 0.0, 128
    %3520 = vxpose.xlu0.b32.cont [9/16] 0.0, 128
    %3521 = vxpose.xlu0.b32.cont [10/16] 0.0, 128
    %3522 = vxpose.xlu0.b32.cont [11/16] 0.0, 128
    %3523 = vxpose.xlu0.b32.cont [12/16] 0.0, 128
    %3524 = vxpose.xlu0.b32.cont [13/16] 0.0, 128
    %3525 = vxpose.xlu0.b32.cont [14/16] 0.0, 128
    %3526 = vxpose.xlu0.b32.cont [15/16] 0.0, 128
    %3527 = vxpose.xlu0.b32.end [16/16] 0.0, 128
    %v3528 = vpop.trf.xlu0
    %v3529 = vpop.trf.xlu0
    %v3530 = vpop.trf.xlu0
    %v3531 = vpop.trf.xlu0
    %v3532 = vpop.trf.xlu0
    %v3533 = vpop.trf.xlu0
    %v3534 = vpop.trf.xlu0
    %v3535 = vpop.trf.xlu0
    %v3536 = vpop.trf.xlu0
    %v3537 = vpop.trf.xlu0
    %v3538 = vpop.trf.xlu0
    %v3539 = vpop.trf.xlu0
    %v3540 = vpop.trf.xlu0
    %v3541 = vpop.trf.xlu0
    %v3542 = vpop.trf.xlu0
    %v3543 = vpop.trf.xlu0
    %3544 = vxpose.xlu0.b32.start [1/16] %v2385, 128
    %3545 = vxpose.xlu0.b32.cont [2/16] 0.0, 128
    %3546 = vxpose.xlu0.b32.cont [3/16] 0.0, 128
    %3547 = vxpose.xlu0.b32.cont [4/16] 0.0, 128
    %3548 = vxpose.xlu0.b32.cont [5/16] 0.0, 128
    %3549 = vxpose.xlu0.b32.cont [6/16] 0.0, 128
    %3550 = vxpose.xlu0.b32.cont [7/16] 0.0, 128
    %3551 = vxpose.xlu0.b32.cont [8/16] 0.0, 128
    %3552 = vxpose.xlu0.b32.cont [9/16] 0.0, 128
    %3553 = vxpose.xlu0.b32.cont [10/16] 0.0, 128
    %3554 = vxpose.xlu0.b32.cont [11/16] 0.0, 128
    %3555 = vxpose.xlu0.b32.cont [12/16] 0.0, 128
    %3556 = vxpose.xlu0.b32.cont [13/16] 0.0, 128
    %3557 = vxpose.xlu0.b32.cont [14/16] 0.0, 128
    %3558 = vxpose.xlu0.b32.cont [15/16] 0.0, 128
    %3559 = vxpose.xlu0.b32.end [16/16] 0.0, 128
    %v3560 = vpop.trf.xlu0
    %v3561 = vpop.trf.xlu0
    %v3562 = vpop.trf.xlu0
    %v3563 = vpop.trf.xlu0
    %v3564 = vpop.trf.xlu0
    %v3565 = vpop.trf.xlu0
    %v3566 = vpop.trf.xlu0
    %v3567 = vpop.trf.xlu0
    %v3568 = vpop.trf.xlu0
    %v3569 = vpop.trf.xlu0
    %v3570 = vpop.trf.xlu0
    %v3571 = vpop.trf.xlu0
    %v3572 = vpop.trf.xlu0
    %v3573 = vpop.trf.xlu0
    %v3574 = vpop.trf.xlu0
    %v3575 = vpop.trf.xlu0
    %3576 = vxpose.xlu0.b32.start [1/16] %v2458, 128
    %3577 = vxpose.xlu0.b32.cont [2/16] 0.0, 128
    %3578 = vxpose.xlu0.b32.cont [3/16] 0.0, 128
    %3579 = vxpose.xlu0.b32.cont [4/16] 0.0, 128
    %3580 = vxpose.xlu0.b32.cont [5/16] 0.0, 128
    %3581 = vxpose.xlu0.b32.cont [6/16] 0.0, 128
    %3582 = vxpose.xlu0.b32.cont [7/16] 0.0, 128
    %3583 = vxpose.xlu0.b32.cont [8/16] 0.0, 128
    %3584 = vxpose.xlu0.b32.cont [9/16] 0.0, 128
    %3585 = vxpose.xlu0.b32.cont [10/16] 0.0, 128
    %3586 = vxpose.xlu0.b32.cont [11/16] 0.0, 128
    %3587 = vxpose.xlu0.b32.cont [12/16] 0.0, 128
    %3588 = vxpose.xlu0.b32.cont [13/16] 0.0, 128
    %3589 = vxpose.xlu0.b32.cont [14/16] 0.0, 128
    %3590 = vxpose.xlu0.b32.cont [15/16] 0.0, 128
    %3591 = vxpose.xlu0.b32.end [16/16] 0.0, 128
    %v3592 = vpop.trf.xlu0
    %v3593 = vpop.trf.xlu0
    %v3594 = vpop.trf.xlu0
    %v3595 = vpop.trf.xlu0
    %v3596 = vpop.trf.xlu0
    %v3597 = vpop.trf.xlu0
    %v3598 = vpop.trf.xlu0
    %v3599 = vpop.trf.xlu0
    %v3600 = vpop.trf.xlu0
    %v3601 = vpop.trf.xlu0
    %v3602 = vpop.trf.xlu0
    %v3603 = vpop.trf.xlu0
    %v3604 = vpop.trf.xlu0
    %v3605 = vpop.trf.xlu0
    %v3606 = vpop.trf.xlu0
    %v3607 = vpop.trf.xlu0
    %3608 = vxpose.xlu0.b32.start [1/16] %v2531, 128
    %3609 = vxpose.xlu0.b32.cont [2/16] 0.0, 128
    %3610 = vxpose.xlu0.b32.cont [3/16] 0.0, 128
    %3611 = vxpose.xlu0.b32.cont [4/16] 0.0, 128
    %3612 = vxpose.xlu0.b32.cont [5/16] 0.0, 128
    %3613 = vxpose.xlu0.b32.cont [6/16] 0.0, 128
    %3614 = vxpose.xlu0.b32.cont [7/16] 0.0, 128
    %3615 = vxpose.xlu0.b32.cont [8/16] 0.0, 128
    %3616 = vxpose.xlu0.b32.cont [9/16] 0.0, 128
    %3617 = vxpose.xlu0.b32.cont [10/16] 0.0, 128
    %3618 = vxpose.xlu0.b32.cont [11/16] 0.0, 128
    %3619 = vxpose.xlu0.b32.cont [12/16] 0.0, 128
    %3620 = vxpose.xlu0.b32.cont [13/16] 0.0, 128
    %3621 = vxpose.xlu0.b32.cont [14/16] 0.0, 128
    %3622 = vxpose.xlu0.b32.cont [15/16] 0.0, 128
    %3623 = vxpose.xlu0.b32.end [16/16] 0.0, 128
    %v3624 = vpop.trf.xlu0
    %v3625 = vpop.trf.xlu0
    %v3626 = vpop.trf.xlu0
    %v3627 = vpop.trf.xlu0
    %v3628 = vpop.trf.xlu0
    %v3629 = vpop.trf.xlu0
    %v3630 = vpop.trf.xlu0
    %v3631 = vpop.trf.xlu0
    %v3632 = vpop.trf.xlu0
    %v3633 = vpop.trf.xlu0
    %v3634 = vpop.trf.xlu0
    %v3635 = vpop.trf.xlu0
    %v3636 = vpop.trf.xlu0
    %v3637 = vpop.trf.xlu0
    %v3638 = vpop.trf.xlu0
    %v3639 = vpop.trf.xlu0
    %3640 = vxpose.xlu0.b32.start [1/16] %v2604, 128
    %3641 = vxpose.xlu0.b32.cont [2/16] 0.0, 128
    %3642 = vxpose.xlu0.b32.cont [3/16] 0.0, 128
    %3643 = vxpose.xlu0.b32.cont [4/16] 0.0, 128
    %3644 = vxpose.xlu0.b32.cont [5/16] 0.0, 128
    %3645 = vxpose.xlu0.b32.cont [6/16] 0.0, 128
    %3646 = vxpose.xlu0.b32.cont [7/16] 0.0, 128
    %3647 = vxpose.xlu0.b32.cont [8/16] 0.0, 128
    %3648 = vxpose.xlu0.b32.cont [9/16] 0.0, 128
    %3649 = vxpose.xlu0.b32.cont [10/16] 0.0, 128
    %3650 = vxpose.xlu0.b32.cont [11/16] 0.0, 128
    %3651 = vxpose.xlu0.b32.cont [12/16] 0.0, 128
    %3652 = vxpose.xlu0.b32.cont [13/16] 0.0, 128
    %3653 = vxpose.xlu0.b32.cont [14/16] 0.0, 128
    %3654 = vxpose.xlu0.b32.cont [15/16] 0.0, 128
    %3655 = vxpose.xlu0.b32.end [16/16] 0.0, 128
    %v3656 = vpop.trf.xlu0
    %v3657 = vpop.trf.xlu0
    %v3658 = vpop.trf.xlu0
    %v3659 = vpop.trf.xlu0
    %v3660 = vpop.trf.xlu0
    %v3661 = vpop.trf.xlu0
    %v3662 = vpop.trf.xlu0
    %v3663 = vpop.trf.xlu0
    %v3664 = vpop.trf.xlu0
    %v3665 = vpop.trf.xlu0
    %v3666 = vpop.trf.xlu0
    %v3667 = vpop.trf.xlu0
    %v3668 = vpop.trf.xlu0
    %v3669 = vpop.trf.xlu0
    %v3670 = vpop.trf.xlu0
    %v3671 = vpop.trf.xlu0
    %3672 = vxpose.xlu0.b32.start [1/16] %v2677, 128
    %3673 = vxpose.xlu0.b32.cont [2/16] 0.0, 128
    %3674 = vxpose.xlu0.b32.cont [3/16] 0.0, 128
    %3675 = vxpose.xlu0.b32.cont [4/16] 0.0, 128
    %3676 = vxpose.xlu0.b32.cont [5/16] 0.0, 128
    %3677 = vxpose.xlu0.b32.cont [6/16] 0.0, 128
    %3678 = vxpose.xlu0.b32.cont [7/16] 0.0, 128
    %3679 = vxpose.xlu0.b32.cont [8/16] 0.0, 128
    %3680 = vxpose.xlu0.b32.cont [9/16] 0.0, 128
    %3681 = vxpose.xlu0.b32.cont [10/16] 0.0, 128
    %3682 = vxpose.xlu0.b32.cont [11/16] 0.0, 128
    %3683 = vxpose.xlu0.b32.cont [12/16] 0.0, 128
    %3684 = vxpose.xlu0.b32.cont [13/16] 0.0, 128
    %3685 = vxpose.xlu0.b32.cont [14/16] 0.0, 128
    %3686 = vxpose.xlu0.b32.cont [15/16] 0.0, 128
    %3687 = vxpose.xlu0.b32.end [16/16] 0.0, 128
    %v3688 = vpop.trf.xlu0
    %v3689 = vpop.trf.xlu0
    %v3690 = vpop.trf.xlu0
    %v3691 = vpop.trf.xlu0
    %v3692 = vpop.trf.xlu0
    %v3693 = vpop.trf.xlu0
    %v3694 = vpop.trf.xlu0
    %v3695 = vpop.trf.xlu0
    %v3696 = vpop.trf.xlu0
    %v3697 = vpop.trf.xlu0
    %v3698 = vpop.trf.xlu0
    %v3699 = vpop.trf.xlu0
    %v3700 = vpop.trf.xlu0
    %v3701 = vpop.trf.xlu0
    %v3702 = vpop.trf.xlu0
    %v3703 = vpop.trf.xlu0
    %v3704 = vmul.f32 %v798, %v2696
    %v3705 = vmul.f32 %v803, %v2728
    %v3706 = vmul.f32 %v808, %v2760
    %v3707 = vmul.f32 %v813, %v2792
    %v3708 = vmul.f32 %v818, %v2824
    %v3709 = vmul.f32 %v823, %v2856
    %v3710 = vmul.f32 %v828, %v2888
    %v3711 = vmul.f32 %v833, %v2920
    %v3712 = vsel %vm127, %v3704, 0.0
    %3713 = vadd.xlane.f32.xlu0 %v3712
    %v3714 = vpop.xlane.xlu0 %3713
    %v3715 = vsel %vm127, %v3705, 0.0
    %3716 = vadd.xlane.f32.xlu0 %v3715
    %v3717 = vpop.xlane.xlu0 %3716
    %v3718 = vsel %vm127, %v3706, 0.0
    %3719 = vadd.xlane.f32.xlu0 %v3718
    %v3720 = vpop.xlane.xlu0 %3719
    %v3721 = vsel %vm127, %v3707, 0.0
    %3722 = vadd.xlane.f32.xlu0 %v3721
    %v3723 = vpop.xlane.xlu0 %3722
    %v3724 = vsel %vm127, %v3708, 0.0
    %3725 = vadd.xlane.f32.xlu0 %v3724
    %v3726 = vpop.xlane.xlu0 %3725
    %v3727 = vsel %vm127, %v3709, 0.0
    %3728 = vadd.xlane.f32.xlu0 %v3727
    %v3729 = vpop.xlane.xlu0 %3728
    %v3730 = vsel %vm127, %v3710, 0.0
    %3731 = vadd.xlane.f32.xlu0 %v3730
    %v3732 = vpop.xlane.xlu0 %3731
    %v3733 = vsel %vm127, %v3711, 0.0
    %3734 = vadd.xlane.f32.xlu0 %v3733
    %v3735 = vpop.xlane.xlu0 %3734
    %v3744 = vlaneseq
    %v3745 = vshrl.u32 %v3744, 7
    %v3746 = vsub.s32 %v877, %v3745
    %v3747 = vrot.slane %v3714, %v3746
    %v3748 = vlaneseq
    %v3749 = vshrl.u32 %v3748, 7
    %v3750 = vsub.s32 %v877, %v3749
    %v3751 = vrot.slane %v3717, %v3750
    %v3752 = vlaneseq
    %v3753 = vshrl.u32 %v3752, 7
    %v3754 = vsub.s32 %v877, %v3753
    %v3755 = vrot.slane %v3720, %v3754
    %v3756 = vlaneseq
    %v3757 = vshrl.u32 %v3756, 7
    %v3758 = vsub.s32 %v877, %v3757
    %v3759 = vrot.slane %v3723, %v3758
    %v3760 = vlaneseq
    %v3761 = vshrl.u32 %v3760, 7
    %v3762 = vsub.s32 %v877, %v3761
    %v3763 = vrot.slane %v3726, %v3762
    %v3764 = vlaneseq
    %v3765 = vshrl.u32 %v3764, 7
    %v3766 = vsub.s32 %v877, %v3765
    %v3767 = vrot.slane %v3729, %v3766
    %v3768 = vlaneseq
    %v3769 = vshrl.u32 %v3768, 7
    %v3770 = vsub.s32 %v877, %v3769
    %v3771 = vrot.slane %v3732, %v3770
    %v3772 = vlaneseq
    %v3773 = vshrl.u32 %v3772, 7
    %v3774 = vsub.s32 %v877, %v3773
    %v3775 = vrot.slane %v3735, %v3774
    %v3776 = vsel %vm910, %v3751, %v3747
    %v3777 = vsel %vm912, %v3755, %v3776
    %v3778 = vsel %vm914, %v3759, %v3777
    %v3779 = vsel %vm916, %v3763, %v3778
    %v3780 = vsel %vm918, %v3767, %v3779
    %v3781 = vsel %vm920, %v3771, %v3780
    %v3782 = vsel %vm922, %v3775, %v3781
    %v3784 = vsel %vm127, %v3782, 0.0
    %3785 = vadd.xlane.f32.xlu0 %v3784
    %v3786 = vpop.xlane.xlu0 %3785
    %v3787 = vmul.f32 %v3786, -0.5
    %v3788 = vadd.f32 %v927, %v3787
    %v3789 = vmul.f32 %v998, %v2696
    %v3790 = vmul.f32 %v1071, %v2728
    %v3791 = vmul.f32 %v1144, %v2760
    %v3792 = vmul.f32 %v1217, %v2792
    %v3793 = vmul.f32 %v1290, %v2824
    %v3794 = vmul.f32 %v1363, %v2856
    %v3795 = vmul.f32 %v1436, %v2888
    %v3796 = vmul.f32 %v1509, %v2920
    %v3797 = vsel %vm127, %v3789, 0.0
    %3798 = vadd.xlane.f32.xlu0 %v3797
    %v3799 = vpop.xlane.xlu0 %3798
    %v3800 = vsel %vm127, %v3790, 0.0
    %3801 = vadd.xlane.f32.xlu0 %v3800
    %v3802 = vpop.xlane.xlu0 %3801
    %v3803 = vsel %vm127, %v3791, 0.0
    %3804 = vadd.xlane.f32.xlu0 %v3803
    %v3805 = vpop.xlane.xlu0 %3804
    %v3806 = vsel %vm127, %v3792, 0.0
    %3807 = vadd.xlane.f32.xlu0 %v3806
    %v3808 = vpop.xlane.xlu0 %3807
    %v3809 = vsel %vm127, %v3793, 0.0
    %3810 = vadd.xlane.f32.xlu0 %v3809
    %v3811 = vpop.xlane.xlu0 %3810
    %v3812 = vsel %vm127, %v3794, 0.0
    %3813 = vadd.xlane.f32.xlu0 %v3812
    %v3814 = vpop.xlane.xlu0 %3813
    %v3815 = vsel %vm127, %v3795, 0.0
    %3816 = vadd.xlane.f32.xlu0 %v3815
    %v3817 = vpop.xlane.xlu0 %3816
    %v3818 = vsel %vm127, %v3796, 0.0
    %3819 = vadd.xlane.f32.xlu0 %v3818
    %v3820 = vpop.xlane.xlu0 %3819
    %v3829 = vlaneseq
    %v3830 = vshrl.u32 %v3829, 7
    %v3831 = vsub.s32 %v877, %v3830
    %v3832 = vrot.slane %v3799, %v3831
    %v3833 = vlaneseq
    %v3834 = vshrl.u32 %v3833, 7
    %v3835 = vsub.s32 %v877, %v3834
    %v3836 = vrot.slane %v3802, %v3835
    %v3837 = vlaneseq
    %v3838 = vshrl.u32 %v3837, 7
    %v3839 = vsub.s32 %v877, %v3838
    %v3840 = vrot.slane %v3805, %v3839
    %v3841 = vlaneseq
    %v3842 = vshrl.u32 %v3841, 7
    %v3843 = vsub.s32 %v877, %v3842
    %v3844 = vrot.slane %v3808, %v3843
    %v3845 = vlaneseq
    %v3846 = vshrl.u32 %v3845, 7
    %v3847 = vsub.s32 %v877, %v3846
    %v3848 = vrot.slane %v3811, %v3847
    %v3849 = vlaneseq
    %v3850 = vshrl.u32 %v3849, 7
    %v3851 = vsub.s32 %v877, %v3850
    %v3852 = vrot.slane %v3814, %v3851
    %v3853 = vlaneseq
    %v3854 = vshrl.u32 %v3853, 7
    %v3855 = vsub.s32 %v877, %v3854
    %v3856 = vrot.slane %v3817, %v3855
    %v3857 = vlaneseq
    %v3858 = vshrl.u32 %v3857, 7
    %v3859 = vsub.s32 %v877, %v3858
    %v3860 = vrot.slane %v3820, %v3859
    %v3861 = vsel %vm910, %v3836, %v3832
    %v3862 = vsel %vm912, %v3840, %v3861
    %v3863 = vsel %vm914, %v3844, %v3862
    %v3864 = vsel %vm916, %v3848, %v3863
    %v3865 = vsel %vm918, %v3852, %v3864
    %v3866 = vsel %vm920, %v3856, %v3865
    %v3867 = vsel %vm922, %v3860, %v3866
    %v3869 = vsel %vm127, %v3867, 0.0
    %3870 = vadd.xlane.f32.xlu0 %v3869
    %v3871 = vpop.xlane.xlu0 %3870
    %v3872 = vmul.f32 %v3871, 0.33333334
    %v3873 = vadd.f32 %v3788, %v3872
    %v3874 = vmul.f32 %v998, %v2952
    %v3875 = vmul.f32 %v1071, %v2984
    %v3876 = vmul.f32 %v1144, %v3016
    %v3877 = vmul.f32 %v1217, %v3048
    %v3878 = vmul.f32 %v1290, %v3080
    %v3879 = vmul.f32 %v1363, %v3112
    %v3880 = vmul.f32 %v1436, %v3144
    %v3881 = vmul.f32 %v1509, %v3176
    %v3882 = vsel %vm127, %v3874, 0.0
    %3883 = vadd.xlane.f32.xlu0 %v3882
    %v3884 = vpop.xlane.xlu0 %3883
    %v3885 = vsel %vm127, %v3875, 0.0
    %3886 = vadd.xlane.f32.xlu0 %v3885
    %v3887 = vpop.xlane.xlu0 %3886
    %v3888 = vsel %vm127, %v3876, 0.0
    %3889 = vadd.xlane.f32.xlu0 %v3888
    %v3890 = vpop.xlane.xlu0 %3889
    %v3891 = vsel %vm127, %v3877, 0.0
    %3892 = vadd.xlane.f32.xlu0 %v3891
    %v3893 = vpop.xlane.xlu0 %3892
    %v3894 = vsel %vm127, %v3878, 0.0
    %3895 = vadd.xlane.f32.xlu0 %v3894
    %v3896 = vpop.xlane.xlu0 %3895
    %v3897 = vsel %vm127, %v3879, 0.0
    %3898 = vadd.xlane.f32.xlu0 %v3897
    %v3899 = vpop.xlane.xlu0 %3898
    %v3900 = vsel %vm127, %v3880, 0.0
    %3901 = vadd.xlane.f32.xlu0 %v3900
    %v3902 = vpop.xlane.xlu0 %3901
    %v3903 = vsel %vm127, %v3881, 0.0
    %3904 = vadd.xlane.f32.xlu0 %v3903
    %v3905 = vpop.xlane.xlu0 %3904
    %v3914 = vlaneseq
    %v3915 = vshrl.u32 %v3914, 7
    %v3916 = vsub.s32 %v877, %v3915
    %v3917 = vrot.slane %v3884, %v3916
    %v3918 = vlaneseq
    %v3919 = vshrl.u32 %v3918, 7
    %v3920 = vsub.s32 %v877, %v3919
    %v3921 = vrot.slane %v3887, %v3920
    %v3922 = vlaneseq
    %v3923 = vshrl.u32 %v3922, 7
    %v3924 = vsub.s32 %v877, %v3923
    %v3925 = vrot.slane %v3890, %v3924
    %v3926 = vlaneseq
    %v3927 = vshrl.u32 %v3926, 7
    %v3928 = vsub.s32 %v877, %v3927
    %v3929 = vrot.slane %v3893, %v3928
    %v3930 = vlaneseq
    %v3931 = vshrl.u32 %v3930, 7
    %v3932 = vsub.s32 %v877, %v3931
    %v3933 = vrot.slane %v3896, %v3932
    %v3934 = vlaneseq
    %v3935 = vshrl.u32 %v3934, 7
    %v3936 = vsub.s32 %v877, %v3935
    %v3937 = vrot.slane %v3899, %v3936
    %v3938 = vlaneseq
    %v3939 = vshrl.u32 %v3938, 7
    %v3940 = vsub.s32 %v877, %v3939
    %v3941 = vrot.slane %v3902, %v3940
    %v3942 = vlaneseq
    %v3943 = vshrl.u32 %v3942, 7
    %v3944 = vsub.s32 %v877, %v3943
    %v3945 = vrot.slane %v3905, %v3944
    %v3946 = vsel %vm910, %v3921, %v3917
    %v3947 = vsel %vm912, %v3925, %v3946
    %v3948 = vsel %vm914, %v3929, %v3947
    %v3949 = vsel %vm916, %v3933, %v3948
    %v3950 = vsel %vm918, %v3937, %v3949
    %v3951 = vsel %vm920, %v3941, %v3950
    %v3952 = vsel %vm922, %v3945, %v3951
    %v3954 = vsel %vm127, %v3952, 0.0
    %3955 = vadd.xlane.f32.xlu0 %v3954
    %v3956 = vpop.xlane.xlu0 %3955
    %v3957 = vmul.f32 %v3956, -0.25
    %v3958 = vadd.f32 %v3873, %v3957
    %v3959 = vmul.f32 %v1582, %v2952
    %v3960 = vmul.f32 %v1655, %v2984
    %v3961 = vmul.f32 %v1728, %v3016
    %v3962 = vmul.f32 %v1801, %v3048
    %v3963 = vmul.f32 %v1874, %v3080
    %v3964 = vmul.f32 %v1947, %v3112
    %v3965 = vmul.f32 %v2020, %v3144
    %v3966 = vmul.f32 %v2093, %v3176
    %v3967 = vsel %vm127, %v3959, 0.0
    %3968 = vadd.xlane.f32.xlu0 %v3967
    %v3969 = vpop.xlane.xlu0 %3968
    %v3970 = vsel %vm127, %v3960, 0.0
    %3971 = vadd.xlane.f32.xlu0 %v3970
    %v3972 = vpop.xlane.xlu0 %3971
    %v3973 = vsel %vm127, %v3961, 0.0
    %3974 = vadd.xlane.f32.xlu0 %v3973
    %v3975 = vpop.xlane.xlu0 %3974
    %v3976 = vsel %vm127, %v3962, 0.0
    %3977 = vadd.xlane.f32.xlu0 %v3976
    %v3978 = vpop.xlane.xlu0 %3977
    %v3979 = vsel %vm127, %v3963, 0.0
    %3980 = vadd.xlane.f32.xlu0 %v3979
    %v3981 = vpop.xlane.xlu0 %3980
    %v3982 = vsel %vm127, %v3964, 0.0
    %3983 = vadd.xlane.f32.xlu0 %v3982
    %v3984 = vpop.xlane.xlu0 %3983
    %v3985 = vsel %vm127, %v3965, 0.0
    %3986 = vadd.xlane.f32.xlu0 %v3985
    %v3987 = vpop.xlane.xlu0 %3986
    %v3988 = vsel %vm127, %v3966, 0.0
    %3989 = vadd.xlane.f32.xlu0 %v3988
    %v3990 = vpop.xlane.xlu0 %3989
    %v3999 = vlaneseq
    %v4000 = vshrl.u32 %v3999, 7
    %v4001 = vsub.s32 %v877, %v4000
    %v4002 = vrot.slane %v3969, %v4001
    %v4003 = vlaneseq
    %v4004 = vshrl.u32 %v4003, 7
    %v4005 = vsub.s32 %v877, %v4004
    %v4006 = vrot.slane %v3972, %v4005
    %v4007 = vlaneseq
    %v4008 = vshrl.u32 %v4007, 7
    %v4009 = vsub.s32 %v877, %v4008
    %v4010 = vrot.slane %v3975, %v4009
    %v4011 = vlaneseq
    %v4012 = vshrl.u32 %v4011, 7
    %v4013 = vsub.s32 %v877, %v4012
    %v4014 = vrot.slane %v3978, %v4013
    %v4015 = vlaneseq
    %v4016 = vshrl.u32 %v4015, 7
    %v4017 = vsub.s32 %v877, %v4016
    %v4018 = vrot.slane %v3981, %v4017
    %v4019 = vlaneseq
    %v4020 = vshrl.u32 %v4019, 7
    %v4021 = vsub.s32 %v877, %v4020
    %v4022 = vrot.slane %v3984, %v4021
    %v4023 = vlaneseq
    %v4024 = vshrl.u32 %v4023, 7
    %v4025 = vsub.s32 %v877, %v4024
    %v4026 = vrot.slane %v3987, %v4025
    %v4027 = vlaneseq
    %v4028 = vshrl.u32 %v4027, 7
    %v4029 = vsub.s32 %v877, %v4028
    %v4030 = vrot.slane %v3990, %v4029
    %v4031 = vsel %vm910, %v4006, %v4002
    %v4032 = vsel %vm912, %v4010, %v4031
    %v4033 = vsel %vm914, %v4014, %v4032
    %v4034 = vsel %vm916, %v4018, %v4033
    %v4035 = vsel %vm918, %v4022, %v4034
    %v4036 = vsel %vm920, %v4026, %v4035
    %v4037 = vsel %vm922, %v4030, %v4036
    %v4039 = vsel %vm127, %v4037, 0.0
    %4040 = vadd.xlane.f32.xlu0 %v4039
    %v4041 = vpop.xlane.xlu0 %4040
    %v4042 = vmul.f32 %v4041, 0.2
    %v4043 = vadd.f32 %v3958, %v4042
    %v4044 = vmul.f32 %v1582, %v3208
    %v4045 = vmul.f32 %v1655, %v3240
    %v4046 = vmul.f32 %v1728, %v3272
    %v4047 = vmul.f32 %v1801, %v3304
    %v4048 = vmul.f32 %v1874, %v3336
    %v4049 = vmul.f32 %v1947, %v3368
    %v4050 = vmul.f32 %v2020, %v3400
    %v4051 = vmul.f32 %v2093, %v3432
    %v4052 = vsel %vm127, %v4044, 0.0
    %4053 = vadd.xlane.f32.xlu0 %v4052
    %v4054 = vpop.xlane.xlu0 %4053
    %v4055 = vsel %vm127, %v4045, 0.0
    %4056 = vadd.xlane.f32.xlu0 %v4055
    %v4057 = vpop.xlane.xlu0 %4056
    %v4058 = vsel %vm127, %v4046, 0.0
    %4059 = vadd.xlane.f32.xlu0 %v4058
    %v4060 = vpop.xlane.xlu0 %4059
    %v4061 = vsel %vm127, %v4047, 0.0
    %4062 = vadd.xlane.f32.xlu0 %v4061
    %v4063 = vpop.xlane.xlu0 %4062
    %v4064 = vsel %vm127, %v4048, 0.0
    %4065 = vadd.xlane.f32.xlu0 %v4064
    %v4066 = vpop.xlane.xlu0 %4065
    %v4067 = vsel %vm127, %v4049, 0.0
    %4068 = vadd.xlane.f32.xlu0 %v4067
    %v4069 = vpop.xlane.xlu0 %4068
    %v4070 = vsel %vm127, %v4050, 0.0
    %4071 = vadd.xlane.f32.xlu0 %v4070
    %v4072 = vpop.xlane.xlu0 %4071
    %v4073 = vsel %vm127, %v4051, 0.0
    %4074 = vadd.xlane.f32.xlu0 %v4073
    %v4075 = vpop.xlane.xlu0 %4074
    %v4084 = vlaneseq
    %v4085 = vshrl.u32 %v4084, 7
    %v4086 = vsub.s32 %v877, %v4085
    %v4087 = vrot.slane %v4054, %v4086
    %v4088 = vlaneseq
    %v4089 = vshrl.u32 %v4088, 7
    %v4090 = vsub.s32 %v877, %v4089
    %v4091 = vrot.slane %v4057, %v4090
    %v4092 = vlaneseq
    %v4093 = vshrl.u32 %v4092, 7
    %v4094 = vsub.s32 %v877, %v4093
    %v4095 = vrot.slane %v4060, %v4094
    %v4096 = vlaneseq
    %v4097 = vshrl.u32 %v4096, 7
    %v4098 = vsub.s32 %v877, %v4097
    %v4099 = vrot.slane %v4063, %v4098
    %v4100 = vlaneseq
    %v4101 = vshrl.u32 %v4100, 7
    %v4102 = vsub.s32 %v877, %v4101
    %v4103 = vrot.slane %v4066, %v4102
    %v4104 = vlaneseq
    %v4105 = vshrl.u32 %v4104, 7
    %v4106 = vsub.s32 %v877, %v4105
    %v4107 = vrot.slane %v4069, %v4106
    %v4108 = vlaneseq
    %v4109 = vshrl.u32 %v4108, 7
    %v4110 = vsub.s32 %v877, %v4109
    %v4111 = vrot.slane %v4072, %v4110
    %v4112 = vlaneseq
    %v4113 = vshrl.u32 %v4112, 7
    %v4114 = vsub.s32 %v877, %v4113
    %v4115 = vrot.slane %v4075, %v4114
    %v4116 = vsel %vm910, %v4091, %v4087
    %v4117 = vsel %vm912, %v4095, %v4116
    %v4118 = vsel %vm914, %v4099, %v4117
    %v4119 = vsel %vm916, %v4103, %v4118
    %v4120 = vsel %vm918, %v4107, %v4119
    %v4121 = vsel %vm920, %v4111, %v4120
    %v4122 = vsel %vm922, %v4115, %v4121
    %v4124 = vsel %vm127, %v4122, 0.0
    %4125 = vadd.xlane.f32.xlu0 %v4124
    %v4126 = vpop.xlane.xlu0 %4125
    %v4127 = vmul.f32 %v4126, -0.16666667
    %v4128 = vadd.f32 %v4043, %v4127
    %v4129 = vmul.f32 %v2166, %v3208
    %v4130 = vmul.f32 %v2239, %v3240
    %v4131 = vmul.f32 %v2312, %v3272
    %v4132 = vmul.f32 %v2385, %v3304
    %v4133 = vmul.f32 %v2458, %v3336
    %v4134 = vmul.f32 %v2531, %v3368
    %v4135 = vmul.f32 %v2604, %v3400
    %v4136 = vmul.f32 %v2677, %v3432
    %v4137 = vsel %vm127, %v4129, 0.0
    %4138 = vadd.xlane.f32.xlu0 %v4137
    %v4139 = vpop.xlane.xlu0 %4138
    %v4140 = vsel %vm127, %v4130, 0.0
    %4141 = vadd.xlane.f32.xlu0 %v4140
    %v4142 = vpop.xlane.xlu0 %4141
    %v4143 = vsel %vm127, %v4131, 0.0
    %4144 = vadd.xlane.f32.xlu0 %v4143
    %v4145 = vpop.xlane.xlu0 %4144
    %v4146 = vsel %vm127, %v4132, 0.0
    %4147 = vadd.xlane.f32.xlu0 %v4146
    %v4148 = vpop.xlane.xlu0 %4147
    %v4149 = vsel %vm127, %v4133, 0.0
    %4150 = vadd.xlane.f32.xlu0 %v4149
    %v4151 = vpop.xlane.xlu0 %4150
    %v4152 = vsel %vm127, %v4134, 0.0
    %4153 = vadd.xlane.f32.xlu0 %v4152
    %v4154 = vpop.xlane.xlu0 %4153
    %v4155 = vsel %vm127, %v4135, 0.0
    %4156 = vadd.xlane.f32.xlu0 %v4155
    %v4157 = vpop.xlane.xlu0 %4156
    %v4158 = vsel %vm127, %v4136, 0.0
    %4159 = vadd.xlane.f32.xlu0 %v4158
    %v4160 = vpop.xlane.xlu0 %4159
    %v4169 = vlaneseq
    %v4170 = vshrl.u32 %v4169, 7
    %v4171 = vsub.s32 %v877, %v4170
    %v4172 = vrot.slane %v4139, %v4171
    %v4173 = vlaneseq
    %v4174 = vshrl.u32 %v4173, 7
    %v4175 = vsub.s32 %v877, %v4174
    %v4176 = vrot.slane %v4142, %v4175
    %v4177 = vlaneseq
    %v4178 = vshrl.u32 %v4177, 7
    %v4179 = vsub.s32 %v877, %v4178
    %v4180 = vrot.slane %v4145, %v4179
    %v4181 = vlaneseq
    %v4182 = vshrl.u32 %v4181, 7
    %v4183 = vsub.s32 %v877, %v4182
    %v4184 = vrot.slane %v4148, %v4183
    %v4185 = vlaneseq
    %v4186 = vshrl.u32 %v4185, 7
    %v4187 = vsub.s32 %v877, %v4186
    %v4188 = vrot.slane %v4151, %v4187
    %v4189 = vlaneseq
    %v4190 = vshrl.u32 %v4189, 7
    %v4191 = vsub.s32 %v877, %v4190
    %v4192 = vrot.slane %v4154, %v4191
    %v4193 = vlaneseq
    %v4194 = vshrl.u32 %v4193, 7
    %v4195 = vsub.s32 %v877, %v4194
    %v4196 = vrot.slane %v4157, %v4195
    %v4197 = vlaneseq
    %v4198 = vshrl.u32 %v4197, 7
    %v4199 = vsub.s32 %v877, %v4198
    %v4200 = vrot.slane %v4160, %v4199
    %v4201 = vsel %vm910, %v4176, %v4172
    %v4202 = vsel %vm912, %v4180, %v4201
    %v4203 = vsel %vm914, %v4184, %v4202
    %v4204 = vsel %vm916, %v4188, %v4203
    %v4205 = vsel %vm918, %v4192, %v4204
    %v4206 = vsel %vm920, %v4196, %v4205
    %v4207 = vsel %vm922, %v4200, %v4206
    %v4209 = vsel %vm127, %v4207, 0.0
    %4210 = vadd.xlane.f32.xlu0 %v4209
    %v4211 = vpop.xlane.xlu0 %4210
    %v4212 = vmul.f32 %v4211, 0.14285715
    %v4213 = vadd.f32 %v4128, %v4212
    %v4214 = vmul.f32 %v2166, %v3464
    %v4215 = vmul.f32 %v2239, %v3496
    %v4216 = vmul.f32 %v2312, %v3528
    %v4217 = vmul.f32 %v2385, %v3560
    %v4218 = vmul.f32 %v2458, %v3592
    %v4219 = vmul.f32 %v2531, %v3624
    %v4220 = vmul.f32 %v2604, %v3656
    %v4221 = vmul.f32 %v2677, %v3688
    %v4222 = vsel %vm127, %v4214, 0.0
    %4223 = vadd.xlane.f32.xlu0 %v4222
    %v4224 = vpop.xlane.xlu0 %4223
    %v4225 = vsel %vm127, %v4215, 0.0
    %4226 = vadd.xlane.f32.xlu0 %v4225
    %v4227 = vpop.xlane.xlu0 %4226
    %v4228 = vsel %vm127, %v4216, 0.0
    %4229 = vadd.xlane.f32.xlu0 %v4228
    %v4230 = vpop.xlane.xlu0 %4229
    %v4231 = vsel %vm127, %v4217, 0.0
    %4232 = vadd.xlane.f32.xlu0 %v4231
    %v4233 = vpop.xlane.xlu0 %4232
    %v4234 = vsel %vm127, %v4218, 0.0
    %4235 = vadd.xlane.f32.xlu0 %v4234
    %v4236 = vpop.xlane.xlu0 %4235
    %v4237 = vsel %vm127, %v4219, 0.0
    %4238 = vadd.xlane.f32.xlu0 %v4237
    %v4239 = vpop.xlane.xlu0 %4238
    %v4240 = vsel %vm127, %v4220, 0.0
    %4241 = vadd.xlane.f32.xlu0 %v4240
    %v4242 = vpop.xlane.xlu0 %4241
    %v4243 = vsel %vm127, %v4221, 0.0
    %4244 = vadd.xlane.f32.xlu0 %v4243
    %v4245 = vpop.xlane.xlu0 %4244
    %v4254 = vlaneseq
    %v4255 = vshrl.u32 %v4254, 7
    %v4256 = vsub.s32 %v877, %v4255
    %v4257 = vrot.slane %v4224, %v4256
    %v4258 = vlaneseq
    %v4259 = vshrl.u32 %v4258, 7
    %v4260 = vsub.s32 %v877, %v4259
    %v4261 = vrot.slane %v4227, %v4260
    %v4262 = vlaneseq
    %v4263 = vshrl.u32 %v4262, 7
    %v4264 = vsub.s32 %v877, %v4263
    %v4265 = vrot.slane %v4230, %v4264
    %v4266 = vlaneseq
    %v4267 = vshrl.u32 %v4266, 7
    %v4268 = vsub.s32 %v877, %v4267
    %v4269 = vrot.slane %v4233, %v4268
    %v4270 = vlaneseq
    %v4271 = vshrl.u32 %v4270, 7
    %v4272 = vsub.s32 %v877, %v4271
    %v4273 = vrot.slane %v4236, %v4272
    %v4274 = vlaneseq
    %v4275 = vshrl.u32 %v4274, 7
    %v4276 = vsub.s32 %v877, %v4275
    %v4277 = vrot.slane %v4239, %v4276
    %v4278 = vlaneseq
    %v4279 = vshrl.u32 %v4278, 7
    %v4280 = vsub.s32 %v877, %v4279
    %v4281 = vrot.slane %v4242, %v4280
    %v4282 = vlaneseq
    %v4283 = vshrl.u32 %v4282, 7
    %v4284 = vsub.s32 %v877, %v4283
    %v4285 = vrot.slane %v4245, %v4284
    %v4286 = vsel %vm910, %v4261, %v4257
    %v4287 = vsel %vm912, %v4265, %v4286
    %v4288 = vsel %vm914, %v4269, %v4287
    %v4289 = vsel %vm916, %v4273, %v4288
    %v4290 = vsel %vm918, %v4277, %v4289
    %v4291 = vsel %vm920, %v4281, %v4290
    %v4292 = vsel %vm922, %v4285, %v4291
    %v4294 = vsel %vm127, %v4292, 0.0
    %4295 = vadd.xlane.f32.xlu0 %v4294
    %v4296 = vpop.xlane.xlu0 %4295
    %v4297 = vmul.f32 %v4296, -0.125
    %v4298 = vadd.f32 %v4213, %v4297
    %v4299 = vadd.f32 %v107, %v379
    %v4300 = vadd.f32 %v4298, 0.0
    %s4301 = scalar_lea.vmem %s1, 1
    %v4302 = vld [vmem:[%s4301] sm:$0x1]
    %v4304 = vlaneseq
    %v4305 = vshrl.u32 %v4304, 7
    %v4306 = vsub.s32 0, %v4305
    %v4307 = vrot.slane %v4302, %v4306
    %v4309 = vmul.f32 %v4299, %v4307
    %s4310 = scalar_lea.vmem [#allocation2], 1
    %v4311 = vld [vmem:[%s4310] sm:$0x1]
    %v4313 = vlaneseq
    %v4314 = vshrl.u32 %v4313, 7
    %v4315 = vsub.s32 0, %v4314
    %v4316 = vrot.slane %v4311, %v4315
    %v4318 = vadd.f32 %v4309, %v4316
    %s4319 = scalar_lea.vmem %s3, 8
    %v4320 = vld [vmem:[%s4319] sm:$0xff]
    %s4321 = scalar_lea.vmem %s5, 32
    %v4322 = vld [vmem:[%s4321] sm:$0xff]
    %v4323 = vld [vmem:[%s4321 + $0x8] sm:$0xff]
    %v4324 = vld [vmem:[%s4321 + $0x10] sm:$0xff]
    %v4325 = vld [vmem:[%s4321 + $0x18] sm:$0xff]
    %s4326 = scalar_lea.vmem %s7, 32
    %v4327 = vld [vmem:[%s4326] sm:$0xff]
    %v4328 = vld [vmem:[%s4326 + $0x8] sm:$0xff]
    %v4329 = vld [vmem:[%s4326 + $0x10] sm:$0xff]
    %v4330 = vld [vmem:[%s4326 + $0x18] sm:$0xff]
    %s4331 = scalar_lea.vmem [#allocation8], 8
    %v4332 = vld [vmem:[%s4331] sm:$0xff]
    %s4333 = scalar_lea.vmem [#allocation5], 1
    %v4334 = vld [vmem:[%s4333] sm:$0x1]
    %s4335 = scalar_lea.vmem [#allocation7], 1
    %v4336 = vld [vmem:[%s4335] sm:$0x1]
    %s4337 = scalar_lea.vmem %s9, 1
    %v4338 = vld [vmem:[%s4337] sm:$0x1]
    %v4340 = vlaneseq
    %v4341 = vshrl.u32 %v4340, 7
    %v4342 = vsub.s32 0, %v4341
    %v4343 = vrot.slane %v4334, %v4342
    %v4346 = vsel %vm127, %v4318, 0
    %4348 = vmatprep.subr.mxu0 0.0
    %4349 = vmatpush1.msra.mxu0 %v4320
    %4350 = vmatprep.subr.mxu0 0.0
    %4351 = vmatpush1.msra.mxu0 0.0
    %4352 = vmatprep.subr.mxu0 0.0
    %4353 = vmatpush1.msra.mxu0 0.0
    %4354 = vmatprep.subr.mxu0 0.0
    %4355 = vmatpush1.msra.mxu0 0.0
    %4356 = vmatprep.subr.mxu0 0.0
    %4357 = vmatpush1.msra.mxu0 0.0
    %4358 = vmatprep.subr.mxu0 0.0
    %4359 = vmatpush1.msra.mxu0 0.0
    %4360 = vmatprep.subr.mxu0 0.0
    %4361 = vmatpush1.msra.mxu0 0.0
    %4362 = vmatprep.subr.mxu0 0.0
    %4363 = vmatpush1.msra.mxu0 0.0
    %4364 = vmatprep.subr.mxu0 0.0
    %4365 = vmatpush1.msra.mxu0 0.0
    %4366 = vmatprep.subr.mxu0 0.0
    %4367 = vmatpush1.msra.mxu0 0.0
    %4368 = vmatprep.subr.mxu0 0.0
    %4369 = vmatpush1.msra.mxu0 0.0
    %4370 = vmatprep.subr.mxu0 0.0
    %4371 = vmatpush1.msra.mxu0 0.0
    %4372 = vmatprep.subr.mxu0 0.0
    %4373 = vmatpush1.msra.mxu0 0.0
    %4374 = vmatprep.subr.mxu0 0.0
    %4375 = vmatpush1.msra.mxu0 0.0
    %4376 = vmatprep.subr.mxu0 0.0
    %4377 = vmatpush1.msra.mxu0 0.0
    %4378 = vmatprep.subr.mxu0 0.0
    %4379 = vmatpush1.msra.mxu0 0.0
    %4380 = vmatprep.subr.mxu0 0.0
    %4381 = vmatpush1.msra.mxu0 0.0
    %4382 = vmatprep.subr.mxu0 0.0
    %4383 = vmatpush1.msra.mxu0 0.0
    %4384 = vmatprep.subr.mxu0 0.0
    %4385 = vmatpush1.msra.mxu0 0.0
    %4386 = vmatprep.subr.mxu0 0.0
    %4387 = vmatpush1.msra.mxu0 0.0
    %4388 = vmatprep.subr.mxu0 0.0
    %4389 = vmatpush1.msra.mxu0 0.0
    %4390 = vmatprep.subr.mxu0 0.0
    %4391 = vmatpush1.msra.mxu0 0.0
    %4392 = vmatprep.subr.mxu0 0.0
    %4393 = vmatpush1.msra.mxu0 0.0
    %4394 = vmatprep.subr.mxu0 0.0
    %4395 = vmatpush1.msra.mxu0 0.0
    %4396 = vmatprep.subr.mxu0 0.0
    %4397 = vmatpush1.msra.mxu0 0.0
    %4398 = vmatprep.subr.mxu0 0.0
    %4399 = vmatpush1.msra.mxu0 0.0
    %4400 = vmatprep.subr.mxu0 0.0
    %4401 = vmatpush1.msra.mxu0 0.0
    %4402 = vmatprep.subr.mxu0 0.0
    %4403 = vmatpush1.msra.mxu0 0.0
    %4404 = vmatprep.subr.mxu0 0.0
    %4405 = vmatpush1.msra.mxu0 0.0
    %4406 = vmatprep.subr.mxu0 0.0
    %4407 = vmatpush1.msra.mxu0 0.0
    %4408 = vmatprep.subr.mxu0 0.0
    %4409 = vmatpush1.msra.mxu0 0.0
    %4410 = vmatprep.subr.mxu0 0.0
    %4411 = vmatpush1.msra.mxu0 0.0
    %4412 = vmatprep.mubr.f32.mxu0 0.0
    %4413 = vmatmul.mubr.f32.gmra.mrb[0].mxu0 %v4346
    %v4414 = vpop.f32.mrb[0].mxu0
    %v4415 = vadd.f32 %v4343, %v4414
    %v4416 = vpop.f32.mrb[0].mxu0
    %4417 = vdwg.mxu0
    %v4418 = vsub.f32 0.0, %v4415
    %v4419 = vmul.f32 %v4418, 1.442695
    %v4420 = vpow.pop %v4419
    %v4421 = vadd.f32 %v4420, 1.0
    %v4422 = vrcp.pop %v4421
    %v4423 = vmul.f32 %v4415, %v4422
    %v4424 = vmul.f32 %v4423, 0.90909094
    %v4425 = vsub.f32 1.0, %v4422
    %v4426 = vmul.f32 %v4423, %v4425
    %v4427 = vadd.f32 %v4422, %v4426
    %v4428 = vmul.f32 %v4427, 0.90909094
    %v4430 = vlaneseq
    %v4431 = vshrl.u32 %v4430, 7
    %v4432 = vsub.s32 0, %v4431
    %v4433 = vrot.slane %v4336, %v4432
    %v4436 = vsel %vm218, %v4424, 0
    %4438 = vmatprep.subr.mxu0 0.0
    %4439 = vmatpush1.msra.mxu0 %v4322
    %4440 = vmatprep.subr.mxu0 0.0
    %4441 = vmatpush1.msra.mxu0 %v4323
    %4442 = vmatprep.subr.mxu0 0.0
    %4443 = vmatpush1.msra.mxu0 %v4324
    %4444 = vmatprep.subr.mxu0 0.0
    %4445 = vmatpush1.msra.mxu0 %v4325
    %4446 = vmatprep.subr.mxu0 0.0
    %4447 = vmatpush1.msra.mxu0 0.0
    %4448 = vmatprep.subr.mxu0 0.0
    %4449 = vmatpush1.msra.mxu0 0.0
    %4450 = vmatprep.subr.mxu0 0.0
    %4451 = vmatpush1.msra.mxu0 0.0
    %4452 = vmatprep.subr.mxu0 0.0
    %4453 = vmatpush1.msra.mxu0 0.0
    %4454 = vmatprep.subr.mxu0 0.0
    %4455 = vmatpush1.msra.mxu0 0.0
    %4456 = vmatprep.subr.mxu0 0.0
    %4457 = vmatpush1.msra.mxu0 0.0
    %4458 = vmatprep.subr.mxu0 0.0
    %4459 = vmatpush1.msra.mxu0 0.0
    %4460 = vmatprep.subr.mxu0 0.0
    %4461 = vmatpush1.msra.mxu0 0.0
    %4462 = vmatprep.subr.mxu0 0.0
    %4463 = vmatpush1.msra.mxu0 0.0
    %4464 = vmatprep.subr.mxu0 0.0
    %4465 = vmatpush1.msra.mxu0 0.0
    %4466 = vmatprep.subr.mxu0 0.0
    %4467 = vmatpush1.msra.mxu0 0.0
    %4468 = vmatprep.subr.mxu0 0.0
    %4469 = vmatpush1.msra.mxu0 0.0
    %4470 = vmatprep.subr.mxu0 0.0
    %4471 = vmatpush1.msra.mxu0 0.0
    %4472 = vmatprep.subr.mxu0 0.0
    %4473 = vmatpush1.msra.mxu0 0.0
    %4474 = vmatprep.subr.mxu0 0.0
    %4475 = vmatpush1.msra.mxu0 0.0
    %4476 = vmatprep.subr.mxu0 0.0
    %4477 = vmatpush1.msra.mxu0 0.0
    %4478 = vmatprep.subr.mxu0 0.0
    %4479 = vmatpush1.msra.mxu0 0.0
    %4480 = vmatprep.subr.mxu0 0.0
    %4481 = vmatpush1.msra.mxu0 0.0
    %4482 = vmatprep.subr.mxu0 0.0
    %4483 = vmatpush1.msra.mxu0 0.0
    %4484 = vmatprep.subr.mxu0 0.0
    %4485 = vmatpush1.msra.mxu0 0.0
    %4486 = vmatprep.subr.mxu0 0.0
    %4487 = vmatpush1.msra.mxu0 0.0
    %4488 = vmatprep.subr.mxu0 0.0
    %4489 = vmatpush1.msra.mxu0 0.0
    %4490 = vmatprep.subr.mxu0 0.0
    %4491 = vmatpush1.msra.mxu0 0.0
    %4492 = vmatprep.subr.mxu0 0.0
    %4493 = vmatpush1.msra.mxu0 0.0
    %4494 = vmatprep.subr.mxu0 0.0
    %4495 = vmatpush1.msra.mxu0 0.0
    %4496 = vmatprep.subr.mxu0 0.0
    %4497 = vmatpush1.msra.mxu0 0.0
    %4498 = vmatprep.subr.mxu0 0.0
    %4499 = vmatpush1.msra.mxu0 0.0
    %4500 = vmatprep.subr.mxu0 0.0
    %4501 = vmatpush1.msra.mxu0 0.0
    %4502 = vmatprep.mubr.f32.mxu0 0.0
    %4503 = vmatmul.mubr.f32.gmra.mrb[0].mxu0 %v4436
    %v4504 = vpop.f32.mrb[0].mxu0
    %v4505 = vadd.f32 %v4433, %v4504
    %v4506 = vpop.f32.mrb[0].mxu0
    %4507 = vdwg.mxu0
    %v4508 = vsub.f32 0.0, %v4505
    %v4509 = vmul.f32 %v4508, 1.442695
    %v4510 = vpow.pop %v4509
    %v4511 = vadd.f32 %v4510, 1.0
    %v4512 = vrcp.pop %v4511
    %v4513 = vmul.f32 %v4505, %v4512
    %v4514 = vmul.f32 %v4513, 0.90909094
    %v4515 = vsub.f32 1.0, %v4512
    %v4516 = vmul.f32 %v4513, %v4515
    %v4517 = vadd.f32 %v4512, %v4516
    %v4518 = vmul.f32 %v4517, 0.90909094
    %v4520 = vlaneseq
    %v4521 = vshrl.u32 %v4520, 7
    %v4522 = vsub.s32 0, %v4521
    %v4523 = vrot.slane %v4338, %v4522
    %v4526 = vsel %vm218, %v4514, 0
    %4528 = vmatprep.subr.mxu0 0.0
    %4529 = vmatpush1.msra.mxu0 %v4327
    %4530 = vmatprep.subr.mxu0 0.0
    %4531 = vmatpush1.msra.mxu0 %v4328
    %4532 = vmatprep.subr.mxu0 0.0
    %4533 = vmatpush1.msra.mxu0 %v4329
    %4534 = vmatprep.subr.mxu0 0.0
    %4535 = vmatpush1.msra.mxu0 %v4330
    %4536 = vmatprep.subr.mxu0 0.0
    %4537 = vmatpush1.msra.mxu0 0.0
    %4538 = vmatprep.subr.mxu0 0.0
    %4539 = vmatpush1.msra.mxu0 0.0
    %4540 = vmatprep.subr.mxu0 0.0
    %4541 = vmatpush1.msra.mxu0 0.0
    %4542 = vmatprep.subr.mxu0 0.0
    %4543 = vmatpush1.msra.mxu0 0.0
    %4544 = vmatprep.subr.mxu0 0.0
    %4545 = vmatpush1.msra.mxu0 0.0
    %4546 = vmatprep.subr.mxu0 0.0
    %4547 = vmatpush1.msra.mxu0 0.0
    %4548 = vmatprep.subr.mxu0 0.0
    %4549 = vmatpush1.msra.mxu0 0.0
    %4550 = vmatprep.subr.mxu0 0.0
    %4551 = vmatpush1.msra.mxu0 0.0
    %4552 = vmatprep.subr.mxu0 0.0
    %4553 = vmatpush1.msra.mxu0 0.0
    %4554 = vmatprep.subr.mxu0 0.0
    %4555 = vmatpush1.msra.mxu0 0.0
    %4556 = vmatprep.subr.mxu0 0.0
    %4557 = vmatpush1.msra.mxu0 0.0
    %4558 = vmatprep.subr.mxu0 0.0
    %4559 = vmatpush1.msra.mxu0 0.0
    %4560 = vmatprep.subr.mxu0 0.0
    %4561 = vmatpush1.msra.mxu0 0.0
    %4562 = vmatprep.subr.mxu0 0.0
    %4563 = vmatpush1.msra.mxu0 0.0
    %4564 = vmatprep.subr.mxu0 0.0
    %4565 = vmatpush1.msra.mxu0 0.0
    %4566 = vmatprep.subr.mxu0 0.0
    %4567 = vmatpush1.msra.mxu0 0.0
    %4568 = vmatprep.subr.mxu0 0.0
    %4569 = vmatpush1.msra.mxu0 0.0
    %4570 = vmatprep.subr.mxu0 0.0
    %4571 = vmatpush1.msra.mxu0 0.0
    %4572 = vmatprep.subr.mxu0 0.0
    %4573 = vmatpush1.msra.mxu0 0.0
    %4574 = vmatprep.subr.mxu0 0.0
    %4575 = vmatpush1.msra.mxu0 0.0
    %4576 = vmatprep.subr.mxu0 0.0
    %4577 = vmatpush1.msra.mxu0 0.0
    %4578 = vmatprep.subr.mxu0 0.0
    %4579 = vmatpush1.msra.mxu0 0.0
    %4580 = vmatprep.subr.mxu0 0.0
    %4581 = vmatpush1.msra.mxu0 0.0
    %4582 = vmatprep.subr.mxu0 0.0
    %4583 = vmatpush1.msra.mxu0 0.0
    %4584 = vmatprep.subr.mxu0 0.0
    %4585 = vmatpush1.msra.mxu0 0.0
    %4586 = vmatprep.subr.mxu0 0.0
    %4587 = vmatpush1.msra.mxu0 0.0
    %4588 = vmatprep.subr.mxu0 0.0
    %4589 = vmatpush1.msra.mxu0 0.0
    %4590 = vmatprep.subr.mxu0 0.0
    %4591 = vmatpush1.msra.mxu0 0.0
    %4592 = vmatprep.mubr.f32.mxu0 0.0
    %4593 = vmatmul.mubr.f32.gmra.mrb[0].mxu0 %v4526
    %v4594 = vpop.f32.mrb[0].mxu0
    %v4595 = vadd.f32 %v4523, %v4594
    %v4596 = vpop.f32.mrb[0].mxu0
    %4597 = vdwg.mxu0
    %v4599 = vcombine.high %v4428, %v4428
    %v4601 = vunpack.c.l.s4 1966171168
    %v4602 = vunpack.c.0.s8 %v4601
    %v4603 = vlaneseq
    %v4604 = vshrl.u32 %v4603, 7
    %v4605 = vsub.s32 %v4602, %v4604
    %v4606 = vrot.slane %v4428, %v4605
    %v4608 = vunpack.c.l.s4 1966171168
    %v4609 = vunpack.c.0.s8 %v4608
    %v4610 = vlaneseq
    %v4611 = vshrl.u32 %v4610, 7
    %v4612 = vsub.s32 %v4609, %v4611
    %v4613 = vrot.slane %v4599, %v4612
    %v4614 = vcombine.high %v4606, %v4606
    %v4615 = vcombine.high %v4613, %v4613
    %v4617 = vunpack.c.l.s4 1966171168
    %v4618 = vunpack.c.0.s8 %v4617
    %v4619 = vlaneseq
    %v4620 = vshrl.u32 %v4619, 7
    %v4621 = vsub.s32 %v4618, %v4620
    %v4622 = vrot.slane %v4606, %v4621
    %v4624 = vunpack.c.l.s4 1966171168
    %v4625 = vunpack.c.0.s8 %v4624
    %v4626 = vlaneseq
    %v4627 = vshrl.u32 %v4626, 7
    %v4628 = vsub.s32 %v4625, %v4627
    %v4629 = vrot.slane %v4613, %v4628
    %v4631 = vunpack.c.l.s4 1966171168
    %v4632 = vunpack.c.0.s8 %v4631
    %v4633 = vlaneseq
    %v4634 = vshrl.u32 %v4633, 7
    %v4635 = vsub.s32 %v4632, %v4634
    %v4636 = vrot.slane %v4614, %v4635
    %v4638 = vunpack.c.l.s4 1966171168
    %v4639 = vunpack.c.0.s8 %v4638
    %v4640 = vlaneseq
    %v4641 = vshrl.u32 %v4640, 7
    %v4642 = vsub.s32 %v4639, %v4641
    %v4643 = vrot.slane %v4615, %v4642
    %v4644 = vcombine.high %v4622, %v4622
    %v4645 = vcombine.high %v4629, %v4629
    %v4646 = vcombine.high %v4636, %v4636
    %v4647 = vcombine.high %v4643, %v4643
    %v4648 = vlaneseq
    %v4649 = vshrl.u32 %v4648, 7
    %v4650 = vsub.s32 0, %v4649
    %v4651 = vrot.slane %v4622, %v4650
    %v4652 = vlaneseq
    %v4653 = vshrl.u32 %v4652, 7
    %v4654 = vsub.s32 0, %v4653
    %v4655 = vrot.slane %v4636, %v4654
    %v4656 = vlaneseq
    %v4657 = vshrl.u32 %v4656, 7
    %v4658 = vsub.s32 0, %v4657
    %v4659 = vrot.slane %v4644, %v4658
    %v4660 = vlaneseq
    %v4661 = vshrl.u32 %v4660, 7
    %v4662 = vsub.s32 0, %v4661
    %v4663 = vrot.slane %v4646, %v4662
    %v4664 = vlaneseq
    %v4665 = vshrl.u32 %v4664, 7
    %v4666 = vsub.s32 0, %v4665
    %v4667 = vrot.slane %v4629, %v4666
    %v4668 = vlaneseq
    %v4669 = vshrl.u32 %v4668, 7
    %v4670 = vsub.s32 0, %v4669
    %v4671 = vrot.slane %v4643, %v4670
    %v4672 = vlaneseq
    %v4673 = vshrl.u32 %v4672, 7
    %v4674 = vsub.s32 0, %v4673
    %v4675 = vrot.slane %v4645, %v4674
    %v4676 = vlaneseq
    %v4677 = vshrl.u32 %v4676, 7
    %v4678 = vsub.s32 0, %v4677
    %v4679 = vrot.slane %v4647, %v4678
    %v4689 = vcombine.high %v4518, %v4518
    %v4691 = vunpack.c.l.s4 1966171168
    %v4692 = vunpack.c.0.s8 %v4691
    %v4693 = vlaneseq
    %v4694 = vshrl.u32 %v4693, 7
    %v4695 = vsub.s32 %v4692, %v4694
    %v4696 = vrot.slane %v4518, %v4695
    %v4698 = vunpack.c.l.s4 1966171168
    %v4699 = vunpack.c.0.s8 %v4698
    %v4700 = vlaneseq
    %v4701 = vshrl.u32 %v4700, 7
    %v4702 = vsub.s32 %v4699, %v4701
    %v4703 = vrot.slane %v4689, %v4702
    %v4704 = vcombine.high %v4696, %v4696
    %v4705 = vcombine.high %v4703, %v4703
    %v4707 = vunpack.c.l.s4 1966171168
    %v4708 = vunpack.c.0.s8 %v4707
    %v4709 = vlaneseq
    %v4710 = vshrl.u32 %v4709, 7
    %v4711 = vsub.s32 %v4708, %v4710
    %v4712 = vrot.slane %v4696, %v4711
    %v4714 = vunpack.c.l.s4 1966171168
    %v4715 = vunpack.c.0.s8 %v4714
    %v4716 = vlaneseq
    %v4717 = vshrl.u32 %v4716, 7
    %v4718 = vsub.s32 %v4715, %v4717
    %v4719 = vrot.slane %v4703, %v4718
    %v4721 = vunpack.c.l.s4 1966171168
    %v4722 = vunpack.c.0.s8 %v4721
    %v4723 = vlaneseq
    %v4724 = vshrl.u32 %v4723, 7
    %v4725 = vsub.s32 %v4722, %v4724
    %v4726 = vrot.slane %v4704, %v4725
    %v4728 = vunpack.c.l.s4 1966171168
    %v4729 = vunpack.c.0.s8 %v4728
    %v4730 = vlaneseq
    %v4731 = vshrl.u32 %v4730, 7
    %v4732 = vsub.s32 %v4729, %v4731
    %v4733 = vrot.slane %v4705, %v4732
    %v4734 = vcombine.high %v4712, %v4712
    %v4735 = vcombine.high %v4719, %v4719
    %v4736 = vcombine.high %v4726, %v4726
    %v4737 = vcombine.high %v4733, %v4733
    %v4738 = vlaneseq
    %v4739 = vshrl.u32 %v4738, 7
    %v4740 = vsub.s32 0, %v4739
    %v4741 = vrot.slane %v4712, %v4740
    %v4742 = vlaneseq
    %v4743 = vshrl.u32 %v4742, 7
    %v4744 = vsub.s32 0, %v4743
    %v4745 = vrot.slane %v4726, %v4744
    %v4746 = vlaneseq
    %v4747 = vshrl.u32 %v4746, 7
    %v4748 = vsub.s32 0, %v4747
    %v4749 = vrot.slane %v4734, %v4748
    %v4750 = vlaneseq
    %v4751 = vshrl.u32 %v4750, 7
    %v4752 = vsub.s32 0, %v4751
    %v4753 = vrot.slane %v4736, %v4752
    %v4754 = vlaneseq
    %v4755 = vshrl.u32 %v4754, 7
    %v4756 = vsub.s32 0, %v4755
    %v4757 = vrot.slane %v4719, %v4756
    %v4758 = vlaneseq
    %v4759 = vshrl.u32 %v4758, 7
    %v4760 = vsub.s32 0, %v4759
    %v4761 = vrot.slane %v4733, %v4760
    %v4762 = vlaneseq
    %v4763 = vshrl.u32 %v4762, 7
    %v4764 = vsub.s32 0, %v4763
    %v4765 = vrot.slane %v4735, %v4764
    %v4766 = vlaneseq
    %v4767 = vshrl.u32 %v4766, 7
    %v4768 = vsub.s32 0, %v4767
    %v4769 = vrot.slane %v4737, %v4768
    %v4778 = vmul.f32 %v4320, %v4651
    %v4779 = vmul.f32 %v4320, %v4655
    %v4780 = vmul.f32 %v4320, %v4659
    %v4781 = vmul.f32 %v4320, %v4663
    %v4782 = vmul.f32 %v4320, %v4667
    %v4783 = vmul.f32 %v4320, %v4671
    %v4784 = vmul.f32 %v4320, %v4675
    %v4785 = vmul.f32 %v4320, %v4679
    %v4787 = vsel %vm218, %v4778, 0
    %v4790 = vsel %vm218, %v4779, 0
    %v4793 = vsel %vm218, %v4780, 0
    %v4796 = vsel %vm218, %v4781, 0
    %v4799 = vsel %vm218, %v4782, 0
    %v4802 = vsel %vm218, %v4783, 0
    %v4805 = vsel %vm218, %v4784, 0
    %v4808 = vsel %vm218, %v4785, 0
    %4810 = vmatprep.subr.mxu0 0.0
    %4811 = vmatpush1.msra.mxu0 %v4322
    %4812 = vmatprep.subr.mxu0 0.0
    %4813 = vmatpush1.msra.mxu0 %v4323
    %4814 = vmatprep.subr.mxu0 0.0
    %4815 = vmatpush1.msra.mxu0 %v4324
    %4816 = vmatprep.subr.mxu0 0.0
    %4817 = vmatpush1.msra.mxu0 %v4325
    %4818 = vmatprep.subr.mxu0 0.0
    %4819 = vmatpush1.msra.mxu0 0.0
    %4820 = vmatprep.subr.mxu0 0.0
    %4821 = vmatpush1.msra.mxu0 0.0
    %4822 = vmatprep.subr.mxu0 0.0
    %4823 = vmatpush1.msra.mxu0 0.0
    %4824 = vmatprep.subr.mxu0 0.0
    %4825 = vmatpush1.msra.mxu0 0.0
    %4826 = vmatprep.subr.mxu0 0.0
    %4827 = vmatpush1.msra.mxu0 0.0
    %4828 = vmatprep.subr.mxu0 0.0
    %4829 = vmatpush1.msra.mxu0 0.0
    %4830 = vmatprep.subr.mxu0 0.0
    %4831 = vmatpush1.msra.mxu0 0.0
    %4832 = vmatprep.subr.mxu0 0.0
    %4833 = vmatpush1.msra.mxu0 0.0
    %4834 = vmatprep.subr.mxu0 0.0
    %4835 = vmatpush1.msra.mxu0 0.0
    %4836 = vmatprep.subr.mxu0 0.0
    %4837 = vmatpush1.msra.mxu0 0.0
    %4838 = vmatprep.subr.mxu0 0.0
    %4839 = vmatpush1.msra.mxu0 0.0
    %4840 = vmatprep.subr.mxu0 0.0
    %4841 = vmatpush1.msra.mxu0 0.0
    %4842 = vmatprep.subr.mxu0 0.0
    %4843 = vmatpush1.msra.mxu0 0.0
    %4844 = vmatprep.subr.mxu0 0.0
    %4845 = vmatpush1.msra.mxu0 0.0
    %4846 = vmatprep.subr.mxu0 0.0
    %4847 = vmatpush1.msra.mxu0 0.0
    %4848 = vmatprep.subr.mxu0 0.0
    %4849 = vmatpush1.msra.mxu0 0.0
    %4850 = vmatprep.subr.mxu0 0.0
    %4851 = vmatpush1.msra.mxu0 0.0
    %4852 = vmatprep.subr.mxu0 0.0
    %4853 = vmatpush1.msra.mxu0 0.0
    %4854 = vmatprep.subr.mxu0 0.0
    %4855 = vmatpush1.msra.mxu0 0.0
    %4856 = vmatprep.subr.mxu0 0.0
    %4857 = vmatpush1.msra.mxu0 0.0
    %4858 = vmatprep.subr.mxu0 0.0
    %4859 = vmatpush1.msra.mxu0 0.0
    %4860 = vmatprep.subr.mxu0 0.0
    %4861 = vmatpush1.msra.mxu0 0.0
    %4862 = vmatprep.subr.mxu0 0.0
    %4863 = vmatpush1.msra.mxu0 0.0
    %4864 = vmatprep.subr.mxu0 0.0
    %4865 = vmatpush1.msra.mxu0 0.0
    %4866 = vmatprep.subr.mxu0 0.0
    %4867 = vmatpush1.msra.mxu0 0.0
    %4868 = vmatprep.subr.mxu0 0.0
    %4869 = vmatpush1.msra.mxu0 0.0
    %4870 = vmatprep.subr.mxu0 0.0
    %4871 = vmatpush1.msra.mxu0 0.0
    %4872 = vmatprep.subr.mxu0 0.0
    %4873 = vmatpush1.msra.mxu0 0.0
    %4874 = vmatprep.mubr.f32.mxu0 0.0
    %4875 = vmatmul.mubr.f32.gmra.mrb[0].mxu0 %v4787
    %v4876 = vpop.f32.mrb[0].mxu0
    %v4877 = vadd.f32 0.0, %v4876
    %v4878 = vpop.f32.mrb[0].mxu0
    %4879 = vmatprep.mubr.f32.mxu0 0.0
    %4880 = vmatmul.mubr.f32.gmra.mrb[0].mxu0 %v4790
    %v4881 = vpop.f32.mrb[0].mxu0
    %v4882 = vadd.f32 0.0, %v4881
    %v4883 = vpop.f32.mrb[0].mxu0
    %4884 = vmatprep.mubr.f32.mxu0 0.0
    %4885 = vmatmul.mubr.f32.gmra.mrb[0].mxu0 %v4793
    %v4886 = vpop.f32.mrb[0].mxu0
    %v4887 = vadd.f32 0.0, %v4886
    %v4888 = vpop.f32.mrb[0].mxu0
    %4889 = vmatprep.mubr.f32.mxu0 0.0
    %4890 = vmatmul.mubr.f32.gmra.mrb[0].mxu0 %v4796
    %v4891 = vpop.f32.mrb[0].mxu0
    %v4892 = vadd.f32 0.0, %v4891
    %v4893 = vpop.f32.mrb[0].mxu0
    %4894 = vmatprep.mubr.f32.mxu0 0.0
    %4895 = vmatmul.mubr.f32.gmra.mrb[0].mxu0 %v4799
    %v4896 = vpop.f32.mrb[0].mxu0
    %v4897 = vadd.f32 0.0, %v4896
    %v4898 = vpop.f32.mrb[0].mxu0
    %4899 = vmatprep.mubr.f32.mxu0 0.0
    %4900 = vmatmul.mubr.f32.gmra.mrb[0].mxu0 %v4802
    %v4901 = vpop.f32.mrb[0].mxu0
    %v4902 = vadd.f32 0.0, %v4901
    %v4903 = vpop.f32.mrb[0].mxu0
    %4904 = vmatprep.mubr.f32.mxu0 0.0
    %4905 = vmatmul.mubr.f32.gmra.mrb[0].mxu0 %v4805
    %v4906 = vpop.f32.mrb[0].mxu0
    %v4907 = vadd.f32 0.0, %v4906
    %v4908 = vpop.f32.mrb[0].mxu0
    %4909 = vmatprep.mubr.f32.mxu0 0.0
    %4910 = vmatmul.mubr.f32.gmra.mrb[0].mxu0 %v4808
    %v4911 = vpop.f32.mrb[0].mxu0
    %v4912 = vadd.f32 0.0, %v4911
    %v4913 = vpop.f32.mrb[0].mxu0
    %4914 = vdwg.mxu0
    %v4915 = vmul.f32 %v4877, %v4741
    %v4916 = vmul.f32 %v4882, %v4745
    %v4917 = vmul.f32 %v4887, %v4749
    %v4918 = vmul.f32 %v4892, %v4753
    %v4919 = vmul.f32 %v4897, %v4757
    %v4920 = vmul.f32 %v4902, %v4761
    %v4921 = vmul.f32 %v4907, %v4765
    %v4922 = vmul.f32 %v4912, %v4769
    %v4924 = vsel %vm218, %v4915, 0
    %v4927 = vsel %vm218, %v4916, 0
    %v4930 = vsel %vm218, %v4917, 0
    %v4933 = vsel %vm218, %v4918, 0
    %v4936 = vsel %vm218, %v4919, 0
    %v4939 = vsel %vm218, %v4920, 0
    %v4942 = vsel %vm218, %v4921, 0
    %v4945 = vsel %vm218, %v4922, 0
    %4947 = vmatprep.subr.mxu0 0.0
    %4948 = vmatpush1.msra.mxu0 %v4327
    %4949 = vmatprep.subr.mxu0 0.0
    %4950 = vmatpush1.msra.mxu0 %v4328
    %4951 = vmatprep.subr.mxu0 0.0
    %4952 = vmatpush1.msra.mxu0 %v4329
    %4953 = vmatprep.subr.mxu0 0.0
    %4954 = vmatpush1.msra.mxu0 %v4330
    %4955 = vmatprep.subr.mxu0 0.0
    %4956 = vmatpush1.msra.mxu0 0.0
    %4957 = vmatprep.subr.mxu0 0.0
    %4958 = vmatpush1.msra.mxu0 0.0
    %4959 = vmatprep.subr.mxu0 0.0
    %4960 = vmatpush1.msra.mxu0 0.0
    %4961 = vmatprep.subr.mxu0 0.0
    %4962 = vmatpush1.msra.mxu0 0.0
    %4963 = vmatprep.subr.mxu0 0.0
    %4964 = vmatpush1.msra.mxu0 0.0
    %4965 = vmatprep.subr.mxu0 0.0
    %4966 = vmatpush1.msra.mxu0 0.0
    %4967 = vmatprep.subr.mxu0 0.0
    %4968 = vmatpush1.msra.mxu0 0.0
    %4969 = vmatprep.subr.mxu0 0.0
    %4970 = vmatpush1.msra.mxu0 0.0
    %4971 = vmatprep.subr.mxu0 0.0
    %4972 = vmatpush1.msra.mxu0 0.0
    %4973 = vmatprep.subr.mxu0 0.0
    %4974 = vmatpush1.msra.mxu0 0.0
    %4975 = vmatprep.subr.mxu0 0.0
    %4976 = vmatpush1.msra.mxu0 0.0
    %4977 = vmatprep.subr.mxu0 0.0
    %4978 = vmatpush1.msra.mxu0 0.0
    %4979 = vmatprep.subr.mxu0 0.0
    %4980 = vmatpush1.msra.mxu0 0.0
    %4981 = vmatprep.subr.mxu0 0.0
    %4982 = vmatpush1.msra.mxu0 0.0
    %4983 = vmatprep.subr.mxu0 0.0
    %4984 = vmatpush1.msra.mxu0 0.0
    %4985 = vmatprep.subr.mxu0 0.0
    %4986 = vmatpush1.msra.mxu0 0.0
    %4987 = vmatprep.subr.mxu0 0.0
    %4988 = vmatpush1.msra.mxu0 0.0
    %4989 = vmatprep.subr.mxu0 0.0
    %4990 = vmatpush1.msra.mxu0 0.0
    %4991 = vmatprep.subr.mxu0 0.0
    %4992 = vmatpush1.msra.mxu0 0.0
    %4993 = vmatprep.subr.mxu0 0.0
    %4994 = vmatpush1.msra.mxu0 0.0
    %4995 = vmatprep.subr.mxu0 0.0
    %4996 = vmatpush1.msra.mxu0 0.0
    %4997 = vmatprep.subr.mxu0 0.0
    %4998 = vmatpush1.msra.mxu0 0.0
    %4999 = vmatprep.subr.mxu0 0.0
    %5000 = vmatpush1.msra.mxu0 0.0
    %5001 = vmatprep.subr.mxu0 0.0
    %5002 = vmatpush1.msra.mxu0 0.0
    %5003 = vmatprep.subr.mxu0 0.0
    %5004 = vmatpush1.msra.mxu0 0.0
    %5005 = vmatprep.subr.mxu0 0.0
    %5006 = vmatpush1.msra.mxu0 0.0
    %5007 = vmatprep.subr.mxu0 0.0
    %5008 = vmatpush1.msra.mxu0 0.0
    %5009 = vmatprep.subr.mxu0 0.0
    %5010 = vmatpush1.msra.mxu0 0.0
    %5011 = vmatprep.mubr.f32.mxu0 0.0
    %5012 = vmatmul.mubr.f32.gmra.mrb[0].mxu0 %v4924
    %v5013 = vpop.f32.mrb[0].mxu0
    %v5014 = vadd.f32 0.0, %v5013
    %v5015 = vpop.f32.mrb[0].mxu0
    %5016 = vmatprep.mubr.f32.mxu0 0.0
    %5017 = vmatmul.mubr.f32.gmra.mrb[0].mxu0 %v4927
    %v5018 = vpop.f32.mrb[0].mxu0
    %v5019 = vadd.f32 0.0, %v5018
    %v5020 = vpop.f32.mrb[0].mxu0
    %5021 = vmatprep.mubr.f32.mxu0 0.0
    %5022 = vmatmul.mubr.f32.gmra.mrb[0].mxu0 %v4930
    %v5023 = vpop.f32.mrb[0].mxu0
    %v5024 = vadd.f32 0.0, %v5023
    %v5025 = vpop.f32.mrb[0].mxu0
    %5026 = vmatprep.mubr.f32.mxu0 0.0
    %5027 = vmatmul.mubr.f32.gmra.mrb[0].mxu0 %v4933
    %v5028 = vpop.f32.mrb[0].mxu0
    %v5029 = vadd.f32 0.0, %v5028
    %v5030 = vpop.f32.mrb[0].mxu0
    %5031 = vmatprep.mubr.f32.mxu0 0.0
    %5032 = vmatmul.mubr.f32.gmra.mrb[0].mxu0 %v4936
    %v5033 = vpop.f32.mrb[0].mxu0
    %v5034 = vadd.f32 0.0, %v5033
    %v5035 = vpop.f32.mrb[0].mxu0
    %5036 = vmatprep.mubr.f32.mxu0 0.0
    %5037 = vmatmul.mubr.f32.gmra.mrb[0].mxu0 %v4939
    %v5038 = vpop.f32.mrb[0].mxu0
    %v5039 = vadd.f32 0.0, %v5038
    %v5040 = vpop.f32.mrb[0].mxu0
    %5041 = vmatprep.mubr.f32.mxu0 0.0
    %5042 = vmatmul.mubr.f32.gmra.mrb[0].mxu0 %v4942
    %v5043 = vpop.f32.mrb[0].mxu0
    %v5044 = vadd.f32 0.0, %v5043
    %v5045 = vpop.f32.mrb[0].mxu0
    %5046 = vmatprep.mubr.f32.mxu0 0.0
    %5047 = vmatmul.mubr.f32.gmra.mrb[0].mxu0 %v4945
    %v5048 = vpop.f32.mrb[0].mxu0
    %v5049 = vadd.f32 0.0, %v5048
    %v5050 = vpop.f32.mrb[0].mxu0
    %5051 = vdwg.mxu0
    %v5052 = vmul.f32 %v4915, %v4332
    %v5053 = vmul.f32 %v4916, %v4332
    %v5054 = vmul.f32 %v4917, %v4332
    %v5055 = vmul.f32 %v4918, %v4332
    %v5056 = vmul.f32 %v4919, %v4332
    %v5057 = vmul.f32 %v4920, %v4332
    %v5058 = vmul.f32 %v4921, %v4332
    %v5059 = vmul.f32 %v4922, %v4332
    %v5060 = vsel %vm218, %v5052, 0.0
    %5061 = vadd.xlane.f32.xlu0 %v5060
    %v5062 = vpop.xlane.xlu0 %5061
    %v5063 = vsel %vm218, %v5053, 0.0
    %5064 = vadd.xlane.f32.xlu0 %v5063
    %v5065 = vpop.xlane.xlu0 %5064
    %v5066 = vsel %vm218, %v5054, 0.0
    %5067 = vadd.xlane.f32.xlu0 %v5066
    %v5068 = vpop.xlane.xlu0 %5067
    %v5069 = vsel %vm218, %v5055, 0.0
    %5070 = vadd.xlane.f32.xlu0 %v5069
    %v5071 = vpop.xlane.xlu0 %5070
    %v5072 = vsel %vm218, %v5056, 0.0
    %5073 = vadd.xlane.f32.xlu0 %v5072
    %v5074 = vpop.xlane.xlu0 %5073
    %v5075 = vsel %vm218, %v5057, 0.0
    %5076 = vadd.xlane.f32.xlu0 %v5075
    %v5077 = vpop.xlane.xlu0 %5076
    %v5078 = vsel %vm218, %v5058, 0.0
    %5079 = vadd.xlane.f32.xlu0 %v5078
    %v5080 = vpop.xlane.xlu0 %5079
    %v5081 = vsel %vm218, %v5059, 0.0
    %5082 = vadd.xlane.f32.xlu0 %v5081
    %v5083 = vpop.xlane.xlu0 %5082
    %v5092 = vlaneseq
    %v5093 = vshrl.u32 %v5092, 7
    %v5094 = vsub.s32 %v877, %v5093
    %v5095 = vrot.slane %v5062, %v5094
    %v5096 = vlaneseq
    %v5097 = vshrl.u32 %v5096, 7
    %v5098 = vsub.s32 %v877, %v5097
    %v5099 = vrot.slane %v5065, %v5098
    %v5100 = vlaneseq
    %v5101 = vshrl.u32 %v5100, 7
    %v5102 = vsub.s32 %v877, %v5101
    %v5103 = vrot.slane %v5068, %v5102
    %v5104 = vlaneseq
    %v5105 = vshrl.u32 %v5104, 7
    %v5106 = vsub.s32 %v877, %v5105
    %v5107 = vrot.slane %v5071, %v5106
    %v5108 = vlaneseq
    %v5109 = vshrl.u32 %v5108, 7
    %v5110 = vsub.s32 %v877, %v5109
    %v5111 = vrot.slane %v5074, %v5110
    %v5112 = vlaneseq
    %v5113 = vshrl.u32 %v5112, 7
    %v5114 = vsub.s32 %v877, %v5113
    %v5115 = vrot.slane %v5077, %v5114
    %v5116 = vlaneseq
    %v5117 = vshrl.u32 %v5116, 7
    %v5118 = vsub.s32 %v877, %v5117
    %v5119 = vrot.slane %v5080, %v5118
    %v5120 = vlaneseq
    %v5121 = vshrl.u32 %v5120, 7
    %v5122 = vsub.s32 %v877, %v5121
    %v5123 = vrot.slane %v5083, %v5122
    %v5124 = vsel %vm910, %v5099, %v5095
    %v5125 = vsel %vm912, %v5103, %v5124
    %v5126 = vsel %vm914, %v5107, %v5125
    %v5127 = vsel %vm916, %v5111, %v5126
    %v5128 = vsel %vm918, %v5115, %v5127
    %v5129 = vsel %vm920, %v5119, %v5128
    %v5130 = vsel %vm922, %v5123, %v5129
    %v5132 = vsel %vm127, %v5130, 0.0
    %5133 = vadd.xlane.f32.xlu0 %v5132
    %v5134 = vpop.xlane.xlu0 %5133
    %v5136 = vsel %vm127, %v5014, 0
    %5138 = vmatprep.subr.mxu0 0.0
    %5139 = vmatpush1.msra.mxu0 %v5014
    %5140 = vmatprep.subr.mxu0 0.0
    %5141 = vmatpush1.msra.mxu0 0.0
    %5142 = vmatprep.subr.mxu0 0.0
    %5143 = vmatpush1.msra.mxu0 0.0
    %5144 = vmatprep.subr.mxu0 0.0
    %5145 = vmatpush1.msra.mxu0 0.0
    %5146 = vmatprep.subr.mxu0 0.0
    %5147 = vmatpush1.msra.mxu0 0.0
    %5148 = vmatprep.subr.mxu0 0.0
    %5149 = vmatpush1.msra.mxu0 0.0
    %5150 = vmatprep.subr.mxu0 0.0
    %5151 = vmatpush1.msra.mxu0 0.0
    %5152 = vmatprep.subr.mxu0 0.0
    %5153 = vmatpush1.msra.mxu0 0.0
    %5154 = vmatprep.subr.mxu0 0.0
    %5155 = vmatpush1.msra.mxu0 0.0
    %5156 = vmatprep.subr.mxu0 0.0
    %5157 = vmatpush1.msra.mxu0 0.0
    %5158 = vmatprep.subr.mxu0 0.0
    %5159 = vmatpush1.msra.mxu0 0.0
    %5160 = vmatprep.subr.mxu0 0.0
    %5161 = vmatpush1.msra.mxu0 0.0
    %5162 = vmatprep.subr.mxu0 0.0
    %5163 = vmatpush1.msra.mxu0 0.0
    %5164 = vmatprep.subr.mxu0 0.0
    %5165 = vmatpush1.msra.mxu0 0.0
    %5166 = vmatprep.subr.mxu0 0.0
    %5167 = vmatpush1.msra.mxu0 0.0
    %5168 = vmatprep.subr.mxu0 0.0
    %5169 = vmatpush1.msra.mxu0 0.0
    %5170 = vmatprep.subr.mxu0 0.0
    %5171 = vmatpush1.msra.mxu0 0.0
    %5172 = vmatprep.subr.mxu0 0.0
    %5173 = vmatpush1.msra.mxu0 0.0
    %5174 = vmatprep.subr.mxu0 0.0
    %5175 = vmatpush1.msra.mxu0 0.0
    %5176 = vmatprep.subr.mxu0 0.0
    %5177 = vmatpush1.msra.mxu0 0.0
    %5178 = vmatprep.subr.mxu0 0.0
    %5179 = vmatpush1.msra.mxu0 0.0
    %5180 = vmatprep.subr.mxu0 0.0
    %5181 = vmatpush1.msra.mxu0 0.0
    %5182 = vmatprep.subr.mxu0 0.0
    %5183 = vmatpush1.msra.mxu0 0.0
    %5184 = vmatprep.subr.mxu0 0.0
    %5185 = vmatpush1.msra.mxu0 0.0
    %5186 = vmatprep.subr.mxu0 0.0
    %5187 = vmatpush1.msra.mxu0 0.0
    %5188 = vmatprep.subr.mxu0 0.0
    %5189 = vmatpush1.msra.mxu0 0.0
    %5190 = vmatprep.subr.mxu0 0.0
    %5191 = vmatpush1.msra.mxu0 0.0
    %5192 = vmatprep.subr.mxu0 0.0
    %5193 = vmatpush1.msra.mxu0 0.0
    %5194 = vmatprep.subr.mxu0 0.0
    %5195 = vmatpush1.msra.mxu0 0.0
    %5196 = vmatprep.subr.mxu0 0.0
    %5197 = vmatpush1.msra.mxu0 0.0
    %5198 = vmatprep.subr.mxu0 0.0
    %5199 = vmatpush1.msra.mxu0 0.0
    %5200 = vmatprep.subr.mxu0 0.0
    %5201 = vmatpush1.msra.mxu0 0.0
    %5202 = vmatprep.mubr.f32.mxu0 0.0
    %5203 = vmatmul.mubr.f32.gmra.mrb[0].mxu0 %v5136
    %v5204 = vpop.f32.mrb[0].mxu0
    %v5205 = vadd.f32 0.0, %v5204
    %v5206 = vpop.f32.mrb[0].mxu0
    %5207 = vdwg.mxu0
    %v5209 = vsel %vm127, %v5019, 0
    %5211 = vmatprep.subr.mxu0 0.0
    %5212 = vmatpush1.msra.mxu0 %v5019
    %5213 = vmatprep.subr.mxu0 0.0
    %5214 = vmatpush1.msra.mxu0 0.0
    %5215 = vmatprep.subr.mxu0 0.0
    %5216 = vmatpush1.msra.mxu0 0.0
    %5217 = vmatprep.subr.mxu0 0.0
    %5218 = vmatpush1.msra.mxu0 0.0
    %5219 = vmatprep.subr.mxu0 0.0
    %5220 = vmatpush1.msra.mxu0 0.0
    %5221 = vmatprep.subr.mxu0 0.0
    %5222 = vmatpush1.msra.mxu0 0.0
    %5223 = vmatprep.subr.mxu0 0.0
    %5224 = vmatpush1.msra.mxu0 0.0
    %5225 = vmatprep.subr.mxu0 0.0
    %5226 = vmatpush1.msra.mxu0 0.0
    %5227 = vmatprep.subr.mxu0 0.0
    %5228 = vmatpush1.msra.mxu0 0.0
    %5229 = vmatprep.subr.mxu0 0.0
    %5230 = vmatpush1.msra.mxu0 0.0
    %5231 = vmatprep.subr.mxu0 0.0
    %5232 = vmatpush1.msra.mxu0 0.0
    %5233 = vmatprep.subr.mxu0 0.0
    %5234 = vmatpush1.msra.mxu0 0.0
    %5235 = vmatprep.subr.mxu0 0.0
    %5236 = vmatpush1.msra.mxu0 0.0
    %5237 = vmatprep.subr.mxu0 0.0
    %5238 = vmatpush1.msra.mxu0 0.0
    %5239 = vmatprep.subr.mxu0 0.0
    %5240 = vmatpush1.msra.mxu0 0.0
    %5241 = vmatprep.subr.mxu0 0.0
    %5242 = vmatpush1.msra.mxu0 0.0
    %5243 = vmatprep.subr.mxu0 0.0
    %5244 = vmatpush1.msra.mxu0 0.0
    %5245 = vmatprep.subr.mxu0 0.0
    %5246 = vmatpush1.msra.mxu0 0.0
    %5247 = vmatprep.subr.mxu0 0.0
    %5248 = vmatpush1.msra.mxu0 0.0
    %5249 = vmatprep.subr.mxu0 0.0
    %5250 = vmatpush1.msra.mxu0 0.0
    %5251 = vmatprep.subr.mxu0 0.0
    %5252 = vmatpush1.msra.mxu0 0.0
    %5253 = vmatprep.subr.mxu0 0.0
    %5254 = vmatpush1.msra.mxu0 0.0
    %5255 = vmatprep.subr.mxu0 0.0
    %5256 = vmatpush1.msra.mxu0 0.0
    %5257 = vmatprep.subr.mxu0 0.0
    %5258 = vmatpush1.msra.mxu0 0.0
    %5259 = vmatprep.subr.mxu0 0.0
    %5260 = vmatpush1.msra.mxu0 0.0
    %5261 = vmatprep.subr.mxu0 0.0
    %5262 = vmatpush1.msra.mxu0 0.0
    %5263 = vmatprep.subr.mxu0 0.0
    %5264 = vmatpush1.msra.mxu0 0.0
    %5265 = vmatprep.subr.mxu0 0.0
    %5266 = vmatpush1.msra.mxu0 0.0
    %5267 = vmatprep.subr.mxu0 0.0
    %5268 = vmatpush1.msra.mxu0 0.0
    %5269 = vmatprep.subr.mxu0 0.0
    %5270 = vmatpush1.msra.mxu0 0.0
    %5271 = vmatprep.subr.mxu0 0.0
    %5272 = vmatpush1.msra.mxu0 0.0
    %5273 = vmatprep.subr.mxu0 0.0
    %5274 = vmatpush1.msra.mxu0 0.0
    %5275 = vmatprep.mubr.f32.mxu0 0.0
    %5276 = vmatmul.mubr.f32.gmra.mrb[0].mxu0 %v5209
    %v5277 = vpop.f32.mrb[0].mxu0
    %v5278 = vadd.f32 0.0, %v5277
    %v5279 = vpop.f32.mrb[0].mxu0
    %5280 = vdwg.mxu0
    %v5282 = vsel %vm127, %v5024, 0
    %5284 = vmatprep.subr.mxu0 0.0
    %5285 = vmatpush1.msra.mxu0 %v5024
    %5286 = vmatprep.subr.mxu0 0.0
    %5287 = vmatpush1.msra.mxu0 0.0
    %5288 = vmatprep.subr.mxu0 0.0
    %5289 = vmatpush1.msra.mxu0 0.0
    %5290 = vmatprep.subr.mxu0 0.0
    %5291 = vmatpush1.msra.mxu0 0.0
    %5292 = vmatprep.subr.mxu0 0.0
    %5293 = vmatpush1.msra.mxu0 0.0
    %5294 = vmatprep.subr.mxu0 0.0
    %5295 = vmatpush1.msra.mxu0 0.0
    %5296 = vmatprep.subr.mxu0 0.0
    %5297 = vmatpush1.msra.mxu0 0.0
    %5298 = vmatprep.subr.mxu0 0.0
    %5299 = vmatpush1.msra.mxu0 0.0
    %5300 = vmatprep.subr.mxu0 0.0
    %5301 = vmatpush1.msra.mxu0 0.0
    %5302 = vmatprep.subr.mxu0 0.0
    %5303 = vmatpush1.msra.mxu0 0.0
    %5304 = vmatprep.subr.mxu0 0.0
    %5305 = vmatpush1.msra.mxu0 0.0
    %5306 = vmatprep.subr.mxu0 0.0
    %5307 = vmatpush1.msra.mxu0 0.0
    %5308 = vmatprep.subr.mxu0 0.0
    %5309 = vmatpush1.msra.mxu0 0.0
    %5310 = vmatprep.subr.mxu0 0.0
    %5311 = vmatpush1.msra.mxu0 0.0
    %5312 = vmatprep.subr.mxu0 0.0
    %5313 = vmatpush1.msra.mxu0 0.0
    %5314 = vmatprep.subr.mxu0 0.0
    %5315 = vmatpush1.msra.mxu0 0.0
    %5316 = vmatprep.subr.mxu0 0.0
    %5317 = vmatpush1.msra.mxu0 0.0
    %5318 = vmatprep.subr.mxu0 0.0
    %5319 = vmatpush1.msra.mxu0 0.0
    %5320 = vmatprep.subr.mxu0 0.0
    %5321 = vmatpush1.msra.mxu0 0.0
    %5322 = vmatprep.subr.mxu0 0.0
    %5323 = vmatpush1.msra.mxu0 0.0
    %5324 = vmatprep.subr.mxu0 0.0
    %5325 = vmatpush1.msra.mxu0 0.0
    %5326 = vmatprep.subr.mxu0 0.0
    %5327 = vmatpush1.msra.mxu0 0.0
    %5328 = vmatprep.subr.mxu0 0.0
    %5329 = vmatpush1.msra.mxu0 0.0
    %5330 = vmatprep.subr.mxu0 0.0
    %5331 = vmatpush1.msra.mxu0 0.0
    %5332 = vmatprep.subr.mxu0 0.0
    %5333 = vmatpush1.msra.mxu0 0.0
    %5334 = vmatprep.subr.mxu0 0.0
    %5335 = vmatpush1.msra.mxu0 0.0
    %5336 = vmatprep.subr.mxu0 0.0
    %5337 = vmatpush1.msra.mxu0 0.0
    %5338 = vmatprep.subr.mxu0 0.0
    %5339 = vmatpush1.msra.mxu0 0.0
    %5340 = vmatprep.subr.mxu0 0.0
    %5341 = vmatpush1.msra.mxu0 0.0
    %5342 = vmatprep.subr.mxu0 0.0
    %5343 = vmatpush1.msra.mxu0 0.0
    %5344 = vmatprep.subr.mxu0 0.0
    %5345 = vmatpush1.msra.mxu0 0.0
    %5346 = vmatprep.subr.mxu0 0.0
    %5347 = vmatpush1.msra.mxu0 0.0
    %5348 = vmatprep.mubr.f32.mxu0 0.0
    %5349 = vmatmul.mubr.f32.gmra.mrb[0].mxu0 %v5282
    %v5350 = vpop.f32.mrb[0].mxu0
    %v5351 = vadd.f32 0.0, %v5350
    %v5352 = vpop.f32.mrb[0].mxu0
    %5353 = vdwg.mxu0
    %v5355 = vsel %vm127, %v5029, 0
    %5357 = vmatprep.subr.mxu0 0.0
    %5358 = vmatpush1.msra.mxu0 %v5029
    %5359 = vmatprep.subr.mxu0 0.0
    %5360 = vmatpush1.msra.mxu0 0.0
    %5361 = vmatprep.subr.mxu0 0.0
    %5362 = vmatpush1.msra.mxu0 0.0
    %5363 = vmatprep.subr.mxu0 0.0
    %5364 = vmatpush1.msra.mxu0 0.0
    %5365 = vmatprep.subr.mxu0 0.0
    %5366 = vmatpush1.msra.mxu0 0.0
    %5367 = vmatprep.subr.mxu0 0.0
    %5368 = vmatpush1.msra.mxu0 0.0
    %5369 = vmatprep.subr.mxu0 0.0
    %5370 = vmatpush1.msra.mxu0 0.0
    %5371 = vmatprep.subr.mxu0 0.0
    %5372 = vmatpush1.msra.mxu0 0.0
    %5373 = vmatprep.subr.mxu0 0.0
    %5374 = vmatpush1.msra.mxu0 0.0
    %5375 = vmatprep.subr.mxu0 0.0
    %5376 = vmatpush1.msra.mxu0 0.0
    %5377 = vmatprep.subr.mxu0 0.0
    %5378 = vmatpush1.msra.mxu0 0.0
    %5379 = vmatprep.subr.mxu0 0.0
    %5380 = vmatpush1.msra.mxu0 0.0
    %5381 = vmatprep.subr.mxu0 0.0
    %5382 = vmatpush1.msra.mxu0 0.0
    %5383 = vmatprep.subr.mxu0 0.0
    %5384 = vmatpush1.msra.mxu0 0.0
    %5385 = vmatprep.subr.mxu0 0.0
    %5386 = vmatpush1.msra.mxu0 0.0
    %5387 = vmatprep.subr.mxu0 0.0
    %5388 = vmatpush1.msra.mxu0 0.0
    %5389 = vmatprep.subr.mxu0 0.0
    %5390 = vmatpush1.msra.mxu0 0.0
    %5391 = vmatprep.subr.mxu0 0.0
    %5392 = vmatpush1.msra.mxu0 0.0
    %5393 = vmatprep.subr.mxu0 0.0
    %5394 = vmatpush1.msra.mxu0 0.0
    %5395 = vmatprep.subr.mxu0 0.0
    %5396 = vmatpush1.msra.mxu0 0.0
    %5397 = vmatprep.subr.mxu0 0.0
    %5398 = vmatpush1.msra.mxu0 0.0
    %5399 = vmatprep.subr.mxu0 0.0
    %5400 = vmatpush1.msra.mxu0 0.0
    %5401 = vmatprep.subr.mxu0 0.0
    %5402 = vmatpush1.msra.mxu0 0.0
    %5403 = vmatprep.subr.mxu0 0.0
    %5404 = vmatpush1.msra.mxu0 0.0
    %5405 = vmatprep.subr.mxu0 0.0
    %5406 = vmatpush1.msra.mxu0 0.0
    %5407 = vmatprep.subr.mxu0 0.0
    %5408 = vmatpush1.msra.mxu0 0.0
    %5409 = vmatprep.subr.mxu0 0.0
    %5410 = vmatpush1.msra.mxu0 0.0
    %5411 = vmatprep.subr.mxu0 0.0
    %5412 = vmatpush1.msra.mxu0 0.0
    %5413 = vmatprep.subr.mxu0 0.0
    %5414 = vmatpush1.msra.mxu0 0.0
    %5415 = vmatprep.subr.mxu0 0.0
    %5416 = vmatpush1.msra.mxu0 0.0
    %5417 = vmatprep.subr.mxu0 0.0
    %5418 = vmatpush1.msra.mxu0 0.0
    %5419 = vmatprep.subr.mxu0 0.0
    %5420 = vmatpush1.msra.mxu0 0.0
    %5421 = vmatprep.mubr.f32.mxu0 0.0
    %5422 = vmatmul.mubr.f32.gmra.mrb[0].mxu0 %v5355
    %v5423 = vpop.f32.mrb[0].mxu0
    %v5424 = vadd.f32 0.0, %v5423
    %v5425 = vpop.f32.mrb[0].mxu0
    %5426 = vdwg.mxu0
    %v5428 = vsel %vm127, %v5034, 0
    %5430 = vmatprep.subr.mxu0 0.0
    %5431 = vmatpush1.msra.mxu0 %v5034
    %5432 = vmatprep.subr.mxu0 0.0
    %5433 = vmatpush1.msra.mxu0 0.0
    %5434 = vmatprep.subr.mxu0 0.0
    %5435 = vmatpush1.msra.mxu0 0.0
    %5436 = vmatprep.subr.mxu0 0.0
    %5437 = vmatpush1.msra.mxu0 0.0
    %5438 = vmatprep.subr.mxu0 0.0
    %5439 = vmatpush1.msra.mxu0 0.0
    %5440 = vmatprep.subr.mxu0 0.0
    %5441 = vmatpush1.msra.mxu0 0.0
    %5442 = vmatprep.subr.mxu0 0.0
    %5443 = vmatpush1.msra.mxu0 0.0
    %5444 = vmatprep.subr.mxu0 0.0
    %5445 = vmatpush1.msra.mxu0 0.0
    %5446 = vmatprep.subr.mxu0 0.0
    %5447 = vmatpush1.msra.mxu0 0.0
    %5448 = vmatprep.subr.mxu0 0.0
    %5449 = vmatpush1.msra.mxu0 0.0
    %5450 = vmatprep.subr.mxu0 0.0
    %5451 = vmatpush1.msra.mxu0 0.0
    %5452 = vmatprep.subr.mxu0 0.0
    %5453 = vmatpush1.msra.mxu0 0.0
    %5454 = vmatprep.subr.mxu0 0.0
    %5455 = vmatpush1.msra.mxu0 0.0
    %5456 = vmatprep.subr.mxu0 0.0
    %5457 = vmatpush1.msra.mxu0 0.0
    %5458 = vmatprep.subr.mxu0 0.0
    %5459 = vmatpush1.msra.mxu0 0.0
    %5460 = vmatprep.subr.mxu0 0.0
    %5461 = vmatpush1.msra.mxu0 0.0
    %5462 = vmatprep.subr.mxu0 0.0
    %5463 = vmatpush1.msra.mxu0 0.0
    %5464 = vmatprep.subr.mxu0 0.0
    %5465 = vmatpush1.msra.mxu0 0.0
    %5466 = vmatprep.subr.mxu0 0.0
    %5467 = vmatpush1.msra.mxu0 0.0
    %5468 = vmatprep.subr.mxu0 0.0
    %5469 = vmatpush1.msra.mxu0 0.0
    %5470 = vmatprep.subr.mxu0 0.0
    %5471 = vmatpush1.msra.mxu0 0.0
    %5472 = vmatprep.subr.mxu0 0.0
    %5473 = vmatpush1.msra.mxu0 0.0
    %5474 = vmatprep.subr.mxu0 0.0
    %5475 = vmatpush1.msra.mxu0 0.0
    %5476 = vmatprep.subr.mxu0 0.0
    %5477 = vmatpush1.msra.mxu0 0.0
    %5478 = vmatprep.subr.mxu0 0.0
    %5479 = vmatpush1.msra.mxu0 0.0
    %5480 = vmatprep.subr.mxu0 0.0
    %5481 = vmatpush1.msra.mxu0 0.0
    %5482 = vmatprep.subr.mxu0 0.0
    %5483 = vmatpush1.msra.mxu0 0.0
    %5484 = vmatprep.subr.mxu0 0.0
    %5485 = vmatpush1.msra.mxu0 0.0
    %5486 = vmatprep.subr.mxu0 0.0
    %5487 = vmatpush1.msra.mxu0 0.0
    %5488 = vmatprep.subr.mxu0 0.0
    %5489 = vmatpush1.msra.mxu0 0.0
    %5490 = vmatprep.subr.mxu0 0.0
    %5491 = vmatpush1.msra.mxu0 0.0
    %5492 = vmatprep.subr.mxu0 0.0
    %5493 = vmatpush1.msra.mxu0 0.0
    %5494 = vmatprep.mubr.f32.mxu0 0.0
    %5495 = vmatmul.mubr.f32.gmra.mrb[0].mxu0 %v5428
    %v5496 = vpop.f32.mrb[0].mxu0
    %v5497 = vadd.f32 0.0, %v5496
    %v5498 = vpop.f32.mrb[0].mxu0
    %5499 = vdwg.mxu0
    %v5501 = vsel %vm127, %v5039, 0
    %5503 = vmatprep.subr.mxu0 0.0
    %5504 = vmatpush1.msra.mxu0 %v5039
    %5505 = vmatprep.subr.mxu0 0.0
    %5506 = vmatpush1.msra.mxu0 0.0
    %5507 = vmatprep.subr.mxu0 0.0
    %5508 = vmatpush1.msra.mxu0 0.0
    %5509 = vmatprep.subr.mxu0 0.0
    %5510 = vmatpush1.msra.mxu0 0.0
    %5511 = vmatprep.subr.mxu0 0.0
    %5512 = vmatpush1.msra.mxu0 0.0
    %5513 = vmatprep.subr.mxu0 0.0
    %5514 = vmatpush1.msra.mxu0 0.0
    %5515 = vmatprep.subr.mxu0 0.0
    %5516 = vmatpush1.msra.mxu0 0.0
    %5517 = vmatprep.subr.mxu0 0.0
    %5518 = vmatpush1.msra.mxu0 0.0
    %5519 = vmatprep.subr.mxu0 0.0
    %5520 = vmatpush1.msra.mxu0 0.0
    %5521 = vmatprep.subr.mxu0 0.0
    %5522 = vmatpush1.msra.mxu0 0.0
    %5523 = vmatprep.subr.mxu0 0.0
    %5524 = vmatpush1.msra.mxu0 0.0
    %5525 = vmatprep.subr.mxu0 0.0
    %5526 = vmatpush1.msra.mxu0 0.0
    %5527 = vmatprep.subr.mxu0 0.0
    %5528 = vmatpush1.msra.mxu0 0.0
    %5529 = vmatprep.subr.mxu0 0.0
    %5530 = vmatpush1.msra.mxu0 0.0
    %5531 = vmatprep.subr.mxu0 0.0
    %5532 = vmatpush1.msra.mxu0 0.0
    %5533 = vmatprep.subr.mxu0 0.0
    %5534 = vmatpush1.msra.mxu0 0.0
    %5535 = vmatprep.subr.mxu0 0.0
    %5536 = vmatpush1.msra.mxu0 0.0
    %5537 = vmatprep.subr.mxu0 0.0
    %5538 = vmatpush1.msra.mxu0 0.0
    %5539 = vmatprep.subr.mxu0 0.0
    %5540 = vmatpush1.msra.mxu0 0.0
    %5541 = vmatprep.subr.mxu0 0.0
    %5542 = vmatpush1.msra.mxu0 0.0
    %5543 = vmatprep.subr.mxu0 0.0
    %5544 = vmatpush1.msra.mxu0 0.0
    %5545 = vmatprep.subr.mxu0 0.0
    %5546 = vmatpush1.msra.mxu0 0.0
    %5547 = vmatprep.subr.mxu0 0.0
    %5548 = vmatpush1.msra.mxu0 0.0
    %5549 = vmatprep.subr.mxu0 0.0
    %5550 = vmatpush1.msra.mxu0 0.0
    %5551 = vmatprep.subr.mxu0 0.0
    %5552 = vmatpush1.msra.mxu0 0.0
    %5553 = vmatprep.subr.mxu0 0.0
    %5554 = vmatpush1.msra.mxu0 0.0
    %5555 = vmatprep.subr.mxu0 0.0
    %5556 = vmatpush1.msra.mxu0 0.0
    %5557 = vmatprep.subr.mxu0 0.0
    %5558 = vmatpush1.msra.mxu0 0.0
    %5559 = vmatprep.subr.mxu0 0.0
    %5560 = vmatpush1.msra.mxu0 0.0
    %5561 = vmatprep.subr.mxu0 0.0
    %5562 = vmatpush1.msra.mxu0 0.0
    %5563 = vmatprep.subr.mxu0 0.0
    %5564 = vmatpush1.msra.mxu0 0.0
    %5565 = vmatprep.subr.mxu0 0.0
    %5566 = vmatpush1.msra.mxu0 0.0
    %5567 = vmatprep.mubr.f32.mxu0 0.0
    %5568 = vmatmul.mubr.f32.gmra.mrb[0].mxu0 %v5501
    %v5569 = vpop.f32.mrb[0].mxu0
    %v5570 = vadd.f32 0.0, %v5569
    %v5571 = vpop.f32.mrb[0].mxu0
    %5572 = vdwg.mxu0
    %v5574 = vsel %vm127, %v5044, 0
    %5576 = vmatprep.subr.mxu0 0.0
    %5577 = vmatpush1.msra.mxu0 %v5044
    %5578 = vmatprep.subr.mxu0 0.0
    %5579 = vmatpush1.msra.mxu0 0.0
    %5580 = vmatprep.subr.mxu0 0.0
    %5581 = vmatpush1.msra.mxu0 0.0
    %5582 = vmatprep.subr.mxu0 0.0
    %5583 = vmatpush1.msra.mxu0 0.0
    %5584 = vmatprep.subr.mxu0 0.0
    %5585 = vmatpush1.msra.mxu0 0.0
    %5586 = vmatprep.subr.mxu0 0.0
    %5587 = vmatpush1.msra.mxu0 0.0
    %5588 = vmatprep.subr.mxu0 0.0
    %5589 = vmatpush1.msra.mxu0 0.0
    %5590 = vmatprep.subr.mxu0 0.0
    %5591 = vmatpush1.msra.mxu0 0.0
    %5592 = vmatprep.subr.mxu0 0.0
    %5593 = vmatpush1.msra.mxu0 0.0
    %5594 = vmatprep.subr.mxu0 0.0
    %5595 = vmatpush1.msra.mxu0 0.0
    %5596 = vmatprep.subr.mxu0 0.0
    %5597 = vmatpush1.msra.mxu0 0.0
    %5598 = vmatprep.subr.mxu0 0.0
    %5599 = vmatpush1.msra.mxu0 0.0
    %5600 = vmatprep.subr.mxu0 0.0
    %5601 = vmatpush1.msra.mxu0 0.0
    %5602 = vmatprep.subr.mxu0 0.0
    %5603 = vmatpush1.msra.mxu0 0.0
    %5604 = vmatprep.subr.mxu0 0.0
    %5605 = vmatpush1.msra.mxu0 0.0
    %5606 = vmatprep.subr.mxu0 0.0
    %5607 = vmatpush1.msra.mxu0 0.0
    %5608 = vmatprep.subr.mxu0 0.0
    %5609 = vmatpush1.msra.mxu0 0.0
    %5610 = vmatprep.subr.mxu0 0.0
    %5611 = vmatpush1.msra.mxu0 0.0
    %5612 = vmatprep.subr.mxu0 0.0
    %5613 = vmatpush1.msra.mxu0 0.0
    %5614 = vmatprep.subr.mxu0 0.0
    %5615 = vmatpush1.msra.mxu0 0.0
    %5616 = vmatprep.subr.mxu0 0.0
    %5617 = vmatpush1.msra.mxu0 0.0
    %5618 = vmatprep.subr.mxu0 0.0
    %5619 = vmatpush1.msra.mxu0 0.0
    %5620 = vmatprep.subr.mxu0 0.0
    %5621 = vmatpush1.msra.mxu0 0.0
    %5622 = vmatprep.subr.mxu0 0.0
    %5623 = vmatpush1.msra.mxu0 0.0
    %5624 = vmatprep.subr.mxu0 0.0
    %5625 = vmatpush1.msra.mxu0 0.0
    %5626 = vmatprep.subr.mxu0 0.0
    %5627 = vmatpush1.msra.mxu0 0.0
    %5628 = vmatprep.subr.mxu0 0.0
    %5629 = vmatpush1.msra.mxu0 0.0
    %5630 = vmatprep.subr.mxu0 0.0
    %5631 = vmatpush1.msra.mxu0 0.0
    %5632 = vmatprep.subr.mxu0 0.0
    %5633 = vmatpush1.msra.mxu0 0.0
    %5634 = vmatprep.subr.mxu0 0.0
    %5635 = vmatpush1.msra.mxu0 0.0
    %5636 = vmatprep.subr.mxu0 0.0
    %5637 = vmatpush1.msra.mxu0 0.0
    %5638 = vmatprep.subr.mxu0 0.0
    %5639 = vmatpush1.msra.mxu0 0.0
    %5640 = vmatprep.mubr.f32.mxu0 0.0
    %5641 = vmatmul.mubr.f32.gmra.mrb[0].mxu0 %v5574
    %v5642 = vpop.f32.mrb[0].mxu0
    %v5643 = vadd.f32 0.0, %v5642
    %v5644 = vpop.f32.mrb[0].mxu0
    %5645 = vdwg.mxu0
    %v5647 = vsel %vm127, %v5049, 0
    %5649 = vmatprep.subr.mxu0 0.0
    %5650 = vmatpush1.msra.mxu0 %v5049
    %5651 = vmatprep.subr.mxu0 0.0
    %5652 = vmatpush1.msra.mxu0 0.0
    %5653 = vmatprep.subr.mxu0 0.0
    %5654 = vmatpush1.msra.mxu0 0.0
    %5655 = vmatprep.subr.mxu0 0.0
    %5656 = vmatpush1.msra.mxu0 0.0
    %5657 = vmatprep.subr.mxu0 0.0
    %5658 = vmatpush1.msra.mxu0 0.0
    %5659 = vmatprep.subr.mxu0 0.0
    %5660 = vmatpush1.msra.mxu0 0.0
    %5661 = vmatprep.subr.mxu0 0.0
    %5662 = vmatpush1.msra.mxu0 0.0
    %5663 = vmatprep.subr.mxu0 0.0
    %5664 = vmatpush1.msra.mxu0 0.0
    %5665 = vmatprep.subr.mxu0 0.0
    %5666 = vmatpush1.msra.mxu0 0.0
    %5667 = vmatprep.subr.mxu0 0.0
    %5668 = vmatpush1.msra.mxu0 0.0
    %5669 = vmatprep.subr.mxu0 0.0
    %5670 = vmatpush1.msra.mxu0 0.0
    %5671 = vmatprep.subr.mxu0 0.0
    %5672 = vmatpush1.msra.mxu0 0.0
    %5673 = vmatprep.subr.mxu0 0.0
    %5674 = vmatpush1.msra.mxu0 0.0
    %5675 = vmatprep.subr.mxu0 0.0
    %5676 = vmatpush1.msra.mxu0 0.0
    %5677 = vmatprep.subr.mxu0 0.0
    %5678 = vmatpush1.msra.mxu0 0.0
    %5679 = vmatprep.subr.mxu0 0.0
    %5680 = vmatpush1.msra.mxu0 0.0
    %5681 = vmatprep.subr.mxu0 0.0
    %5682 = vmatpush1.msra.mxu0 0.0
    %5683 = vmatprep.subr.mxu0 0.0
    %5684 = vmatpush1.msra.mxu0 0.0
    %5685 = vmatprep.subr.mxu0 0.0
    %5686 = vmatpush1.msra.mxu0 0.0
    %5687 = vmatprep.subr.mxu0 0.0
    %5688 = vmatpush1.msra.mxu0 0.0
    %5689 = vmatprep.subr.mxu0 0.0
    %5690 = vmatpush1.msra.mxu0 0.0
    %5691 = vmatprep.subr.mxu0 0.0
    %5692 = vmatpush1.msra.mxu0 0.0
    %5693 = vmatprep.subr.mxu0 0.0
    %5694 = vmatpush1.msra.mxu0 0.0
    %5695 = vmatprep.subr.mxu0 0.0
    %5696 = vmatpush1.msra.mxu0 0.0
    %5697 = vmatprep.subr.mxu0 0.0
    %5698 = vmatpush1.msra.mxu0 0.0
    %5699 = vmatprep.subr.mxu0 0.0
    %5700 = vmatpush1.msra.mxu0 0.0
    %5701 = vmatprep.subr.mxu0 0.0
    %5702 = vmatpush1.msra.mxu0 0.0
    %5703 = vmatprep.subr.mxu0 0.0
    %5704 = vmatpush1.msra.mxu0 0.0
    %5705 = vmatprep.subr.mxu0 0.0
    %5706 = vmatpush1.msra.mxu0 0.0
    %5707 = vmatprep.subr.mxu0 0.0
    %5708 = vmatpush1.msra.mxu0 0.0
    %5709 = vmatprep.subr.mxu0 0.0
    %5710 = vmatpush1.msra.mxu0 0.0
    %5711 = vmatprep.subr.mxu0 0.0
    %5712 = vmatpush1.msra.mxu0 0.0
    %5713 = vmatprep.mubr.f32.mxu0 0.0
    %5714 = vmatmul.mubr.f32.gmra.mrb[0].mxu0 %v5647
    %v5715 = vpop.f32.mrb[0].mxu0
    %v5716 = vadd.f32 0.0, %v5715
    %v5717 = vpop.f32.mrb[0].mxu0
    %5718 = vdwg.mxu0
    %v5720 = vsel %vm127, %v5205, 0
    %5722 = vmatprep.subr.mxu0 0.0
    %5723 = vmatpush1.msra.mxu0 %v5014
    %5724 = vmatprep.subr.mxu0 0.0
    %5725 = vmatpush1.msra.mxu0 0.0
    %5726 = vmatprep.subr.mxu0 0.0
    %5727 = vmatpush1.msra.mxu0 0.0
    %5728 = vmatprep.subr.mxu0 0.0
    %5729 = vmatpush1.msra.mxu0 0.0
    %5730 = vmatprep.subr.mxu0 0.0
    %5731 = vmatpush1.msra.mxu0 0.0
    %5732 = vmatprep.subr.mxu0 0.0
    %5733 = vmatpush1.msra.mxu0 0.0
    %5734 = vmatprep.subr.mxu0 0.0
    %5735 = vmatpush1.msra.mxu0 0.0
    %5736 = vmatprep.subr.mxu0 0.0
    %5737 = vmatpush1.msra.mxu0 0.0
    %5738 = vmatprep.subr.mxu0 0.0
    %5739 = vmatpush1.msra.mxu0 0.0
    %5740 = vmatprep.subr.mxu0 0.0
    %5741 = vmatpush1.msra.mxu0 0.0
    %5742 = vmatprep.subr.mxu0 0.0
    %5743 = vmatpush1.msra.mxu0 0.0
    %5744 = vmatprep.subr.mxu0 0.0
    %5745 = vmatpush1.msra.mxu0 0.0
    %5746 = vmatprep.subr.mxu0 0.0
    %5747 = vmatpush1.msra.mxu0 0.0
    %5748 = vmatprep.subr.mxu0 0.0
    %5749 = vmatpush1.msra.mxu0 0.0
    %5750 = vmatprep.subr.mxu0 0.0
    %5751 = vmatpush1.msra.mxu0 0.0
    %5752 = vmatprep.subr.mxu0 0.0
    %5753 = vmatpush1.msra.mxu0 0.0
    %5754 = vmatprep.subr.mxu0 0.0
    %5755 = vmatpush1.msra.mxu0 0.0
    %5756 = vmatprep.subr.mxu0 0.0
    %5757 = vmatpush1.msra.mxu0 0.0
    %5758 = vmatprep.subr.mxu0 0.0
    %5759 = vmatpush1.msra.mxu0 0.0
    %5760 = vmatprep.subr.mxu0 0.0
    %5761 = vmatpush1.msra.mxu0 0.0
    %5762 = vmatprep.subr.mxu0 0.0
    %5763 = vmatpush1.msra.mxu0 0.0
    %5764 = vmatprep.subr.mxu0 0.0
    %5765 = vmatpush1.msra.mxu0 0.0
    %5766 = vmatprep.subr.mxu0 0.0
    %5767 = vmatpush1.msra.mxu0 0.0
    %5768 = vmatprep.subr.mxu0 0.0
    %5769 = vmatpush1.msra.mxu0 0.0
    %5770 = vmatprep.subr.mxu0 0.0
    %5771 = vmatpush1.msra.mxu0 0.0
    %5772 = vmatprep.subr.mxu0 0.0
    %5773 = vmatpush1.msra.mxu0 0.0
    %5774 = vmatprep.subr.mxu0 0.0
    %5775 = vmatpush1.msra.mxu0 0.0
    %5776 = vmatprep.subr.mxu0 0.0
    %5777 = vmatpush1.msra.mxu0 0.0
    %5778 = vmatprep.subr.mxu0 0.0
    %5779 = vmatpush1.msra.mxu0 0.0
    %5780 = vmatprep.subr.mxu0 0.0
    %5781 = vmatpush1.msra.mxu0 0.0
    %5782 = vmatprep.subr.mxu0 0.0
    %5783 = vmatpush1.msra.mxu0 0.0
    %5784 = vmatprep.subr.mxu0 0.0
    %5785 = vmatpush1.msra.mxu0 0.0
    %5786 = vmatprep.mubr.f32.mxu0 0.0
    %5787 = vmatmul.mubr.f32.gmra.mrb[0].mxu0 %v5720
    %v5788 = vpop.f32.mrb[0].mxu0
    %v5789 = vadd.f32 0.0, %v5788
    %v5790 = vpop.f32.mrb[0].mxu0
    %5791 = vdwg.mxu0
    %v5793 = vsel %vm127, %v5278, 0
    %5795 = vmatprep.subr.mxu0 0.0
    %5796 = vmatpush1.msra.mxu0 %v5019
    %5797 = vmatprep.subr.mxu0 0.0
    %5798 = vmatpush1.msra.mxu0 0.0
    %5799 = vmatprep.subr.mxu0 0.0
    %5800 = vmatpush1.msra.mxu0 0.0
    %5801 = vmatprep.subr.mxu0 0.0
    %5802 = vmatpush1.msra.mxu0 0.0
    %5803 = vmatprep.subr.mxu0 0.0
    %5804 = vmatpush1.msra.mxu0 0.0
    %5805 = vmatprep.subr.mxu0 0.0
    %5806 = vmatpush1.msra.mxu0 0.0
    %5807 = vmatprep.subr.mxu0 0.0
    %5808 = vmatpush1.msra.mxu0 0.0
    %5809 = vmatprep.subr.mxu0 0.0
    %5810 = vmatpush1.msra.mxu0 0.0
    %5811 = vmatprep.subr.mxu0 0.0
    %5812 = vmatpush1.msra.mxu0 0.0
    %5813 = vmatprep.subr.mxu0 0.0
    %5814 = vmatpush1.msra.mxu0 0.0
    %5815 = vmatprep.subr.mxu0 0.0
    %5816 = vmatpush1.msra.mxu0 0.0
    %5817 = vmatprep.subr.mxu0 0.0
    %5818 = vmatpush1.msra.mxu0 0.0
    %5819 = vmatprep.subr.mxu0 0.0
    %5820 = vmatpush1.msra.mxu0 0.0
    %5821 = vmatprep.subr.mxu0 0.0
    %5822 = vmatpush1.msra.mxu0 0.0
    %5823 = vmatprep.subr.mxu0 0.0
    %5824 = vmatpush1.msra.mxu0 0.0
    %5825 = vmatprep.subr.mxu0 0.0
    %5826 = vmatpush1.msra.mxu0 0.0
    %5827 = vmatprep.subr.mxu0 0.0
    %5828 = vmatpush1.msra.mxu0 0.0
    %5829 = vmatprep.subr.mxu0 0.0
    %5830 = vmatpush1.msra.mxu0 0.0
    %5831 = vmatprep.subr.mxu0 0.0
    %5832 = vmatpush1.msra.mxu0 0.0
    %5833 = vmatprep.subr.mxu0 0.0
    %5834 = vmatpush1.msra.mxu0 0.0
    %5835 = vmatprep.subr.mxu0 0.0
    %5836 = vmatpush1.msra.mxu0 0.0
    %5837 = vmatprep.subr.mxu0 0.0
    %5838 = vmatpush1.msra.mxu0 0.0
    %5839 = vmatprep.subr.mxu0 0.0
    %5840 = vmatpush1.msra.mxu0 0.0
    %5841 = vmatprep.subr.mxu0 0.0
    %5842 = vmatpush1.msra.mxu0 0.0
    %5843 = vmatprep.subr.mxu0 0.0
    %5844 = vmatpush1.msra.mxu0 0.0
    %5845 = vmatprep.subr.mxu0 0.0
    %5846 = vmatpush1.msra.mxu0 0.0
    %5847 = vmatprep.subr.mxu0 0.0
    %5848 = vmatpush1.msra.mxu0 0.0
    %5849 = vmatprep.subr.mxu0 0.0
    %5850 = vmatpush1.msra.mxu0 0.0
    %5851 = vmatprep.subr.mxu0 0.0
    %5852 = vmatpush1.msra.mxu0 0.0
    %5853 = vmatprep.subr.mxu0 0.0
    %5854 = vmatpush1.msra.mxu0 0.0
    %5855 = vmatprep.subr.mxu0 0.0
    %5856 = vmatpush1.msra.mxu0 0.0
    %5857 = vmatprep.subr.mxu0 0.0
    %5858 = vmatpush1.msra.mxu0 0.0
    %5859 = vmatprep.mubr.f32.mxu0 0.0
    %5860 = vmatmul.mubr.f32.gmra.mrb[0].mxu0 %v5793
    %v5861 = vpop.f32.mrb[0].mxu0
    %v5862 = vadd.f32 0.0, %v5861
    %v5863 = vpop.f32.mrb[0].mxu0
    %5864 = vdwg.mxu0
    %v5866 = vsel %vm127, %v5351, 0
    %5868 = vmatprep.subr.mxu0 0.0
    %5869 = vmatpush1.msra.mxu0 %v5024
    %5870 = vmatprep.subr.mxu0 0.0
    %5871 = vmatpush1.msra.mxu0 0.0
    %5872 = vmatprep.subr.mxu0 0.0
    %5873 = vmatpush1.msra.mxu0 0.0
    %5874 = vmatprep.subr.mxu0 0.0
    %5875 = vmatpush1.msra.mxu0 0.0
    %5876 = vmatprep.subr.mxu0 0.0
    %5877 = vmatpush1.msra.mxu0 0.0
    %5878 = vmatprep.subr.mxu0 0.0
    %5879 = vmatpush1.msra.mxu0 0.0
    %5880 = vmatprep.subr.mxu0 0.0
    %5881 = vmatpush1.msra.mxu0 0.0
    %5882 = vmatprep.subr.mxu0 0.0
    %5883 = vmatpush1.msra.mxu0 0.0
    %5884 = vmatprep.subr.mxu0 0.0
    %5885 = vmatpush1.msra.mxu0 0.0
    %5886 = vmatprep.subr.mxu0 0.0
    %5887 = vmatpush1.msra.mxu0 0.0
    %5888 = vmatprep.subr.mxu0 0.0
    %5889 = vmatpush1.msra.mxu0 0.0
    %5890 = vmatprep.subr.mxu0 0.0
    %5891 = vmatpush1.msra.mxu0 0.0
    %5892 = vmatprep.subr.mxu0 0.0
    %5893 = vmatpush1.msra.mxu0 0.0
    %5894 = vmatprep.subr.mxu0 0.0
    %5895 = vmatpush1.msra.mxu0 0.0
    %5896 = vmatprep.subr.mxu0 0.0
    %5897 = vmatpush1.msra.mxu0 0.0
    %5898 = vmatprep.subr.mxu0 0.0
    %5899 = vmatpush1.msra.mxu0 0.0
    %5900 = vmatprep.subr.mxu0 0.0
    %5901 = vmatpush1.msra.mxu0 0.0
    %5902 = vmatprep.subr.mxu0 0.0
    %5903 = vmatpush1.msra.mxu0 0.0
    %5904 = vmatprep.subr.mxu0 0.0
    %5905 = vmatpush1.msra.mxu0 0.0
    %5906 = vmatprep.subr.mxu0 0.0
    %5907 = vmatpush1.msra.mxu0 0.0
    %5908 = vmatprep.subr.mxu0 0.0
    %5909 = vmatpush1.msra.mxu0 0.0
    %5910 = vmatprep.subr.mxu0 0.0
    %5911 = vmatpush1.msra.mxu0 0.0
    %5912 = vmatprep.subr.mxu0 0.0
    %5913 = vmatpush1.msra.mxu0 0.0
    %5914 = vmatprep.subr.mxu0 0.0
    %5915 = vmatpush1.msra.mxu0 0.0
    %5916 = vmatprep.subr.mxu0 0.0
    %5917 = vmatpush1.msra.mxu0 0.0
    %5918 = vmatprep.subr.mxu0 0.0
    %5919 = vmatpush1.msra.mxu0 0.0
    %5920 = vmatprep.subr.mxu0 0.0
    %5921 = vmatpush1.msra.mxu0 0.0
    %5922 = vmatprep.subr.mxu0 0.0
    %5923 = vmatpush1.msra.mxu0 0.0
    %5924 = vmatprep.subr.mxu0 0.0
    %5925 = vmatpush1.msra.mxu0 0.0
    %5926 = vmatprep.subr.mxu0 0.0
    %5927 = vmatpush1.msra.mxu0 0.0
    %5928 = vmatprep.subr.mxu0 0.0
    %5929 = vmatpush1.msra.mxu0 0.0
    %5930 = vmatprep.subr.mxu0 0.0
    %5931 = vmatpush1.msra.mxu0 0.0
    %5932 = vmatprep.mubr.f32.mxu0 0.0
    %5933 = vmatmul.mubr.f32.gmra.mrb[0].mxu0 %v5866
    %v5934 = vpop.f32.mrb[0].mxu0
    %v5935 = vadd.f32 0.0, %v5934
    %v5936 = vpop.f32.mrb[0].mxu0
    %5937 = vdwg.mxu0
    %v5939 = vsel %vm127, %v5424, 0
    %5941 = vmatprep.subr.mxu0 0.0
    %5942 = vmatpush1.msra.mxu0 %v5029
    %5943 = vmatprep.subr.mxu0 0.0
    %5944 = vmatpush1.msra.mxu0 0.0
    %5945 = vmatprep.subr.mxu0 0.0
    %5946 = vmatpush1.msra.mxu0 0.0
    %5947 = vmatprep.subr.mxu0 0.0
    %5948 = vmatpush1.msra.mxu0 0.0
    %5949 = vmatprep.subr.mxu0 0.0
    %5950 = vmatpush1.msra.mxu0 0.0
    %5951 = vmatprep.subr.mxu0 0.0
    %5952 = vmatpush1.msra.mxu0 0.0
    %5953 = vmatprep.subr.mxu0 0.0
    %5954 = vmatpush1.msra.mxu0 0.0
    %5955 = vmatprep.subr.mxu0 0.0
    %5956 = vmatpush1.msra.mxu0 0.0
    %5957 = vmatprep.subr.mxu0 0.0
    %5958 = vmatpush1.msra.mxu0 0.0
    %5959 = vmatprep.subr.mxu0 0.0
    %5960 = vmatpush1.msra.mxu0 0.0
    %5961 = vmatprep.subr.mxu0 0.0
    %5962 = vmatpush1.msra.mxu0 0.0
    %5963 = vmatprep.subr.mxu0 0.0
    %5964 = vmatpush1.msra.mxu0 0.0
    %5965 = vmatprep.subr.mxu0 0.0
    %5966 = vmatpush1.msra.mxu0 0.0
    %5967 = vmatprep.subr.mxu0 0.0
    %5968 = vmatpush1.msra.mxu0 0.0
    %5969 = vmatprep.subr.mxu0 0.0
    %5970 = vmatpush1.msra.mxu0 0.0
    %5971 = vmatprep.subr.mxu0 0.0
    %5972 = vmatpush1.msra.mxu0 0.0
    %5973 = vmatprep.subr.mxu0 0.0
    %5974 = vmatpush1.msra.mxu0 0.0
    %5975 = vmatprep.subr.mxu0 0.0
    %5976 = vmatpush1.msra.mxu0 0.0
    %5977 = vmatprep.subr.mxu0 0.0
    %5978 = vmatpush1.msra.mxu0 0.0
    %5979 = vmatprep.subr.mxu0 0.0
    %5980 = vmatpush1.msra.mxu0 0.0
    %5981 = vmatprep.subr.mxu0 0.0
    %5982 = vmatpush1.msra.mxu0 0.0
    %5983 = vmatprep.subr.mxu0 0.0
    %5984 = vmatpush1.msra.mxu0 0.0
    %5985 = vmatprep.subr.mxu0 0.0
    %5986 = vmatpush1.msra.mxu0 0.0
    %5987 = vmatprep.subr.mxu0 0.0
    %5988 = vmatpush1.msra.mxu0 0.0
    %5989 = vmatprep.subr.mxu0 0.0
    %5990 = vmatpush1.msra.mxu0 0.0
    %5991 = vmatprep.subr.mxu0 0.0
    %5992 = vmatpush1.msra.mxu0 0.0
    %5993 = vmatprep.subr.mxu0 0.0
    %5994 = vmatpush1.msra.mxu0 0.0
    %5995 = vmatprep.subr.mxu0 0.0
    %5996 = vmatpush1.msra.mxu0 0.0
    %5997 = vmatprep.subr.mxu0 0.0
    %5998 = vmatpush1.msra.mxu0 0.0
    %5999 = vmatprep.subr.mxu0 0.0
    %6000 = vmatpush1.msra.mxu0 0.0
    %6001 = vmatprep.subr.mxu0 0.0
    %6002 = vmatpush1.msra.mxu0 0.0
    %6003 = vmatprep.subr.mxu0 0.0
    %6004 = vmatpush1.msra.mxu0 0.0
    %6005 = vmatprep.mubr.f32.mxu0 0.0
    %6006 = vmatmul.mubr.f32.gmra.mrb[0].mxu0 %v5939
    %v6007 = vpop.f32.mrb[0].mxu0
    %v6008 = vadd.f32 0.0, %v6007
    %v6009 = vpop.f32.mrb[0].mxu0
    %6010 = vdwg.mxu0
    %v6012 = vsel %vm127, %v5497, 0
    %6014 = vmatprep.subr.mxu0 0.0
    %6015 = vmatpush1.msra.mxu0 %v5034
    %6016 = vmatprep.subr.mxu0 0.0
    %6017 = vmatpush1.msra.mxu0 0.0
    %6018 = vmatprep.subr.mxu0 0.0
    %6019 = vmatpush1.msra.mxu0 0.0
    %6020 = vmatprep.subr.mxu0 0.0
    %6021 = vmatpush1.msra.mxu0 0.0
    %6022 = vmatprep.subr.mxu0 0.0
    %6023 = vmatpush1.msra.mxu0 0.0
    %6024 = vmatprep.subr.mxu0 0.0
    %6025 = vmatpush1.msra.mxu0 0.0
    %6026 = vmatprep.subr.mxu0 0.0
    %6027 = vmatpush1.msra.mxu0 0.0
    %6028 = vmatprep.subr.mxu0 0.0
    %6029 = vmatpush1.msra.mxu0 0.0
    %6030 = vmatprep.subr.mxu0 0.0
    %6031 = vmatpush1.msra.mxu0 0.0
    %6032 = vmatprep.subr.mxu0 0.0
    %6033 = vmatpush1.msra.mxu0 0.0
    %6034 = vmatprep.subr.mxu0 0.0
    %6035 = vmatpush1.msra.mxu0 0.0
    %6036 = vmatprep.subr.mxu0 0.0
    %6037 = vmatpush1.msra.mxu0 0.0
    %6038 = vmatprep.subr.mxu0 0.0
    %6039 = vmatpush1.msra.mxu0 0.0
    %6040 = vmatprep.subr.mxu0 0.0
    %6041 = vmatpush1.msra.mxu0 0.0
    %6042 = vmatprep.subr.mxu0 0.0
    %6043 = vmatpush1.msra.mxu0 0.0
    %6044 = vmatprep.subr.mxu0 0.0
    %6045 = vmatpush1.msra.mxu0 0.0
    %6046 = vmatprep.subr.mxu0 0.0
    %6047 = vmatpush1.msra.mxu0 0.0
    %6048 = vmatprep.subr.mxu0 0.0
    %6049 = vmatpush1.msra.mxu0 0.0
    %6050 = vmatprep.subr.mxu0 0.0
    %6051 = vmatpush1.msra.mxu0 0.0
    %6052 = vmatprep.subr.mxu0 0.0
    %6053 = vmatpush1.msra.mxu0 0.0
    %6054 = vmatprep.subr.mxu0 0.0
    %6055 = vmatpush1.msra.mxu0 0.0
    %6056 = vmatprep.subr.mxu0 0.0
    %6057 = vmatpush1.msra.mxu0 0.0
    %6058 = vmatprep.subr.mxu0 0.0
    %6059 = vmatpush1.msra.mxu0 0.0
    %6060 = vmatprep.subr.mxu0 0.0
    %6061 = vmatpush1.msra.mxu0 0.0
    %6062 = vmatprep.subr.mxu0 0.0
    %6063 = vmatpush1.msra.mxu0 0.0
    %6064 = vmatprep.subr.mxu0 0.0
    %6065 = vmatpush1.msra.mxu0 0.0
    %6066 = vmatprep.subr.mxu0 0.0
    %6067 = vmatpush1.msra.mxu0 0.0
    %6068 = vmatprep.subr.mxu0 0.0
    %6069 = vmatpush1.msra.mxu0 0.0
    %6070 = vmatprep.subr.mxu0 0.0
    %6071 = vmatpush1.msra.mxu0 0.0
    %6072 = vmatprep.subr.mxu0 0.0
    %6073 = vmatpush1.msra.mxu0 0.0
    %6074 = vmatprep.subr.mxu0 0.0
    %6075 = vmatpush1.msra.mxu0 0.0
    %6076 = vmatprep.subr.mxu0 0.0
    %6077 = vmatpush1.msra.mxu0 0.0
    %6078 = vmatprep.mubr.f32.mxu0 0.0
    %6079 = vmatmul.mubr.f32.gmra.mrb[0].mxu0 %v6012
    %v6080 = vpop.f32.mrb[0].mxu0
    %v6081 = vadd.f32 0.0, %v6080
    %v6082 = vpop.f32.mrb[0].mxu0
    %6083 = vdwg.mxu0
    %v6085 = vsel %vm127, %v5570, 0
    %6087 = vmatprep.subr.mxu0 0.0
    %6088 = vmatpush1.msra.mxu0 %v5039
    %6089 = vmatprep.subr.mxu0 0.0
    %6090 = vmatpush1.msra.mxu0 0.0
    %6091 = vmatprep.subr.mxu0 0.0
    %6092 = vmatpush1.msra.mxu0 0.0
    %6093 = vmatprep.subr.mxu0 0.0
    %6094 = vmatpush1.msra.mxu0 0.0
    %6095 = vmatprep.subr.mxu0 0.0
    %6096 = vmatpush1.msra.mxu0 0.0
    %6097 = vmatprep.subr.mxu0 0.0
    %6098 = vmatpush1.msra.mxu0 0.0
    %6099 = vmatprep.subr.mxu0 0.0
    %6100 = vmatpush1.msra.mxu0 0.0
    %6101 = vmatprep.subr.mxu0 0.0
    %6102 = vmatpush1.msra.mxu0 0.0
    %6103 = vmatprep.subr.mxu0 0.0
    %6104 = vmatpush1.msra.mxu0 0.0
    %6105 = vmatprep.subr.mxu0 0.0
    %6106 = vmatpush1.msra.mxu0 0.0
    %6107 = vmatprep.subr.mxu0 0.0
    %6108 = vmatpush1.msra.mxu0 0.0
    %6109 = vmatprep.subr.mxu0 0.0
    %6110 = vmatpush1.msra.mxu0 0.0
    %6111 = vmatprep.subr.mxu0 0.0
    %6112 = vmatpush1.msra.mxu0 0.0
    %6113 = vmatprep.subr.mxu0 0.0
    %6114 = vmatpush1.msra.mxu0 0.0
    %6115 = vmatprep.subr.mxu0 0.0
    %6116 = vmatpush1.msra.mxu0 0.0
    %6117 = vmatprep.subr.mxu0 0.0
    %6118 = vmatpush1.msra.mxu0 0.0
    %6119 = vmatprep.subr.mxu0 0.0
    %6120 = vmatpush1.msra.mxu0 0.0
    %6121 = vmatprep.subr.mxu0 0.0
    %6122 = vmatpush1.msra.mxu0 0.0
    %6123 = vmatprep.subr.mxu0 0.0
    %6124 = vmatpush1.msra.mxu0 0.0
    %6125 = vmatprep.subr.mxu0 0.0
    %6126 = vmatpush1.msra.mxu0 0.0
    %6127 = vmatprep.subr.mxu0 0.0
    %6128 = vmatpush1.msra.mxu0 0.0
    %6129 = vmatprep.subr.mxu0 0.0
    %6130 = vmatpush1.msra.mxu0 0.0
    %6131 = vmatprep.subr.mxu0 0.0
    %6132 = vmatpush1.msra.mxu0 0.0
    %6133 = vmatprep.subr.mxu0 0.0
    %6134 = vmatpush1.msra.mxu0 0.0
    %6135 = vmatprep.subr.mxu0 0.0
    %6136 = vmatpush1.msra.mxu0 0.0
    %6137 = vmatprep.subr.mxu0 0.0
    %6138 = vmatpush1.msra.mxu0 0.0
    %6139 = vmatprep.subr.mxu0 0.0
    %6140 = vmatpush1.msra.mxu0 0.0
    %6141 = vmatprep.subr.mxu0 0.0
    %6142 = vmatpush1.msra.mxu0 0.0
    %6143 = vmatprep.subr.mxu0 0.0
    %6144 = vmatpush1.msra.mxu0 0.0
    %6145 = vmatprep.subr.mxu0 0.0
    %6146 = vmatpush1.msra.mxu0 0.0
    %6147 = vmatprep.subr.mxu0 0.0
    %6148 = vmatpush1.msra.mxu0 0.0
    %6149 = vmatprep.subr.mxu0 0.0
    %6150 = vmatpush1.msra.mxu0 0.0
    %6151 = vmatprep.mubr.f32.mxu0 0.0
    %6152 = vmatmul.mubr.f32.gmra.mrb[0].mxu0 %v6085
    %v6153 = vpop.f32.mrb[0].mxu0
    %v6154 = vadd.f32 0.0, %v6153
    %v6155 = vpop.f32.mrb[0].mxu0
    %6156 = vdwg.mxu0
    %v6158 = vsel %vm127, %v5643, 0
    %6160 = vmatprep.subr.mxu0 0.0
    %6161 = vmatpush1.msra.mxu0 %v5044
    %6162 = vmatprep.subr.mxu0 0.0
    %6163 = vmatpush1.msra.mxu0 0.0
    %6164 = vmatprep.subr.mxu0 0.0
    %6165 = vmatpush1.msra.mxu0 0.0
    %6166 = vmatprep.subr.mxu0 0.0
    %6167 = vmatpush1.msra.mxu0 0.0
    %6168 = vmatprep.subr.mxu0 0.0
    %6169 = vmatpush1.msra.mxu0 0.0
    %6170 = vmatprep.subr.mxu0 0.0
    %6171 = vmatpush1.msra.mxu0 0.0
    %6172 = vmatprep.subr.mxu0 0.0
    %6173 = vmatpush1.msra.mxu0 0.0
    %6174 = vmatprep.subr.mxu0 0.0
    %6175 = vmatpush1.msra.mxu0 0.0
    %6176 = vmatprep.subr.mxu0 0.0
    %6177 = vmatpush1.msra.mxu0 0.0
    %6178 = vmatprep.subr.mxu0 0.0
    %6179 = vmatpush1.msra.mxu0 0.0
    %6180 = vmatprep.subr.mxu0 0.0
    %6181 = vmatpush1.msra.mxu0 0.0
    %6182 = vmatprep.subr.mxu0 0.0
    %6183 = vmatpush1.msra.mxu0 0.0
    %6184 = vmatprep.subr.mxu0 0.0
    %6185 = vmatpush1.msra.mxu0 0.0
    %6186 = vmatprep.subr.mxu0 0.0
    %6187 = vmatpush1.msra.mxu0 0.0
    %6188 = vmatprep.subr.mxu0 0.0
    %6189 = vmatpush1.msra.mxu0 0.0
    %6190 = vmatprep.subr.mxu0 0.0
    %6191 = vmatpush1.msra.mxu0 0.0
    %6192 = vmatprep.subr.mxu0 0.0
    %6193 = vmatpush1.msra.mxu0 0.0
    %6194 = vmatprep.subr.mxu0 0.0
    %6195 = vmatpush1.msra.mxu0 0.0
    %6196 = vmatprep.subr.mxu0 0.0
    %6197 = vmatpush1.msra.mxu0 0.0
    %6198 = vmatprep.subr.mxu0 0.0
    %6199 = vmatpush1.msra.mxu0 0.0
    %6200 = vmatprep.subr.mxu0 0.0
    %6201 = vmatpush1.msra.mxu0 0.0
    %6202 = vmatprep.subr.mxu0 0.0
    %6203 = vmatpush1.msra.mxu0 0.0
    %6204 = vmatprep.subr.mxu0 0.0
    %6205 = vmatpush1.msra.mxu0 0.0
    %6206 = vmatprep.subr.mxu0 0.0
    %6207 = vmatpush1.msra.mxu0 0.0
    %6208 = vmatprep.subr.mxu0 0.0
    %6209 = vmatpush1.msra.mxu0 0.0
    %6210 = vmatprep.subr.mxu0 0.0
    %6211 = vmatpush1.msra.mxu0 0.0
    %6212 = vmatprep.subr.mxu0 0.0
    %6213 = vmatpush1.msra.mxu0 0.0
    %6214 = vmatprep.subr.mxu0 0.0
    %6215 = vmatpush1.msra.mxu0 0.0
    %6216 = vmatprep.subr.mxu0 0.0
    %6217 = vmatpush1.msra.mxu0 0.0
    %6218 = vmatprep.subr.mxu0 0.0
    %6219 = vmatpush1.msra.mxu0 0.0
    %6220 = vmatprep.subr.mxu0 0.0
    %6221 = vmatpush1.msra.mxu0 0.0
    %6222 = vmatprep.subr.mxu0 0.0
    %6223 = vmatpush1.msra.mxu0 0.0
    %6224 = vmatprep.mubr.f32.mxu0 0.0
    %6225 = vmatmul.mubr.f32.gmra.mrb[0].mxu0 %v6158
    %v6226 = vpop.f32.mrb[0].mxu0
    %v6227 = vadd.f32 0.0, %v6226
    %v6228 = vpop.f32.mrb[0].mxu0
    %6229 = vdwg.mxu0
    %v6231 = vsel %vm127, %v5716, 0
    %6233 = vmatprep.subr.mxu0 0.0
    %6234 = vmatpush1.msra.mxu0 %v5049
    %6235 = vmatprep.subr.mxu0 0.0
    %6236 = vmatpush1.msra.mxu0 0.0
    %6237 = vmatprep.subr.mxu0 0.0
    %6238 = vmatpush1.msra.mxu0 0.0
    %6239 = vmatprep.subr.mxu0 0.0
    %6240 = vmatpush1.msra.mxu0 0.0
    %6241 = vmatprep.subr.mxu0 0.0
    %6242 = vmatpush1.msra.mxu0 0.0
    %6243 = vmatprep.subr.mxu0 0.0
    %6244 = vmatpush1.msra.mxu0 0.0
    %6245 = vmatprep.subr.mxu0 0.0
    %6246 = vmatpush1.msra.mxu0 0.0
    %6247 = vmatprep.subr.mxu0 0.0
    %6248 = vmatpush1.msra.mxu0 0.0
    %6249 = vmatprep.subr.mxu0 0.0
    %6250 = vmatpush1.msra.mxu0 0.0
    %6251 = vmatprep.subr.mxu0 0.0
    %6252 = vmatpush1.msra.mxu0 0.0
    %6253 = vmatprep.subr.mxu0 0.0
    %6254 = vmatpush1.msra.mxu0 0.0
    %6255 = vmatprep.subr.mxu0 0.0
    %6256 = vmatpush1.msra.mxu0 0.0
    %6257 = vmatprep.subr.mxu0 0.0
    %6258 = vmatpush1.msra.mxu0 0.0
    %6259 = vmatprep.subr.mxu0 0.0
    %6260 = vmatpush1.msra.mxu0 0.0
    %6261 = vmatprep.subr.mxu0 0.0
    %6262 = vmatpush1.msra.mxu0 0.0
    %6263 = vmatprep.subr.mxu0 0.0
    %6264 = vmatpush1.msra.mxu0 0.0
    %6265 = vmatprep.subr.mxu0 0.0
    %6266 = vmatpush1.msra.mxu0 0.0
    %6267 = vmatprep.subr.mxu0 0.0
    %6268 = vmatpush1.msra.mxu0 0.0
    %6269 = vmatprep.subr.mxu0 0.0
    %6270 = vmatpush1.msra.mxu0 0.0
    %6271 = vmatprep.subr.mxu0 0.0
    %6272 = vmatpush1.msra.mxu0 0.0
    %6273 = vmatprep.subr.mxu0 0.0
    %6274 = vmatpush1.msra.mxu0 0.0
    %6275 = vmatprep.subr.mxu0 0.0
    %6276 = vmatpush1.msra.mxu0 0.0
    %6277 = vmatprep.subr.mxu0 0.0
    %6278 = vmatpush1.msra.mxu0 0.0
    %6279 = vmatprep.subr.mxu0 0.0
    %6280 = vmatpush1.msra.mxu0 0.0
    %6281 = vmatprep.subr.mxu0 0.0
    %6282 = vmatpush1.msra.mxu0 0.0
    %6283 = vmatprep.subr.mxu0 0.0
    %6284 = vmatpush1.msra.mxu0 0.0
    %6285 = vmatprep.subr.mxu0 0.0
    %6286 = vmatpush1.msra.mxu0 0.0
    %6287 = vmatprep.subr.mxu0 0.0
    %6288 = vmatpush1.msra.mxu0 0.0
    %6289 = vmatprep.subr.mxu0 0.0
    %6290 = vmatpush1.msra.mxu0 0.0
    %6291 = vmatprep.subr.mxu0 0.0
    %6292 = vmatpush1.msra.mxu0 0.0
    %6293 = vmatprep.subr.mxu0 0.0
    %6294 = vmatpush1.msra.mxu0 0.0
    %6295 = vmatprep.subr.mxu0 0.0
    %6296 = vmatpush1.msra.mxu0 0.0
    %6297 = vmatprep.mubr.f32.mxu0 0.0
    %6298 = vmatmul.mubr.f32.gmra.mrb[0].mxu0 %v6231
    %v6299 = vpop.f32.mrb[0].mxu0
    %v6300 = vadd.f32 0.0, %v6299
    %v6301 = vpop.f32.mrb[0].mxu0
    %6302 = vdwg.mxu0
    %v6304 = vsel %vm127, %v5789, 0
    %6306 = vmatprep.subr.mxu0 0.0
    %6307 = vmatpush1.msra.mxu0 %v5014
    %6308 = vmatprep.subr.mxu0 0.0
    %6309 = vmatpush1.msra.mxu0 0.0
    %6310 = vmatprep.subr.mxu0 0.0
    %6311 = vmatpush1.msra.mxu0 0.0
    %6312 = vmatprep.subr.mxu0 0.0
    %6313 = vmatpush1.msra.mxu0 0.0
    %6314 = vmatprep.subr.mxu0 0.0
    %6315 = vmatpush1.msra.mxu0 0.0
    %6316 = vmatprep.subr.mxu0 0.0
    %6317 = vmatpush1.msra.mxu0 0.0
    %6318 = vmatprep.subr.mxu0 0.0
    %6319 = vmatpush1.msra.mxu0 0.0
    %6320 = vmatprep.subr.mxu0 0.0
    %6321 = vmatpush1.msra.mxu0 0.0
    %6322 = vmatprep.subr.mxu0 0.0
    %6323 = vmatpush1.msra.mxu0 0.0
    %6324 = vmatprep.subr.mxu0 0.0
    %6325 = vmatpush1.msra.mxu0 0.0
    %6326 = vmatprep.subr.mxu0 0.0
    %6327 = vmatpush1.msra.mxu0 0.0
    %6328 = vmatprep.subr.mxu0 0.0
    %6329 = vmatpush1.msra.mxu0 0.0
    %6330 = vmatprep.subr.mxu0 0.0
    %6331 = vmatpush1.msra.mxu0 0.0
    %6332 = vmatprep.subr.mxu0 0.0
    %6333 = vmatpush1.msra.mxu0 0.0
    %6334 = vmatprep.subr.mxu0 0.0
    %6335 = vmatpush1.msra.mxu0 0.0
    %6336 = vmatprep.subr.mxu0 0.0
    %6337 = vmatpush1.msra.mxu0 0.0
    %6338 = vmatprep.subr.mxu0 0.0
    %6339 = vmatpush1.msra.mxu0 0.0
    %6340 = vmatprep.subr.mxu0 0.0
    %6341 = vmatpush1.msra.mxu0 0.0
    %6342 = vmatprep.subr.mxu0 0.0
    %6343 = vmatpush1.msra.mxu0 0.0
    %6344 = vmatprep.subr.mxu0 0.0
    %6345 = vmatpush1.msra.mxu0 0.0
    %6346 = vmatprep.subr.mxu0 0.0
    %6347 = vmatpush1.msra.mxu0 0.0
    %6348 = vmatprep.subr.mxu0 0.0
    %6349 = vmatpush1.msra.mxu0 0.0
    %6350 = vmatprep.subr.mxu0 0.0
    %6351 = vmatpush1.msra.mxu0 0.0
    %6352 = vmatprep.subr.mxu0 0.0
    %6353 = vmatpush1.msra.mxu0 0.0
    %6354 = vmatprep.subr.mxu0 0.0
    %6355 = vmatpush1.msra.mxu0 0.0
    %6356 = vmatprep.subr.mxu0 0.0
    %6357 = vmatpush1.msra.mxu0 0.0
    %6358 = vmatprep.subr.mxu0 0.0
    %6359 = vmatpush1.msra.mxu0 0.0
    %6360 = vmatprep.subr.mxu0 0.0
    %6361 = vmatpush1.msra.mxu0 0.0
    %6362 = vmatprep.subr.mxu0 0.0
    %6363 = vmatpush1.msra.mxu0 0.0
    %6364 = vmatprep.subr.mxu0 0.0
    %6365 = vmatpush1.msra.mxu0 0.0
    %6366 = vmatprep.subr.mxu0 0.0
    %6367 = vmatpush1.msra.mxu0 0.0
    %6368 = vmatprep.subr.mxu0 0.0
    %6369 = vmatpush1.msra.mxu0 0.0
    %6370 = vmatprep.mubr.f32.mxu0 0.0
    %6371 = vmatmul.mubr.f32.gmra.mrb[0].mxu0 %v6304
    %v6372 = vpop.f32.mrb[0].mxu0
    %v6373 = vadd.f32 0.0, %v6372
    %v6374 = vpop.f32.mrb[0].mxu0
    %6375 = vdwg.mxu0
    %v6377 = vsel %vm127, %v5862, 0
    %6379 = vmatprep.subr.mxu0 0.0
    %6380 = vmatpush1.msra.mxu0 %v5019
    %6381 = vmatprep.subr.mxu0 0.0
    %6382 = vmatpush1.msra.mxu0 0.0
    %6383 = vmatprep.subr.mxu0 0.0
    %6384 = vmatpush1.msra.mxu0 0.0
    %6385 = vmatprep.subr.mxu0 0.0
    %6386 = vmatpush1.msra.mxu0 0.0
    %6387 = vmatprep.subr.mxu0 0.0
    %6388 = vmatpush1.msra.mxu0 0.0
    %6389 = vmatprep.subr.mxu0 0.0
    %6390 = vmatpush1.msra.mxu0 0.0
    %6391 = vmatprep.subr.mxu0 0.0
    %6392 = vmatpush1.msra.mxu0 0.0
    %6393 = vmatprep.subr.mxu0 0.0
    %6394 = vmatpush1.msra.mxu0 0.0
    %6395 = vmatprep.subr.mxu0 0.0
    %6396 = vmatpush1.msra.mxu0 0.0
    %6397 = vmatprep.subr.mxu0 0.0
    %6398 = vmatpush1.msra.mxu0 0.0
    %6399 = vmatprep.subr.mxu0 0.0
    %6400 = vmatpush1.msra.mxu0 0.0
    %6401 = vmatprep.subr.mxu0 0.0
    %6402 = vmatpush1.msra.mxu0 0.0
    %6403 = vmatprep.subr.mxu0 0.0
    %6404 = vmatpush1.msra.mxu0 0.0
    %6405 = vmatprep.subr.mxu0 0.0
    %6406 = vmatpush1.msra.mxu0 0.0
    %6407 = vmatprep.subr.mxu0 0.0
    %6408 = vmatpush1.msra.mxu0 0.0
    %6409 = vmatprep.subr.mxu0 0.0
    %6410 = vmatpush1.msra.mxu0 0.0
    %6411 = vmatprep.subr.mxu0 0.0
    %6412 = vmatpush1.msra.mxu0 0.0
    %6413 = vmatprep.subr.mxu0 0.0
    %6414 = vmatpush1.msra.mxu0 0.0
    %6415 = vmatprep.subr.mxu0 0.0
    %6416 = vmatpush1.msra.mxu0 0.0
    %6417 = vmatprep.subr.mxu0 0.0
    %6418 = vmatpush1.msra.mxu0 0.0
    %6419 = vmatprep.subr.mxu0 0.0
    %6420 = vmatpush1.msra.mxu0 0.0
    %6421 = vmatprep.subr.mxu0 0.0
    %6422 = vmatpush1.msra.mxu0 0.0
    %6423 = vmatprep.subr.mxu0 0.0
    %6424 = vmatpush1.msra.mxu0 0.0
    %6425 = vmatprep.subr.mxu0 0.0
    %6426 = vmatpush1.msra.mxu0 0.0
    %6427 = vmatprep.subr.mxu0 0.0
    %6428 = vmatpush1.msra.mxu0 0.0
    %6429 = vmatprep.subr.mxu0 0.0
    %6430 = vmatpush1.msra.mxu0 0.0
    %6431 = vmatprep.subr.mxu0 0.0
    %6432 = vmatpush1.msra.mxu0 0.0
    %6433 = vmatprep.subr.mxu0 0.0
    %6434 = vmatpush1.msra.mxu0 0.0
    %6435 = vmatprep.subr.mxu0 0.0
    %6436 = vmatpush1.msra.mxu0 0.0
    %6437 = vmatprep.subr.mxu0 0.0
    %6438 = vmatpush1.msra.mxu0 0.0
    %6439 = vmatprep.subr.mxu0 0.0
    %6440 = vmatpush1.msra.mxu0 0.0
    %6441 = vmatprep.subr.mxu0 0.0
    %6442 = vmatpush1.msra.mxu0 0.0
    %6443 = vmatprep.mubr.f32.mxu0 0.0
    %6444 = vmatmul.mubr.f32.gmra.mrb[0].mxu0 %v6377
    %v6445 = vpop.f32.mrb[0].mxu0
    %v6446 = vadd.f32 0.0, %v6445
    %v6447 = vpop.f32.mrb[0].mxu0
    %6448 = vdwg.mxu0
    %v6450 = vsel %vm127, %v5935, 0
    %6452 = vmatprep.subr.mxu0 0.0
    %6453 = vmatpush1.msra.mxu0 %v5024
    %6454 = vmatprep.subr.mxu0 0.0
    %6455 = vmatpush1.msra.mxu0 0.0
    %6456 = vmatprep.subr.mxu0 0.0
    %6457 = vmatpush1.msra.mxu0 0.0
    %6458 = vmatprep.subr.mxu0 0.0
    %6459 = vmatpush1.msra.mxu0 0.0
    %6460 = vmatprep.subr.mxu0 0.0
    %6461 = vmatpush1.msra.mxu0 0.0
    %6462 = vmatprep.subr.mxu0 0.0
    %6463 = vmatpush1.msra.mxu0 0.0
    %6464 = vmatprep.subr.mxu0 0.0
    %6465 = vmatpush1.msra.mxu0 0.0
    %6466 = vmatprep.subr.mxu0 0.0
    %6467 = vmatpush1.msra.mxu0 0.0
    %6468 = vmatprep.subr.mxu0 0.0
    %6469 = vmatpush1.msra.mxu0 0.0
    %6470 = vmatprep.subr.mxu0 0.0
    %6471 = vmatpush1.msra.mxu0 0.0
    %6472 = vmatprep.subr.mxu0 0.0
    %6473 = vmatpush1.msra.mxu0 0.0
    %6474 = vmatprep.subr.mxu0 0.0
    %6475 = vmatpush1.msra.mxu0 0.0
    %6476 = vmatprep.subr.mxu0 0.0
    %6477 = vmatpush1.msra.mxu0 0.0
    %6478 = vmatprep.subr.mxu0 0.0
    %6479 = vmatpush1.msra.mxu0 0.0
    %6480 = vmatprep.subr.mxu0 0.0
    %6481 = vmatpush1.msra.mxu0 0.0
    %6482 = vmatprep.subr.mxu0 0.0
    %6483 = vmatpush1.msra.mxu0 0.0
    %6484 = vmatprep.subr.mxu0 0.0
    %6485 = vmatpush1.msra.mxu0 0.0
    %6486 = vmatprep.subr.mxu0 0.0
    %6487 = vmatpush1.msra.mxu0 0.0
    %6488 = vmatprep.subr.mxu0 0.0
    %6489 = vmatpush1.msra.mxu0 0.0
    %6490 = vmatprep.subr.mxu0 0.0
    %6491 = vmatpush1.msra.mxu0 0.0
    %6492 = vmatprep.subr.mxu0 0.0
    %6493 = vmatpush1.msra.mxu0 0.0
    %6494 = vmatprep.subr.mxu0 0.0
    %6495 = vmatpush1.msra.mxu0 0.0
    %6496 = vmatprep.subr.mxu0 0.0
    %6497 = vmatpush1.msra.mxu0 0.0
    %6498 = vmatprep.subr.mxu0 0.0
    %6499 = vmatpush1.msra.mxu0 0.0
    %6500 = vmatprep.subr.mxu0 0.0
    %6501 = vmatpush1.msra.mxu0 0.0
    %6502 = vmatprep.subr.mxu0 0.0
    %6503 = vmatpush1.msra.mxu0 0.0
    %6504 = vmatprep.subr.mxu0 0.0
    %6505 = vmatpush1.msra.mxu0 0.0
    %6506 = vmatprep.subr.mxu0 0.0
    %6507 = vmatpush1.msra.mxu0 0.0
    %6508 = vmatprep.subr.mxu0 0.0
    %6509 = vmatpush1.msra.mxu0 0.0
    %6510 = vmatprep.subr.mxu0 0.0
    %6511 = vmatpush1.msra.mxu0 0.0
    %6512 = vmatprep.subr.mxu0 0.0
    %6513 = vmatpush1.msra.mxu0 0.0
    %6514 = vmatprep.subr.mxu0 0.0
    %6515 = vmatpush1.msra.mxu0 0.0
    %6516 = vmatprep.mubr.f32.mxu0 0.0
    %6517 = vmatmul.mubr.f32.gmra.mrb[0].mxu0 %v6450
    %v6518 = vpop.f32.mrb[0].mxu0
    %v6519 = vadd.f32 0.0, %v6518
    %v6520 = vpop.f32.mrb[0].mxu0
    %6521 = vdwg.mxu0
    %v6523 = vsel %vm127, %v6008, 0
    %6525 = vmatprep.subr.mxu0 0.0
    %6526 = vmatpush1.msra.mxu0 %v5029
    %6527 = vmatprep.subr.mxu0 0.0
    %6528 = vmatpush1.msra.mxu0 0.0
    %6529 = vmatprep.subr.mxu0 0.0
    %6530 = vmatpush1.msra.mxu0 0.0
    %6531 = vmatprep.subr.mxu0 0.0
    %6532 = vmatpush1.msra.mxu0 0.0
    %6533 = vmatprep.subr.mxu0 0.0
    %6534 = vmatpush1.msra.mxu0 0.0
    %6535 = vmatprep.subr.mxu0 0.0
    %6536 = vmatpush1.msra.mxu0 0.0
    %6537 = vmatprep.subr.mxu0 0.0
    %6538 = vmatpush1.msra.mxu0 0.0
    %6539 = vmatprep.subr.mxu0 0.0
    %6540 = vmatpush1.msra.mxu0 0.0
    %6541 = vmatprep.subr.mxu0 0.0
    %6542 = vmatpush1.msra.mxu0 0.0
    %6543 = vmatprep.subr.mxu0 0.0
    %6544 = vmatpush1.msra.mxu0 0.0
    %6545 = vmatprep.subr.mxu0 0.0
    %6546 = vmatpush1.msra.mxu0 0.0
    %6547 = vmatprep.subr.mxu0 0.0
    %6548 = vmatpush1.msra.mxu0 0.0
    %6549 = vmatprep.subr.mxu0 0.0
    %6550 = vmatpush1.msra.mxu0 0.0
    %6551 = vmatprep.subr.mxu0 0.0
    %6552 = vmatpush1.msra.mxu0 0.0
    %6553 = vmatprep.subr.mxu0 0.0
    %6554 = vmatpush1.msra.mxu0 0.0
    %6555 = vmatprep.subr.mxu0 0.0
    %6556 = vmatpush1.msra.mxu0 0.0
    %6557 = vmatprep.subr.mxu0 0.0
    %6558 = vmatpush1.msra.mxu0 0.0
    %6559 = vmatprep.subr.mxu0 0.0
    %6560 = vmatpush1.msra.mxu0 0.0
    %6561 = vmatprep.subr.mxu0 0.0
    %6562 = vmatpush1.msra.mxu0 0.0
    %6563 = vmatprep.subr.mxu0 0.0
    %6564 = vmatpush1.msra.mxu0 0.0
    %6565 = vmatprep.subr.mxu0 0.0
    %6566 = vmatpush1.msra.mxu0 0.0
    %6567 = vmatprep.subr.mxu0 0.0
    %6568 = vmatpush1.msra.mxu0 0.0
    %6569 = vmatprep.subr.mxu0 0.0
    %6570 = vmatpush1.msra.mxu0 0.0
    %6571 = vmatprep.subr.mxu0 0.0
    %6572 = vmatpush1.msra.mxu0 0.0
    %6573 = vmatprep.subr.mxu0 0.0
    %6574 = vmatpush1.msra.mxu0 0.0
    %6575 = vmatprep.subr.mxu0 0.0
    %6576 = vmatpush1.msra.mxu0 0.0
    %6577 = vmatprep.subr.mxu0 0.0
    %6578 = vmatpush1.msra.mxu0 0.0
    %6579 = vmatprep.subr.mxu0 0.0
    %6580 = vmatpush1.msra.mxu0 0.0
    %6581 = vmatprep.subr.mxu0 0.0
    %6582 = vmatpush1.msra.mxu0 0.0
    %6583 = vmatprep.subr.mxu0 0.0
    %6584 = vmatpush1.msra.mxu0 0.0
    %6585 = vmatprep.subr.mxu0 0.0
    %6586 = vmatpush1.msra.mxu0 0.0
    %6587 = vmatprep.subr.mxu0 0.0
    %6588 = vmatpush1.msra.mxu0 0.0
    %6589 = vmatprep.mubr.f32.mxu0 0.0
    %6590 = vmatmul.mubr.f32.gmra.mrb[0].mxu0 %v6523
    %v6591 = vpop.f32.mrb[0].mxu0
    %v6592 = vadd.f32 0.0, %v6591
    %v6593 = vpop.f32.mrb[0].mxu0
    %6594 = vdwg.mxu0
    %v6596 = vsel %vm127, %v6081, 0
    %6598 = vmatprep.subr.mxu0 0.0
    %6599 = vmatpush1.msra.mxu0 %v5034
    %6600 = vmatprep.subr.mxu0 0.0
    %6601 = vmatpush1.msra.mxu0 0.0
    %6602 = vmatprep.subr.mxu0 0.0
    %6603 = vmatpush1.msra.mxu0 0.0
    %6604 = vmatprep.subr.mxu0 0.0
    %6605 = vmatpush1.msra.mxu0 0.0
    %6606 = vmatprep.subr.mxu0 0.0
    %6607 = vmatpush1.msra.mxu0 0.0
    %6608 = vmatprep.subr.mxu0 0.0
    %6609 = vmatpush1.msra.mxu0 0.0
    %6610 = vmatprep.subr.mxu0 0.0
    %6611 = vmatpush1.msra.mxu0 0.0
    %6612 = vmatprep.subr.mxu0 0.0
    %6613 = vmatpush1.msra.mxu0 0.0
    %6614 = vmatprep.subr.mxu0 0.0
    %6615 = vmatpush1.msra.mxu0 0.0
    %6616 = vmatprep.subr.mxu0 0.0
    %6617 = vmatpush1.msra.mxu0 0.0
    %6618 = vmatprep.subr.mxu0 0.0
    %6619 = vmatpush1.msra.mxu0 0.0
    %6620 = vmatprep.subr.mxu0 0.0
    %6621 = vmatpush1.msra.mxu0 0.0
    %6622 = vmatprep.subr.mxu0 0.0
    %6623 = vmatpush1.msra.mxu0 0.0
    %6624 = vmatprep.subr.mxu0 0.0
    %6625 = vmatpush1.msra.mxu0 0.0
    %6626 = vmatprep.subr.mxu0 0.0
    %6627 = vmatpush1.msra.mxu0 0.0
    %6628 = vmatprep.subr.mxu0 0.0
    %6629 = vmatpush1.msra.mxu0 0.0
    %6630 = vmatprep.subr.mxu0 0.0
    %6631 = vmatpush1.msra.mxu0 0.0
    %6632 = vmatprep.subr.mxu0 0.0
    %6633 = vmatpush1.msra.mxu0 0.0
    %6634 = vmatprep.subr.mxu0 0.0
    %6635 = vmatpush1.msra.mxu0 0.0
    %6636 = vmatprep.subr.mxu0 0.0
    %6637 = vmatpush1.msra.mxu0 0.0
    %6638 = vmatprep.subr.mxu0 0.0
    %6639 = vmatpush1.msra.mxu0 0.0
    %6640 = vmatprep.subr.mxu0 0.0
    %6641 = vmatpush1.msra.mxu0 0.0
    %6642 = vmatprep.subr.mxu0 0.0
    %6643 = vmatpush1.msra.mxu0 0.0
    %6644 = vmatprep.subr.mxu0 0.0
    %6645 = vmatpush1.msra.mxu0 0.0
    %6646 = vmatprep.subr.mxu0 0.0
    %6647 = vmatpush1.msra.mxu0 0.0
    %6648 = vmatprep.subr.mxu0 0.0
    %6649 = vmatpush1.msra.mxu0 0.0
    %6650 = vmatprep.subr.mxu0 0.0
    %6651 = vmatpush1.msra.mxu0 0.0
    %6652 = vmatprep.subr.mxu0 0.0
    %6653 = vmatpush1.msra.mxu0 0.0
    %6654 = vmatprep.subr.mxu0 0.0
    %6655 = vmatpush1.msra.mxu0 0.0
    %6656 = vmatprep.subr.mxu0 0.0
    %6657 = vmatpush1.msra.mxu0 0.0
    %6658 = vmatprep.subr.mxu0 0.0
    %6659 = vmatpush1.msra.mxu0 0.0
    %6660 = vmatprep.subr.mxu0 0.0
    %6661 = vmatpush1.msra.mxu0 0.0
    %6662 = vmatprep.mubr.f32.mxu0 0.0
    %6663 = vmatmul.mubr.f32.gmra.mrb[0].mxu0 %v6596
    %v6664 = vpop.f32.mrb[0].mxu0
    %v6665 = vadd.f32 0.0, %v6664
    %v6666 = vpop.f32.mrb[0].mxu0
    %6667 = vdwg.mxu0
    %v6669 = vsel %vm127, %v6154, 0
    %6671 = vmatprep.subr.mxu0 0.0
    %6672 = vmatpush1.msra.mxu0 %v5039
    %6673 = vmatprep.subr.mxu0 0.0
    %6674 = vmatpush1.msra.mxu0 0.0
    %6675 = vmatprep.subr.mxu0 0.0
    %6676 = vmatpush1.msra.mxu0 0.0
    %6677 = vmatprep.subr.mxu0 0.0
    %6678 = vmatpush1.msra.mxu0 0.0
    %6679 = vmatprep.subr.mxu0 0.0
    %6680 = vmatpush1.msra.mxu0 0.0
    %6681 = vmatprep.subr.mxu0 0.0
    %6682 = vmatpush1.msra.mxu0 0.0
    %6683 = vmatprep.subr.mxu0 0.0
    %6684 = vmatpush1.msra.mxu0 0.0
    %6685 = vmatprep.subr.mxu0 0.0
    %6686 = vmatpush1.msra.mxu0 0.0
    %6687 = vmatprep.subr.mxu0 0.0
    %6688 = vmatpush1.msra.mxu0 0.0
    %6689 = vmatprep.subr.mxu0 0.0
    %6690 = vmatpush1.msra.mxu0 0.0
    %6691 = vmatprep.subr.mxu0 0.0
    %6692 = vmatpush1.msra.mxu0 0.0
    %6693 = vmatprep.subr.mxu0 0.0
    %6694 = vmatpush1.msra.mxu0 0.0
    %6695 = vmatprep.subr.mxu0 0.0
    %6696 = vmatpush1.msra.mxu0 0.0
    %6697 = vmatprep.subr.mxu0 0.0
    %6698 = vmatpush1.msra.mxu0 0.0
    %6699 = vmatprep.subr.mxu0 0.0
    %6700 = vmatpush1.msra.mxu0 0.0
    %6701 = vmatprep.subr.mxu0 0.0
    %6702 = vmatpush1.msra.mxu0 0.0
    %6703 = vmatprep.subr.mxu0 0.0
    %6704 = vmatpush1.msra.mxu0 0.0
    %6705 = vmatprep.subr.mxu0 0.0
    %6706 = vmatpush1.msra.mxu0 0.0
    %6707 = vmatprep.subr.mxu0 0.0
    %6708 = vmatpush1.msra.mxu0 0.0
    %6709 = vmatprep.subr.mxu0 0.0
    %6710 = vmatpush1.msra.mxu0 0.0
    %6711 = vmatprep.subr.mxu0 0.0
    %6712 = vmatpush1.msra.mxu0 0.0
    %6713 = vmatprep.subr.mxu0 0.0
    %6714 = vmatpush1.msra.mxu0 0.0
    %6715 = vmatprep.subr.mxu0 0.0
    %6716 = vmatpush1.msra.mxu0 0.0
    %6717 = vmatprep.subr.mxu0 0.0
    %6718 = vmatpush1.msra.mxu0 0.0
    %6719 = vmatprep.subr.mxu0 0.0
    %6720 = vmatpush1.msra.mxu0 0.0
    %6721 = vmatprep.subr.mxu0 0.0
    %6722 = vmatpush1.msra.mxu0 0.0
    %6723 = vmatprep.subr.mxu0 0.0
    %6724 = vmatpush1.msra.mxu0 0.0
    %6725 = vmatprep.subr.mxu0 0.0
    %6726 = vmatpush1.msra.mxu0 0.0
    %6727 = vmatprep.subr.mxu0 0.0
    %6728 = vmatpush1.msra.mxu0 0.0
    %6729 = vmatprep.subr.mxu0 0.0
    %6730 = vmatpush1.msra.mxu0 0.0
    %6731 = vmatprep.subr.mxu0 0.0
    %6732 = vmatpush1.msra.mxu0 0.0
    %6733 = vmatprep.subr.mxu0 0.0
    %6734 = vmatpush1.msra.mxu0 0.0
    %6735 = vmatprep.mubr.f32.mxu0 0.0
    %6736 = vmatmul.mubr.f32.gmra.mrb[0].mxu0 %v6669
    %v6737 = vpop.f32.mrb[0].mxu0
    %v6738 = vadd.f32 0.0, %v6737
    %v6739 = vpop.f32.mrb[0].mxu0
    %6740 = vdwg.mxu0
    %v6742 = vsel %vm127, %v6227, 0
    %6744 = vmatprep.subr.mxu0 0.0
    %6745 = vmatpush1.msra.mxu0 %v5044
    %6746 = vmatprep.subr.mxu0 0.0
    %6747 = vmatpush1.msra.mxu0 0.0
    %6748 = vmatprep.subr.mxu0 0.0
    %6749 = vmatpush1.msra.mxu0 0.0
    %6750 = vmatprep.subr.mxu0 0.0
    %6751 = vmatpush1.msra.mxu0 0.0
    %6752 = vmatprep.subr.mxu0 0.0
    %6753 = vmatpush1.msra.mxu0 0.0
    %6754 = vmatprep.subr.mxu0 0.0
    %6755 = vmatpush1.msra.mxu0 0.0
    %6756 = vmatprep.subr.mxu0 0.0
    %6757 = vmatpush1.msra.mxu0 0.0
    %6758 = vmatprep.subr.mxu0 0.0
    %6759 = vmatpush1.msra.mxu0 0.0
    %6760 = vmatprep.subr.mxu0 0.0
    %6761 = vmatpush1.msra.mxu0 0.0
    %6762 = vmatprep.subr.mxu0 0.0
    %6763 = vmatpush1.msra.mxu0 0.0
    %6764 = vmatprep.subr.mxu0 0.0
    %6765 = vmatpush1.msra.mxu0 0.0
    %6766 = vmatprep.subr.mxu0 0.0
    %6767 = vmatpush1.msra.mxu0 0.0
    %6768 = vmatprep.subr.mxu0 0.0
    %6769 = vmatpush1.msra.mxu0 0.0
    %6770 = vmatprep.subr.mxu0 0.0
    %6771 = vmatpush1.msra.mxu0 0.0
    %6772 = vmatprep.subr.mxu0 0.0
    %6773 = vmatpush1.msra.mxu0 0.0
    %6774 = vmatprep.subr.mxu0 0.0
    %6775 = vmatpush1.msra.mxu0 0.0
    %6776 = vmatprep.subr.mxu0 0.0
    %6777 = vmatpush1.msra.mxu0 0.0
    %6778 = vmatprep.subr.mxu0 0.0
    %6779 = vmatpush1.msra.mxu0 0.0
    %6780 = vmatprep.subr.mxu0 0.0
    %6781 = vmatpush1.msra.mxu0 0.0
    %6782 = vmatprep.subr.mxu0 0.0
    %6783 = vmatpush1.msra.mxu0 0.0
    %6784 = vmatprep.subr.mxu0 0.0
    %6785 = vmatpush1.msra.mxu0 0.0
    %6786 = vmatprep.subr.mxu0 0.0
    %6787 = vmatpush1.msra.mxu0 0.0
    %6788 = vmatprep.subr.mxu0 0.0
    %6789 = vmatpush1.msra.mxu0 0.0
    %6790 = vmatprep.subr.mxu0 0.0
    %6791 = vmatpush1.msra.mxu0 0.0
    %6792 = vmatprep.subr.mxu0 0.0
    %6793 = vmatpush1.msra.mxu0 0.0
    %6794 = vmatprep.subr.mxu0 0.0
    %6795 = vmatpush1.msra.mxu0 0.0
    %6796 = vmatprep.subr.mxu0 0.0
    %6797 = vmatpush1.msra.mxu0 0.0
    %6798 = vmatprep.subr.mxu0 0.0
    %6799 = vmatpush1.msra.mxu0 0.0
    %6800 = vmatprep.subr.mxu0 0.0
    %6801 = vmatpush1.msra.mxu0 0.0
    %6802 = vmatprep.subr.mxu0 0.0
    %6803 = vmatpush1.msra.mxu0 0.0
    %6804 = vmatprep.subr.mxu0 0.0
    %6805 = vmatpush1.msra.mxu0 0.0
    %6806 = vmatprep.subr.mxu0 0.0
    %6807 = vmatpush1.msra.mxu0 0.0
    %6808 = vmatprep.mubr.f32.mxu0 0.0
    %6809 = vmatmul.mubr.f32.gmra.mrb[0].mxu0 %v6742
    %v6810 = vpop.f32.mrb[0].mxu0
    %v6811 = vadd.f32 0.0, %v6810
    %v6812 = vpop.f32.mrb[0].mxu0
    %6813 = vdwg.mxu0
    %v6815 = vsel %vm127, %v6300, 0
    %6817 = vmatprep.subr.mxu0 0.0
    %6818 = vmatpush1.msra.mxu0 %v5049
    %6819 = vmatprep.subr.mxu0 0.0
    %6820 = vmatpush1.msra.mxu0 0.0
    %6821 = vmatprep.subr.mxu0 0.0
    %6822 = vmatpush1.msra.mxu0 0.0
    %6823 = vmatprep.subr.mxu0 0.0
    %6824 = vmatpush1.msra.mxu0 0.0
    %6825 = vmatprep.subr.mxu0 0.0
    %6826 = vmatpush1.msra.mxu0 0.0
    %6827 = vmatprep.subr.mxu0 0.0
    %6828 = vmatpush1.msra.mxu0 0.0
    %6829 = vmatprep.subr.mxu0 0.0
    %6830 = vmatpush1.msra.mxu0 0.0
    %6831 = vmatprep.subr.mxu0 0.0
    %6832 = vmatpush1.msra.mxu0 0.0
    %6833 = vmatprep.subr.mxu0 0.0
    %6834 = vmatpush1.msra.mxu0 0.0
    %6835 = vmatprep.subr.mxu0 0.0
    %6836 = vmatpush1.msra.mxu0 0.0
    %6837 = vmatprep.subr.mxu0 0.0
    %6838 = vmatpush1.msra.mxu0 0.0
    %6839 = vmatprep.subr.mxu0 0.0
    %6840 = vmatpush1.msra.mxu0 0.0
    %6841 = vmatprep.subr.mxu0 0.0
    %6842 = vmatpush1.msra.mxu0 0.0
    %6843 = vmatprep.subr.mxu0 0.0
    %6844 = vmatpush1.msra.mxu0 0.0
    %6845 = vmatprep.subr.mxu0 0.0
    %6846 = vmatpush1.msra.mxu0 0.0
    %6847 = vmatprep.subr.mxu0 0.0
    %6848 = vmatpush1.msra.mxu0 0.0
    %6849 = vmatprep.subr.mxu0 0.0
    %6850 = vmatpush1.msra.mxu0 0.0
    %6851 = vmatprep.subr.mxu0 0.0
    %6852 = vmatpush1.msra.mxu0 0.0
    %6853 = vmatprep.subr.mxu0 0.0
    %6854 = vmatpush1.msra.mxu0 0.0
    %6855 = vmatprep.subr.mxu0 0.0
    %6856 = vmatpush1.msra.mxu0 0.0
    %6857 = vmatprep.subr.mxu0 0.0
    %6858 = vmatpush1.msra.mxu0 0.0
    %6859 = vmatprep.subr.mxu0 0.0
    %6860 = vmatpush1.msra.mxu0 0.0
    %6861 = vmatprep.subr.mxu0 0.0
    %6862 = vmatpush1.msra.mxu0 0.0
    %6863 = vmatprep.subr.mxu0 0.0
    %6864 = vmatpush1.msra.mxu0 0.0
    %6865 = vmatprep.subr.mxu0 0.0
    %6866 = vmatpush1.msra.mxu0 0.0
    %6867 = vmatprep.subr.mxu0 0.0
    %6868 = vmatpush1.msra.mxu0 0.0
    %6869 = vmatprep.subr.mxu0 0.0
    %6870 = vmatpush1.msra.mxu0 0.0
    %6871 = vmatprep.subr.mxu0 0.0
    %6872 = vmatpush1.msra.mxu0 0.0
    %6873 = vmatprep.subr.mxu0 0.0
    %6874 = vmatpush1.msra.mxu0 0.0
    %6875 = vmatprep.subr.mxu0 0.0
    %6876 = vmatpush1.msra.mxu0 0.0
    %6877 = vmatprep.subr.mxu0 0.0
    %6878 = vmatpush1.msra.mxu0 0.0
    %6879 = vmatprep.subr.mxu0 0.0
    %6880 = vmatpush1.msra.mxu0 0.0
    %6881 = vmatprep.mubr.f32.mxu0 0.0
    %6882 = vmatmul.mubr.f32.gmra.mrb[0].mxu0 %v6815
    %v6883 = vpop.f32.mrb[0].mxu0
    %v6884 = vadd.f32 0.0, %v6883
    %v6885 = vpop.f32.mrb[0].mxu0
    %6886 = vdwg.mxu0
    %6887 = vxpose.xlu0.b32.start [1/16] %v5014, 128
    %6888 = vxpose.xlu0.b32.cont [2/16] 0.0, 128
    %6889 = vxpose.xlu0.b32.cont [3/16] 0.0, 128
    %6890 = vxpose.xlu0.b32.cont [4/16] 0.0, 128
    %6891 = vxpose.xlu0.b32.cont [5/16] 0.0, 128
    %6892 = vxpose.xlu0.b32.cont [6/16] 0.0, 128
    %6893 = vxpose.xlu0.b32.cont [7/16] 0.0, 128
    %6894 = vxpose.xlu0.b32.cont [8/16] 0.0, 128
    %6895 = vxpose.xlu0.b32.cont [9/16] 0.0, 128
    %6896 = vxpose.xlu0.b32.cont [10/16] 0.0, 128
    %6897 = vxpose.xlu0.b32.cont [11/16] 0.0, 128
    %6898 = vxpose.xlu0.b32.cont [12/16] 0.0, 128
    %6899 = vxpose.xlu0.b32.cont [13/16] 0.0, 128
    %6900 = vxpose.xlu0.b32.cont [14/16] 0.0, 128
    %6901 = vxpose.xlu0.b32.cont [15/16] 0.0, 128
    %6902 = vxpose.xlu0.b32.end [16/16] 0.0, 128
    %v6903 = vpop.trf.xlu0
    %v6904 = vpop.trf.xlu0
    %v6905 = vpop.trf.xlu0
    %v6906 = vpop.trf.xlu0
    %v6907 = vpop.trf.xlu0
    %v6908 = vpop.trf.xlu0
    %v6909 = vpop.trf.xlu0
    %v6910 = vpop.trf.xlu0
    %v6911 = vpop.trf.xlu0
    %v6912 = vpop.trf.xlu0
    %v6913 = vpop.trf.xlu0
    %v6914 = vpop.trf.xlu0
    %v6915 = vpop.trf.xlu0
    %v6916 = vpop.trf.xlu0
    %v6917 = vpop.trf.xlu0
    %v6918 = vpop.trf.xlu0
    %6919 = vxpose.xlu0.b32.start [1/16] %v5019, 128
    %6920 = vxpose.xlu0.b32.cont [2/16] 0.0, 128
    %6921 = vxpose.xlu0.b32.cont [3/16] 0.0, 128
    %6922 = vxpose.xlu0.b32.cont [4/16] 0.0, 128
    %6923 = vxpose.xlu0.b32.cont [5/16] 0.0, 128
    %6924 = vxpose.xlu0.b32.cont [6/16] 0.0, 128
    %6925 = vxpose.xlu0.b32.cont [7/16] 0.0, 128
    %6926 = vxpose.xlu0.b32.cont [8/16] 0.0, 128
    %6927 = vxpose.xlu0.b32.cont [9/16] 0.0, 128
    %6928 = vxpose.xlu0.b32.cont [10/16] 0.0, 128
    %6929 = vxpose.xlu0.b32.cont [11/16] 0.0, 128
    %6930 = vxpose.xlu0.b32.cont [12/16] 0.0, 128
    %6931 = vxpose.xlu0.b32.cont [13/16] 0.0, 128
    %6932 = vxpose.xlu0.b32.cont [14/16] 0.0, 128
    %6933 = vxpose.xlu0.b32.cont [15/16] 0.0, 128
    %6934 = vxpose.xlu0.b32.end [16/16] 0.0, 128
    %v6935 = vpop.trf.xlu0
    %v6936 = vpop.trf.xlu0
    %v6937 = vpop.trf.xlu0
    %v6938 = vpop.trf.xlu0
    %v6939 = vpop.trf.xlu0
    %v6940 = vpop.trf.xlu0
    %v6941 = vpop.trf.xlu0
    %v6942 = vpop.trf.xlu0
    %v6943 = vpop.trf.xlu0
    %v6944 = vpop.trf.xlu0
    %v6945 = vpop.trf.xlu0
    %v6946 = vpop.trf.xlu0
    %v6947 = vpop.trf.xlu0
    %v6948 = vpop.trf.xlu0
    %v6949 = vpop.trf.xlu0
    %v6950 = vpop.trf.xlu0
    %6951 = vxpose.xlu0.b32.start [1/16] %v5024, 128
    %6952 = vxpose.xlu0.b32.cont [2/16] 0.0, 128
    %6953 = vxpose.xlu0.b32.cont [3/16] 0.0, 128
    %6954 = vxpose.xlu0.b32.cont [4/16] 0.0, 128
    %6955 = vxpose.xlu0.b32.cont [5/16] 0.0, 128
    %6956 = vxpose.xlu0.b32.cont [6/16] 0.0, 128
    %6957 = vxpose.xlu0.b32.cont [7/16] 0.0, 128
    %6958 = vxpose.xlu0.b32.cont [8/16] 0.0, 128
    %6959 = vxpose.xlu0.b32.cont [9/16] 0.0, 128
    %6960 = vxpose.xlu0.b32.cont [10/16] 0.0, 128
    %6961 = vxpose.xlu0.b32.cont [11/16] 0.0, 128
    %6962 = vxpose.xlu0.b32.cont [12/16] 0.0, 128
    %6963 = vxpose.xlu0.b32.cont [13/16] 0.0, 128
    %6964 = vxpose.xlu0.b32.cont [14/16] 0.0, 128
    %6965 = vxpose.xlu0.b32.cont [15/16] 0.0, 128
    %6966 = vxpose.xlu0.b32.end [16/16] 0.0, 128
    %v6967 = vpop.trf.xlu0
    %v6968 = vpop.trf.xlu0
    %v6969 = vpop.trf.xlu0
    %v6970 = vpop.trf.xlu0
    %v6971 = vpop.trf.xlu0
    %v6972 = vpop.trf.xlu0
    %v6973 = vpop.trf.xlu0
    %v6974 = vpop.trf.xlu0
    %v6975 = vpop.trf.xlu0
    %v6976 = vpop.trf.xlu0
    %v6977 = vpop.trf.xlu0
    %v6978 = vpop.trf.xlu0
    %v6979 = vpop.trf.xlu0
    %v6980 = vpop.trf.xlu0
    %v6981 = vpop.trf.xlu0
    %v6982 = vpop.trf.xlu0
    %6983 = vxpose.xlu0.b32.start [1/16] %v5029, 128
    %6984 = vxpose.xlu0.b32.cont [2/16] 0.0, 128
    %6985 = vxpose.xlu0.b32.cont [3/16] 0.0, 128
    %6986 = vxpose.xlu0.b32.cont [4/16] 0.0, 128
    %6987 = vxpose.xlu0.b32.cont [5/16] 0.0, 128
    %6988 = vxpose.xlu0.b32.cont [6/16] 0.0, 128
    %6989 = vxpose.xlu0.b32.cont [7/16] 0.0, 128
    %6990 = vxpose.xlu0.b32.cont [8/16] 0.0, 128
    %6991 = vxpose.xlu0.b32.cont [9/16] 0.0, 128
    %6992 = vxpose.xlu0.b32.cont [10/16] 0.0, 128
    %6993 = vxpose.xlu0.b32.cont [11/16] 0.0, 128
    %6994 = vxpose.xlu0.b32.cont [12/16] 0.0, 128
    %6995 = vxpose.xlu0.b32.cont [13/16] 0.0, 128
    %6996 = vxpose.xlu0.b32.cont [14/16] 0.0, 128
    %6997 = vxpose.xlu0.b32.cont [15/16] 0.0, 128
    %6998 = vxpose.xlu0.b32.end [16/16] 0.0, 128
    %v6999 = vpop.trf.xlu0
    %v7000 = vpop.trf.xlu0
    %v7001 = vpop.trf.xlu0
    %v7002 = vpop.trf.xlu0
    %v7003 = vpop.trf.xlu0
    %v7004 = vpop.trf.xlu0
    %v7005 = vpop.trf.xlu0
    %v7006 = vpop.trf.xlu0
    %v7007 = vpop.trf.xlu0
    %v7008 = vpop.trf.xlu0
    %v7009 = vpop.trf.xlu0
    %v7010 = vpop.trf.xlu0
    %v7011 = vpop.trf.xlu0
    %v7012 = vpop.trf.xlu0
    %v7013 = vpop.trf.xlu0
    %v7014 = vpop.trf.xlu0
    %7015 = vxpose.xlu0.b32.start [1/16] %v5034, 128
    %7016 = vxpose.xlu0.b32.cont [2/16] 0.0, 128
    %7017 = vxpose.xlu0.b32.cont [3/16] 0.0, 128
    %7018 = vxpose.xlu0.b32.cont [4/16] 0.0, 128
    %7019 = vxpose.xlu0.b32.cont [5/16] 0.0, 128
    %7020 = vxpose.xlu0.b32.cont [6/16] 0.0, 128
    %7021 = vxpose.xlu0.b32.cont [7/16] 0.0, 128
    %7022 = vxpose.xlu0.b32.cont [8/16] 0.0, 128
    %7023 = vxpose.xlu0.b32.cont [9/16] 0.0, 128
    %7024 = vxpose.xlu0.b32.cont [10/16] 0.0, 128
    %7025 = vxpose.xlu0.b32.cont [11/16] 0.0, 128
    %7026 = vxpose.xlu0.b32.cont [12/16] 0.0, 128
    %7027 = vxpose.xlu0.b32.cont [13/16] 0.0, 128
    %7028 = vxpose.xlu0.b32.cont [14/16] 0.0, 128
    %7029 = vxpose.xlu0.b32.cont [15/16] 0.0, 128
    %7030 = vxpose.xlu0.b32.end [16/16] 0.0, 128
    %v7031 = vpop.trf.xlu0
    %v7032 = vpop.trf.xlu0
    %v7033 = vpop.trf.xlu0
    %v7034 = vpop.trf.xlu0
    %v7035 = vpop.trf.xlu0
    %v7036 = vpop.trf.xlu0
    %v7037 = vpop.trf.xlu0
    %v7038 = vpop.trf.xlu0
    %v7039 = vpop.trf.xlu0
    %v7040 = vpop.trf.xlu0
    %v7041 = vpop.trf.xlu0
    %v7042 = vpop.trf.xlu0
    %v7043 = vpop.trf.xlu0
    %v7044 = vpop.trf.xlu0
    %v7045 = vpop.trf.xlu0
    %v7046 = vpop.trf.xlu0
    %7047 = vxpose.xlu0.b32.start [1/16] %v5039, 128
    %7048 = vxpose.xlu0.b32.cont [2/16] 0.0, 128
    %7049 = vxpose.xlu0.b32.cont [3/16] 0.0, 128
    %7050 = vxpose.xlu0.b32.cont [4/16] 0.0, 128
    %7051 = vxpose.xlu0.b32.cont [5/16] 0.0, 128
    %7052 = vxpose.xlu0.b32.cont [6/16] 0.0, 128
    %7053 = vxpose.xlu0.b32.cont [7/16] 0.0, 128
    %7054 = vxpose.xlu0.b32.cont [8/16] 0.0, 128
    %7055 = vxpose.xlu0.b32.cont [9/16] 0.0, 128
    %7056 = vxpose.xlu0.b32.cont [10/16] 0.0, 128
    %7057 = vxpose.xlu0.b32.cont [11/16] 0.0, 128
    %7058 = vxpose.xlu0.b32.cont [12/16] 0.0, 128
    %7059 = vxpose.xlu0.b32.cont [13/16] 0.0, 128
    %7060 = vxpose.xlu0.b32.cont [14/16] 0.0, 128
    %7061 = vxpose.xlu0.b32.cont [15/16] 0.0, 128
    %7062 = vxpose.xlu0.b32.end [16/16] 0.0, 128
    %v7063 = vpop.trf.xlu0
    %v7064 = vpop.trf.xlu0
    %v7065 = vpop.trf.xlu0
    %v7066 = vpop.trf.xlu0
    %v7067 = vpop.trf.xlu0
    %v7068 = vpop.trf.xlu0
    %v7069 = vpop.trf.xlu0
    %v7070 = vpop.trf.xlu0
    %v7071 = vpop.trf.xlu0
    %v7072 = vpop.trf.xlu0
    %v7073 = vpop.trf.xlu0
    %v7074 = vpop.trf.xlu0
    %v7075 = vpop.trf.xlu0
    %v7076 = vpop.trf.xlu0
    %v7077 = vpop.trf.xlu0
    %v7078 = vpop.trf.xlu0
    %7079 = vxpose.xlu0.b32.start [1/16] %v5044, 128
    %7080 = vxpose.xlu0.b32.cont [2/16] 0.0, 128
    %7081 = vxpose.xlu0.b32.cont [3/16] 0.0, 128
    %7082 = vxpose.xlu0.b32.cont [4/16] 0.0, 128
    %7083 = vxpose.xlu0.b32.cont [5/16] 0.0, 128
    %7084 = vxpose.xlu0.b32.cont [6/16] 0.0, 128
    %7085 = vxpose.xlu0.b32.cont [7/16] 0.0, 128
    %7086 = vxpose.xlu0.b32.cont [8/16] 0.0, 128
    %7087 = vxpose.xlu0.b32.cont [9/16] 0.0, 128
    %7088 = vxpose.xlu0.b32.cont [10/16] 0.0, 128
    %7089 = vxpose.xlu0.b32.cont [11/16] 0.0, 128
    %7090 = vxpose.xlu0.b32.cont [12/16] 0.0, 128
    %7091 = vxpose.xlu0.b32.cont [13/16] 0.0, 128
    %7092 = vxpose.xlu0.b32.cont [14/16] 0.0, 128
    %7093 = vxpose.xlu0.b32.cont [15/16] 0.0, 128
    %7094 = vxpose.xlu0.b32.end [16/16] 0.0, 128
    %v7095 = vpop.trf.xlu0
    %v7096 = vpop.trf.xlu0
    %v7097 = vpop.trf.xlu0
    %v7098 = vpop.trf.xlu0
    %v7099 = vpop.trf.xlu0
    %v7100 = vpop.trf.xlu0
    %v7101 = vpop.trf.xlu0
    %v7102 = vpop.trf.xlu0
    %v7103 = vpop.trf.xlu0
    %v7104 = vpop.trf.xlu0
    %v7105 = vpop.trf.xlu0
    %v7106 = vpop.trf.xlu0
    %v7107 = vpop.trf.xlu0
    %v7108 = vpop.trf.xlu0
    %v7109 = vpop.trf.xlu0
    %v7110 = vpop.trf.xlu0
    %7111 = vxpose.xlu0.b32.start [1/16] %v5049, 128
    %7112 = vxpose.xlu0.b32.cont [2/16] 0.0, 128
    %7113 = vxpose.xlu0.b32.cont [3/16] 0.0, 128
    %7114 = vxpose.xlu0.b32.cont [4/16] 0.0, 128
    %7115 = vxpose.xlu0.b32.cont [5/16] 0.0, 128
    %7116 = vxpose.xlu0.b32.cont [6/16] 0.0, 128
    %7117 = vxpose.xlu0.b32.cont [7/16] 0.0, 128
    %7118 = vxpose.xlu0.b32.cont [8/16] 0.0, 128
    %7119 = vxpose.xlu0.b32.cont [9/16] 0.0, 128
    %7120 = vxpose.xlu0.b32.cont [10/16] 0.0, 128
    %7121 = vxpose.xlu0.b32.cont [11/16] 0.0, 128
    %7122 = vxpose.xlu0.b32.cont [12/16] 0.0, 128
    %7123 = vxpose.xlu0.b32.cont [13/16] 0.0, 128
    %7124 = vxpose.xlu0.b32.cont [14/16] 0.0, 128
    %7125 = vxpose.xlu0.b32.cont [15/16] 0.0, 128
    %7126 = vxpose.xlu0.b32.end [16/16] 0.0, 128
    %v7127 = vpop.trf.xlu0
    %v7128 = vpop.trf.xlu0
    %v7129 = vpop.trf.xlu0
    %v7130 = vpop.trf.xlu0
    %v7131 = vpop.trf.xlu0
    %v7132 = vpop.trf.xlu0
    %v7133 = vpop.trf.xlu0
    %v7134 = vpop.trf.xlu0
    %v7135 = vpop.trf.xlu0
    %v7136 = vpop.trf.xlu0
    %v7137 = vpop.trf.xlu0
    %v7138 = vpop.trf.xlu0
    %v7139 = vpop.trf.xlu0
    %v7140 = vpop.trf.xlu0
    %v7141 = vpop.trf.xlu0
    %v7142 = vpop.trf.xlu0
    %7143 = vxpose.xlu0.b32.start [1/16] %v5205, 128
    %7144 = vxpose.xlu0.b32.cont [2/16] 0.0, 128
    %7145 = vxpose.xlu0.b32.cont [3/16] 0.0, 128
    %7146 = vxpose.xlu0.b32.cont [4/16] 0.0, 128
    %7147 = vxpose.xlu0.b32.cont [5/16] 0.0, 128
    %7148 = vxpose.xlu0.b32.cont [6/16] 0.0, 128
    %7149 = vxpose.xlu0.b32.cont [7/16] 0.0, 128
    %7150 = vxpose.xlu0.b32.cont [8/16] 0.0, 128
    %7151 = vxpose.xlu0.b32.cont [9/16] 0.0, 128
    %7152 = vxpose.xlu0.b32.cont [10/16] 0.0, 128
    %7153 = vxpose.xlu0.b32.cont [11/16] 0.0, 128
    %7154 = vxpose.xlu0.b32.cont [12/16] 0.0, 128
    %7155 = vxpose.xlu0.b32.cont [13/16] 0.0, 128
    %7156 = vxpose.xlu0.b32.cont [14/16] 0.0, 128
    %7157 = vxpose.xlu0.b32.cont [15/16] 0.0, 128
    %7158 = vxpose.xlu0.b32.end [16/16] 0.0, 128
    %v7159 = vpop.trf.xlu0
    %v7160 = vpop.trf.xlu0
    %v7161 = vpop.trf.xlu0
    %v7162 = vpop.trf.xlu0
    %v7163 = vpop.trf.xlu0
    %v7164 = vpop.trf.xlu0
    %v7165 = vpop.trf.xlu0
    %v7166 = vpop.trf.xlu0
    %v7167 = vpop.trf.xlu0
    %v7168 = vpop.trf.xlu0
    %v7169 = vpop.trf.xlu0
    %v7170 = vpop.trf.xlu0
    %v7171 = vpop.trf.xlu0
    %v7172 = vpop.trf.xlu0
    %v7173 = vpop.trf.xlu0
    %v7174 = vpop.trf.xlu0
    %7175 = vxpose.xlu0.b32.start [1/16] %v5278, 128
    %7176 = vxpose.xlu0.b32.cont [2/16] 0.0, 128
    %7177 = vxpose.xlu0.b32.cont [3/16] 0.0, 128
    %7178 = vxpose.xlu0.b32.cont [4/16] 0.0, 128
    %7179 = vxpose.xlu0.b32.cont [5/16] 0.0, 128
    %7180 = vxpose.xlu0.b32.cont [6/16] 0.0, 128
    %7181 = vxpose.xlu0.b32.cont [7/16] 0.0, 128
    %7182 = vxpose.xlu0.b32.cont [8/16] 0.0, 128
    %7183 = vxpose.xlu0.b32.cont [9/16] 0.0, 128
    %7184 = vxpose.xlu0.b32.cont [10/16] 0.0, 128
    %7185 = vxpose.xlu0.b32.cont [11/16] 0.0, 128
    %7186 = vxpose.xlu0.b32.cont [12/16] 0.0, 128
    %7187 = vxpose.xlu0.b32.cont [13/16] 0.0, 128
    %7188 = vxpose.xlu0.b32.cont [14/16] 0.0, 128
    %7189 = vxpose.xlu0.b32.cont [15/16] 0.0, 128
    %7190 = vxpose.xlu0.b32.end [16/16] 0.0, 128
    %v7191 = vpop.trf.xlu0
    %v7192 = vpop.trf.xlu0
    %v7193 = vpop.trf.xlu0
    %v7194 = vpop.trf.xlu0
    %v7195 = vpop.trf.xlu0
    %v7196 = vpop.trf.xlu0
    %v7197 = vpop.trf.xlu0
    %v7198 = vpop.trf.xlu0
    %v7199 = vpop.trf.xlu0
    %v7200 = vpop.trf.xlu0
    %v7201 = vpop.trf.xlu0
    %v7202 = vpop.trf.xlu0
    %v7203 = vpop.trf.xlu0
    %v7204 = vpop.trf.xlu0
    %v7205 = vpop.trf.xlu0
    %v7206 = vpop.trf.xlu0
    %7207 = vxpose.xlu0.b32.start [1/16] %v5351, 128
    %7208 = vxpose.xlu0.b32.cont [2/16] 0.0, 128
    %7209 = vxpose.xlu0.b32.cont [3/16] 0.0, 128
    %7210 = vxpose.xlu0.b32.cont [4/16] 0.0, 128
    %7211 = vxpose.xlu0.b32.cont [5/16] 0.0, 128
    %7212 = vxpose.xlu0.b32.cont [6/16] 0.0, 128
    %7213 = vxpose.xlu0.b32.cont [7/16] 0.0, 128
    %7214 = vxpose.xlu0.b32.cont [8/16] 0.0, 128
    %7215 = vxpose.xlu0.b32.cont [9/16] 0.0, 128
    %7216 = vxpose.xlu0.b32.cont [10/16] 0.0, 128
    %7217 = vxpose.xlu0.b32.cont [11/16] 0.0, 128
    %7218 = vxpose.xlu0.b32.cont [12/16] 0.0, 128
    %7219 = vxpose.xlu0.b32.cont [13/16] 0.0, 128
    %7220 = vxpose.xlu0.b32.cont [14/16] 0.0, 128
    %7221 = vxpose.xlu0.b32.cont [15/16] 0.0, 128
    %7222 = vxpose.xlu0.b32.end [16/16] 0.0, 128
    %v7223 = vpop.trf.xlu0
    %v7224 = vpop.trf.xlu0
    %v7225 = vpop.trf.xlu0
    %v7226 = vpop.trf.xlu0
    %v7227 = vpop.trf.xlu0
    %v7228 = vpop.trf.xlu0
    %v7229 = vpop.trf.xlu0
    %v7230 = vpop.trf.xlu0
    %v7231 = vpop.trf.xlu0
    %v7232 = vpop.trf.xlu0
    %v7233 = vpop.trf.xlu0
    %v7234 = vpop.trf.xlu0
    %v7235 = vpop.trf.xlu0
    %v7236 = vpop.trf.xlu0
    %v7237 = vpop.trf.xlu0
    %v7238 = vpop.trf.xlu0
    %7239 = vxpose.xlu0.b32.start [1/16] %v5424, 128
    %7240 = vxpose.xlu0.b32.cont [2/16] 0.0, 128
    %7241 = vxpose.xlu0.b32.cont [3/16] 0.0, 128
    %7242 = vxpose.xlu0.b32.cont [4/16] 0.0, 128
    %7243 = vxpose.xlu0.b32.cont [5/16] 0.0, 128
    %7244 = vxpose.xlu0.b32.cont [6/16] 0.0, 128
    %7245 = vxpose.xlu0.b32.cont [7/16] 0.0, 128
    %7246 = vxpose.xlu0.b32.cont [8/16] 0.0, 128
    %7247 = vxpose.xlu0.b32.cont [9/16] 0.0, 128
    %7248 = vxpose.xlu0.b32.cont [10/16] 0.0, 128
    %7249 = vxpose.xlu0.b32.cont [11/16] 0.0, 128
    %7250 = vxpose.xlu0.b32.cont [12/16] 0.0, 128
    %7251 = vxpose.xlu0.b32.cont [13/16] 0.0, 128
    %7252 = vxpose.xlu0.b32.cont [14/16] 0.0, 128
    %7253 = vxpose.xlu0.b32.cont [15/16] 0.0, 128
    %7254 = vxpose.xlu0.b32.end [16/16] 0.0, 128
    %v7255 = vpop.trf.xlu0
    %v7256 = vpop.trf.xlu0
    %v7257 = vpop.trf.xlu0
    %v7258 = vpop.trf.xlu0
    %v7259 = vpop.trf.xlu0
    %v7260 = vpop.trf.xlu0
    %v7261 = vpop.trf.xlu0
    %v7262 = vpop.trf.xlu0
    %v7263 = vpop.trf.xlu0
    %v7264 = vpop.trf.xlu0
    %v7265 = vpop.trf.xlu0
    %v7266 = vpop.trf.xlu0
    %v7267 = vpop.trf.xlu0
    %v7268 = vpop.trf.xlu0
    %v7269 = vpop.trf.xlu0
    %v7270 = vpop.trf.xlu0
    %7271 = vxpose.xlu0.b32.start [1/16] %v5497, 128
    %7272 = vxpose.xlu0.b32.cont [2/16] 0.0, 128
    %7273 = vxpose.xlu0.b32.cont [3/16] 0.0, 128
    %7274 = vxpose.xlu0.b32.cont [4/16] 0.0, 128
    %7275 = vxpose.xlu0.b32.cont [5/16] 0.0, 128
    %7276 = vxpose.xlu0.b32.cont [6/16] 0.0, 128
    %7277 = vxpose.xlu0.b32.cont [7/16] 0.0, 128
    %7278 = vxpose.xlu0.b32.cont [8/16] 0.0, 128
    %7279 = vxpose.xlu0.b32.cont [9/16] 0.0, 128
    %7280 = vxpose.xlu0.b32.cont [10/16] 0.0, 128
    %7281 = vxpose.xlu0.b32.cont [11/16] 0.0, 128
    %7282 = vxpose.xlu0.b32.cont [12/16] 0.0, 128
    %7283 = vxpose.xlu0.b32.cont [13/16] 0.0, 128
    %7284 = vxpose.xlu0.b32.cont [14/16] 0.0, 128
    %7285 = vxpose.xlu0.b32.cont [15/16] 0.0, 128
    %7286 = vxpose.xlu0.b32.end [16/16] 0.0, 128
    %v7287 = vpop.trf.xlu0
    %v7288 = vpop.trf.xlu0
    %v7289 = vpop.trf.xlu0
    %v7290 = vpop.trf.xlu0
    %v7291 = vpop.trf.xlu0
    %v7292 = vpop.trf.xlu0
    %v7293 = vpop.trf.xlu0
    %v7294 = vpop.trf.xlu0
    %v7295 = vpop.trf.xlu0
    %v7296 = vpop.trf.xlu0
    %v7297 = vpop.trf.xlu0
    %v7298 = vpop.trf.xlu0
    %v7299 = vpop.trf.xlu0
    %v7300 = vpop.trf.xlu0
    %v7301 = vpop.trf.xlu0
    %v7302 = vpop.trf.xlu0
    %7303 = vxpose.xlu0.b32.start [1/16] %v5570, 128
    %7304 = vxpose.xlu0.b32.cont [2/16] 0.0, 128
    %7305 = vxpose.xlu0.b32.cont [3/16] 0.0, 128
    %7306 = vxpose.xlu0.b32.cont [4/16] 0.0, 128
    %7307 = vxpose.xlu0.b32.cont [5/16] 0.0, 128
    %7308 = vxpose.xlu0.b32.cont [6/16] 0.0, 128
    %7309 = vxpose.xlu0.b32.cont [7/16] 0.0, 128
    %7310 = vxpose.xlu0.b32.cont [8/16] 0.0, 128
    %7311 = vxpose.xlu0.b32.cont [9/16] 0.0, 128
    %7312 = vxpose.xlu0.b32.cont [10/16] 0.0, 128
    %7313 = vxpose.xlu0.b32.cont [11/16] 0.0, 128
    %7314 = vxpose.xlu0.b32.cont [12/16] 0.0, 128
    %7315 = vxpose.xlu0.b32.cont [13/16] 0.0, 128
    %7316 = vxpose.xlu0.b32.cont [14/16] 0.0, 128
    %7317 = vxpose.xlu0.b32.cont [15/16] 0.0, 128
    %7318 = vxpose.xlu0.b32.end [16/16] 0.0, 128
    %v7319 = vpop.trf.xlu0
    %v7320 = vpop.trf.xlu0
    %v7321 = vpop.trf.xlu0
    %v7322 = vpop.trf.xlu0
    %v7323 = vpop.trf.xlu0
    %v7324 = vpop.trf.xlu0
    %v7325 = vpop.trf.xlu0
    %v7326 = vpop.trf.xlu0
    %v7327 = vpop.trf.xlu0
    %v7328 = vpop.trf.xlu0
    %v7329 = vpop.trf.xlu0
    %v7330 = vpop.trf.xlu0
    %v7331 = vpop.trf.xlu0
    %v7332 = vpop.trf.xlu0
    %v7333 = vpop.trf.xlu0
    %v7334 = vpop.trf.xlu0
    %7335 = vxpose.xlu0.b32.start [1/16] %v5643, 128
    %7336 = vxpose.xlu0.b32.cont [2/16] 0.0, 128
    %7337 = vxpose.xlu0.b32.cont [3/16] 0.0, 128
    %7338 = vxpose.xlu0.b32.cont [4/16] 0.0, 128
    %7339 = vxpose.xlu0.b32.cont [5/16] 0.0, 128
    %7340 = vxpose.xlu0.b32.cont [6/16] 0.0, 128
    %7341 = vxpose.xlu0.b32.cont [7/16] 0.0, 128
    %7342 = vxpose.xlu0.b32.cont [8/16] 0.0, 128
    %7343 = vxpose.xlu0.b32.cont [9/16] 0.0, 128
    %7344 = vxpose.xlu0.b32.cont [10/16] 0.0, 128
    %7345 = vxpose.xlu0.b32.cont [11/16] 0.0, 128
    %7346 = vxpose.xlu0.b32.cont [12/16] 0.0, 128
    %7347 = vxpose.xlu0.b32.cont [13/16] 0.0, 128
    %7348 = vxpose.xlu0.b32.cont [14/16] 0.0, 128
    %7349 = vxpose.xlu0.b32.cont [15/16] 0.0, 128
    %7350 = vxpose.xlu0.b32.end [16/16] 0.0, 128
    %v7351 = vpop.trf.xlu0
    %v7352 = vpop.trf.xlu0
    %v7353 = vpop.trf.xlu0
    %v7354 = vpop.trf.xlu0
    %v7355 = vpop.trf.xlu0
    %v7356 = vpop.trf.xlu0
    %v7357 = vpop.trf.xlu0
    %v7358 = vpop.trf.xlu0
    %v7359 = vpop.trf.xlu0
    %v7360 = vpop.trf.xlu0
    %v7361 = vpop.trf.xlu0
    %v7362 = vpop.trf.xlu0
    %v7363 = vpop.trf.xlu0
    %v7364 = vpop.trf.xlu0
    %v7365 = vpop.trf.xlu0
    %v7366 = vpop.trf.xlu0
    %7367 = vxpose.xlu0.b32.start [1/16] %v5716, 128
    %7368 = vxpose.xlu0.b32.cont [2/16] 0.0, 128
    %7369 = vxpose.xlu0.b32.cont [3/16] 0.0, 128
    %7370 = vxpose.xlu0.b32.cont [4/16] 0.0, 128
    %7371 = vxpose.xlu0.b32.cont [5/16] 0.0, 128
    %7372 = vxpose.xlu0.b32.cont [6/16] 0.0, 128
    %7373 = vxpose.xlu0.b32.cont [7/16] 0.0, 128
    %7374 = vxpose.xlu0.b32.cont [8/16] 0.0, 128
    %7375 = vxpose.xlu0.b32.cont [9/16] 0.0, 128
    %7376 = vxpose.xlu0.b32.cont [10/16] 0.0, 128
    %7377 = vxpose.xlu0.b32.cont [11/16] 0.0, 128
    %7378 = vxpose.xlu0.b32.cont [12/16] 0.0, 128
    %7379 = vxpose.xlu0.b32.cont [13/16] 0.0, 128
    %7380 = vxpose.xlu0.b32.cont [14/16] 0.0, 128
    %7381 = vxpose.xlu0.b32.cont [15/16] 0.0, 128
    %7382 = vxpose.xlu0.b32.end [16/16] 0.0, 128
    %v7383 = vpop.trf.xlu0
    %v7384 = vpop.trf.xlu0
    %v7385 = vpop.trf.xlu0
    %v7386 = vpop.trf.xlu0
    %v7387 = vpop.trf.xlu0
    %v7388 = vpop.trf.xlu0
    %v7389 = vpop.trf.xlu0
    %v7390 = vpop.trf.xlu0
    %v7391 = vpop.trf.xlu0
    %v7392 = vpop.trf.xlu0
    %v7393 = vpop.trf.xlu0
    %v7394 = vpop.trf.xlu0
    %v7395 = vpop.trf.xlu0
    %v7396 = vpop.trf.xlu0
    %v7397 = vpop.trf.xlu0
    %v7398 = vpop.trf.xlu0
    %7399 = vxpose.xlu0.b32.start [1/16] %v5789, 128
    %7400 = vxpose.xlu0.b32.cont [2/16] 0.0, 128
    %7401 = vxpose.xlu0.b32.cont [3/16] 0.0, 128
    %7402 = vxpose.xlu0.b32.cont [4/16] 0.0, 128
    %7403 = vxpose.xlu0.b32.cont [5/16] 0.0, 128
    %7404 = vxpose.xlu0.b32.cont [6/16] 0.0, 128
    %7405 = vxpose.xlu0.b32.cont [7/16] 0.0, 128
    %7406 = vxpose.xlu0.b32.cont [8/16] 0.0, 128
    %7407 = vxpose.xlu0.b32.cont [9/16] 0.0, 128
    %7408 = vxpose.xlu0.b32.cont [10/16] 0.0, 128
    %7409 = vxpose.xlu0.b32.cont [11/16] 0.0, 128
    %7410 = vxpose.xlu0.b32.cont [12/16] 0.0, 128
    %7411 = vxpose.xlu0.b32.cont [13/16] 0.0, 128
    %7412 = vxpose.xlu0.b32.cont [14/16] 0.0, 128
    %7413 = vxpose.xlu0.b32.cont [15/16] 0.0, 128
    %7414 = vxpose.xlu0.b32.end [16/16] 0.0, 128
    %v7415 = vpop.trf.xlu0
    %v7416 = vpop.trf.xlu0
    %v7417 = vpop.trf.xlu0
    %v7418 = vpop.trf.xlu0
    %v7419 = vpop.trf.xlu0
    %v7420 = vpop.trf.xlu0
    %v7421 = vpop.trf.xlu0
    %v7422 = vpop.trf.xlu0
    %v7423 = vpop.trf.xlu0
    %v7424 = vpop.trf.xlu0
    %v7425 = vpop.trf.xlu0
    %v7426 = vpop.trf.xlu0
    %v7427 = vpop.trf.xlu0
    %v7428 = vpop.trf.xlu0
    %v7429 = vpop.trf.xlu0
    %v7430 = vpop.trf.xlu0
    %7431 = vxpose.xlu0.b32.start [1/16] %v5862, 128
    %7432 = vxpose.xlu0.b32.cont [2/16] 0.0, 128
    %7433 = vxpose.xlu0.b32.cont [3/16] 0.0, 128
    %7434 = vxpose.xlu0.b32.cont [4/16] 0.0, 128
    %7435 = vxpose.xlu0.b32.cont [5/16] 0.0, 128
    %7436 = vxpose.xlu0.b32.cont [6/16] 0.0, 128
    %7437 = vxpose.xlu0.b32.cont [7/16] 0.0, 128
    %7438 = vxpose.xlu0.b32.cont [8/16] 0.0, 128
    %7439 = vxpose.xlu0.b32.cont [9/16] 0.0, 128
    %7440 = vxpose.xlu0.b32.cont [10/16] 0.0, 128
    %7441 = vxpose.xlu0.b32.cont [11/16] 0.0, 128
    %7442 = vxpose.xlu0.b32.cont [12/16] 0.0, 128
    %7443 = vxpose.xlu0.b32.cont [13/16] 0.0, 128
    %7444 = vxpose.xlu0.b32.cont [14/16] 0.0, 128
    %7445 = vxpose.xlu0.b32.cont [15/16] 0.0, 128
    %7446 = vxpose.xlu0.b32.end [16/16] 0.0, 128
    %v7447 = vpop.trf.xlu0
    %v7448 = vpop.trf.xlu0
    %v7449 = vpop.trf.xlu0
    %v7450 = vpop.trf.xlu0
    %v7451 = vpop.trf.xlu0
    %v7452 = vpop.trf.xlu0
    %v7453 = vpop.trf.xlu0
    %v7454 = vpop.trf.xlu0
    %v7455 = vpop.trf.xlu0
    %v7456 = vpop.trf.xlu0
    %v7457 = vpop.trf.xlu0
    %v7458 = vpop.trf.xlu0
    %v7459 = vpop.trf.xlu0
    %v7460 = vpop.trf.xlu0
    %v7461 = vpop.trf.xlu0
    %v7462 = vpop.trf.xlu0
    %7463 = vxpose.xlu0.b32.start [1/16] %v5935, 128
    %7464 = vxpose.xlu0.b32.cont [2/16] 0.0, 128
    %7465 = vxpose.xlu0.b32.cont [3/16] 0.0, 128
    %7466 = vxpose.xlu0.b32.cont [4/16] 0.0, 128
    %7467 = vxpose.xlu0.b32.cont [5/16] 0.0, 128
    %7468 = vxpose.xlu0.b32.cont [6/16] 0.0, 128
    %7469 = vxpose.xlu0.b32.cont [7/16] 0.0, 128
    %7470 = vxpose.xlu0.b32.cont [8/16] 0.0, 128
    %7471 = vxpose.xlu0.b32.cont [9/16] 0.0, 128
    %7472 = vxpose.xlu0.b32.cont [10/16] 0.0, 128
    %7473 = vxpose.xlu0.b32.cont [11/16] 0.0, 128
    %7474 = vxpose.xlu0.b32.cont [12/16] 0.0, 128
    %7475 = vxpose.xlu0.b32.cont [13/16] 0.0, 128
    %7476 = vxpose.xlu0.b32.cont [14/16] 0.0, 128
    %7477 = vxpose.xlu0.b32.cont [15/16] 0.0, 128
    %7478 = vxpose.xlu0.b32.end [16/16] 0.0, 128
    %v7479 = vpop.trf.xlu0
    %v7480 = vpop.trf.xlu0
    %v7481 = vpop.trf.xlu0
    %v7482 = vpop.trf.xlu0
    %v7483 = vpop.trf.xlu0
    %v7484 = vpop.trf.xlu0
    %v7485 = vpop.trf.xlu0
    %v7486 = vpop.trf.xlu0
    %v7487 = vpop.trf.xlu0
    %v7488 = vpop.trf.xlu0
    %v7489 = vpop.trf.xlu0
    %v7490 = vpop.trf.xlu0
    %v7491 = vpop.trf.xlu0
    %v7492 = vpop.trf.xlu0
    %v7493 = vpop.trf.xlu0
    %v7494 = vpop.trf.xlu0
    %7495 = vxpose.xlu0.b32.start [1/16] %v6008, 128
    %7496 = vxpose.xlu0.b32.cont [2/16] 0.0, 128
    %7497 = vxpose.xlu0.b32.cont [3/16] 0.0, 128
    %7498 = vxpose.xlu0.b32.cont [4/16] 0.0, 128
    %7499 = vxpose.xlu0.b32.cont [5/16] 0.0, 128
    %7500 = vxpose.xlu0.b32.cont [6/16] 0.0, 128
    %7501 = vxpose.xlu0.b32.cont [7/16] 0.0, 128
    %7502 = vxpose.xlu0.b32.cont [8/16] 0.0, 128
    %7503 = vxpose.xlu0.b32.cont [9/16] 0.0, 128
    %7504 = vxpose.xlu0.b32.cont [10/16] 0.0, 128
    %7505 = vxpose.xlu0.b32.cont [11/16] 0.0, 128
    %7506 = vxpose.xlu0.b32.cont [12/16] 0.0, 128
    %7507 = vxpose.xlu0.b32.cont [13/16] 0.0, 128
    %7508 = vxpose.xlu0.b32.cont [14/16] 0.0, 128
    %7509 = vxpose.xlu0.b32.cont [15/16] 0.0, 128
    %7510 = vxpose.xlu0.b32.end [16/16] 0.0, 128
    %v7511 = vpop.trf.xlu0
    %v7512 = vpop.trf.xlu0
    %v7513 = vpop.trf.xlu0
    %v7514 = vpop.trf.xlu0
    %v7515 = vpop.trf.xlu0
    %v7516 = vpop.trf.xlu0
    %v7517 = vpop.trf.xlu0
    %v7518 = vpop.trf.xlu0
    %v7519 = vpop.trf.xlu0
    %v7520 = vpop.trf.xlu0
    %v7521 = vpop.trf.xlu0
    %v7522 = vpop.trf.xlu0
    %v7523 = vpop.trf.xlu0
    %v7524 = vpop.trf.xlu0
    %v7525 = vpop.trf.xlu0
    %v7526 = vpop.trf.xlu0
    %7527 = vxpose.xlu0.b32.start [1/16] %v6081, 128
    %7528 = vxpose.xlu0.b32.cont [2/16] 0.0, 128
    %7529 = vxpose.xlu0.b32.cont [3/16] 0.0, 128
    %7530 = vxpose.xlu0.b32.cont [4/16] 0.0, 128
    %7531 = vxpose.xlu0.b32.cont [5/16] 0.0, 128
    %7532 = vxpose.xlu0.b32.cont [6/16] 0.0, 128
    %7533 = vxpose.xlu0.b32.cont [7/16] 0.0, 128
    %7534 = vxpose.xlu0.b32.cont [8/16] 0.0, 128
    %7535 = vxpose.xlu0.b32.cont [9/16] 0.0, 128
    %7536 = vxpose.xlu0.b32.cont [10/16] 0.0, 128
    %7537 = vxpose.xlu0.b32.cont [11/16] 0.0, 128
    %7538 = vxpose.xlu0.b32.cont [12/16] 0.0, 128
    %7539 = vxpose.xlu0.b32.cont [13/16] 0.0, 128
    %7540 = vxpose.xlu0.b32.cont [14/16] 0.0, 128
    %7541 = vxpose.xlu0.b32.cont [15/16] 0.0, 128
    %7542 = vxpose.xlu0.b32.end [16/16] 0.0, 128
    %v7543 = vpop.trf.xlu0
    %v7544 = vpop.trf.xlu0
    %v7545 = vpop.trf.xlu0
    %v7546 = vpop.trf.xlu0
    %v7547 = vpop.trf.xlu0
    %v7548 = vpop.trf.xlu0
    %v7549 = vpop.trf.xlu0
    %v7550 = vpop.trf.xlu0
    %v7551 = vpop.trf.xlu0
    %v7552 = vpop.trf.xlu0
    %v7553 = vpop.trf.xlu0
    %v7554 = vpop.trf.xlu0
    %v7555 = vpop.trf.xlu0
    %v7556 = vpop.trf.xlu0
    %v7557 = vpop.trf.xlu0
    %v7558 = vpop.trf.xlu0
    %7559 = vxpose.xlu0.b32.start [1/16] %v6154, 128
    %7560 = vxpose.xlu0.b32.cont [2/16] 0.0, 128
    %7561 = vxpose.xlu0.b32.cont [3/16] 0.0, 128
    %7562 = vxpose.xlu0.b32.cont [4/16] 0.0, 128
    %7563 = vxpose.xlu0.b32.cont [5/16] 0.0, 128
    %7564 = vxpose.xlu0.b32.cont [6/16] 0.0, 128
    %7565 = vxpose.xlu0.b32.cont [7/16] 0.0, 128
    %7566 = vxpose.xlu0.b32.cont [8/16] 0.0, 128
    %7567 = vxpose.xlu0.b32.cont [9/16] 0.0, 128
    %7568 = vxpose.xlu0.b32.cont [10/16] 0.0, 128
    %7569 = vxpose.xlu0.b32.cont [11/16] 0.0, 128
    %7570 = vxpose.xlu0.b32.cont [12/16] 0.0, 128
    %7571 = vxpose.xlu0.b32.cont [13/16] 0.0, 128
    %7572 = vxpose.xlu0.b32.cont [14/16] 0.0, 128
    %7573 = vxpose.xlu0.b32.cont [15/16] 0.0, 128
    %7574 = vxpose.xlu0.b32.end [16/16] 0.0, 128
    %v7575 = vpop.trf.xlu0
    %v7576 = vpop.trf.xlu0
    %v7577 = vpop.trf.xlu0
    %v7578 = vpop.trf.xlu0
    %v7579 = vpop.trf.xlu0
    %v7580 = vpop.trf.xlu0
    %v7581 = vpop.trf.xlu0
    %v7582 = vpop.trf.xlu0
    %v7583 = vpop.trf.xlu0
    %v7584 = vpop.trf.xlu0
    %v7585 = vpop.trf.xlu0
    %v7586 = vpop.trf.xlu0
    %v7587 = vpop.trf.xlu0
    %v7588 = vpop.trf.xlu0
    %v7589 = vpop.trf.xlu0
    %v7590 = vpop.trf.xlu0
    %7591 = vxpose.xlu0.b32.start [1/16] %v6227, 128
    %7592 = vxpose.xlu0.b32.cont [2/16] 0.0, 128
    %7593 = vxpose.xlu0.b32.cont [3/16] 0.0, 128
    %7594 = vxpose.xlu0.b32.cont [4/16] 0.0, 128
    %7595 = vxpose.xlu0.b32.cont [5/16] 0.0, 128
    %7596 = vxpose.xlu0.b32.cont [6/16] 0.0, 128
    %7597 = vxpose.xlu0.b32.cont [7/16] 0.0, 128
    %7598 = vxpose.xlu0.b32.cont [8/16] 0.0, 128
    %7599 = vxpose.xlu0.b32.cont [9/16] 0.0, 128
    %7600 = vxpose.xlu0.b32.cont [10/16] 0.0, 128
    %7601 = vxpose.xlu0.b32.cont [11/16] 0.0, 128
    %7602 = vxpose.xlu0.b32.cont [12/16] 0.0, 128
    %7603 = vxpose.xlu0.b32.cont [13/16] 0.0, 128
    %7604 = vxpose.xlu0.b32.cont [14/16] 0.0, 128
    %7605 = vxpose.xlu0.b32.cont [15/16] 0.0, 128
    %7606 = vxpose.xlu0.b32.end [16/16] 0.0, 128
    %v7607 = vpop.trf.xlu0
    %v7608 = vpop.trf.xlu0
    %v7609 = vpop.trf.xlu0
    %v7610 = vpop.trf.xlu0
    %v7611 = vpop.trf.xlu0
    %v7612 = vpop.trf.xlu0
    %v7613 = vpop.trf.xlu0
    %v7614 = vpop.trf.xlu0
    %v7615 = vpop.trf.xlu0
    %v7616 = vpop.trf.xlu0
    %v7617 = vpop.trf.xlu0
    %v7618 = vpop.trf.xlu0
    %v7619 = vpop.trf.xlu0
    %v7620 = vpop.trf.xlu0
    %v7621 = vpop.trf.xlu0
    %v7622 = vpop.trf.xlu0
    %7623 = vxpose.xlu0.b32.start [1/16] %v6300, 128
    %7624 = vxpose.xlu0.b32.cont [2/16] 0.0, 128
    %7625 = vxpose.xlu0.b32.cont [3/16] 0.0, 128
    %7626 = vxpose.xlu0.b32.cont [4/16] 0.0, 128
    %7627 = vxpose.xlu0.b32.cont [5/16] 0.0, 128
    %7628 = vxpose.xlu0.b32.cont [6/16] 0.0, 128
    %7629 = vxpose.xlu0.b32.cont [7/16] 0.0, 128
    %7630 = vxpose.xlu0.b32.cont [8/16] 0.0, 128
    %7631 = vxpose.xlu0.b32.cont [9/16] 0.0, 128
    %7632 = vxpose.xlu0.b32.cont [10/16] 0.0, 128
    %7633 = vxpose.xlu0.b32.cont [11/16] 0.0, 128
    %7634 = vxpose.xlu0.b32.cont [12/16] 0.0, 128
    %7635 = vxpose.xlu0.b32.cont [13/16] 0.0, 128
    %7636 = vxpose.xlu0.b32.cont [14/16] 0.0, 128
    %7637 = vxpose.xlu0.b32.cont [15/16] 0.0, 128
    %7638 = vxpose.xlu0.b32.end [16/16] 0.0, 128
    %v7639 = vpop.trf.xlu0
    %v7640 = vpop.trf.xlu0
    %v7641 = vpop.trf.xlu0
    %v7642 = vpop.trf.xlu0
    %v7643 = vpop.trf.xlu0
    %v7644 = vpop.trf.xlu0
    %v7645 = vpop.trf.xlu0
    %v7646 = vpop.trf.xlu0
    %v7647 = vpop.trf.xlu0
    %v7648 = vpop.trf.xlu0
    %v7649 = vpop.trf.xlu0
    %v7650 = vpop.trf.xlu0
    %v7651 = vpop.trf.xlu0
    %v7652 = vpop.trf.xlu0
    %v7653 = vpop.trf.xlu0
    %v7654 = vpop.trf.xlu0
    %7655 = vxpose.xlu0.b32.start [1/16] %v6373, 128
    %7656 = vxpose.xlu0.b32.cont [2/16] 0.0, 128
    %7657 = vxpose.xlu0.b32.cont [3/16] 0.0, 128
    %7658 = vxpose.xlu0.b32.cont [4/16] 0.0, 128
    %7659 = vxpose.xlu0.b32.cont [5/16] 0.0, 128
    %7660 = vxpose.xlu0.b32.cont [6/16] 0.0, 128
    %7661 = vxpose.xlu0.b32.cont [7/16] 0.0, 128
    %7662 = vxpose.xlu0.b32.cont [8/16] 0.0, 128
    %7663 = vxpose.xlu0.b32.cont [9/16] 0.0, 128
    %7664 = vxpose.xlu0.b32.cont [10/16] 0.0, 128
    %7665 = vxpose.xlu0.b32.cont [11/16] 0.0, 128
    %7666 = vxpose.xlu0.b32.cont [12/16] 0.0, 128
    %7667 = vxpose.xlu0.b32.cont [13/16] 0.0, 128
    %7668 = vxpose.xlu0.b32.cont [14/16] 0.0, 128
    %7669 = vxpose.xlu0.b32.cont [15/16] 0.0, 128
    %7670 = vxpose.xlu0.b32.end [16/16] 0.0, 128
    %v7671 = vpop.trf.xlu0
    %v7672 = vpop.trf.xlu0
    %v7673 = vpop.trf.xlu0
    %v7674 = vpop.trf.xlu0
    %v7675 = vpop.trf.xlu0
    %v7676 = vpop.trf.xlu0
    %v7677 = vpop.trf.xlu0
    %v7678 = vpop.trf.xlu0
    %v7679 = vpop.trf.xlu0
    %v7680 = vpop.trf.xlu0
    %v7681 = vpop.trf.xlu0
    %v7682 = vpop.trf.xlu0
    %v7683 = vpop.trf.xlu0
    %v7684 = vpop.trf.xlu0
    %v7685 = vpop.trf.xlu0
    %v7686 = vpop.trf.xlu0
    %7687 = vxpose.xlu0.b32.start [1/16] %v6446, 128
    %7688 = vxpose.xlu0.b32.cont [2/16] 0.0, 128
    %7689 = vxpose.xlu0.b32.cont [3/16] 0.0, 128
    %7690 = vxpose.xlu0.b32.cont [4/16] 0.0, 128
    %7691 = vxpose.xlu0.b32.cont [5/16] 0.0, 128
    %7692 = vxpose.xlu0.b32.cont [6/16] 0.0, 128
    %7693 = vxpose.xlu0.b32.cont [7/16] 0.0, 128
    %7694 = vxpose.xlu0.b32.cont [8/16] 0.0, 128
    %7695 = vxpose.xlu0.b32.cont [9/16] 0.0, 128
    %7696 = vxpose.xlu0.b32.cont [10/16] 0.0, 128
    %7697 = vxpose.xlu0.b32.cont [11/16] 0.0, 128
    %7698 = vxpose.xlu0.b32.cont [12/16] 0.0, 128
    %7699 = vxpose.xlu0.b32.cont [13/16] 0.0, 128
    %7700 = vxpose.xlu0.b32.cont [14/16] 0.0, 128
    %7701 = vxpose.xlu0.b32.cont [15/16] 0.0, 128
    %7702 = vxpose.xlu0.b32.end [16/16] 0.0, 128
    %v7703 = vpop.trf.xlu0
    %v7704 = vpop.trf.xlu0
    %v7705 = vpop.trf.xlu0
    %v7706 = vpop.trf.xlu0
    %v7707 = vpop.trf.xlu0
    %v7708 = vpop.trf.xlu0
    %v7709 = vpop.trf.xlu0
    %v7710 = vpop.trf.xlu0
    %v7711 = vpop.trf.xlu0
    %v7712 = vpop.trf.xlu0
    %v7713 = vpop.trf.xlu0
    %v7714 = vpop.trf.xlu0
    %v7715 = vpop.trf.xlu0
    %v7716 = vpop.trf.xlu0
    %v7717 = vpop.trf.xlu0
    %v7718 = vpop.trf.xlu0
    %7719 = vxpose.xlu0.b32.start [1/16] %v6519, 128
    %7720 = vxpose.xlu0.b32.cont [2/16] 0.0, 128
    %7721 = vxpose.xlu0.b32.cont [3/16] 0.0, 128
    %7722 = vxpose.xlu0.b32.cont [4/16] 0.0, 128
    %7723 = vxpose.xlu0.b32.cont [5/16] 0.0, 128
    %7724 = vxpose.xlu0.b32.cont [6/16] 0.0, 128
    %7725 = vxpose.xlu0.b32.cont [7/16] 0.0, 128
    %7726 = vxpose.xlu0.b32.cont [8/16] 0.0, 128
    %7727 = vxpose.xlu0.b32.cont [9/16] 0.0, 128
    %7728 = vxpose.xlu0.b32.cont [10/16] 0.0, 128
    %7729 = vxpose.xlu0.b32.cont [11/16] 0.0, 128
    %7730 = vxpose.xlu0.b32.cont [12/16] 0.0, 128
    %7731 = vxpose.xlu0.b32.cont [13/16] 0.0, 128
    %7732 = vxpose.xlu0.b32.cont [14/16] 0.0, 128
    %7733 = vxpose.xlu0.b32.cont [15/16] 0.0, 128
    %7734 = vxpose.xlu0.b32.end [16/16] 0.0, 128
    %v7735 = vpop.trf.xlu0
    %v7736 = vpop.trf.xlu0
    %v7737 = vpop.trf.xlu0
    %v7738 = vpop.trf.xlu0
    %v7739 = vpop.trf.xlu0
    %v7740 = vpop.trf.xlu0
    %v7741 = vpop.trf.xlu0
    %v7742 = vpop.trf.xlu0
    %v7743 = vpop.trf.xlu0
    %v7744 = vpop.trf.xlu0
    %v7745 = vpop.trf.xlu0
    %v7746 = vpop.trf.xlu0
    %v7747 = vpop.trf.xlu0
    %v7748 = vpop.trf.xlu0
    %v7749 = vpop.trf.xlu0
    %v7750 = vpop.trf.xlu0
    %7751 = vxpose.xlu0.b32.start [1/16] %v6592, 128
    %7752 = vxpose.xlu0.b32.cont [2/16] 0.0, 128
    %7753 = vxpose.xlu0.b32.cont [3/16] 0.0, 128
    %7754 = vxpose.xlu0.b32.cont [4/16] 0.0, 128
    %7755 = vxpose.xlu0.b32.cont [5/16] 0.0, 128
    %7756 = vxpose.xlu0.b32.cont [6/16] 0.0, 128
    %7757 = vxpose.xlu0.b32.cont [7/16] 0.0, 128
    %7758 = vxpose.xlu0.b32.cont [8/16] 0.0, 128
    %7759 = vxpose.xlu0.b32.cont [9/16] 0.0, 128
    %7760 = vxpose.xlu0.b32.cont [10/16] 0.0, 128
    %7761 = vxpose.xlu0.b32.cont [11/16] 0.0, 128
    %7762 = vxpose.xlu0.b32.cont [12/16] 0.0, 128
    %7763 = vxpose.xlu0.b32.cont [13/16] 0.0, 128
    %7764 = vxpose.xlu0.b32.cont [14/16] 0.0, 128
    %7765 = vxpose.xlu0.b32.cont [15/16] 0.0, 128
    %7766 = vxpose.xlu0.b32.end [16/16] 0.0, 128
    %v7767 = vpop.trf.xlu0
    %v7768 = vpop.trf.xlu0
    %v7769 = vpop.trf.xlu0
    %v7770 = vpop.trf.xlu0
    %v7771 = vpop.trf.xlu0
    %v7772 = vpop.trf.xlu0
    %v7773 = vpop.trf.xlu0
    %v7774 = vpop.trf.xlu0
    %v7775 = vpop.trf.xlu0
    %v7776 = vpop.trf.xlu0
    %v7777 = vpop.trf.xlu0
    %v7778 = vpop.trf.xlu0
    %v7779 = vpop.trf.xlu0
    %v7780 = vpop.trf.xlu0
    %v7781 = vpop.trf.xlu0
    %v7782 = vpop.trf.xlu0
    %7783 = vxpose.xlu0.b32.start [1/16] %v6665, 128
    %7784 = vxpose.xlu0.b32.cont [2/16] 0.0, 128
    %7785 = vxpose.xlu0.b32.cont [3/16] 0.0, 128
    %7786 = vxpose.xlu0.b32.cont [4/16] 0.0, 128
    %7787 = vxpose.xlu0.b32.cont [5/16] 0.0, 128
    %7788 = vxpose.xlu0.b32.cont [6/16] 0.0, 128
    %7789 = vxpose.xlu0.b32.cont [7/16] 0.0, 128
    %7790 = vxpose.xlu0.b32.cont [8/16] 0.0, 128
    %7791 = vxpose.xlu0.b32.cont [9/16] 0.0, 128
    %7792 = vxpose.xlu0.b32.cont [10/16] 0.0, 128
    %7793 = vxpose.xlu0.b32.cont [11/16] 0.0, 128
    %7794 = vxpose.xlu0.b32.cont [12/16] 0.0, 128
    %7795 = vxpose.xlu0.b32.cont [13/16] 0.0, 128
    %7796 = vxpose.xlu0.b32.cont [14/16] 0.0, 128
    %7797 = vxpose.xlu0.b32.cont [15/16] 0.0, 128
    %7798 = vxpose.xlu0.b32.end [16/16] 0.0, 128
    %v7799 = vpop.trf.xlu0
    %v7800 = vpop.trf.xlu0
    %v7801 = vpop.trf.xlu0
    %v7802 = vpop.trf.xlu0
    %v7803 = vpop.trf.xlu0
    %v7804 = vpop.trf.xlu0
    %v7805 = vpop.trf.xlu0
    %v7806 = vpop.trf.xlu0
    %v7807 = vpop.trf.xlu0
    %v7808 = vpop.trf.xlu0
    %v7809 = vpop.trf.xlu0
    %v7810 = vpop.trf.xlu0
    %v7811 = vpop.trf.xlu0
    %v7812 = vpop.trf.xlu0
    %v7813 = vpop.trf.xlu0
    %v7814 = vpop.trf.xlu0
    %7815 = vxpose.xlu0.b32.start [1/16] %v6738, 128
    %7816 = vxpose.xlu0.b32.cont [2/16] 0.0, 128
    %7817 = vxpose.xlu0.b32.cont [3/16] 0.0, 128
    %7818 = vxpose.xlu0.b32.cont [4/16] 0.0, 128
    %7819 = vxpose.xlu0.b32.cont [5/16] 0.0, 128
    %7820 = vxpose.xlu0.b32.cont [6/16] 0.0, 128
    %7821 = vxpose.xlu0.b32.cont [7/16] 0.0, 128
    %7822 = vxpose.xlu0.b32.cont [8/16] 0.0, 128
    %7823 = vxpose.xlu0.b32.cont [9/16] 0.0, 128
    %7824 = vxpose.xlu0.b32.cont [10/16] 0.0, 128
    %7825 = vxpose.xlu0.b32.cont [11/16] 0.0, 128
    %7826 = vxpose.xlu0.b32.cont [12/16] 0.0, 128
    %7827 = vxpose.xlu0.b32.cont [13/16] 0.0, 128
    %7828 = vxpose.xlu0.b32.cont [14/16] 0.0, 128
    %7829 = vxpose.xlu0.b32.cont [15/16] 0.0, 128
    %7830 = vxpose.xlu0.b32.end [16/16] 0.0, 128
    %v7831 = vpop.trf.xlu0
    %v7832 = vpop.trf.xlu0
    %v7833 = vpop.trf.xlu0
    %v7834 = vpop.trf.xlu0
    %v7835 = vpop.trf.xlu0
    %v7836 = vpop.trf.xlu0
    %v7837 = vpop.trf.xlu0
    %v7838 = vpop.trf.xlu0
    %v7839 = vpop.trf.xlu0
    %v7840 = vpop.trf.xlu0
    %v7841 = vpop.trf.xlu0
    %v7842 = vpop.trf.xlu0
    %v7843 = vpop.trf.xlu0
    %v7844 = vpop.trf.xlu0
    %v7845 = vpop.trf.xlu0
    %v7846 = vpop.trf.xlu0
    %7847 = vxpose.xlu0.b32.start [1/16] %v6811, 128
    %7848 = vxpose.xlu0.b32.cont [2/16] 0.0, 128
    %7849 = vxpose.xlu0.b32.cont [3/16] 0.0, 128
    %7850 = vxpose.xlu0.b32.cont [4/16] 0.0, 128
    %7851 = vxpose.xlu0.b32.cont [5/16] 0.0, 128
    %7852 = vxpose.xlu0.b32.cont [6/16] 0.0, 128
    %7853 = vxpose.xlu0.b32.cont [7/16] 0.0, 128
    %7854 = vxpose.xlu0.b32.cont [8/16] 0.0, 128
    %7855 = vxpose.xlu0.b32.cont [9/16] 0.0, 128
    %7856 = vxpose.xlu0.b32.cont [10/16] 0.0, 128
    %7857 = vxpose.xlu0.b32.cont [11/16] 0.0, 128
    %7858 = vxpose.xlu0.b32.cont [12/16] 0.0, 128
    %7859 = vxpose.xlu0.b32.cont [13/16] 0.0, 128
    %7860 = vxpose.xlu0.b32.cont [14/16] 0.0, 128
    %7861 = vxpose.xlu0.b32.cont [15/16] 0.0, 128
    %7862 = vxpose.xlu0.b32.end [16/16] 0.0, 128
    %v7863 = vpop.trf.xlu0
    %v7864 = vpop.trf.xlu0
    %v7865 = vpop.trf.xlu0
    %v7866 = vpop.trf.xlu0
    %v7867 = vpop.trf.xlu0
    %v7868 = vpop.trf.xlu0
    %v7869 = vpop.trf.xlu0
    %v7870 = vpop.trf.xlu0
    %v7871 = vpop.trf.xlu0
    %v7872 = vpop.trf.xlu0
    %v7873 = vpop.trf.xlu0
    %v7874 = vpop.trf.xlu0
    %v7875 = vpop.trf.xlu0
    %v7876 = vpop.trf.xlu0
    %v7877 = vpop.trf.xlu0
    %v7878 = vpop.trf.xlu0
    %7879 = vxpose.xlu0.b32.start [1/16] %v6884, 128
    %7880 = vxpose.xlu0.b32.cont [2/16] 0.0, 128
    %7881 = vxpose.xlu0.b32.cont [3/16] 0.0, 128
    %7882 = vxpose.xlu0.b32.cont [4/16] 0.0, 128
    %7883 = vxpose.xlu0.b32.cont [5/16] 0.0, 128
    %7884 = vxpose.xlu0.b32.cont [6/16] 0.0, 128
    %7885 = vxpose.xlu0.b32.cont [7/16] 0.0, 128
    %7886 = vxpose.xlu0.b32.cont [8/16] 0.0, 128
    %7887 = vxpose.xlu0.b32.cont [9/16] 0.0, 128
    %7888 = vxpose.xlu0.b32.cont [10/16] 0.0, 128
    %7889 = vxpose.xlu0.b32.cont [11/16] 0.0, 128
    %7890 = vxpose.xlu0.b32.cont [12/16] 0.0, 128
    %7891 = vxpose.xlu0.b32.cont [13/16] 0.0, 128
    %7892 = vxpose.xlu0.b32.cont [14/16] 0.0, 128
    %7893 = vxpose.xlu0.b32.cont [15/16] 0.0, 128
    %7894 = vxpose.xlu0.b32.end [16/16] 0.0, 128
    %v7895 = vpop.trf.xlu0
    %v7896 = vpop.trf.xlu0
    %v7897 = vpop.trf.xlu0
    %v7898 = vpop.trf.xlu0
    %v7899 = vpop.trf.xlu0
    %v7900 = vpop.trf.xlu0
    %v7901 = vpop.trf.xlu0
    %v7902 = vpop.trf.xlu0
    %v7903 = vpop.trf.xlu0
    %v7904 = vpop.trf.xlu0
    %v7905 = vpop.trf.xlu0
    %v7906 = vpop.trf.xlu0
    %v7907 = vpop.trf.xlu0
    %v7908 = vpop.trf.xlu0
    %v7909 = vpop.trf.xlu0
    %v7910 = vpop.trf.xlu0
    %v7911 = vmul.f32 %v5014, %v6903
    %v7912 = vmul.f32 %v5019, %v6935
    %v7913 = vmul.f32 %v5024, %v6967
    %v7914 = vmul.f32 %v5029, %v6999
    %v7915 = vmul.f32 %v5034, %v7031
    %v7916 = vmul.f32 %v5039, %v7063
    %v7917 = vmul.f32 %v5044, %v7095
    %v7918 = vmul.f32 %v5049, %v7127
    %v7919 = vsel %vm127, %v7911, 0.0
    %7920 = vadd.xlane.f32.xlu0 %v7919
    %v7921 = vpop.xlane.xlu0 %7920
    %v7922 = vsel %vm127, %v7912, 0.0
    %7923 = vadd.xlane.f32.xlu0 %v7922
    %v7924 = vpop.xlane.xlu0 %7923
    %v7925 = vsel %vm127, %v7913, 0.0
    %7926 = vadd.xlane.f32.xlu0 %v7925
    %v7927 = vpop.xlane.xlu0 %7926
    %v7928 = vsel %vm127, %v7914, 0.0
    %7929 = vadd.xlane.f32.xlu0 %v7928
    %v7930 = vpop.xlane.xlu0 %7929
    %v7931 = vsel %vm127, %v7915, 0.0
    %7932 = vadd.xlane.f32.xlu0 %v7931
    %v7933 = vpop.xlane.xlu0 %7932
    %v7934 = vsel %vm127, %v7916, 0.0
    %7935 = vadd.xlane.f32.xlu0 %v7934
    %v7936 = vpop.xlane.xlu0 %7935
    %v7937 = vsel %vm127, %v7917, 0.0
    %7938 = vadd.xlane.f32.xlu0 %v7937
    %v7939 = vpop.xlane.xlu0 %7938
    %v7940 = vsel %vm127, %v7918, 0.0
    %7941 = vadd.xlane.f32.xlu0 %v7940
    %v7942 = vpop.xlane.xlu0 %7941
    %v7951 = vlaneseq
    %v7952 = vshrl.u32 %v7951, 7
    %v7953 = vsub.s32 %v877, %v7952
    %v7954 = vrot.slane %v7921, %v7953
    %v7955 = vlaneseq
    %v7956 = vshrl.u32 %v7955, 7
    %v7957 = vsub.s32 %v877, %v7956
    %v7958 = vrot.slane %v7924, %v7957
    %v7959 = vlaneseq
    %v7960 = vshrl.u32 %v7959, 7
    %v7961 = vsub.s32 %v877, %v7960
    %v7962 = vrot.slane %v7927, %v7961
    %v7963 = vlaneseq
    %v7964 = vshrl.u32 %v7963, 7
    %v7965 = vsub.s32 %v877, %v7964
    %v7966 = vrot.slane %v7930, %v7965
    %v7967 = vlaneseq
    %v7968 = vshrl.u32 %v7967, 7
    %v7969 = vsub.s32 %v877, %v7968
    %v7970 = vrot.slane %v7933, %v7969
    %v7971 = vlaneseq
    %v7972 = vshrl.u32 %v7971, 7
    %v7973 = vsub.s32 %v877, %v7972
    %v7974 = vrot.slane %v7936, %v7973
    %v7975 = vlaneseq
    %v7976 = vshrl.u32 %v7975, 7
    %v7977 = vsub.s32 %v877, %v7976
    %v7978 = vrot.slane %v7939, %v7977
    %v7979 = vlaneseq
    %v7980 = vshrl.u32 %v7979, 7
    %v7981 = vsub.s32 %v877, %v7980
    %v7982 = vrot.slane %v7942, %v7981
    %v7983 = vsel %vm910, %v7958, %v7954
    %v7984 = vsel %vm912, %v7962, %v7983
    %v7985 = vsel %vm914, %v7966, %v7984
    %v7986 = vsel %vm916, %v7970, %v7985
    %v7987 = vsel %vm918, %v7974, %v7986
    %v7988 = vsel %vm920, %v7978, %v7987
    %v7989 = vsel %vm922, %v7982, %v7988
    %v7991 = vsel %vm127, %v7989, 0.0
    %7992 = vadd.xlane.f32.xlu0 %v7991
    %v7993 = vpop.xlane.xlu0 %7992
    %v7994 = vmul.f32 %v7993, -0.5
    %v7995 = vadd.f32 %v5134, %v7994
    %v7996 = vmul.f32 %v5205, %v6903
    %v7997 = vmul.f32 %v5278, %v6935
    %v7998 = vmul.f32 %v5351, %v6967
    %v7999 = vmul.f32 %v5424, %v6999
    %v8000 = vmul.f32 %v5497, %v7031
    %v8001 = vmul.f32 %v5570, %v7063
    %v8002 = vmul.f32 %v5643, %v7095
    %v8003 = vmul.f32 %v5716, %v7127
    %v8004 = vsel %vm127, %v7996, 0.0
    %8005 = vadd.xlane.f32.xlu0 %v8004
    %v8006 = vpop.xlane.xlu0 %8005
    %v8007 = vsel %vm127, %v7997, 0.0
    %8008 = vadd.xlane.f32.xlu0 %v8007
    %v8009 = vpop.xlane.xlu0 %8008
    %v8010 = vsel %vm127, %v7998, 0.0
    %8011 = vadd.xlane.f32.xlu0 %v8010
    %v8012 = vpop.xlane.xlu0 %8011
    %v8013 = vsel %vm127, %v7999, 0.0
    %8014 = vadd.xlane.f32.xlu0 %v8013
    %v8015 = vpop.xlane.xlu0 %8014
    %v8016 = vsel %vm127, %v8000, 0.0
    %8017 = vadd.xlane.f32.xlu0 %v8016
    %v8018 = vpop.xlane.xlu0 %8017
    %v8019 = vsel %vm127, %v8001, 0.0
    %8020 = vadd.xlane.f32.xlu0 %v8019
    %v8021 = vpop.xlane.xlu0 %8020
    %v8022 = vsel %vm127, %v8002, 0.0
    %8023 = vadd.xlane.f32.xlu0 %v8022
    %v8024 = vpop.xlane.xlu0 %8023
    %v8025 = vsel %vm127, %v8003, 0.0
    %8026 = vadd.xlane.f32.xlu0 %v8025
    %v8027 = vpop.xlane.xlu0 %8026
    %v8036 = vlaneseq
    %v8037 = vshrl.u32 %v8036, 7
    %v8038 = vsub.s32 %v877, %v8037
    %v8039 = vrot.slane %v8006, %v8038
    %v8040 = vlaneseq
    %v8041 = vshrl.u32 %v8040, 7
    %v8042 = vsub.s32 %v877, %v8041
    %v8043 = vrot.slane %v8009, %v8042
    %v8044 = vlaneseq
    %v8045 = vshrl.u32 %v8044, 7
    %v8046 = vsub.s32 %v877, %v8045
    %v8047 = vrot.slane %v8012, %v8046
    %v8048 = vlaneseq
    %v8049 = vshrl.u32 %v8048, 7
    %v8050 = vsub.s32 %v877, %v8049
    %v8051 = vrot.slane %v8015, %v8050
    %v8052 = vlaneseq
    %v8053 = vshrl.u32 %v8052, 7
    %v8054 = vsub.s32 %v877, %v8053
    %v8055 = vrot.slane %v8018, %v8054
    %v8056 = vlaneseq
    %v8057 = vshrl.u32 %v8056, 7
    %v8058 = vsub.s32 %v877, %v8057
    %v8059 = vrot.slane %v8021, %v8058
    %v8060 = vlaneseq
    %v8061 = vshrl.u32 %v8060, 7
    %v8062 = vsub.s32 %v877, %v8061
    %v8063 = vrot.slane %v8024, %v8062
    %v8064 = vlaneseq
    %v8065 = vshrl.u32 %v8064, 7
    %v8066 = vsub.s32 %v877, %v8065
    %v8067 = vrot.slane %v8027, %v8066
    %v8068 = vsel %vm910, %v8043, %v8039
    %v8069 = vsel %vm912, %v8047, %v8068
    %v8070 = vsel %vm914, %v8051, %v8069
    %v8071 = vsel %vm916, %v8055, %v8070
    %v8072 = vsel %vm918, %v8059, %v8071
    %v8073 = vsel %vm920, %v8063, %v8072
    %v8074 = vsel %vm922, %v8067, %v8073
    %v8076 = vsel %vm127, %v8074, 0.0
    %8077 = vadd.xlane.f32.xlu0 %v8076
    %v8078 = vpop.xlane.xlu0 %8077
    %v8079 = vmul.f32 %v8078, 0.33333334
    %v8080 = vadd.f32 %v7995, %v8079
    %v8081 = vmul.f32 %v5205, %v7159
    %v8082 = vmul.f32 %v5278, %v7191
    %v8083 = vmul.f32 %v5351, %v7223
    %v8084 = vmul.f32 %v5424, %v7255
    %v8085 = vmul.f32 %v5497, %v7287
    %v8086 = vmul.f32 %v5570, %v7319
    %v8087 = vmul.f32 %v5643, %v7351
    %v8088 = vmul.f32 %v5716, %v7383
    %v8089 = vsel %vm127, %v8081, 0.0
    %8090 = vadd.xlane.f32.xlu0 %v8089
    %v8091 = vpop.xlane.xlu0 %8090
    %v8092 = vsel %vm127, %v8082, 0.0
    %8093 = vadd.xlane.f32.xlu0 %v8092
    %v8094 = vpop.xlane.xlu0 %8093
    %v8095 = vsel %vm127, %v8083, 0.0
    %8096 = vadd.xlane.f32.xlu0 %v8095
    %v8097 = vpop.xlane.xlu0 %8096
    %v8098 = vsel %vm127, %v8084, 0.0
    %8099 = vadd.xlane.f32.xlu0 %v8098
    %v8100 = vpop.xlane.xlu0 %8099
    %v8101 = vsel %vm127, %v8085, 0.0
    %8102 = vadd.xlane.f32.xlu0 %v8101
    %v8103 = vpop.xlane.xlu0 %8102
    %v8104 = vsel %vm127, %v8086, 0.0
    %8105 = vadd.xlane.f32.xlu0 %v8104
    %v8106 = vpop.xlane.xlu0 %8105
    %v8107 = vsel %vm127, %v8087, 0.0
    %8108 = vadd.xlane.f32.xlu0 %v8107
    %v8109 = vpop.xlane.xlu0 %8108
    %v8110 = vsel %vm127, %v8088, 0.0
    %8111 = vadd.xlane.f32.xlu0 %v8110
    %v8112 = vpop.xlane.xlu0 %8111
    %v8121 = vlaneseq
    %v8122 = vshrl.u32 %v8121, 7
    %v8123 = vsub.s32 %v877, %v8122
    %v8124 = vrot.slane %v8091, %v8123
    %v8125 = vlaneseq
    %v8126 = vshrl.u32 %v8125, 7
    %v8127 = vsub.s32 %v877, %v8126
    %v8128 = vrot.slane %v8094, %v8127
    %v8129 = vlaneseq
    %v8130 = vshrl.u32 %v8129, 7
    %v8131 = vsub.s32 %v877, %v8130
    %v8132 = vrot.slane %v8097, %v8131
    %v8133 = vlaneseq
    %v8134 = vshrl.u32 %v8133, 7
    %v8135 = vsub.s32 %v877, %v8134
    %v8136 = vrot.slane %v8100, %v8135
    %v8137 = vlaneseq
    %v8138 = vshrl.u32 %v8137, 7
    %v8139 = vsub.s32 %v877, %v8138
    %v8140 = vrot.slane %v8103, %v8139
    %v8141 = vlaneseq
    %v8142 = vshrl.u32 %v8141, 7
    %v8143 = vsub.s32 %v877, %v8142
    %v8144 = vrot.slane %v8106, %v8143
    %v8145 = vlaneseq
    %v8146 = vshrl.u32 %v8145, 7
    %v8147 = vsub.s32 %v877, %v8146
    %v8148 = vrot.slane %v8109, %v8147
    %v8149 = vlaneseq
    %v8150 = vshrl.u32 %v8149, 7
    %v8151 = vsub.s32 %v877, %v8150
    %v8152 = vrot.slane %v8112, %v8151
    %v8153 = vsel %vm910, %v8128, %v8124
    %v8154 = vsel %vm912, %v8132, %v8153
    %v8155 = vsel %vm914, %v8136, %v8154
    %v8156 = vsel %vm916, %v8140, %v8155
    %v8157 = vsel %vm918, %v8144, %v8156
    %v8158 = vsel %vm920, %v8148, %v8157
    %v8159 = vsel %vm922, %v8152, %v8158
    %v8161 = vsel %vm127, %v8159, 0.0
    %8162 = vadd.xlane.f32.xlu0 %v8161
    %v8163 = vpop.xlane.xlu0 %8162
    %v8164 = vmul.f32 %v8163, -0.25
    %v8165 = vadd.f32 %v8080, %v8164
    %v8166 = vmul.f32 %v5789, %v7159
    %v8167 = vmul.f32 %v5862, %v7191
    %v8168 = vmul.f32 %v5935, %v7223
    %v8169 = vmul.f32 %v6008, %v7255
    %v8170 = vmul.f32 %v6081, %v7287
    %v8171 = vmul.f32 %v6154, %v7319
    %v8172 = vmul.f32 %v6227, %v7351
    %v8173 = vmul.f32 %v6300, %v7383
    %v8174 = vsel %vm127, %v8166, 0.0
    %8175 = vadd.xlane.f32.xlu0 %v8174
    %v8176 = vpop.xlane.xlu0 %8175
    %v8177 = vsel %vm127, %v8167, 0.0
    %8178 = vadd.xlane.f32.xlu0 %v8177
    %v8179 = vpop.xlane.xlu0 %8178
    %v8180 = vsel %vm127, %v8168, 0.0
    %8181 = vadd.xlane.f32.xlu0 %v8180
    %v8182 = vpop.xlane.xlu0 %8181
    %v8183 = vsel %vm127, %v8169, 0.0
    %8184 = vadd.xlane.f32.xlu0 %v8183
    %v8185 = vpop.xlane.xlu0 %8184
    %v8186 = vsel %vm127, %v8170, 0.0
    %8187 = vadd.xlane.f32.xlu0 %v8186
    %v8188 = vpop.xlane.xlu0 %8187
    %v8189 = vsel %vm127, %v8171, 0.0
    %8190 = vadd.xlane.f32.xlu0 %v8189
    %v8191 = vpop.xlane.xlu0 %8190
    %v8192 = vsel %vm127, %v8172, 0.0
    %8193 = vadd.xlane.f32.xlu0 %v8192
    %v8194 = vpop.xlane.xlu0 %8193
    %v8195 = vsel %vm127, %v8173, 0.0
    %8196 = vadd.xlane.f32.xlu0 %v8195
    %v8197 = vpop.xlane.xlu0 %8196
    %v8206 = vlaneseq
    %v8207 = vshrl.u32 %v8206, 7
    %v8208 = vsub.s32 %v877, %v8207
    %v8209 = vrot.slane %v8176, %v8208
    %v8210 = vlaneseq
    %v8211 = vshrl.u32 %v8210, 7
    %v8212 = vsub.s32 %v877, %v8211
    %v8213 = vrot.slane %v8179, %v8212
    %v8214 = vlaneseq
    %v8215 = vshrl.u32 %v8214, 7
    %v8216 = vsub.s32 %v877, %v8215
    %v8217 = vrot.slane %v8182, %v8216
    %v8218 = vlaneseq
    %v8219 = vshrl.u32 %v8218, 7
    %v8220 = vsub.s32 %v877, %v8219
    %v8221 = vrot.slane %v8185, %v8220
    %v8222 = vlaneseq
    %v8223 = vshrl.u32 %v8222, 7
    %v8224 = vsub.s32 %v877, %v8223
    %v8225 = vrot.slane %v8188, %v8224
    %v8226 = vlaneseq
    %v8227 = vshrl.u32 %v8226, 7
    %v8228 = vsub.s32 %v877, %v8227
    %v8229 = vrot.slane %v8191, %v8228
    %v8230 = vlaneseq
    %v8231 = vshrl.u32 %v8230, 7
    %v8232 = vsub.s32 %v877, %v8231
    %v8233 = vrot.slane %v8194, %v8232
    %v8234 = vlaneseq
    %v8235 = vshrl.u32 %v8234, 7
    %v8236 = vsub.s32 %v877, %v8235
    %v8237 = vrot.slane %v8197, %v8236
    %v8238 = vsel %vm910, %v8213, %v8209
    %v8239 = vsel %vm912, %v8217, %v8238
    %v8240 = vsel %vm914, %v8221, %v8239
    %v8241 = vsel %vm916, %v8225, %v8240
    %v8242 = vsel %vm918, %v8229, %v8241
    %v8243 = vsel %vm920, %v8233, %v8242
    %v8244 = vsel %vm922, %v8237, %v8243
    %v8246 = vsel %vm127, %v8244, 0.0
    %8247 = vadd.xlane.f32.xlu0 %v8246
    %v8248 = vpop.xlane.xlu0 %8247
    %v8249 = vmul.f32 %v8248, 0.2
    %v8250 = vadd.f32 %v8165, %v8249
    %v8251 = vmul.f32 %v5789, %v7415
    %v8252 = vmul.f32 %v5862, %v7447
    %v8253 = vmul.f32 %v5935, %v7479
    %v8254 = vmul.f32 %v6008, %v7511
    %v8255 = vmul.f32 %v6081, %v7543
    %v8256 = vmul.f32 %v6154, %v7575
    %v8257 = vmul.f32 %v6227, %v7607
    %v8258 = vmul.f32 %v6300, %v7639
    %v8259 = vsel %vm127, %v8251, 0.0
    %8260 = vadd.xlane.f32.xlu0 %v8259
    %v8261 = vpop.xlane.xlu0 %8260
    %v8262 = vsel %vm127, %v8252, 0.0
    %8263 = vadd.xlane.f32.xlu0 %v8262
    %v8264 = vpop.xlane.xlu0 %8263
    %v8265 = vsel %vm127, %v8253, 0.0
    %8266 = vadd.xlane.f32.xlu0 %v8265
    %v8267 = vpop.xlane.xlu0 %8266
    %v8268 = vsel %vm127, %v8254, 0.0
    %8269 = vadd.xlane.f32.xlu0 %v8268
    %v8270 = vpop.xlane.xlu0 %8269
    %v8271 = vsel %vm127, %v8255, 0.0
    %8272 = vadd.xlane.f32.xlu0 %v8271
    %v8273 = vpop.xlane.xlu0 %8272
    %v8274 = vsel %vm127, %v8256, 0.0
    %8275 = vadd.xlane.f32.xlu0 %v8274
    %v8276 = vpop.xlane.xlu0 %8275
    %v8277 = vsel %vm127, %v8257, 0.0
    %8278 = vadd.xlane.f32.xlu0 %v8277
    %v8279 = vpop.xlane.xlu0 %8278
    %v8280 = vsel %vm127, %v8258, 0.0
    %8281 = vadd.xlane.f32.xlu0 %v8280
    %v8282 = vpop.xlane.xlu0 %8281
    %v8291 = vlaneseq
    %v8292 = vshrl.u32 %v8291, 7
    %v8293 = vsub.s32 %v877, %v8292
    %v8294 = vrot.slane %v8261, %v8293
    %v8295 = vlaneseq
    %v8296 = vshrl.u32 %v8295, 7
    %v8297 = vsub.s32 %v877, %v8296
    %v8298 = vrot.slane %v8264, %v8297
    %v8299 = vlaneseq
    %v8300 = vshrl.u32 %v8299, 7
    %v8301 = vsub.s32 %v877, %v8300
    %v8302 = vrot.slane %v8267, %v8301
    %v8303 = vlaneseq
    %v8304 = vshrl.u32 %v8303, 7
    %v8305 = vsub.s32 %v877, %v8304
    %v8306 = vrot.slane %v8270, %v8305
    %v8307 = vlaneseq
    %v8308 = vshrl.u32 %v8307, 7
    %v8309 = vsub.s32 %v877, %v8308
    %v8310 = vrot.slane %v8273, %v8309
    %v8311 = vlaneseq
    %v8312 = vshrl.u32 %v8311, 7
    %v8313 = vsub.s32 %v877, %v8312
    %v8314 = vrot.slane %v8276, %v8313
    %v8315 = vlaneseq
    %v8316 = vshrl.u32 %v8315, 7
    %v8317 = vsub.s32 %v877, %v8316
    %v8318 = vrot.slane %v8279, %v8317
    %v8319 = vlaneseq
    %v8320 = vshrl.u32 %v8319, 7
    %v8321 = vsub.s32 %v877, %v8320
    %v8322 = vrot.slane %v8282, %v8321
    %v8323 = vsel %vm910, %v8298, %v8294
    %v8324 = vsel %vm912, %v8302, %v8323
    %v8325 = vsel %vm914, %v8306, %v8324
    %v8326 = vsel %vm916, %v8310, %v8325
    %v8327 = vsel %vm918, %v8314, %v8326
    %v8328 = vsel %vm920, %v8318, %v8327
    %v8329 = vsel %vm922, %v8322, %v8328
    %v8331 = vsel %vm127, %v8329, 0.0
    %8332 = vadd.xlane.f32.xlu0 %v8331
    %v8333 = vpop.xlane.xlu0 %8332
    %v8334 = vmul.f32 %v8333, -0.16666667
    %v8335 = vadd.f32 %v8250, %v8334
    %v8336 = vmul.f32 %v6373, %v7415
    %v8337 = vmul.f32 %v6446, %v7447
    %v8338 = vmul.f32 %v6519, %v7479
    %v8339 = vmul.f32 %v6592, %v7511
    %v8340 = vmul.f32 %v6665, %v7543
    %v8341 = vmul.f32 %v6738, %v7575
    %v8342 = vmul.f32 %v6811, %v7607
    %v8343 = vmul.f32 %v6884, %v7639
    %v8344 = vsel %vm127, %v8336, 0.0
    %8345 = vadd.xlane.f32.xlu0 %v8344
    %v8346 = vpop.xlane.xlu0 %8345
    %v8347 = vsel %vm127, %v8337, 0.0
    %8348 = vadd.xlane.f32.xlu0 %v8347
    %v8349 = vpop.xlane.xlu0 %8348
    %v8350 = vsel %vm127, %v8338, 0.0
    %8351 = vadd.xlane.f32.xlu0 %v8350
    %v8352 = vpop.xlane.xlu0 %8351
    %v8353 = vsel %vm127, %v8339, 0.0
    %8354 = vadd.xlane.f32.xlu0 %v8353
    %v8355 = vpop.xlane.xlu0 %8354
    %v8356 = vsel %vm127, %v8340, 0.0
    %8357 = vadd.xlane.f32.xlu0 %v8356
    %v8358 = vpop.xlane.xlu0 %8357
    %v8359 = vsel %vm127, %v8341, 0.0
    %8360 = vadd.xlane.f32.xlu0 %v8359
    %v8361 = vpop.xlane.xlu0 %8360
    %v8362 = vsel %vm127, %v8342, 0.0
    %8363 = vadd.xlane.f32.xlu0 %v8362
    %v8364 = vpop.xlane.xlu0 %8363
    %v8365 = vsel %vm127, %v8343, 0.0
    %8366 = vadd.xlane.f32.xlu0 %v8365
    %v8367 = vpop.xlane.xlu0 %8366
    %v8376 = vlaneseq
    %v8377 = vshrl.u32 %v8376, 7
    %v8378 = vsub.s32 %v877, %v8377
    %v8379 = vrot.slane %v8346, %v8378
    %v8380 = vlaneseq
    %v8381 = vshrl.u32 %v8380, 7
    %v8382 = vsub.s32 %v877, %v8381
    %v8383 = vrot.slane %v8349, %v8382
    %v8384 = vlaneseq
    %v8385 = vshrl.u32 %v8384, 7
    %v8386 = vsub.s32 %v877, %v8385
    %v8387 = vrot.slane %v8352, %v8386
    %v8388 = vlaneseq
    %v8389 = vshrl.u32 %v8388, 7
    %v8390 = vsub.s32 %v877, %v8389
    %v8391 = vrot.slane %v8355, %v8390
    %v8392 = vlaneseq
    %v8393 = vshrl.u32 %v8392, 7
    %v8394 = vsub.s32 %v877, %v8393
    %v8395 = vrot.slane %v8358, %v8394
    %v8396 = vlaneseq
    %v8397 = vshrl.u32 %v8396, 7
    %v8398 = vsub.s32 %v877, %v8397
    %v8399 = vrot.slane %v8361, %v8398
    %v8400 = vlaneseq
    %v8401 = vshrl.u32 %v8400, 7
    %v8402 = vsub.s32 %v877, %v8401
    %v8403 = vrot.slane %v8364, %v8402
    %v8404 = vlaneseq
    %v8405 = vshrl.u32 %v8404, 7
    %v8406 = vsub.s32 %v877, %v8405
    %v8407 = vrot.slane %v8367, %v8406
    %v8408 = vsel %vm910, %v8383, %v8379
    %v8409 = vsel %vm912, %v8387, %v8408
    %v8410 = vsel %vm914, %v8391, %v8409
    %v8411 = vsel %vm916, %v8395, %v8410
    %v8412 = vsel %vm918, %v8399, %v8411
    %v8413 = vsel %vm920, %v8403, %v8412
    %v8414 = vsel %vm922, %v8407, %v8413
    %v8416 = vsel %vm127, %v8414, 0.0
    %8417 = vadd.xlane.f32.xlu0 %v8416
    %v8418 = vpop.xlane.xlu0 %8417
    %v8419 = vmul.f32 %v8418, 0.14285715
    %v8420 = vadd.f32 %v8335, %v8419
    %v8421 = vmul.f32 %v6373, %v7671
    %v8422 = vmul.f32 %v6446, %v7703
    %v8423 = vmul.f32 %v6519, %v7735
    %v8424 = vmul.f32 %v6592, %v7767
    %v8425 = vmul.f32 %v6665, %v7799
    %v8426 = vmul.f32 %v6738, %v7831
    %v8427 = vmul.f32 %v6811, %v7863
    %v8428 = vmul.f32 %v6884, %v7895
    %v8429 = vsel %vm127, %v8421, 0.0
    %8430 = vadd.xlane.f32.xlu0 %v8429
    %v8431 = vpop.xlane.xlu0 %8430
    %v8432 = vsel %vm127, %v8422, 0.0
    %8433 = vadd.xlane.f32.xlu0 %v8432
    %v8434 = vpop.xlane.xlu0 %8433
    %v8435 = vsel %vm127, %v8423, 0.0
    %8436 = vadd.xlane.f32.xlu0 %v8435
    %v8437 = vpop.xlane.xlu0 %8436
    %v8438 = vsel %vm127, %v8424, 0.0
    %8439 = vadd.xlane.f32.xlu0 %v8438
    %v8440 = vpop.xlane.xlu0 %8439
    %v8441 = vsel %vm127, %v8425, 0.0
    %8442 = vadd.xlane.f32.xlu0 %v8441
    %v8443 = vpop.xlane.xlu0 %8442
    %v8444 = vsel %vm127, %v8426, 0.0
    %8445 = vadd.xlane.f32.xlu0 %v8444
    %v8446 = vpop.xlane.xlu0 %8445
    %v8447 = vsel %vm127, %v8427, 0.0
    %8448 = vadd.xlane.f32.xlu0 %v8447
    %v8449 = vpop.xlane.xlu0 %8448
    %v8450 = vsel %vm127, %v8428, 0.0
    %8451 = vadd.xlane.f32.xlu0 %v8450
    %v8452 = vpop.xlane.xlu0 %8451
    %v8461 = vlaneseq
    %v8462 = vshrl.u32 %v8461, 7
    %v8463 = vsub.s32 %v877, %v8462
    %v8464 = vrot.slane %v8431, %v8463
    %v8465 = vlaneseq
    %v8466 = vshrl.u32 %v8465, 7
    %v8467 = vsub.s32 %v877, %v8466
    %v8468 = vrot.slane %v8434, %v8467
    %v8469 = vlaneseq
    %v8470 = vshrl.u32 %v8469, 7
    %v8471 = vsub.s32 %v877, %v8470
    %v8472 = vrot.slane %v8437, %v8471
    %v8473 = vlaneseq
    %v8474 = vshrl.u32 %v8473, 7
    %v8475 = vsub.s32 %v877, %v8474
    %v8476 = vrot.slane %v8440, %v8475
    %v8477 = vlaneseq
    %v8478 = vshrl.u32 %v8477, 7
    %v8479 = vsub.s32 %v877, %v8478
    %v8480 = vrot.slane %v8443, %v8479
    %v8481 = vlaneseq
    %v8482 = vshrl.u32 %v8481, 7
    %v8483 = vsub.s32 %v877, %v8482
    %v8484 = vrot.slane %v8446, %v8483
    %v8485 = vlaneseq
    %v8486 = vshrl.u32 %v8485, 7
    %v8487 = vsub.s32 %v877, %v8486
    %v8488 = vrot.slane %v8449, %v8487
    %v8489 = vlaneseq
    %v8490 = vshrl.u32 %v8489, 7
    %v8491 = vsub.s32 %v877, %v8490
    %v8492 = vrot.slane %v8452, %v8491
    %v8493 = vsel %vm910, %v8468, %v8464
    %v8494 = vsel %vm912, %v8472, %v8493
    %v8495 = vsel %vm914, %v8476, %v8494
    %v8496 = vsel %vm916, %v8480, %v8495
    %v8497 = vsel %vm918, %v8484, %v8496
    %v8498 = vsel %vm920, %v8488, %v8497
    %v8499 = vsel %vm922, %v8492, %v8498
    %v8501 = vsel %vm127, %v8499, 0.0
    %8502 = vadd.xlane.f32.xlu0 %v8501
    %v8503 = vpop.xlane.xlu0 %8502
    %v8504 = vmul.f32 %v8503, -0.125
    %v8505 = vadd.f32 %v8420, %v8504
    %v8506 = vadd.f32 %v4318, %v4595
    %v8507 = vadd.f32 %v4300, %v8505
    %v8508 = vlaneseq
    %v8509 = vshrl.u32 %v8508, 7
    %vm8510 = vcmp.eq.s32.totalorder %v877, %v8509
    %v8511 = vsel %vm8510, 1, 0
    %v8512 = vcvt.s32.f32 %v8511
    %vm8513 = vcmp.ge.s32.totalorder %v877, 8
    %v8514 = vsel %vm8513, 1, 0
    %v8515 = vcvt.s32.f32 %v8514
    %v8516 = vmul.f32 %v8507, %v8515
    %v8518 = vsel %vm127, %v8506, 0
    %8520 = vmatprep.subr.mxu0 0.0
    %8521 = vmatpush1.msra.mxu0 %v8512
    %8522 = vmatprep.subr.mxu0 0.0
    %8523 = vmatpush1.msra.mxu0 0.0
    %8524 = vmatprep.subr.mxu0 0.0
    %8525 = vmatpush1.msra.mxu0 0.0
    %8526 = vmatprep.subr.mxu0 0.0
    %8527 = vmatpush1.msra.mxu0 0.0
    %8528 = vmatprep.subr.mxu0 0.0
    %8529 = vmatpush1.msra.mxu0 0.0
    %8530 = vmatprep.subr.mxu0 0.0
    %8531 = vmatpush1.msra.mxu0 0.0
    %8532 = vmatprep.subr.mxu0 0.0
    %8533 = vmatpush1.msra.mxu0 0.0
    %8534 = vmatprep.subr.mxu0 0.0
    %8535 = vmatpush1.msra.mxu0 0.0
    %8536 = vmatprep.subr.mxu0 0.0
    %8537 = vmatpush1.msra.mxu0 0.0
    %8538 = vmatprep.subr.mxu0 0.0
    %8539 = vmatpush1.msra.mxu0 0.0
    %8540 = vmatprep.subr.mxu0 0.0
    %8541 = vmatpush1.msra.mxu0 0.0
    %8542 = vmatprep.subr.mxu0 0.0
    %8543 = vmatpush1.msra.mxu0 0.0
    %8544 = vmatprep.subr.mxu0 0.0
    %8545 = vmatpush1.msra.mxu0 0.0
    %8546 = vmatprep.subr.mxu0 0.0
    %8547 = vmatpush1.msra.mxu0 0.0
    %8548 = vmatprep.subr.mxu0 0.0
    %8549 = vmatpush1.msra.mxu0 0.0
    %8550 = vmatprep.subr.mxu0 0.0
    %8551 = vmatpush1.msra.mxu0 0.0
    %8552 = vmatprep.subr.mxu0 0.0
    %8553 = vmatpush1.msra.mxu0 0.0
    %8554 = vmatprep.subr.mxu0 0.0
    %8555 = vmatpush1.msra.mxu0 0.0
    %8556 = vmatprep.subr.mxu0 0.0
    %8557 = vmatpush1.msra.mxu0 0.0
    %8558 = vmatprep.subr.mxu0 0.0
    %8559 = vmatpush1.msra.mxu0 0.0
    %8560 = vmatprep.subr.mxu0 0.0
    %8561 = vmatpush1.msra.mxu0 0.0
    %8562 = vmatprep.subr.mxu0 0.0
    %8563 = vmatpush1.msra.mxu0 0.0
    %8564 = vmatprep.subr.mxu0 0.0
    %8565 = vmatpush1.msra.mxu0 0.0
    %8566 = vmatprep.subr.mxu0 0.0
    %8567 = vmatpush1.msra.mxu0 0.0
    %8568 = vmatprep.subr.mxu0 0.0
    %8569 = vmatpush1.msra.mxu0 0.0
    %8570 = vmatprep.subr.mxu0 0.0
    %8571 = vmatpush1.msra.mxu0 0.0
    %8572 = vmatprep.subr.mxu0 0.0
    %8573 = vmatpush1.msra.mxu0 0.0
    %8574 = vmatprep.subr.mxu0 0.0
    %8575 = vmatpush1.msra.mxu0 0.0
    %8576 = vmatprep.subr.mxu0 0.0
    %8577 = vmatpush1.msra.mxu0 0.0
    %8578 = vmatprep.subr.mxu0 0.0
    %8579 = vmatpush1.msra.mxu0 0.0
    %8580 = vmatprep.subr.mxu0 0.0
    %8581 = vmatpush1.msra.mxu0 0.0
    %8582 = vmatprep.subr.mxu0 0.0
    %8583 = vmatpush1.msra.mxu0 0.0
    %8584 = vmatprep.mubr.f32.mxu0 0.0
    %8585 = vmatmul.mubr.f32.gmra.mrb[0].mxu0 %v8518
    %v8586 = vpop.f32.mrb[0].mxu0
    %v8587 = vadd.f32 %v8516, %v8586
    %v8588 = vpop.f32.mrb[0].mxu0
    %8589 = vdwg.mxu0
    %8590 = vst [vmem:[#allocation10] sm:$0xff] %v8587
    // Predicated region
    $region58: #{tpu_custom_call.1} parent=1 // pred_check
      _
    $region59: #{tpu_custom_call.1} parent=1 // pred_check_branch
      %8592 = sbr.rel (0) target = $region61
    $region60: #{tpu_custom_call.1} parent=1 // pred_region
      %s8594 = ssub.s32 128, 128
      %8595 = vsyncadd [#allocation4], %s8594
      %s8597 = sshll.u32 [#allocation10], 4
      %s8598 = int_to_ptr.vmem [resolvable:$true] %s8597
      %8600 = dma.vmem_to_hbm [thread:$0]  %s8598, 128, %s10, [#allocation4]
    $region61: #{tpu_custom_call.1} parent=1 // pred_fallthru
      _
    // Predicated region
    $region62: #{tpu_custom_call.1} parent=1 // pred_check
      _
    $region63: #{tpu_custom_call.1} parent=1 // pred_check_branch
      %8602 = sbr.rel (0) target = $region65
    $region64: #{tpu_custom_call.1} parent=1 // pred_region
      %8603 = dma.done [#allocation4], 128
    $region65: #{tpu_custom_call.1} parent=1 // pred_fallthru
      _
    %8604 = vsyncpa [#allocation3], 1
    %8605 = vsyncpa [#allocation6], 1
    %8606 = vsyncpa [#allocation9], 1
    %8607 = vsyncpa [#allocation4], 1

</llo_original>
